<compile_context>
chip_gen: v7x
topology: tpu7x:2x2x1
jax: 0.10.0
libtpu: 0.0.40
codegen_flags: <defaults>
</compile_context>

<pallas_src>
import functools

import jax
import jax.numpy as jnp
from jax.experimental import pallas as pl
from jax.experimental.pallas import tpu as pltpu

WS = 7          # GroupAttention window size (ws)
HEAD_DIM = 32   # GroupAttention head_dim
KSIZE = 7       # depthwise conv kernel size
PAD = KSIZE // 2
LN_EPS = 1e-6
BN_EPS = 1e-5


def _gelu_tanh(x):
    # TODO(synk): PyTorch nn.GELU() defaults to the exact erf form; Mosaic has no guaranteed
    # erf lowering, so the tanh approximation is used here (and mirrored in the reference).
    c = 0.7978845608028654  # sqrt(2/pi)
    return 0.5 * x * (1.0 + jnp.tanh(c * (x + 0.044715 * (x * x * x))))


def _bn_affine(p):
    # Eval-mode BatchNorm2d folded into a per-channel scale/shift.
    scale = p["bn_g"] * jax.lax.rsqrt(p["bn_var"] + BN_EPS)
    shift = p["bn_b"] - p["bn_mean"] * scale
    return scale, shift


def _window_partition(t, ws):
    # (B, H, W, C) -> (B, hg*wg*ws*ws, C) with windows contiguous along the row axis.
    B, H, W, C = t.shape
    hg, wg = H // ws, W // ws
    t = t.reshape(B, hg, ws, wg, ws, C).transpose(0, 1, 3, 2, 4, 5)
    return t.reshape(B, hg * wg * ws * ws, C)


def _window_merge(t, ws, H, W):
    # Inverse of _window_partition, returns (B, H*W, C).
    B, _, C = t.shape
    hg, wg = H // ws, W // ws
    t = t.reshape(B, hg, wg, ws, ws, C).transpose(0, 1, 3, 2, 4, 5)
    return t.reshape(B, H * W, C)


# ----------------------------- kernel A: dwconv + LayerNorm -----------------------------
def dwconv_ln_kernel(xp_ref, wdw_ref, bdw_ref, lng_ref, lnb_ref, x1_ref, xn_ref):
    H, W, C = x1_ref.shape[1], x1_ref.shape[2], x1_ref.shape[3]
    xp = xp_ref[0]                       # (H+6, W+6, C) f32, zero-padded input (NHWC)
    wdw = wdw_ref[...]                   # (49, C) depthwise taps
    acc = jnp.zeros((H, W, C), jnp.float32)
    for t in range(KSIZE * KSIZE):       # static unroll over the 7x7 taps (VPU FMAs)
        dh, dw = divmod(t, KSIZE)
        acc = acc + xp[dh:dh + H, dw:dw + W, :] * wdw[t:t + 1, :]
    x1 = acc + bdw_ref[...]              # (H, W, C) + (1, C)
    x1_ref[0] = x1                       # residual branch, kept in f32

    # LayerNorm over channels (channels_last, eps=1e-6)
    mu = jnp.mean(x1, axis=-1, keepdims=True)
    var = jnp.mean((x1 - mu) ** 2, axis=-1, keepdims=True)
    xhat = (x1 - mu) * jax.lax.rsqrt(var + LN_EPS)
    xn_ref[0] = (xhat * lng_ref[...] + lnb_ref[...]).astype(jnp.bfloat16)


# ------------------- kernel B: fused qkv + window attention + proj + residual -----------
def group_attn_kernel(xn_ref, x1_ref, wqkv_ref, wproj_ref, bproj_ref, out_ref,
                      *, num_windows, win, heads, head_dim):
    xn = xn_ref[0]                                     # (G*S, C) bf16 (LayerNorm output)
    c = xn.shape[-1]
    # One fused qkv matmul over all windows of this image: (G*S, C) @ (C, 3C), bf16 -> f32.
    qkv = jnp.dot(xn, wqkv_ref[...], preferred_element_type=jnp.float32)
    scale = head_dim ** -0.5

    win_outs = []
    for g in range(num_windows):                       # static unroll (few windows/step)
        blk = qkv[g * win:(g + 1) * win, :]            # (S, 3C) rows of this window
        head_outs = []
        for h in range(heads):                         # static unroll over heads
            q = blk[:, h * head_dim:(h + 1) * head_dim].astype(jnp.bfloat16)
            k = blk[:, c + h * head_dim:c + (h + 1) * head_dim].astype(jnp.bfloat16)
            v = blk[:, 2 * c + h * head_dim:2 * c + (h + 1) * head_dim].astype(jnp.bfloat16)
            s = jnp.einsum("qd,kd->qk", q, k,
                           preferred_element_type=jnp.float32) * scale      # (S, S)
            s = s - jnp.max(s, axis=-1, keepdims=True)
            e = jnp.exp(s)
            p = e / jnp.sum(e, axis=-1, keepdims=True)
            head_outs.append(jnp.dot(p.astype(jnp.bfloat16), v,
                                     preferred_element_type=jnp.float32))   # (S, hd)
        win_outs.append(head_outs[0] if heads == 1
                        else jnp.concatenate(head_outs, axis=-1))
    attn = win_outs[0] if num_windows == 1 else jnp.concatenate(win_outs, axis=0)  # (G*S, C)

    proj = jnp.dot(attn.astype(jnp.bfloat16), wproj_ref[...],
                   preferred_element_type=jnp.float32)
    out_ref[0] = x1_ref[0] + (proj + bproj_ref[...])   # residual add (f32)


# ------------------- kernel C: pwconv1 + GELU + pwconv2 + BatchNorm + residual ----------
def mlp_bn_kernel(x2_ref, inp_ref, w1_ref, b1_ref, w2_ref, b2_ref, bns_ref, bnb_ref, out_ref):
    x2 = x2_ref[0]                                     # (H*W, C) f32
    h = jnp.dot(x2.astype(jnp.bfloat16), w1_ref[...],
                preferred_element_type=jnp.float32) + b1_ref[...]
    h = _gelu_tanh(h)
    y = jnp.dot(h.astype(jnp.bfloat16), w2_ref[...],
                preferred_element_type=jnp.float32) + b2_ref[...]
    y = y * bns_ref[...] + bnb_ref[...]                # eval-mode BatchNorm2d
    out_ref[0] = inp_ref[0] + y                        # residual with the block input


# ----------------------------------- wrapper ---------------------------------------------
def basicblock2_forward(x, params):
    B, C, H, W = x.shape
    assert H % WS == 0 and W % WS == 0 and C % HEAD_DIM == 0
    hg, wg = H // WS, W // WS
    G, S = hg * wg, WS * WS
    N = H * W

    xcl = jnp.transpose(x, (0, 2, 3, 1))                           # (B, H, W, C)
    xpad = jnp.pad(xcl, ((0, 0), (PAD, PAD), (PAD, PAD), (0, 0)))  # zero pad for 7x7 conv

    def rep(shape):  # broadcast operand: full block, constant index map
        return pl.BlockSpec(shape, lambda i: (0,) * len(shape))

    # ---- kernel A ----
    x1, xn = pl.pallas_call(
        dwconv_ln_kernel,
        grid=(B,),
        out_shape=(jax.ShapeDtypeStruct((B, H, W, C), jnp.float32),
                   jax.ShapeDtypeStruct((B, H, W, C), jnp.bfloat16)),
        in_specs=[
            pl.BlockSpec((1, H + 2 * PAD, W + 2 * PAD, C), lambda i: (i, 0, 0, 0)),
            rep((KSIZE * KSIZE, C)),
            rep((1, C)), rep((1, C)), rep((1, C)),
        ],
        out_specs=(pl.BlockSpec((1, H, W, C), lambda i: (i, 0, 0, 0)),
                   pl.BlockSpec((1, H, W, C), lambda i: (i, 0, 0, 0))),
        compiler_params=pltpu.CompilerParams(dimension_semantics=("parallel",)),
    )(xpad, params["w_dw"], params["b_dw"], params["ln_g"], params["ln_b"])

    # Window partition (pure layout plumbing, wrapper-side).
    xn_w = _window_partition(xn, WS)       # (B, G*S, C) bf16
    x1_w = _window_partition(x1, WS)       # (B, G*S, C) f32

    # ---- kernel B ----
    kernel_b = functools.partial(group_attn_kernel, num_windows=G, win=S,
                                 heads=C // HEAD_DIM, head_dim=HEAD_DIM)
    x2_w = pl.pallas_call(
        kernel_b,
        grid=(B,),
        out_shape=jax.ShapeDtypeStruct((B, G * S, C), jnp.float32),
        in_specs=[
            pl.BlockSpec((1, G * S, C), lambda i: (i, 0, 0)),
            pl.BlockSpec((1, G * S, C), lambda i: (i, 0, 0)),
            rep((C, 3 * C)), rep((C, C)), rep((1, C)),
        ],
        out_specs=pl.BlockSpec((1, G * S, C), lambda i: (i, 0, 0)),
        compiler_params=pltpu.CompilerParams(dimension_semantics=("parallel",)),
    )(xn_w, x1_w, params["w_qkv"], params["w_proj"], params["b_proj"])

    x2 = _window_merge(x2_w, WS, H, W)     # (B, N, C)
    inp = xcl.reshape(B, N, C)
    bn_scale, bn_shift = _bn_affine(params)

    # ---- kernel C ----
    out_cl = pl.pallas_call(
        mlp_bn_kernel,
        grid=(B,),
        out_shape=jax.ShapeDtypeStruct((B, N, C), jnp.float32),
        in_specs=[
            pl.BlockSpec((1, N, C), lambda i: (i, 0, 0)),
            pl.BlockSpec((1, N, C), lambda i: (i, 0, 0)),
            rep((C, 2 * C)), rep((1, 2 * C)), rep((2 * C, C)), rep((1, C)),
            rep((1, C)), rep((1, C)),
        ],
        out_specs=pl.BlockSpec((1, N, C), lambda i: (i, 0, 0)),
        compiler_params=pltpu.CompilerParams(dimension_semantics=("parallel",)),
    )(x2, inp, params["w_pw1"], params["b_pw1"], params["w_pw2"], params["b_pw2"],
      bn_scale, bn_shift)

    return jnp.transpose(out_cl.reshape(B, H, W, C), (0, 3, 1, 2))


# ---------------------- pure-JAX reference (precision-matched) ---------------------------
def reference_forward(x, p):
    f32, bf16 = jnp.float32, jnp.bfloat16
    B, C, H, W = x.shape
    hg, wg = H // WS, W // WS
    G, S = hg * wg, WS * WS
    nh, hd = C // HEAD_DIM, HEAD_DIM

    xcl = jnp.transpose(x, (0, 2, 3, 1))
    xp = jnp.pad(xcl, ((0, 0), (PAD, PAD), (PAD, PAD), (0, 0)))
    acc = jnp.zeros((B, H, W, C), f32)
    for t in range(KSIZE * KSIZE):
        dh, dw = divmod(t, KSIZE)
        acc = acc + xp[:, dh:dh + H, dw:dw + W, :] * p["w_dw"][t]
    x1 = acc + p["b_dw"][0]

    mu = jnp.mean(x1, axis=-1, keepdims=True)
    var = jnp.mean((x1 - mu) ** 2, axis=-1, keepdims=True)
    xhat = (x1 - mu) * jax.lax.rsqrt(var + LN_EPS)
    xn = (xhat * p["ln_g"][0] + p["ln_b"][0]).astype(bf16)

    xn_w = _window_partition(xn, WS)
    x1_w = _window_partition(x1, WS)

    qkv = jnp.einsum("bnc,cd->bnd", xn_w, p["w_qkv"], preferred_element_type=f32)
    qkv = qkv.reshape(B, G, S, 3 * C)
    q = qkv[..., 0 * C:1 * C].reshape(B, G, S, nh, hd).astype(bf16)
    k = qkv[..., 1 * C:2 * C].reshape(B, G, S, nh, hd).astype(bf16)
    v = qkv[..., 2 * C:3 * C].reshape(B, G, S, nh, hd).astype(bf16)
    s = jnp.einsum("bgsnd,bgtnd->bgnst", q, k, preferred_element_type=f32) * (hd ** -0.5)
    s = s - jnp.max(s, axis=-1, keepdims=True)
    e = jnp.exp(s)
    attn = e / jnp.sum(e, axis=-1, keepdims=True)
    o = jnp.einsum("bgnst,bgtnd->bgsnd", attn.astype(bf16), v, preferred_element_type=f32)
    o = o.reshape(B, G * S, C)
    proj = jnp.einsum("bnc,cd->bnd", o.astype(bf16), p["w_proj"],
                      preferred_element_type=f32) + p["b_proj"][0]
    x2_w = x1_w + proj
    x2 = _window_merge(x2_w, WS, H, W)

    h = jnp.einsum("bnc,cd->bnd", x2.astype(bf16), p["w_pw1"],
                   preferred_element_type=f32) + p["b_pw1"][0]
    h = _gelu_tanh(h)
    y = jnp.einsum("bnd,dc->bnc", h.astype(bf16), p["w_pw2"],
                   preferred_element_type=f32) + p["b_pw2"][0]
    bn_scale, bn_shift = _bn_affine(p)
    y = y * bn_scale[0] + bn_shift[0]
    out = xcl.reshape(B, H * W, C) + y
    return jnp.transpose(out.reshape(B, H, W, C), (0, 3, 1, 2))


if __name__ == "__main__":
    B, C, H, W = 2, 32, 14, 14    # dim=32 -> num_heads=1; H, W multiples of ws=7
    f32 = jnp.float32

    key = jax.random.PRNGKey(0)
    ks = jax.random.split(key, 16)

    x = jax.random.normal(ks[0], (B, C, H, W), f32)

    # Parameters in PyTorch layouts, then converted to kernel layouts.
    w_dw_t = jax.random.normal(ks[1], (C, 1, KSIZE, KSIZE), f32) * (1.0 / KSIZE)  # dwconv.weight
    b_dw_t = 0.05 * jax.random.normal(ks[2], (C,), f32)                            # dwconv.bias
    ln_g_t = 1.0 + 0.1 * jax.random.normal(ks[3], (C,), f32)
    ln_b_t = 0.05 * jax.random.normal(ks[4], (C,), f32)
    w_qkv_t = jax.random.normal(ks[5], (3 * C, C), f32) * (C ** -0.5)              # qkv.weight
    w_proj_t = jax.random.normal(ks[6], (C, C), f32) * (C ** -0.5)                 # proj.weight
    b_proj_t = 0.05 * jax.random.normal(ks[7], (C,), f32)
    w_pw1_t = jax.random.normal(ks[8], (2 * C, C), f32) * (C ** -0.5)              # pwconv1.weight
    b_pw1_t = 0.05 * jax.random.normal(ks[9], (2 * C,), f32)
    w_pw2_t = jax.random.normal(ks[10], (C, 2 * C), f32) * ((2 * C) ** -0.5)       # pwconv2.weight
    b_pw2_t = 0.05 * jax.random.normal(ks[11], (C,), f32)
    bn_g_t = 1.0 + 0.1 * jax.random.normal(ks[12], (C,), f32)
    bn_b_t = 0.05 * jax.random.normal(ks[13], (C,), f32)
    bn_mean_t = 0.1 * jax.random.normal(ks[14], (C,), f32)
    bn_var_t = 1.0 + 0.2 * jax.random.uniform(ks[15], (C,), f32)

    params = {
        "w_dw": jnp.transpose(w_dw_t.reshape(C, KSIZE * KSIZE), (1, 0)),   # (49, C)
        "b_dw": b_dw_t.reshape(1, C),
        "ln_g": ln_g_t.reshape(1, C),
        "ln_b": ln_b_t.reshape(1, C),
        # MXU operands pre-cast to bf16 (f32 accumulation in-kernel), per review.
        "w_qkv": jnp.transpose(w_qkv_t).astype(jnp.bfloat16),              # (C, 3C)
        "w_proj": jnp.transpose(w_proj_t).astype(jnp.bfloat16),            # (C, C)
        "b_proj": b_proj_t.reshape(1, C),
        "w_pw1": jnp.transpose(w_pw1_t).astype(jnp.bfloat16),              # (C, 2C)
        "b_pw1": b_pw1_t.reshape(1, 2 * C),
        "w_pw2": jnp.transpose(w_pw2_t).astype(jnp.bfloat16),              # (2C, C)
        "b_pw2": b_pw2_t.reshape(1, C),
        "bn_g": bn_g_t.reshape(1, C),
        "bn_b": bn_b_t.reshape(1, C),
        "bn_mean": bn_mean_t.reshape(1, C),
        "bn_var": bn_var_t.reshape(1, C),
    }

    out = jax.jit(basicblock2_forward)(x, params)
    out = jax.block_until_ready(out)

    ref = reference_forward(x, params)
    assert out.shape == (B, C, H, W)
    err = jnp.max(jnp.abs(out - ref))
    assert jnp.allclose(out, ref, atol=1e-2, rtol=1e-2), f"mismatch vs reference: {err}"

    print("KERNEL_OK")
</pallas_src>

<mosaic_0001>
module attributes {stable_mosaic.version = 11 : i64} {
  func.func @dwconv_ln_kernel(%arg0: i32, %arg1: memref<1x20x20x32xf32, #tpu.memory_space<vmem>>, %arg2: memref<49x32xf32, #tpu.memory_space<vmem>>, %arg3: memref<1x32xf32, #tpu.memory_space<vmem>>, %arg4: memref<1x32xf32, #tpu.memory_space<vmem>>, %arg5: memref<1x32xf32, #tpu.memory_space<vmem>>, %arg6: memref<1x14x14x32xf32, #tpu.memory_space<vmem>>, %arg7: memref<1x14x14x32xbf16, #tpu.memory_space<vmem>>) attributes {dimension_semantics = [#tpu.dimension_semantics<parallel>], iteration_bounds = array<i64: 2>, scalar_prefetch = 0 : i64, scratch_operands = 0 : i64, tpu.core_type = #tpu.core_type<tc>, window_params = [{transform_indices = @transform_0, window_bounds = array<i64: 1, 20, 20, 32>}, {pipeline_mode = #tpu.pipeline_mode<synchronous>, transform_indices = @transform_1, window_bounds = array<i64: 49, 32>}, {pipeline_mode = #tpu.pipeline_mode<synchronous>, transform_indices = @transform_2, window_bounds = array<i64: 1, 32>}, {pipeline_mode = #tpu.pipeline_mode<synchronous>, transform_indices = @transform_3, window_bounds = array<i64: 1, 32>}, {pipeline_mode = #tpu.pipeline_mode<synchronous>, transform_indices = @transform_4, window_bounds = array<i64: 1, 32>}, {transform_indices = @transform_5, window_bounds = array<i64: 1, 14, 14, 32>}, {transform_indices = @transform_6, window_bounds = array<i64: 1, 14, 14, 32>}]} {
    %c0 = arith.constant 0 : index
    %c0_0 = arith.constant 0 : index
    %c0_1 = arith.constant 0 : index
    %c0_2 = arith.constant 0 : index
    %0 = vector.load %arg1[%c0, %c0_0, %c0_1, %c0_2] : memref<1x20x20x32xf32, #tpu.memory_space<vmem>>, vector<1x20x20x32xf32>
    %1 = vector.shape_cast %0 : vector<1x20x20x32xf32> to vector<20x20x32xf32>
    %c0_3 = arith.constant 0 : index
    %c0_4 = arith.constant 0 : index
    %2 = vector.load %arg2[%c0_3, %c0_4] : memref<49x32xf32, #tpu.memory_space<vmem>>, vector<49x32xf32>
    %cst = arith.constant 0.000000e+00 : f32
    %3 = vector.broadcast %cst : f32 to vector<14x14x32xf32>
    %4 = vector.extract_strided_slice %1 {offsets = [0, 0, 0], sizes = [14, 14, 32], strides = [1, 1, 1]} : vector<20x20x32xf32> to vector<14x14x32xf32>
    %5 = vector.extract_strided_slice %2 {offsets = [0, 0], sizes = [1, 32], strides = [1, 1]} : vector<49x32xf32> to vector<1x32xf32>
    %6 = vector.shape_cast %5 : vector<1x32xf32> to vector<1x1x32xf32>
    %7 = vector.broadcast %6 : vector<1x1x32xf32> to vector<14x14x32xf32>
    %8 = arith.mulf %4, %7 : vector<14x14x32xf32>
    %9 = arith.addf %3, %8 : vector<14x14x32xf32>
    %10 = vector.extract_strided_slice %1 {offsets = [0, 1, 0], sizes = [14, 14, 32], strides = [1, 1, 1]} : vector<20x20x32xf32> to vector<14x14x32xf32>
    %11 = vector.extract_strided_slice %2 {offsets = [1, 0], sizes = [1, 32], strides = [1, 1]} : vector<49x32xf32> to vector<1x32xf32>
    %12 = vector.shape_cast %11 : vector<1x32xf32> to vector<1x1x32xf32>
    %13 = vector.broadcast %12 : vector<1x1x32xf32> to vector<14x14x32xf32>
    %14 = arith.mulf %10, %13 : vector<14x14x32xf32>
    %15 = arith.addf %9, %14 : vector<14x14x32xf32>
    %16 = vector.extract_strided_slice %1 {offsets = [0, 2, 0], sizes = [14, 14, 32], strides = [1, 1, 1]} : vector<20x20x32xf32> to vector<14x14x32xf32>
    %17 = vector.extract_strided_slice %2 {offsets = [2, 0], sizes = [1, 32], strides = [1, 1]} : vector<49x32xf32> to vector<1x32xf32>
    %18 = vector.shape_cast %17 : vector<1x32xf32> to vector<1x1x32xf32>
    %19 = vector.broadcast %18 : vector<1x1x32xf32> to vector<14x14x32xf32>
    %20 = arith.mulf %16, %19 : vector<14x14x32xf32>
    %21 = arith.addf %15, %20 : vector<14x14x32xf32>
    %22 = vector.extract_strided_slice %1 {offsets = [0, 3, 0], sizes = [14, 14, 32], strides = [1, 1, 1]} : vector<20x20x32xf32> to vector<14x14x32xf32>
    %23 = vector.extract_strided_slice %2 {offsets = [3, 0], sizes = [1, 32], strides = [1, 1]} : vector<49x32xf32> to vector<1x32xf32>
    %24 = vector.shape_cast %23 : vector<1x32xf32> to vector<1x1x32xf32>
    %25 = vector.broadcast %24 : vector<1x1x32xf32> to vector<14x14x32xf32>
    %26 = arith.mulf %22, %25 : vector<14x14x32xf32>
    %27 = arith.addf %21, %26 : vector<14x14x32xf32>
    %28 = vector.extract_strided_slice %1 {offsets = [0, 4, 0], sizes = [14, 14, 32], strides = [1, 1, 1]} : vector<20x20x32xf32> to vector<14x14x32xf32>
    %29 = vector.extract_strided_slice %2 {offsets = [4, 0], sizes = [1, 32], strides = [1, 1]} : vector<49x32xf32> to vector<1x32xf32>
    %30 = vector.shape_cast %29 : vector<1x32xf32> to vector<1x1x32xf32>
    %31 = vector.broadcast %30 : vector<1x1x32xf32> to vector<14x14x32xf32>
    %32 = arith.mulf %28, %31 : vector<14x14x32xf32>
    %33 = arith.addf %27, %32 : vector<14x14x32xf32>
    %34 = vector.extract_strided_slice %1 {offsets = [0, 5, 0], sizes = [14, 14, 32], strides = [1, 1, 1]} : vector<20x20x32xf32> to vector<14x14x32xf32>
    %35 = vector.extract_strided_slice %2 {offsets = [5, 0], sizes = [1, 32], strides = [1, 1]} : vector<49x32xf32> to vector<1x32xf32>
    %36 = vector.shape_cast %35 : vector<1x32xf32> to vector<1x1x32xf32>
    %37 = vector.broadcast %36 : vector<1x1x32xf32> to vector<14x14x32xf32>
    %38 = arith.mulf %34, %37 : vector<14x14x32xf32>
    %39 = arith.addf %33, %38 : vector<14x14x32xf32>
    %40 = vector.extract_strided_slice %1 {offsets = [0, 6, 0], sizes = [14, 14, 32], strides = [1, 1, 1]} : vector<20x20x32xf32> to vector<14x14x32xf32>
    %41 = vector.extract_strided_slice %2 {offsets = [6, 0], sizes = [1, 32], strides = [1, 1]} : vector<49x32xf32> to vector<1x32xf32>
    %42 = vector.shape_cast %41 : vector<1x32xf32> to vector<1x1x32xf32>
    %43 = vector.broadcast %42 : vector<1x1x32xf32> to vector<14x14x32xf32>
    %44 = arith.mulf %40, %43 : vector<14x14x32xf32>
    %45 = arith.addf %39, %44 : vector<14x14x32xf32>
    %46 = vector.extract_strided_slice %1 {offsets = [1, 0, 0], sizes = [14, 14, 32], strides = [1, 1, 1]} : vector<20x20x32xf32> to vector<14x14x32xf32>
    %47 = vector.extract_strided_slice %2 {offsets = [7, 0], sizes = [1, 32], strides = [1, 1]} : vector<49x32xf32> to vector<1x32xf32>
    %48 = vector.shape_cast %47 : vector<1x32xf32> to vector<1x1x32xf32>
    %49 = vector.broadcast %48 : vector<1x1x32xf32> to vector<14x14x32xf32>
    %50 = arith.mulf %46, %49 : vector<14x14x32xf32>
    %51 = arith.addf %45, %50 : vector<14x14x32xf32>
    %52 = vector.extract_strided_slice %1 {offsets = [1, 1, 0], sizes = [14, 14, 32], strides = [1, 1, 1]} : vector<20x20x32xf32> to vector<14x14x32xf32>
    %53 = vector.extract_strided_slice %2 {offsets = [8, 0], sizes = [1, 32], strides = [1, 1]} : vector<49x32xf32> to vector<1x32xf32>
    %54 = vector.shape_cast %53 : vector<1x32xf32> to vector<1x1x32xf32>
    %55 = vector.broadcast %54 : vector<1x1x32xf32> to vector<14x14x32xf32>
    %56 = arith.mulf %52, %55 : vector<14x14x32xf32>
    %57 = arith.addf %51, %56 : vector<14x14x32xf32>
    %58 = vector.extract_strided_slice %1 {offsets = [1, 2, 0], sizes = [14, 14, 32], strides = [1, 1, 1]} : vector<20x20x32xf32> to vector<14x14x32xf32>
    %59 = vector.extract_strided_slice %2 {offsets = [9, 0], sizes = [1, 32], strides = [1, 1]} : vector<49x32xf32> to vector<1x32xf32>
    %60 = vector.shape_cast %59 : vector<1x32xf32> to vector<1x1x32xf32>
    %61 = vector.broadcast %60 : vector<1x1x32xf32> to vector<14x14x32xf32>
    %62 = arith.mulf %58, %61 : vector<14x14x32xf32>
    %63 = arith.addf %57, %62 : vector<14x14x32xf32>
    %64 = vector.extract_strided_slice %1 {offsets = [1, 3, 0], sizes = [14, 14, 32], strides = [1, 1, 1]} : vector<20x20x32xf32> to vector<14x14x32xf32>
    %65 = vector.extract_strided_slice %2 {offsets = [10, 0], sizes = [1, 32], strides = [1, 1]} : vector<49x32xf32> to vector<1x32xf32>
    %66 = vector.shape_cast %65 : vector<1x32xf32> to vector<1x1x32xf32>
    %67 = vector.broadcast %66 : vector<1x1x32xf32> to vector<14x14x32xf32>
    %68 = arith.mulf %64, %67 : vector<14x14x32xf32>
    %69 = arith.addf %63, %68 : vector<14x14x32xf32>
    %70 = vector.extract_strided_slice %1 {offsets = [1, 4, 0], sizes = [14, 14, 32], strides = [1, 1, 1]} : vector<20x20x32xf32> to vector<14x14x32xf32>
    %71 = vector.extract_strided_slice %2 {offsets = [11, 0], sizes = [1, 32], strides = [1, 1]} : vector<49x32xf32> to vector<1x32xf32>
    %72 = vector.shape_cast %71 : vector<1x32xf32> to vector<1x1x32xf32>
    %73 = vector.broadcast %72 : vector<1x1x32xf32> to vector<14x14x32xf32>
    %74 = arith.mulf %70, %73 : vector<14x14x32xf32>
    %75 = arith.addf %69, %74 : vector<14x14x32xf32>
    %76 = vector.extract_strided_slice %1 {offsets = [1, 5, 0], sizes = [14, 14, 32], strides = [1, 1, 1]} : vector<20x20x32xf32> to vector<14x14x32xf32>
    %77 = vector.extract_strided_slice %2 {offsets = [12, 0], sizes = [1, 32], strides = [1, 1]} : vector<49x32xf32> to vector<1x32xf32>
    %78 = vector.shape_cast %77 : vector<1x32xf32> to vector<1x1x32xf32>
    %79 = vector.broadcast %78 : vector<1x1x32xf32> to vector<14x14x32xf32>
    %80 = arith.mulf %76, %79 : vector<14x14x32xf32>
    %81 = arith.addf %75, %80 : vector<14x14x32xf32>
    %82 = vector.extract_strided_slice %1 {offsets = [1, 6, 0], sizes = [14, 14, 32], strides = [1, 1, 1]} : vector<20x20x32xf32> to vector<14x14x32xf32>
    %83 = vector.extract_strided_slice %2 {offsets = [13, 0], sizes = [1, 32], strides = [1, 1]} : vector<49x32xf32> to vector<1x32xf32>
    %84 = vector.shape_cast %83 : vector<1x32xf32> to vector<1x1x32xf32>
    %85 = vector.broadcast %84 : vector<1x1x32xf32> to vector<14x14x32xf32>
    %86 = arith.mulf %82, %85 : vector<14x14x32xf32>
    %87 = arith.addf %81, %86 : vector<14x14x32xf32>
    %88 = vector.extract_strided_slice %1 {offsets = [2, 0, 0], sizes = [14, 14, 32], strides = [1, 1, 1]} : vector<20x20x32xf32> to vector<14x14x32xf32>
    %89 = vector.extract_strided_slice %2 {offsets = [14, 0], sizes = [1, 32], strides = [1, 1]} : vector<49x32xf32> to vector<1x32xf32>
    %90 = vector.shape_cast %89 : vector<1x32xf32> to vector<1x1x32xf32>
    %91 = vector.broadcast %90 : vector<1x1x32xf32> to vector<14x14x32xf32>
    %92 = arith.mulf %88, %91 : vector<14x14x32xf32>
    %93 = arith.addf %87, %92 : vector<14x14x32xf32>
    %94 = vector.extract_strided_slice %1 {offsets = [2, 1, 0], sizes = [14, 14, 32], strides = [1, 1, 1]} : vector<20x20x32xf32> to vector<14x14x32xf32>
    %95 = vector.extract_strided_slice %2 {offsets = [15, 0], sizes = [1, 32], strides = [1, 1]} : vector<49x32xf32> to vector<1x32xf32>
    %96 = vector.shape_cast %95 : vector<1x32xf32> to vector<1x1x32xf32>
    %97 = vector.broadcast %96 : vector<1x1x32xf32> to vector<14x14x32xf32>
    %98 = arith.mulf %94, %97 : vector<14x14x32xf32>
    %99 = arith.addf %93, %98 : vector<14x14x32xf32>
    %100 = vector.extract_strided_slice %1 {offsets = [2, 2, 0], sizes = [14, 14, 32], strides = [1, 1, 1]} : vector<20x20x32xf32> to vector<14x14x32xf32>
    %101 = vector.extract_strided_slice %2 {offsets = [16, 0], sizes = [1, 32], strides = [1, 1]} : vector<49x32xf32> to vector<1x32xf32>
    %102 = vector.shape_cast %101 : vector<1x32xf32> to vector<1x1x32xf32>
    %103 = vector.broadcast %102 : vector<1x1x32xf32> to vector<14x14x32xf32>
    %104 = arith.mulf %100, %103 : vector<14x14x32xf32>
    %105 = arith.addf %99, %104 : vector<14x14x32xf32>
    %106 = vector.extract_strided_slice %1 {offsets = [2, 3, 0], sizes = [14, 14, 32], strides = [1, 1, 1]} : vector<20x20x32xf32> to vector<14x14x32xf32>
    %107 = vector.extract_strided_slice %2 {offsets = [17, 0], sizes = [1, 32], strides = [1, 1]} : vector<49x32xf32> to vector<1x32xf32>
    %108 = vector.shape_cast %107 : vector<1x32xf32> to vector<1x1x32xf32>
    %109 = vector.broadcast %108 : vector<1x1x32xf32> to vector<14x14x32xf32>
    %110 = arith.mulf %106, %109 : vector<14x14x32xf32>
    %111 = arith.addf %105, %110 : vector<14x14x32xf32>
    %112 = vector.extract_strided_slice %1 {offsets = [2, 4, 0], sizes = [14, 14, 32], strides = [1, 1, 1]} : vector<20x20x32xf32> to vector<14x14x32xf32>
    %113 = vector.extract_strided_slice %2 {offsets = [18, 0], sizes = [1, 32], strides = [1, 1]} : vector<49x32xf32> to vector<1x32xf32>
    %114 = vector.shape_cast %113 : vector<1x32xf32> to vector<1x1x32xf32>
    %115 = vector.broadcast %114 : vector<1x1x32xf32> to vector<14x14x32xf32>
    %116 = arith.mulf %112, %115 : vector<14x14x32xf32>
    %117 = arith.addf %111, %116 : vector<14x14x32xf32>
    %118 = vector.extract_strided_slice %1 {offsets = [2, 5, 0], sizes = [14, 14, 32], strides = [1, 1, 1]} : vector<20x20x32xf32> to vector<14x14x32xf32>
    %119 = vector.extract_strided_slice %2 {offsets = [19, 0], sizes = [1, 32], strides = [1, 1]} : vector<49x32xf32> to vector<1x32xf32>
    %120 = vector.shape_cast %119 : vector<1x32xf32> to vector<1x1x32xf32>
    %121 = vector.broadcast %120 : vector<1x1x32xf32> to vector<14x14x32xf32>
    %122 = arith.mulf %118, %121 : vector<14x14x32xf32>
    %123 = arith.addf %117, %122 : vector<14x14x32xf32>
    %124 = vector.extract_strided_slice %1 {offsets = [2, 6, 0], sizes = [14, 14, 32], strides = [1, 1, 1]} : vector<20x20x32xf32> to vector<14x14x32xf32>
    %125 = vector.extract_strided_slice %2 {offsets = [20, 0], sizes = [1, 32], strides = [1, 1]} : vector<49x32xf32> to vector<1x32xf32>
    %126 = vector.shape_cast %125 : vector<1x32xf32> to vector<1x1x32xf32>
    %127 = vector.broadcast %126 : vector<1x1x32xf32> to vector<14x14x32xf32>
    %128 = arith.mulf %124, %127 : vector<14x14x32xf32>
    %129 = arith.addf %123, %128 : vector<14x14x32xf32>
    %130 = vector.extract_strided_slice %1 {offsets = [3, 0, 0], sizes = [14, 14, 32], strides = [1, 1, 1]} : vector<20x20x32xf32> to vector<14x14x32xf32>
    %131 = vector.extract_strided_slice %2 {offsets = [21, 0], sizes = [1, 32], strides = [1, 1]} : vector<49x32xf32> to vector<1x32xf32>
    %132 = vector.shape_cast %131 : vector<1x32xf32> to vector<1x1x32xf32>
    %133 = vector.broadcast %132 : vector<1x1x32xf32> to vector<14x14x32xf32>
    %134 = arith.mulf %130, %133 : vector<14x14x32xf32>
    %135 = arith.addf %129, %134 : vector<14x14x32xf32>
    %136 = vector.extract_strided_slice %1 {offsets = [3, 1, 0], sizes = [14, 14, 32], strides = [1, 1, 1]} : vector<20x20x32xf32> to vector<14x14x32xf32>
    %137 = vector.extract_strided_slice %2 {offsets = [22, 0], sizes = [1, 32], strides = [1, 1]} : vector<49x32xf32> to vector<1x32xf32>
    %138 = vector.shape_cast %137 : vector<1x32xf32> to vector<1x1x32xf32>
    %139 = vector.broadcast %138 : vector<1x1x32xf32> to vector<14x14x32xf32>
    %140 = arith.mulf %136, %139 : vector<14x14x32xf32>
    %141 = arith.addf %135, %140 : vector<14x14x32xf32>
    %142 = vector.extract_strided_slice %1 {offsets = [3, 2, 0], sizes = [14, 14, 32], strides = [1, 1, 1]} : vector<20x20x32xf32> to vector<14x14x32xf32>
    %143 = vector.extract_strided_slice %2 {offsets = [23, 0], sizes = [1, 32], strides = [1, 1]} : vector<49x32xf32> to vector<1x32xf32>
    %144 = vector.shape_cast %143 : vector<1x32xf32> to vector<1x1x32xf32>
    %145 = vector.broadcast %144 : vector<1x1x32xf32> to vector<14x14x32xf32>
    %146 = arith.mulf %142, %145 : vector<14x14x32xf32>
    %147 = arith.addf %141, %146 : vector<14x14x32xf32>
    %148 = vector.extract_strided_slice %1 {offsets = [3, 3, 0], sizes = [14, 14, 32], strides = [1, 1, 1]} : vector<20x20x32xf32> to vector<14x14x32xf32>
    %149 = vector.extract_strided_slice %2 {offsets = [24, 0], sizes = [1, 32], strides = [1, 1]} : vector<49x32xf32> to vector<1x32xf32>
    %150 = vector.shape_cast %149 : vector<1x32xf32> to vector<1x1x32xf32>
    %151 = vector.broadcast %150 : vector<1x1x32xf32> to vector<14x14x32xf32>
    %152 = arith.mulf %148, %151 : vector<14x14x32xf32>
    %153 = arith.addf %147, %152 : vector<14x14x32xf32>
    %154 = vector.extract_strided_slice %1 {offsets = [3, 4, 0], sizes = [14, 14, 32], strides = [1, 1, 1]} : vector<20x20x32xf32> to vector<14x14x32xf32>
    %155 = vector.extract_strided_slice %2 {offsets = [25, 0], sizes = [1, 32], strides = [1, 1]} : vector<49x32xf32> to vector<1x32xf32>
    %156 = vector.shape_cast %155 : vector<1x32xf32> to vector<1x1x32xf32>
    %157 = vector.broadcast %156 : vector<1x1x32xf32> to vector<14x14x32xf32>
    %158 = arith.mulf %154, %157 : vector<14x14x32xf32>
    %159 = arith.addf %153, %158 : vector<14x14x32xf32>
    %160 = vector.extract_strided_slice %1 {offsets = [3, 5, 0], sizes = [14, 14, 32], strides = [1, 1, 1]} : vector<20x20x32xf32> to vector<14x14x32xf32>
    %161 = vector.extract_strided_slice %2 {offsets = [26, 0], sizes = [1, 32], strides = [1, 1]} : vector<49x32xf32> to vector<1x32xf32>
    %162 = vector.shape_cast %161 : vector<1x32xf32> to vector<1x1x32xf32>
    %163 = vector.broadcast %162 : vector<1x1x32xf32> to vector<14x14x32xf32>
    %164 = arith.mulf %160, %163 : vector<14x14x32xf32>
    %165 = arith.addf %159, %164 : vector<14x14x32xf32>
    %166 = vector.extract_strided_slice %1 {offsets = [3, 6, 0], sizes = [14, 14, 32], strides = [1, 1, 1]} : vector<20x20x32xf32> to vector<14x14x32xf32>
    %167 = vector.extract_strided_slice %2 {offsets = [27, 0], sizes = [1, 32], strides = [1, 1]} : vector<49x32xf32> to vector<1x32xf32>
    %168 = vector.shape_cast %167 : vector<1x32xf32> to vector<1x1x32xf32>
    %169 = vector.broadcast %168 : vector<1x1x32xf32> to vector<14x14x32xf32>
    %170 = arith.mulf %166, %169 : vector<14x14x32xf32>
    %171 = arith.addf %165, %170 : vector<14x14x32xf32>
    %172 = vector.extract_strided_slice %1 {offsets = [4, 0, 0], sizes = [14, 14, 32], strides = [1, 1, 1]} : vector<20x20x32xf32> to vector<14x14x32xf32>
    %173 = vector.extract_strided_slice %2 {offsets = [28, 0], sizes = [1, 32], strides = [1, 1]} : vector<49x32xf32> to vector<1x32xf32>
    %174 = vector.shape_cast %173 : vector<1x32xf32> to vector<1x1x32xf32>
    %175 = vector.broadcast %174 : vector<1x1x32xf32> to vector<14x14x32xf32>
    %176 = arith.mulf %172, %175 : vector<14x14x32xf32>
    %177 = arith.addf %171, %176 : vector<14x14x32xf32>
    %178 = vector.extract_strided_slice %1 {offsets = [4, 1, 0], sizes = [14, 14, 32], strides = [1, 1, 1]} : vector<20x20x32xf32> to vector<14x14x32xf32>
    %179 = vector.extract_strided_slice %2 {offsets = [29, 0], sizes = [1, 32], strides = [1, 1]} : vector<49x32xf32> to vector<1x32xf32>
    %180 = vector.shape_cast %179 : vector<1x32xf32> to vector<1x1x32xf32>
    %181 = vector.broadcast %180 : vector<1x1x32xf32> to vector<14x14x32xf32>
    %182 = arith.mulf %178, %181 : vector<14x14x32xf32>
    %183 = arith.addf %177, %182 : vector<14x14x32xf32>
    %184 = vector.extract_strided_slice %1 {offsets = [4, 2, 0], sizes = [14, 14, 32], strides = [1, 1, 1]} : vector<20x20x32xf32> to vector<14x14x32xf32>
    %185 = vector.extract_strided_slice %2 {offsets = [30, 0], sizes = [1, 32], strides = [1, 1]} : vector<49x32xf32> to vector<1x32xf32>
    %186 = vector.shape_cast %185 : vector<1x32xf32> to vector<1x1x32xf32>
    %187 = vector.broadcast %186 : vector<1x1x32xf32> to vector<14x14x32xf32>
    %188 = arith.mulf %184, %187 : vector<14x14x32xf32>
    %189 = arith.addf %183, %188 : vector<14x14x32xf32>
    %190 = vector.extract_strided_slice %1 {offsets = [4, 3, 0], sizes = [14, 14, 32], strides = [1, 1, 1]} : vector<20x20x32xf32> to vector<14x14x32xf32>
    %191 = vector.extract_strided_slice %2 {offsets = [31, 0], sizes = [1, 32], strides = [1, 1]} : vector<49x32xf32> to vector<1x32xf32>
    %192 = vector.shape_cast %191 : vector<1x32xf32> to vector<1x1x32xf32>
    %193 = vector.broadcast %192 : vector<1x1x32xf32> to vector<14x14x32xf32>
    %194 = arith.mulf %190, %193 : vector<14x14x32xf32>
    %195 = arith.addf %189, %194 : vector<14x14x32xf32>
    %196 = vector.extract_strided_slice %1 {offsets = [4, 4, 0], sizes = [14, 14, 32], strides = [1, 1, 1]} : vector<20x20x32xf32> to vector<14x14x32xf32>
    %197 = vector.extract_strided_slice %2 {offsets = [32, 0], sizes = [1, 32], strides = [1, 1]} : vector<49x32xf32> to vector<1x32xf32>
    %198 = vector.shape_cast %197 : vector<1x32xf32> to vector<1x1x32xf32>
    %199 = vector.broadcast %198 : vector<1x1x32xf32> to vector<14x14x32xf32>
    %200 = arith.mulf %196, %199 : vector<14x14x32xf32>
    %201 = arith.addf %195, %200 : vector<14x14x32xf32>
    %202 = vector.extract_strided_slice %1 {offsets = [4, 5, 0], sizes = [14, 14, 32], strides = [1, 1, 1]} : vector<20x20x32xf32> to vector<14x14x32xf32>
    %203 = vector.extract_strided_slice %2 {offsets = [33, 0], sizes = [1, 32], strides = [1, 1]} : vector<49x32xf32> to vector<1x32xf32>
    %204 = vector.shape_cast %203 : vector<1x32xf32> to vector<1x1x32xf32>
    %205 = vector.broadcast %204 : vector<1x1x32xf32> to vector<14x14x32xf32>
    %206 = arith.mulf %202, %205 : vector<14x14x32xf32>
    %207 = arith.addf %201, %206 : vector<14x14x32xf32>
    %208 = vector.extract_strided_slice %1 {offsets = [4, 6, 0], sizes = [14, 14, 32], strides = [1, 1, 1]} : vector<20x20x32xf32> to vector<14x14x32xf32>
    %209 = vector.extract_strided_slice %2 {offsets = [34, 0], sizes = [1, 32], strides = [1, 1]} : vector<49x32xf32> to vector<1x32xf32>
    %210 = vector.shape_cast %209 : vector<1x32xf32> to vector<1x1x32xf32>
    %211 = vector.broadcast %210 : vector<1x1x32xf32> to vector<14x14x32xf32>
    %212 = arith.mulf %208, %211 : vector<14x14x32xf32>
    %213 = arith.addf %207, %212 : vector<14x14x32xf32>
    %214 = vector.extract_strided_slice %1 {offsets = [5, 0, 0], sizes = [14, 14, 32], strides = [1, 1, 1]} : vector<20x20x32xf32> to vector<14x14x32xf32>
    %215 = vector.extract_strided_slice %2 {offsets = [35, 0], sizes = [1, 32], strides = [1, 1]} : vector<49x32xf32> to vector<1x32xf32>
    %216 = vector.shape_cast %215 : vector<1x32xf32> to vector<1x1x32xf32>
    %217 = vector.broadcast %216 : vector<1x1x32xf32> to vector<14x14x32xf32>
    %218 = arith.mulf %214, %217 : vector<14x14x32xf32>
    %219 = arith.addf %213, %218 : vector<14x14x32xf32>
    %220 = vector.extract_strided_slice %1 {offsets = [5, 1, 0], sizes = [14, 14, 32], strides = [1, 1, 1]} : vector<20x20x32xf32> to vector<14x14x32xf32>
    %221 = vector.extract_strided_slice %2 {offsets = [36, 0], sizes = [1, 32], strides = [1, 1]} : vector<49x32xf32> to vector<1x32xf32>
    %222 = vector.shape_cast %221 : vector<1x32xf32> to vector<1x1x32xf32>
    %223 = vector.broadcast %222 : vector<1x1x32xf32> to vector<14x14x32xf32>
    %224 = arith.mulf %220, %223 : vector<14x14x32xf32>
    %225 = arith.addf %219, %224 : vector<14x14x32xf32>
    %226 = vector.extract_strided_slice %1 {offsets = [5, 2, 0], sizes = [14, 14, 32], strides = [1, 1, 1]} : vector<20x20x32xf32> to vector<14x14x32xf32>
    %227 = vector.extract_strided_slice %2 {offsets = [37, 0], sizes = [1, 32], strides = [1, 1]} : vector<49x32xf32> to vector<1x32xf32>
    %228 = vector.shape_cast %227 : vector<1x32xf32> to vector<1x1x32xf32>
    %229 = vector.broadcast %228 : vector<1x1x32xf32> to vector<14x14x32xf32>
    %230 = arith.mulf %226, %229 : vector<14x14x32xf32>
    %231 = arith.addf %225, %230 : vector<14x14x32xf32>
    %232 = vector.extract_strided_slice %1 {offsets = [5, 3, 0], sizes = [14, 14, 32], strides = [1, 1, 1]} : vector<20x20x32xf32> to vector<14x14x32xf32>
    %233 = vector.extract_strided_slice %2 {offsets = [38, 0], sizes = [1, 32], strides = [1, 1]} : vector<49x32xf32> to vector<1x32xf32>
    %234 = vector.shape_cast %233 : vector<1x32xf32> to vector<1x1x32xf32>
    %235 = vector.broadcast %234 : vector<1x1x32xf32> to vector<14x14x32xf32>
    %236 = arith.mulf %232, %235 : vector<14x14x32xf32>
    %237 = arith.addf %231, %236 : vector<14x14x32xf32>
    %238 = vector.extract_strided_slice %1 {offsets = [5, 4, 0], sizes = [14, 14, 32], strides = [1, 1, 1]} : vector<20x20x32xf32> to vector<14x14x32xf32>
    %239 = vector.extract_strided_slice %2 {offsets = [39, 0], sizes = [1, 32], strides = [1, 1]} : vector<49x32xf32> to vector<1x32xf32>
    %240 = vector.shape_cast %239 : vector<1x32xf32> to vector<1x1x32xf32>
    %241 = vector.broadcast %240 : vector<1x1x32xf32> to vector<14x14x32xf32>
    %242 = arith.mulf %238, %241 : vector<14x14x32xf32>
    %243 = arith.addf %237, %242 : vector<14x14x32xf32>
    %244 = vector.extract_strided_slice %1 {offsets = [5, 5, 0], sizes = [14, 14, 32], strides = [1, 1, 1]} : vector<20x20x32xf32> to vector<14x14x32xf32>
    %245 = vector.extract_strided_slice %2 {offsets = [40, 0], sizes = [1, 32], strides = [1, 1]} : vector<49x32xf32> to vector<1x32xf32>
    %246 = vector.shape_cast %245 : vector<1x32xf32> to vector<1x1x32xf32>
    %247 = vector.broadcast %246 : vector<1x1x32xf32> to vector<14x14x32xf32>
    %248 = arith.mulf %244, %247 : vector<14x14x32xf32>
    %249 = arith.addf %243, %248 : vector<14x14x32xf32>
    %250 = vector.extract_strided_slice %1 {offsets = [5, 6, 0], sizes = [14, 14, 32], strides = [1, 1, 1]} : vector<20x20x32xf32> to vector<14x14x32xf32>
    %251 = vector.extract_strided_slice %2 {offsets = [41, 0], sizes = [1, 32], strides = [1, 1]} : vector<49x32xf32> to vector<1x32xf32>
    %252 = vector.shape_cast %251 : vector<1x32xf32> to vector<1x1x32xf32>
    %253 = vector.broadcast %252 : vector<1x1x32xf32> to vector<14x14x32xf32>
    %254 = arith.mulf %250, %253 : vector<14x14x32xf32>
    %255 = arith.addf %249, %254 : vector<14x14x32xf32>
    %256 = vector.extract_strided_slice %1 {offsets = [6, 0, 0], sizes = [14, 14, 32], strides = [1, 1, 1]} : vector<20x20x32xf32> to vector<14x14x32xf32>
    %257 = vector.extract_strided_slice %2 {offsets = [42, 0], sizes = [1, 32], strides = [1, 1]} : vector<49x32xf32> to vector<1x32xf32>
    %258 = vector.shape_cast %257 : vector<1x32xf32> to vector<1x1x32xf32>
    %259 = vector.broadcast %258 : vector<1x1x32xf32> to vector<14x14x32xf32>
    %260 = arith.mulf %256, %259 : vector<14x14x32xf32>
    %261 = arith.addf %255, %260 : vector<14x14x32xf32>
    %262 = vector.extract_strided_slice %1 {offsets = [6, 1, 0], sizes = [14, 14, 32], strides = [1, 1, 1]} : vector<20x20x32xf32> to vector<14x14x32xf32>
    %263 = vector.extract_strided_slice %2 {offsets = [43, 0], sizes = [1, 32], strides = [1, 1]} : vector<49x32xf32> to vector<1x32xf32>
    %264 = vector.shape_cast %263 : vector<1x32xf32> to vector<1x1x32xf32>
    %265 = vector.broadcast %264 : vector<1x1x32xf32> to vector<14x14x32xf32>
    %266 = arith.mulf %262, %265 : vector<14x14x32xf32>
    %267 = arith.addf %261, %266 : vector<14x14x32xf32>
    %268 = vector.extract_strided_slice %1 {offsets = [6, 2, 0], sizes = [14, 14, 32], strides = [1, 1, 1]} : vector<20x20x32xf32> to vector<14x14x32xf32>
    %269 = vector.extract_strided_slice %2 {offsets = [44, 0], sizes = [1, 32], strides = [1, 1]} : vector<49x32xf32> to vector<1x32xf32>
    %270 = vector.shape_cast %269 : vector<1x32xf32> to vector<1x1x32xf32>
    %271 = vector.broadcast %270 : vector<1x1x32xf32> to vector<14x14x32xf32>
    %272 = arith.mulf %268, %271 : vector<14x14x32xf32>
    %273 = arith.addf %267, %272 : vector<14x14x32xf32>
    %274 = vector.extract_strided_slice %1 {offsets = [6, 3, 0], sizes = [14, 14, 32], strides = [1, 1, 1]} : vector<20x20x32xf32> to vector<14x14x32xf32>
    %275 = vector.extract_strided_slice %2 {offsets = [45, 0], sizes = [1, 32], strides = [1, 1]} : vector<49x32xf32> to vector<1x32xf32>
    %276 = vector.shape_cast %275 : vector<1x32xf32> to vector<1x1x32xf32>
    %277 = vector.broadcast %276 : vector<1x1x32xf32> to vector<14x14x32xf32>
    %278 = arith.mulf %274, %277 : vector<14x14x32xf32>
    %279 = arith.addf %273, %278 : vector<14x14x32xf32>
    %280 = vector.extract_strided_slice %1 {offsets = [6, 4, 0], sizes = [14, 14, 32], strides = [1, 1, 1]} : vector<20x20x32xf32> to vector<14x14x32xf32>
    %281 = vector.extract_strided_slice %2 {offsets = [46, 0], sizes = [1, 32], strides = [1, 1]} : vector<49x32xf32> to vector<1x32xf32>
    %282 = vector.shape_cast %281 : vector<1x32xf32> to vector<1x1x32xf32>
    %283 = vector.broadcast %282 : vector<1x1x32xf32> to vector<14x14x32xf32>
    %284 = arith.mulf %280, %283 : vector<14x14x32xf32>
    %285 = arith.addf %279, %284 : vector<14x14x32xf32>
    %286 = vector.extract_strided_slice %1 {offsets = [6, 5, 0], sizes = [14, 14, 32], strides = [1, 1, 1]} : vector<20x20x32xf32> to vector<14x14x32xf32>
    %287 = vector.extract_strided_slice %2 {offsets = [47, 0], sizes = [1, 32], strides = [1, 1]} : vector<49x32xf32> to vector<1x32xf32>
    %288 = vector.shape_cast %287 : vector<1x32xf32> to vector<1x1x32xf32>
    %289 = vector.broadcast %288 : vector<1x1x32xf32> to vector<14x14x32xf32>
    %290 = arith.mulf %286, %289 : vector<14x14x32xf32>
    %291 = arith.addf %285, %290 : vector<14x14x32xf32>
    %292 = vector.extract_strided_slice %1 {offsets = [6, 6, 0], sizes = [14, 14, 32], strides = [1, 1, 1]} : vector<20x20x32xf32> to vector<14x14x32xf32>
    %293 = vector.extract_strided_slice %2 {offsets = [48, 0], sizes = [1, 32], strides = [1, 1]} : vector<49x32xf32> to vector<1x32xf32>
    %294 = vector.shape_cast %293 : vector<1x32xf32> to vector<1x1x32xf32>
    %295 = vector.broadcast %294 : vector<1x1x32xf32> to vector<14x14x32xf32>
    %296 = arith.mulf %292, %295 : vector<14x14x32xf32>
    %297 = arith.addf %291, %296 : vector<14x14x32xf32>
    %c0_5 = arith.constant 0 : index
    %c0_6 = arith.constant 0 : index
    %298 = vector.load %arg3[%c0_5, %c0_6] : memref<1x32xf32, #tpu.memory_space<vmem>>, vector<1x32xf32>
    %299 = vector.shape_cast %298 : vector<1x32xf32> to vector<1x1x32xf32>
    %300 = vector.broadcast %299 : vector<1x1x32xf32> to vector<14x14x32xf32>
    %301 = arith.addf %297, %300 : vector<14x14x32xf32>
    %c0_7 = arith.constant 0 : index
    %c0_8 = arith.constant 0 : index
    %c0_9 = arith.constant 0 : index
    %c0_10 = arith.constant 0 : index
    %302 = vector.load %arg6[%c0_7, %c0_8, %c0_9, %c0_10] : memref<1x14x14x32xf32, #tpu.memory_space<vmem>>, vector<1x14x14x32xf32>
    %303 = vector.shape_cast %302 : vector<1x14x14x32xf32> to vector<14x14x32xf32>
    %304 = vector.shape_cast %301 : vector<14x14x32xf32> to vector<1x14x14x32xf32>
    tpu.vector_store %arg6[%c0_7, %c0_8, %c0_9, %c0_10], %304 {strides = array<i32>} : memref<1x14x14x32xf32, #tpu.memory_space<vmem>>, vector<1x14x14x32xf32>,
    %cst_11 = arith.constant dense<0.000000e+00> : vector<14x14xf32>
    %305 = vector.multi_reduction <add>, %301, %cst_11 [2] : vector<14x14x32xf32> to vector<14x14xf32>
    %306 = vector.shape_cast %305 : vector<14x14xf32> to vector<14x14x1xf32>
    %cst_12 = arith.constant 3.200000e+01 : f32
    %307 = vector.broadcast %cst_12 : f32 to vector<14x14x1xf32>
    %308 = arith.divf %306, %307 : vector<14x14x1xf32>
    %309 = vector.broadcast %308 : vector<14x14x1xf32> to vector<14x14x32xf32>
    %310 = arith.subf %301, %309 : vector<14x14x32xf32>
    %311 = arith.mulf %310, %310 : vector<14x14x32xf32>
    %cst_13 = arith.constant dense<0.000000e+00> : vector<14x14xf32>
    %312 = vector.multi_reduction <add>, %311, %cst_13 [2] : vector<14x14x32xf32> to vector<14x14xf32>
    %313 = vector.shape_cast %312 : vector<14x14xf32> to vector<14x14x1xf32>
    %cst_14 = arith.constant 3.200000e+01 : f32
    %314 = vector.broadcast %cst_14 : f32 to vector<14x14x1xf32>
    %315 = arith.divf %313, %314 : vector<14x14x1xf32>
    %316 = vector.broadcast %308 : vector<14x14x1xf32> to vector<14x14x32xf32>
    %317 = arith.subf %301, %316 : vector<14x14x32xf32>
    %cst_15 = arith.constant 9.99999997E-7 : f32
    %318 = vector.broadcast %cst_15 : f32 to vector<14x14x1xf32>
    %319 = arith.addf %315, %318 : vector<14x14x1xf32>
    %320 = math.rsqrt %319 : vector<14x14x1xf32>
    %321 = vector.broadcast %320 : vector<14x14x1xf32> to vector<14x14x32xf32>
    %322 = arith.mulf %317, %321 : vector<14x14x32xf32>
    %c0_16 = arith.constant 0 : index
    %c0_17 = arith.constant 0 : index
    %323 = vector.load %arg4[%c0_16, %c0_17] : memref<1x32xf32, #tpu.memory_space<vmem>>, vector<1x32xf32>
    %324 = vector.shape_cast %323 : vector<1x32xf32> to vector<1x1x32xf32>
    %325 = vector.broadcast %324 : vector<1x1x32xf32> to vector<14x14x32xf32>
    %326 = arith.mulf %322, %325 : vector<14x14x32xf32>
    %c0_18 = arith.constant 0 : index
    %c0_19 = arith.constant 0 : index
    %327 = vector.load %arg5[%c0_18, %c0_19] : memref<1x32xf32, #tpu.memory_space<vmem>>, vector<1x32xf32>
    %328 = vector.shape_cast %327 : vector<1x32xf32> to vector<1x1x32xf32>
    %329 = vector.broadcast %328 : vector<1x1x32xf32> to vector<14x14x32xf32>
    %330 = arith.addf %326, %329 : vector<14x14x32xf32>
    %331 = arith.truncf %330 : vector<14x14x32xf32> to vector<14x14x32xbf16>
    %c0_20 = arith.constant 0 : index
    %c0_21 = arith.constant 0 : index
    %c0_22 = arith.constant 0 : index
    %c0_23 = arith.constant 0 : index
    %332 = vector.load %arg7[%c0_20, %c0_21, %c0_22, %c0_23] : memref<1x14x14x32xbf16, #tpu.memory_space<vmem>>, vector<1x14x14x32xbf16>
    %333 = vector.shape_cast %332 : vector<1x14x14x32xbf16> to vector<14x14x32xbf16>
    %334 = vector.shape_cast %331 : vector<14x14x32xbf16> to vector<1x14x14x32xbf16>
    tpu.vector_store %arg7[%c0_20, %c0_21, %c0_22, %c0_23], %334 {strides = array<i32>} : memref<1x14x14x32xbf16, #tpu.memory_space<vmem>>, vector<1x14x14x32xbf16>,
    return
  }
  func.func @transform_0(%arg0: i32) -> (i32, i32, i32, i32) {
    %c0_i32 = arith.constant 0 : i32
    %c0_i32_0 = arith.constant 0 : i32
    %c0_i32_1 = arith.constant 0 : i32
    %c0_i32_2 = arith.constant 0 : i32
    return %arg0, %c0_i32, %c0_i32_0, %c0_i32_1 : i32, i32, i32, i32
  }
  func.func @transform_1(%arg0: i32) -> (i32, i32) {
    %c0_i32 = arith.constant 0 : i32
    %c0_i32_0 = arith.constant 0 : i32
    %c0_i32_1 = arith.constant 0 : i32
    return %c0_i32, %c0_i32_0 : i32, i32
  }
  func.func @transform_2(%arg0: i32) -> (i32, i32) {
    %c0_i32 = arith.constant 0 : i32
    %c0_i32_0 = arith.constant 0 : i32
    %c0_i32_1 = arith.constant 0 : i32
    return %c0_i32, %c0_i32_0 : i32, i32
  }
  func.func @transform_3(%arg0: i32) -> (i32, i32) {
    %c0_i32 = arith.constant 0 : i32
    %c0_i32_0 = arith.constant 0 : i32
    %c0_i32_1 = arith.constant 0 : i32
    return %c0_i32, %c0_i32_0 : i32, i32
  }
  func.func @transform_4(%arg0: i32) -> (i32, i32) {
    %c0_i32 = arith.constant 0 : i32
    %c0_i32_0 = arith.constant 0 : i32
    %c0_i32_1 = arith.constant 0 : i32
    return %c0_i32, %c0_i32_0 : i32, i32
  }
  func.func @transform_5(%arg0: i32) -> (i32, i32, i32, i32) {
    %c0_i32 = arith.constant 0 : i32
    %c0_i32_0 = arith.constant 0 : i32
    %c0_i32_1 = arith.constant 0 : i32
    %c0_i32_2 = arith.constant 0 : i32
    return %arg0, %c0_i32, %c0_i32_0, %c0_i32_1 : i32, i32, i32, i32
  }
  func.func @transform_6(%arg0: i32) -> (i32, i32, i32, i32) {
    %c0_i32 = arith.constant 0 : i32
    %c0_i32_0 = arith.constant 0 : i32
    %c0_i32_1 = arith.constant 0 : i32
    %c0_i32_2 = arith.constant 0 : i32
    return %arg0, %c0_i32, %c0_i32_0, %c0_i32_1 : i32, i32, i32, i32
  }
}

module attributes {stable_mosaic.version = 11 : i64} {
  func.func @group_attn_kernel(%arg0: i32, %arg1: memref<1x196x32xbf16, #tpu.memory_space<vmem>>, %arg2: memref<1x196x32xf32, #tpu.memory_space<vmem>>, %arg3: memref<32x96xbf16, #tpu.memory_space<vmem>>, %arg4: memref<32x32xbf16, #tpu.memory_space<vmem>>, %arg5: memref<1x32xf32, #tpu.memory_space<vmem>>, %arg6: memref<1x196x32xf32, #tpu.memory_space<vmem>>) attributes {dimension_semantics = [#tpu.dimension_semantics<parallel>], iteration_bounds = array<i64: 2>, scalar_prefetch = 0 : i64, scratch_operands = 0 : i64, tpu.core_type = #tpu.core_type<tc>, window_params = [{transform_indices = @transform_0, window_bounds = array<i64: 1, 196, 32>}, {transform_indices = @transform_1, window_bounds = array<i64: 1, 196, 32>}, {pipeline_mode = #tpu.pipeline_mode<synchronous>, transform_indices = @transform_2, window_bounds = array<i64: 32, 96>}, {pipeline_mode = #tpu.pipeline_mode<synchronous>, transform_indices = @transform_3, window_bounds = array<i64: 32, 32>}, {pipeline_mode = #tpu.pipeline_mode<synchronous>, transform_indices = @transform_4, window_bounds = array<i64: 1, 32>}, {transform_indices = @transform_5, window_bounds = array<i64: 1, 196, 32>}]} {
    %c0 = arith.constant 0 : index
    %c0_0 = arith.constant 0 : index
    %c0_1 = arith.constant 0 : index
    %0 = vector.load %arg1[%c0, %c0_0, %c0_1] : memref<1x196x32xbf16, #tpu.memory_space<vmem>>, vector<1x196x32xbf16>
    %1 = vector.shape_cast %0 : vector<1x196x32xbf16> to vector<196x32xbf16>
    %c0_2 = arith.constant 0 : index
    %c0_3 = arith.constant 0 : index
    %2 = vector.load %arg3[%c0_2, %c0_3] : memref<32x96xbf16, #tpu.memory_space<vmem>>, vector<32x96xbf16>
    %cst = arith.constant dense<0.000000e+00> : vector<196x96xf32>
    %3 = tpu.matmul %1, %2, %cst {dimension_numbers = #tpu.dot_dimension_numbers<[1], [0], [0], [1], [0, 0, 1, 1], [], []>} : vector<196x32xbf16>, vector<32x96xbf16>, vector<196x96xf32> -> vector<196x96xf32>
    %4 = vector.extract_strided_slice %3 {offsets = [0, 0], sizes = [49, 96], strides = [1, 1]} : vector<196x96xf32> to vector<49x96xf32>
    %5 = vector.extract_strided_slice %4 {offsets = [0, 0], sizes = [49, 32], strides = [1, 1]} : vector<49x96xf32> to vector<49x32xf32>
    %6 = arith.truncf %5 : vector<49x32xf32> to vector<49x32xbf16>
    %7 = vector.extract_strided_slice %4 {offsets = [0, 32], sizes = [49, 32], strides = [1, 1]} : vector<49x96xf32> to vector<49x32xf32>
    %8 = arith.truncf %7 : vector<49x32xf32> to vector<49x32xbf16>
    %9 = vector.extract_strided_slice %4 {offsets = [0, 64], sizes = [49, 32], strides = [1, 1]} : vector<49x96xf32> to vector<49x32xf32>
    %10 = arith.truncf %9 : vector<49x32xf32> to vector<49x32xbf16>
    "tpu.trace_start"() <{level = 10 : i32, message = "qd,kd->qk"}> : () -> ()
    %cst_4 = arith.constant dense<0.000000e+00> : vector<49x49xf32>
    %11 = tpu.matmul %6, %8, %cst_4 {dimension_numbers = #tpu.dot_dimension_numbers<[1], [1], [0], [0], [0, 0, 1, 0], [], []>} : vector<49x32xbf16>, vector<49x32xbf16>, vector<49x49xf32> -> vector<49x49xf32>
    "tpu.trace_stop"() : () -> ()
    %cst_5 = arith.constant 0.176776692 : f32
    %12 = vector.broadcast %cst_5 : f32 to vector<49x49xf32>
    %13 = arith.mulf %11, %12 : vector<49x49xf32>
    %cst_6 = arith.constant dense<0xFF800000> : vector<49xf32>
    %14 = vector.multi_reduction <maximumf>, %13, %cst_6 [1] : vector<49x49xf32> to vector<49xf32>
    %15 = vector.shape_cast %14 : vector<49xf32> to vector<49x1xf32>
    %16 = vector.broadcast %15 : vector<49x1xf32> to vector<49x49xf32>
    %17 = arith.subf %13, %16 : vector<49x49xf32>
    %18 = math.exp %17 : vector<49x49xf32>
    %cst_7 = arith.constant dense<0.000000e+00> : vector<49xf32>
    %19 = vector.multi_reduction <add>, %18, %cst_7 [1] : vector<49x49xf32> to vector<49xf32>
    %20 = vector.shape_cast %19 : vector<49xf32> to vector<49x1xf32>
    %21 = vector.broadcast %20 : vector<49x1xf32> to vector<49x49xf32>
    %22 = arith.divf %18, %21 : vector<49x49xf32>
    %23 = arith.truncf %22 : vector<49x49xf32> to vector<49x49xbf16>
    %cst_8 = arith.constant dense<0.000000e+00> : vector<49x32xf32>
    %24 = tpu.matmul %23, %10, %cst_8 {dimension_numbers = #tpu.dot_dimension_numbers<[1], [0], [0], [1], [0, 0, 1, 1], [], []>} : vector<49x49xbf16>, vector<49x32xbf16>, vector<49x32xf32> -> vector<49x32xf32>
    %25 = vector.extract_strided_slice %3 {offsets = [49, 0], sizes = [49, 96], strides = [1, 1]} : vector<196x96xf32> to vector<49x96xf32>
    %26 = vector.extract_strided_slice %25 {offsets = [0, 0], sizes = [49, 32], strides = [1, 1]} : vector<49x96xf32> to vector<49x32xf32>
    %27 = arith.truncf %26 : vector<49x32xf32> to vector<49x32xbf16>
    %28 = vector.extract_strided_slice %25 {offsets = [0, 32], sizes = [49, 32], strides = [1, 1]} : vector<49x96xf32> to vector<49x32xf32>
    %29 = arith.truncf %28 : vector<49x32xf32> to vector<49x32xbf16>
    %30 = vector.extract_strided_slice %25 {offsets = [0, 64], sizes = [49, 32], strides = [1, 1]} : vector<49x96xf32> to vector<49x32xf32>
    %31 = arith.truncf %30 : vector<49x32xf32> to vector<49x32xbf16>
    "tpu.trace_start"() <{level = 10 : i32, message = "qd,kd->qk"}> : () -> ()
    %cst_9 = arith.constant dense<0.000000e+00> : vector<49x49xf32>
    %32 = tpu.matmul %27, %29, %cst_9 {dimension_numbers = #tpu.dot_dimension_numbers<[1], [1], [0], [0], [0, 0, 1, 0], [], []>} : vector<49x32xbf16>, vector<49x32xbf16>, vector<49x49xf32> -> vector<49x49xf32>
    "tpu.trace_stop"() : () -> ()
    %cst_10 = arith.constant 0.176776692 : f32
    %33 = vector.broadcast %cst_10 : f32 to vector<49x49xf32>
    %34 = arith.mulf %32, %33 : vector<49x49xf32>
    %cst_11 = arith.constant dense<0xFF800000> : vector<49xf32>
    %35 = vector.multi_reduction <maximumf>, %34, %cst_11 [1] : vector<49x49xf32> to vector<49xf32>
    %36 = vector.shape_cast %35 : vector<49xf32> to vector<49x1xf32>
    %37 = vector.broadcast %36 : vector<49x1xf32> to vector<49x49xf32>
    %38 = arith.subf %34, %37 : vector<49x49xf32>
    %39 = math.exp %38 : vector<49x49xf32>
    %cst_12 = arith.constant dense<0.000000e+00> : vector<49xf32>
    %40 = vector.multi_reduction <add>, %39, %cst_12 [1] : vector<49x49xf32> to vector<49xf32>
    %41 = vector.shape_cast %40 : vector<49xf32> to vector<49x1xf32>
    %42 = vector.broadcast %41 : vector<49x1xf32> to vector<49x49xf32>
    %43 = arith.divf %39, %42 : vector<49x49xf32>
    %44 = arith.truncf %43 : vector<49x49xf32> to vector<49x49xbf16>
    %cst_13 = arith.constant dense<0.000000e+00> : vector<49x32xf32>
    %45 = tpu.matmul %44, %31, %cst_13 {dimension_numbers = #tpu.dot_dimension_numbers<[1], [0], [0], [1], [0, 0, 1, 1], [], []>} : vector<49x49xbf16>, vector<49x32xbf16>, vector<49x32xf32> -> vector<49x32xf32>
    %46 = vector.extract_strided_slice %3 {offsets = [98, 0], sizes = [49, 96], strides = [1, 1]} : vector<196x96xf32> to vector<49x96xf32>
    %47 = vector.extract_strided_slice %46 {offsets = [0, 0], sizes = [49, 32], strides = [1, 1]} : vector<49x96xf32> to vector<49x32xf32>
    %48 = arith.truncf %47 : vector<49x32xf32> to vector<49x32xbf16>
    %49 = vector.extract_strided_slice %46 {offsets = [0, 32], sizes = [49, 32], strides = [1, 1]} : vector<49x96xf32> to vector<49x32xf32>
    %50 = arith.truncf %49 : vector<49x32xf32> to vector<49x32xbf16>
    %51 = vector.extract_strided_slice %46 {offsets = [0, 64], sizes = [49, 32], strides = [1, 1]} : vector<49x96xf32> to vector<49x32xf32>
    %52 = arith.truncf %51 : vector<49x32xf32> to vector<49x32xbf16>
    "tpu.trace_start"() <{level = 10 : i32, message = "qd,kd->qk"}> : () -> ()
    %cst_14 = arith.constant dense<0.000000e+00> : vector<49x49xf32>
    %53 = tpu.matmul %48, %50, %cst_14 {dimension_numbers = #tpu.dot_dimension_numbers<[1], [1], [0], [0], [0, 0, 1, 0], [], []>} : vector<49x32xbf16>, vector<49x32xbf16>, vector<49x49xf32> -> vector<49x49xf32>
    "tpu.trace_stop"() : () -> ()
    %cst_15 = arith.constant 0.176776692 : f32
    %54 = vector.broadcast %cst_15 : f32 to vector<49x49xf32>
    %55 = arith.mulf %53, %54 : vector<49x49xf32>
    %cst_16 = arith.constant dense<0xFF800000> : vector<49xf32>
    %56 = vector.multi_reduction <maximumf>, %55, %cst_16 [1] : vector<49x49xf32> to vector<49xf32>
    %57 = vector.shape_cast %56 : vector<49xf32> to vector<49x1xf32>
    %58 = vector.broadcast %57 : vector<49x1xf32> to vector<49x49xf32>
    %59 = arith.subf %55, %58 : vector<49x49xf32>
    %60 = math.exp %59 : vector<49x49xf32>
    %cst_17 = arith.constant dense<0.000000e+00> : vector<49xf32>
    %61 = vector.multi_reduction <add>, %60, %cst_17 [1] : vector<49x49xf32> to vector<49xf32>
    %62 = vector.shape_cast %61 : vector<49xf32> to vector<49x1xf32>
    %63 = vector.broadcast %62 : vector<49x1xf32> to vector<49x49xf32>
    %64 = arith.divf %60, %63 : vector<49x49xf32>
    %65 = arith.truncf %64 : vector<49x49xf32> to vector<49x49xbf16>
    %cst_18 = arith.constant dense<0.000000e+00> : vector<49x32xf32>
    %66 = tpu.matmul %65, %52, %cst_18 {dimension_numbers = #tpu.dot_dimension_numbers<[1], [0], [0], [1], [0, 0, 1, 1], [], []>} : vector<49x49xbf16>, vector<49x32xbf16>, vector<49x32xf32> -> vector<49x32xf32>
    %67 = vector.extract_strided_slice %3 {offsets = [147, 0], sizes = [49, 96], strides = [1, 1]} : vector<196x96xf32> to vector<49x96xf32>
    %68 = vector.extract_strided_slice %67 {offsets = [0, 0], sizes = [49, 32], strides = [1, 1]} : vector<49x96xf32> to vector<49x32xf32>
    %69 = arith.truncf %68 : vector<49x32xf32> to vector<49x32xbf16>
    %70 = vector.extract_strided_slice %67 {offsets = [0, 32], sizes = [49, 32], strides = [1, 1]} : vector<49x96xf32> to vector<49x32xf32>
    %71 = arith.truncf %70 : vector<49x32xf32> to vector<49x32xbf16>
    %72 = vector.extract_strided_slice %67 {offsets = [0, 64], sizes = [49, 32], strides = [1, 1]} : vector<49x96xf32> to vector<49x32xf32>
    %73 = arith.truncf %72 : vector<49x32xf32> to vector<49x32xbf16>
    "tpu.trace_start"() <{level = 10 : i32, message = "qd,kd->qk"}> : () -> ()
    %cst_19 = arith.constant dense<0.000000e+00> : vector<49x49xf32>
    %74 = tpu.matmul %69, %71, %cst_19 {dimension_numbers = #tpu.dot_dimension_numbers<[1], [1], [0], [0], [0, 0, 1, 0], [], []>} : vector<49x32xbf16>, vector<49x32xbf16>, vector<49x49xf32> -> vector<49x49xf32>
    "tpu.trace_stop"() : () -> ()
    %cst_20 = arith.constant 0.176776692 : f32
    %75 = vector.broadcast %cst_20 : f32 to vector<49x49xf32>
    %76 = arith.mulf %74, %75 : vector<49x49xf32>
    %cst_21 = arith.constant dense<0xFF800000> : vector<49xf32>
    %77 = vector.multi_reduction <maximumf>, %76, %cst_21 [1] : vector<49x49xf32> to vector<49xf32>
    %78 = vector.shape_cast %77 : vector<49xf32> to vector<49x1xf32>
    %79 = vector.broadcast %78 : vector<49x1xf32> to vector<49x49xf32>
    %80 = arith.subf %76, %79 : vector<49x49xf32>
    %81 = math.exp %80 : vector<49x49xf32>
    %cst_22 = arith.constant dense<0.000000e+00> : vector<49xf32>
    %82 = vector.multi_reduction <add>, %81, %cst_22 [1] : vector<49x49xf32> to vector<49xf32>
    %83 = vector.shape_cast %82 : vector<49xf32> to vector<49x1xf32>
    %84 = vector.broadcast %83 : vector<49x1xf32> to vector<49x49xf32>
    %85 = arith.divf %81, %84 : vector<49x49xf32>
    %86 = arith.truncf %85 : vector<49x49xf32> to vector<49x49xbf16>
    %cst_23 = arith.constant dense<0.000000e+00> : vector<49x32xf32>
    %87 = tpu.matmul %86, %73, %cst_23 {dimension_numbers = #tpu.dot_dimension_numbers<[1], [0], [0], [1], [0, 0, 1, 1], [], []>} : vector<49x49xbf16>, vector<49x32xbf16>, vector<49x32xf32> -> vector<49x32xf32>
    %88 = tpu.concatenate %24, %45, %66, %87 in 0 : vector<49x32xf32>, vector<49x32xf32>, vector<49x32xf32>, vector<49x32xf32> -> vector<196x32xf32>
    %89 = arith.truncf %88 : vector<196x32xf32> to vector<196x32xbf16>
    %c0_24 = arith.constant 0 : index
    %c0_25 = arith.constant 0 : index
    %90 = vector.load %arg4[%c0_24, %c0_25] : memref<32x32xbf16, #tpu.memory_space<vmem>>, vector<32x32xbf16>
    %cst_26 = arith.constant dense<0.000000e+00> : vector<196x32xf32>
    %91 = tpu.matmul %89, %90, %cst_26 {dimension_numbers = #tpu.dot_dimension_numbers<[1], [0], [0], [1], [0, 0, 1, 1], [], []>} : vector<196x32xbf16>, vector<32x32xbf16>, vector<196x32xf32> -> vector<196x32xf32>
    %c0_27 = arith.constant 0 : index
    %c0_28 = arith.constant 0 : index
    %c0_29 = arith.constant 0 : index
    %92 = vector.load %arg2[%c0_27, %c0_28, %c0_29] : memref<1x196x32xf32, #tpu.memory_space<vmem>>, vector<1x196x32xf32>
    %93 = vector.shape_cast %92 : vector<1x196x32xf32> to vector<196x32xf32>
    %c0_30 = arith.constant 0 : index
    %c0_31 = arith.constant 0 : index
    %94 = vector.load %arg5[%c0_30, %c0_31] : memref<1x32xf32, #tpu.memory_space<vmem>>, vector<1x32xf32>
    %95 = vector.broadcast %94 : vector<1x32xf32> to vector<196x32xf32>
    %96 = arith.addf %91, %95 : vector<196x32xf32>
    %97 = arith.addf %93, %96 : vector<196x32xf32>
    %c0_32 = arith.constant 0 : index
    %c0_33 = arith.constant 0 : index
    %c0_34 = arith.constant 0 : index
    %98 = vector.load %arg6[%c0_32, %c0_33, %c0_34] : memref<1x196x32xf32, #tpu.memory_space<vmem>>, vector<1x196x32xf32>
    %99 = vector.shape_cast %98 : vector<1x196x32xf32> to vector<196x32xf32>
    %100 = vector.shape_cast %97 : vector<196x32xf32> to vector<1x196x32xf32>
    tpu.vector_store %arg6[%c0_32, %c0_33, %c0_34], %100 {strides = array<i32>} : memref<1x196x32xf32, #tpu.memory_space<vmem>>, vector<1x196x32xf32>,
    return
  }
  func.func @transform_0(%arg0: i32) -> (i32, i32, i32) {
    %c0_i32 = arith.constant 0 : i32
    %c0_i32_0 = arith.constant 0 : i32
    %c0_i32_1 = arith.constant 0 : i32
    return %arg0, %c0_i32, %c0_i32_0 : i32, i32, i32
  }
  func.func @transform_1(%arg0: i32) -> (i32, i32, i32) {
    %c0_i32 = arith.constant 0 : i32
    %c0_i32_0 = arith.constant 0 : i32
    %c0_i32_1 = arith.constant 0 : i32
    return %arg0, %c0_i32, %c0_i32_0 : i32, i32, i32
  }
  func.func @transform_2(%arg0: i32) -> (i32, i32) {
    %c0_i32 = arith.constant 0 : i32
    %c0_i32_0 = arith.constant 0 : i32
    %c0_i32_1 = arith.constant 0 : i32
    return %c0_i32, %c0_i32_0 : i32, i32
  }
  func.func @transform_3(%arg0: i32) -> (i32, i32) {
    %c0_i32 = arith.constant 0 : i32
    %c0_i32_0 = arith.constant 0 : i32
    %c0_i32_1 = arith.constant 0 : i32
    return %c0_i32, %c0_i32_0 : i32, i32
  }
  func.func @transform_4(%arg0: i32) -> (i32, i32) {
    %c0_i32 = arith.constant 0 : i32
    %c0_i32_0 = arith.constant 0 : i32
    %c0_i32_1 = arith.constant 0 : i32
    return %c0_i32, %c0_i32_0 : i32, i32
  }
  func.func @transform_5(%arg0: i32) -> (i32, i32, i32) {
    %c0_i32 = arith.constant 0 : i32
    %c0_i32_0 = arith.constant 0 : i32
    %c0_i32_1 = arith.constant 0 : i32
    return %arg0, %c0_i32, %c0_i32_0 : i32, i32, i32
  }
}

module attributes {stable_mosaic.version = 11 : i64} {
  func.func @mlp_bn_kernel(%arg0: i32, %arg1: memref<1x196x32xf32, #tpu.memory_space<vmem>>, %arg2: memref<1x196x32xf32, #tpu.memory_space<vmem>>, %arg3: memref<32x64xbf16, #tpu.memory_space<vmem>>, %arg4: memref<1x64xf32, #tpu.memory_space<vmem>>, %arg5: memref<64x32xbf16, #tpu.memory_space<vmem>>, %arg6: memref<1x32xf32, #tpu.memory_space<vmem>>, %arg7: memref<1x32xf32, #tpu.memory_space<vmem>>, %arg8: memref<1x32xf32, #tpu.memory_space<vmem>>, %arg9: memref<1x196x32xf32, #tpu.memory_space<vmem>>) attributes {dimension_semantics = [#tpu.dimension_semantics<parallel>], iteration_bounds = array<i64: 2>, scalar_prefetch = 0 : i64, scratch_operands = 0 : i64, tpu.core_type = #tpu.core_type<tc>, window_params = [{transform_indices = @transform_0, window_bounds = array<i64: 1, 196, 32>}, {transform_indices = @transform_1, window_bounds = array<i64: 1, 196, 32>}, {pipeline_mode = #tpu.pipeline_mode<synchronous>, transform_indices = @transform_2, window_bounds = array<i64: 32, 64>}, {pipeline_mode = #tpu.pipeline_mode<synchronous>, transform_indices = @transform_3, window_bounds = array<i64: 1, 64>}, {pipeline_mode = #tpu.pipeline_mode<synchronous>, transform_indices = @transform_4, window_bounds = array<i64: 64, 32>}, {pipeline_mode = #tpu.pipeline_mode<synchronous>, transform_indices = @transform_5, window_bounds = array<i64: 1, 32>}, {pipeline_mode = #tpu.pipeline_mode<synchronous>, transform_indices = @transform_6, window_bounds = array<i64: 1, 32>}, {pipeline_mode = #tpu.pipeline_mode<synchronous>, transform_indices = @transform_7, window_bounds = array<i64: 1, 32>}, {transform_indices = @transform_8, window_bounds = array<i64: 1, 196, 32>}]} {
    %c0 = arith.constant 0 : index
    %c0_0 = arith.constant 0 : index
    %c0_1 = arith.constant 0 : index
    %0 = vector.load %arg1[%c0, %c0_0, %c0_1] : memref<1x196x32xf32, #tpu.memory_space<vmem>>, vector<1x196x32xf32>
    %1 = vector.shape_cast %0 : vector<1x196x32xf32> to vector<196x32xf32>
    %2 = arith.truncf %1 : vector<196x32xf32> to vector<196x32xbf16>
    %c0_2 = arith.constant 0 : index
    %c0_3 = arith.constant 0 : index
    %3 = vector.load %arg3[%c0_2, %c0_3] : memref<32x64xbf16, #tpu.memory_space<vmem>>, vector<32x64xbf16>
    %cst = arith.constant dense<0.000000e+00> : vector<196x64xf32>
    %4 = tpu.matmul %2, %3, %cst {dimension_numbers = #tpu.dot_dimension_numbers<[1], [0], [0], [1], [0, 0, 1, 1], [], []>} : vector<196x32xbf16>, vector<32x64xbf16>, vector<196x64xf32> -> vector<196x64xf32>
    %c0_4 = arith.constant 0 : index
    %c0_5 = arith.constant 0 : index
    %5 = vector.load %arg4[%c0_4, %c0_5] : memref<1x64xf32, #tpu.memory_space<vmem>>, vector<1x64xf32>
    %6 = vector.broadcast %5 : vector<1x64xf32> to vector<196x64xf32>
    %7 = arith.addf %4, %6 : vector<196x64xf32>
    %cst_6 = arith.constant 5.000000e-01 : f32
    %8 = vector.broadcast %cst_6 : f32 to vector<196x64xf32>
    %9 = arith.mulf %8, %7 : vector<196x64xf32>
    %10 = arith.mulf %7, %7 : vector<196x64xf32>
    %11 = arith.mulf %10, %7 : vector<196x64xf32>
    %cst_7 = arith.constant 4.471500e-02 : f32
    %12 = vector.broadcast %cst_7 : f32 to vector<196x64xf32>
    %13 = arith.mulf %12, %11 : vector<196x64xf32>
    %14 = arith.addf %7, %13 : vector<196x64xf32>
    %cst_8 = arith.constant 0.797884583 : f32
    %15 = vector.broadcast %cst_8 : f32 to vector<196x64xf32>
    %16 = arith.mulf %15, %14 : vector<196x64xf32>
    %17 = math.tanh %16 : vector<196x64xf32>
    %cst_9 = arith.constant 1.000000e+00 : f32
    %18 = vector.broadcast %cst_9 : f32 to vector<196x64xf32>
    %19 = arith.addf %18, %17 : vector<196x64xf32>
    %20 = arith.mulf %9, %19 : vector<196x64xf32>
    %21 = arith.truncf %20 : vector<196x64xf32> to vector<196x64xbf16>
    %c0_10 = arith.constant 0 : index
    %c0_11 = arith.constant 0 : index
    %22 = vector.load %arg5[%c0_10, %c0_11] : memref<64x32xbf16, #tpu.memory_space<vmem>>, vector<64x32xbf16>
    %cst_12 = arith.constant dense<0.000000e+00> : vector<196x32xf32>
    %23 = tpu.matmul %21, %22, %cst_12 {dimension_numbers = #tpu.dot_dimension_numbers<[1], [0], [0], [1], [0, 0, 1, 1], [], []>} : vector<196x64xbf16>, vector<64x32xbf16>, vector<196x32xf32> -> vector<196x32xf32>
    %c0_13 = arith.constant 0 : index
    %c0_14 = arith.constant 0 : index
    %24 = vector.load %arg6[%c0_13, %c0_14] : memref<1x32xf32, #tpu.memory_space<vmem>>, vector<1x32xf32>
    %25 = vector.broadcast %24 : vector<1x32xf32> to vector<196x32xf32>
    %26 = arith.addf %23, %25 : vector<196x32xf32>
    %c0_15 = arith.constant 0 : index
    %c0_16 = arith.constant 0 : index
    %27 = vector.load %arg7[%c0_15, %c0_16] : memref<1x32xf32, #tpu.memory_space<vmem>>, vector<1x32xf32>
    %28 = vector.broadcast %27 : vector<1x32xf32> to vector<196x32xf32>
    %29 = arith.mulf %26, %28 : vector<196x32xf32>
    %c0_17 = arith.constant 0 : index
    %c0_18 = arith.constant 0 : index
    %30 = vector.load %arg8[%c0_17, %c0_18] : memref<1x32xf32, #tpu.memory_space<vmem>>, vector<1x32xf32>
    %31 = vector.broadcast %30 : vector<1x32xf32> to vector<196x32xf32>
    %32 = arith.addf %29, %31 : vector<196x32xf32>
    %c0_19 = arith.constant 0 : index
    %c0_20 = arith.constant 0 : index
    %c0_21 = arith.constant 0 : index
    %33 = vector.load %arg2[%c0_19, %c0_20, %c0_21] : memref<1x196x32xf32, #tpu.memory_space<vmem>>, vector<1x196x32xf32>
    %34 = vector.shape_cast %33 : vector<1x196x32xf32> to vector<196x32xf32>
    %35 = arith.addf %34, %32 : vector<196x32xf32>
    %c0_22 = arith.constant 0 : index
    %c0_23 = arith.constant 0 : index
    %c0_24 = arith.constant 0 : index
    %36 = vector.load %arg9[%c0_22, %c0_23, %c0_24] : memref<1x196x32xf32, #tpu.memory_space<vmem>>, vector<1x196x32xf32>
    %37 = vector.shape_cast %36 : vector<1x196x32xf32> to vector<196x32xf32>
    %38 = vector.shape_cast %35 : vector<196x32xf32> to vector<1x196x32xf32>
    tpu.vector_store %arg9[%c0_22, %c0_23, %c0_24], %38 {strides = array<i32>} : memref<1x196x32xf32, #tpu.memory_space<vmem>>, vector<1x196x32xf32>,
    return
  }
  func.func @transform_0(%arg0: i32) -> (i32, i32, i32) {
    %c0_i32 = arith.constant 0 : i32
    %c0_i32_0 = arith.constant 0 : i32
    %c0_i32_1 = arith.constant 0 : i32
    return %arg0, %c0_i32, %c0_i32_0 : i32, i32, i32
  }
  func.func @transform_1(%arg0: i32) -> (i32, i32, i32) {
    %c0_i32 = arith.constant 0 : i32
    %c0_i32_0 = arith.constant 0 : i32
    %c0_i32_1 = arith.constant 0 : i32
    return %arg0, %c0_i32, %c0_i32_0 : i32, i32, i32
  }
  func.func @transform_2(%arg0: i32) -> (i32, i32) {
    %c0_i32 = arith.constant 0 : i32
    %c0_i32_0 = arith.constant 0 : i32
    %c0_i32_1 = arith.constant 0 : i32
    return %c0_i32, %c0_i32_0 : i32, i32
  }
  func.func @transform_3(%arg0: i32) -> (i32, i32) {
    %c0_i32 = arith.constant 0 : i32
    %c0_i32_0 = arith.constant 0 : i32
    %c0_i32_1 = arith.constant 0 : i32
    return %c0_i32, %c0_i32_0 : i32, i32
  }
  func.func @transform_4(%arg0: i32) -> (i32, i32) {
    %c0_i32 = arith.constant 0 : i32
    %c0_i32_0 = arith.constant 0 : i32
    %c0_i32_1 = arith.constant 0 : i32
    return %c0_i32, %c0_i32_0 : i32, i32
  }
  func.func @transform_5(%arg0: i32) -> (i32, i32) {
    %c0_i32 = arith.constant 0 : i32
    %c0_i32_0 = arith.constant 0 : i32
    %c0_i32_1 = arith.constant 0 : i32
    return %c0_i32, %c0_i32_0 : i32, i32
  }
  func.func @transform_6(%arg0: i32) -> (i32, i32) {
    %c0_i32 = arith.constant 0 : i32
    %c0_i32_0 = arith.constant 0 : i32
    %c0_i32_1 = arith.constant 0 : i32
    return %c0_i32, %c0_i32_0 : i32, i32
  }
  func.func @transform_7(%arg0: i32) -> (i32, i32) {
    %c0_i32 = arith.constant 0 : i32
    %c0_i32_0 = arith.constant 0 : i32
    %c0_i32_1 = arith.constant 0 : i32
    return %c0_i32, %c0_i32_0 : i32, i32
  }
  func.func @transform_8(%arg0: i32) -> (i32, i32, i32) {
    %c0_i32 = arith.constant 0 : i32
    %c0_i32_0 = arith.constant 0 : i32
    %c0_i32_1 = arith.constant 0 : i32
    return %arg0, %c0_i32, %c0_i32_0 : i32, i32, i32
  }
}

</mosaic_0001>

<llo_original>
// kernel: basicblock2_forward.4
$region0: #{basicblock2_forward.4}
  #allocation0 [shape = 'u32[]', space=smem, size = 0x4, offset = 0x4, fixed_abs, tag = 'smem constant byte address 0x4 - core index']
  #allocation1 [shape = 'u32[144,128]{1,0:T(1,128)}', space=vmem, size = 0x12000, scoped, tag = 'internal scratch']
  %s0 = inlined_call_operand.vmem [shape: bf16[2,196,32], index: 0, kind: input, shape index: {}]
  %s1 = inlined_call_operand.vmem [shape: f32[2,196,32], index: 1, kind: input, shape index: {}]
  %s2 = inlined_call_operand.vmem [shape: bf16[32,96], index: 2, kind: input, shape index: {}]
  %s3 = inlined_call_operand.vmem [shape: bf16[32,32], index: 3, kind: input, shape index: {}]
  %s4 = inlined_call_operand.vmem [shape: f32[1,32], index: 4, kind: input, shape index: {}]
  %s5 = inlined_call_operand.vmem [shape: f32[2,196,32], index: 5, kind: output, shape index: {}]
  %s6 = sld [smem:[#allocation0]]
  $region53: #{basicblock2_forward.4} parent=0
    _
  %s8 = ssub.s32 1, %s6
  %s9 = scalar_select 0, %s8, %s6
  loop: start=0, step=1, limit=4
  $region2: #{basicblock2_forward.4} parent=0 // loop_pre_header
    _
  $region3: #{basicblock2_forward.4} parent=0 // loop_header
    %s11 = sphi 0, %s15
    %p12 = scmp.ge.s32.totalorder %s11, 4
    %s21 = sphi 0, %s23
    %s24 = sphi 0, %s21
    %s25 = sphi 0, %s24
    %s41 = sphi 0, %s25
    %s47 = sphi 0, %s49
    %s50 = sphi 0, %s47
    %s51 = sphi 0, %s50
    %s67 = sphi 0, %s51
    %s71 = sphi 0, %s71
    %s73 = sphi 0, %s71
    %s74 = sphi 0, %s73
    %s88 = sphi 0, %s74
    %s92 = sphi 0, %s92
    %s94 = sphi 0, %s92
    %s95 = sphi 0, %s94
    %s109 = sphi 0, %s95
    %s113 = sphi 0, %s113
    %s115 = sphi 0, %s113
    %s116 = sphi 0, %s115
    %s130 = sphi 0, %s116
    %s136 = sphi 0, %s138
    %s139 = sphi 0, %s136
    %s140 = sphi 0, %s139
    %s156 = sphi 0, %s140
  $region4: #{basicblock2_forward.4} parent=0 // loop_header_branch
    %14 = sbr.rel (%p12) target = $region8
  $region5: #{basicblock2_forward.4} parent=0 // loop_body
    %s16 = ssub.s32 %s11, 1
    %s17 = ssub.s32 %s11, 2
    %s18 = sadd.s32 %s11, 1
    %s19 = ssub.s32 %s11, %s18
    %p20 = scmp.eq.s32.totalorder %s19, 0
    %s22 = sadd.s32 %s21, 1
    %s23 = scalar_select %p20, %s21, %s22
    %p26 = pneg %p20
    %p27 = scmp.eq.s32.totalorder %s11, 1
    %p28 = por %p26, %p27
    %p29 = scmp.ne.s32.totalorder %s21, %s24
    %p30 = scmp.eq.s32.totalorder %s11, 0
    %p31 = por %p29, %p30
    %p32 = scmp.ne.s32.totalorder %s21, %s24
    %p33 = scmp.eq.s32.totalorder %s16, 1
    %p34 = por %p32, %p33
    %p35 = scmp.ne.s32.totalorder %s24, %s25
    %p36 = scmp.eq.s32.totalorder %s16, 0
    %p37 = por %p35, %p36
    %p38 = scmp.ne.s32.totalorder %s24, %s25
    %p39 = scmp.eq.s32.totalorder %s17, 1
    %p40 = por %p38, %p39
    %p42 = scmp.ne.s32.totalorder %s25, %s41
    %p43 = scmp.eq.s32.totalorder %s17, 0
    %p44 = por %p42, %p43
    %s45 = ssub.s32 %s11, %s18
    %p46 = scmp.eq.s32.totalorder %s45, 0
    %s48 = sadd.s32 %s47, 1
    %s49 = scalar_select %p46, %s47, %s48
    %p52 = pneg %p46
    %p53 = scmp.eq.s32.totalorder %s11, 1
    %p54 = por %p52, %p53
    %p55 = scmp.ne.s32.totalorder %s47, %s50
    %p56 = scmp.eq.s32.totalorder %s11, 0
    %p57 = por %p55, %p56
    %p58 = scmp.ne.s32.totalorder %s47, %s50
    %p59 = scmp.eq.s32.totalorder %s16, 1
    %p60 = por %p58, %p59
    %p61 = scmp.ne.s32.totalorder %s50, %s51
    %p62 = scmp.eq.s32.totalorder %s16, 0
    %p63 = por %p61, %p62
    %p64 = scmp.ne.s32.totalorder %s50, %s51
    %p65 = scmp.eq.s32.totalorder %s17, 1
    %p66 = por %p64, %p65
    %p68 = scmp.ne.s32.totalorder %s51, %s67
    %p69 = scmp.eq.s32.totalorder %s17, 0
    %p70 = por %p68, %p69
    %s72 = sadd.s32 %s71, 1
    %p75 = scmp.eq.s32.totalorder %s11, 1
    %p76 = scmp.ne.s32.totalorder %s71, %s73
    %p77 = scmp.eq.s32.totalorder %s11, 0
    %p78 = por %p76, %p77
    %p79 = scmp.ne.s32.totalorder %s71, %s73
    %p80 = scmp.eq.s32.totalorder %s16, 1
    %p81 = por %p79, %p80
    %p82 = scmp.ne.s32.totalorder %s73, %s74
    %p83 = scmp.eq.s32.totalorder %s16, 0
    %p84 = por %p82, %p83
    %p85 = scmp.ne.s32.totalorder %s73, %s74
    %p86 = scmp.eq.s32.totalorder %s17, 1
    %p87 = por %p85, %p86
    %p89 = scmp.ne.s32.totalorder %s74, %s88
    %p90 = scmp.eq.s32.totalorder %s17, 0
    %p91 = por %p89, %p90
    %s93 = sadd.s32 %s92, 1
    %p96 = scmp.eq.s32.totalorder %s11, 1
    %p97 = scmp.ne.s32.totalorder %s92, %s94
    %p98 = scmp.eq.s32.totalorder %s11, 0
    %p99 = por %p97, %p98
    %p100 = scmp.ne.s32.totalorder %s92, %s94
    %p101 = scmp.eq.s32.totalorder %s16, 1
    %p102 = por %p100, %p101
    %p103 = scmp.ne.s32.totalorder %s94, %s95
    %p104 = scmp.eq.s32.totalorder %s16, 0
    %p105 = por %p103, %p104
    %p106 = scmp.ne.s32.totalorder %s94, %s95
    %p107 = scmp.eq.s32.totalorder %s17, 1
    %p108 = por %p106, %p107
    %p110 = scmp.ne.s32.totalorder %s95, %s109
    %p111 = scmp.eq.s32.totalorder %s17, 0
    %p112 = por %p110, %p111
    %s114 = sadd.s32 %s113, 1
    %p117 = scmp.eq.s32.totalorder %s11, 1
    %p118 = scmp.ne.s32.totalorder %s113, %s115
    %p119 = scmp.eq.s32.totalorder %s11, 0
    %p120 = por %p118, %p119
    %p121 = scmp.ne.s32.totalorder %s113, %s115
    %p122 = scmp.eq.s32.totalorder %s16, 1
    %p123 = por %p121, %p122
    %p124 = scmp.ne.s32.totalorder %s115, %s116
    %p125 = scmp.eq.s32.totalorder %s16, 0
    %p126 = por %p124, %p125
    %p127 = scmp.ne.s32.totalorder %s115, %s116
    %p128 = scmp.eq.s32.totalorder %s17, 1
    %p129 = por %p127, %p128
    %p131 = scmp.ne.s32.totalorder %s116, %s130
    %p132 = scmp.eq.s32.totalorder %s17, 0
    %p133 = por %p131, %p132
    %s134 = ssub.s32 %s11, %s18
    %p135 = scmp.eq.s32.totalorder %s134, 0
    %s137 = sadd.s32 %s136, 1
    %s138 = scalar_select %p135, %s136, %s137
    %p141 = pneg %p135
    %p142 = scmp.eq.s32.totalorder %s11, 1
    %p143 = por %p141, %p142
    %p144 = scmp.ne.s32.totalorder %s136, %s139
    %p145 = scmp.eq.s32.totalorder %s11, 0
    %p146 = por %p144, %p145
    %p147 = scmp.ne.s32.totalorder %s136, %s139
    %p148 = scmp.eq.s32.totalorder %s16, 1
    %p149 = por %p147, %p148
    %p150 = scmp.ne.s32.totalorder %s139, %s140
    %p151 = scmp.eq.s32.totalorder %s16, 0
    %p152 = por %p150, %p151
    %p153 = scmp.ne.s32.totalorder %s139, %s140
    %p154 = scmp.eq.s32.totalorder %s17, 1
    %p155 = por %p153, %p154
    %p157 = scmp.ne.s32.totalorder %s140, %s156
    %p158 = scmp.eq.s32.totalorder %s17, 0
    %p159 = por %p157, %p158
    %p160 = scmp.le.s32.totalorder 1, %s11
    %p161 = scmp.lt.s32.totalorder %s11, 3
    %p162 = pnand %p160, %p161
    %p163 = pneg %p162
    // Predicated region
    $region9: #{basicblock2_forward.4} parent=5 // pred_check
      _
    $region10: #{basicblock2_forward.4} parent=5 // pred_check_branch
      %165 = sbr.rel (%p162) target = $region12
    $region11: #{basicblock2_forward.4} parent=5 // pred_region
      %s166 = ssub.s32 %s11, 1
      // Predicated region
      $region13: #{basicblock2_forward.4} parent=11 // pred_check
        %p167 = pneg %p84
      $region14: #{basicblock2_forward.4} parent=11 // pred_check_branch
        %169 = sbr.rel (%p167) target = $region16
      $region15: #{basicblock2_forward.4} parent=11 // pred_region
        _
      $region16: #{basicblock2_forward.4} parent=11 // pred_fallthru
        _
      // Predicated region
      $region17: #{basicblock2_forward.4} parent=11 // pred_check
        %p170 = pneg %p105
      $region18: #{basicblock2_forward.4} parent=11 // pred_check_branch
        %172 = sbr.rel (%p170) target = $region20
      $region19: #{basicblock2_forward.4} parent=11 // pred_region
        _
      $region20: #{basicblock2_forward.4} parent=11 // pred_fallthru
        _
      // Predicated region
      $region21: #{basicblock2_forward.4} parent=11 // pred_check
        %p173 = pneg %p126
      $region22: #{basicblock2_forward.4} parent=11 // pred_check_branch
        %175 = sbr.rel (%p173) target = $region24
      $region23: #{basicblock2_forward.4} parent=11 // pred_region
        _
      $region24: #{basicblock2_forward.4} parent=11 // pred_fallthru
        _
    $region12: #{basicblock2_forward.4} parent=5 // pred_fallthru
      _
    %p176 = scmp.lt.s32.totalorder %s11, 2
    // Predicated region
    $region25: #{basicblock2_forward.4} parent=5 // pred_check
      %p177 = pneg %p176
    $region26: #{basicblock2_forward.4} parent=5 // pred_check_branch
      %179 = sbr.rel (%p177) target = $region28
    $region27: #{basicblock2_forward.4} parent=5 // pred_region
      // Predicated region
      $region29: #{basicblock2_forward.4} parent=27 // pred_check
        %p180 = pneg %p31
      $region30: #{basicblock2_forward.4} parent=27 // pred_check_branch
        %182 = sbr.rel (%p180) target = $region32
      $region31: #{basicblock2_forward.4} parent=27 // pred_region
        %p183 = scmp.lt.s32.totalorder %s11, 1
        %s184 = scalar_select %p183, %s11, 1
        %s185 = smul.addr %s184, 25
        %s186 = smul.addr %s185, 4
        %s187 = scalar_lea.vmem %s0, %s186
      $region32: #{basicblock2_forward.4} parent=27 // pred_fallthru
        _
      // Predicated region
      $region33: #{basicblock2_forward.4} parent=27 // pred_check
        %p188 = pneg %p57
      $region34: #{basicblock2_forward.4} parent=27 // pred_check_branch
        %190 = sbr.rel (%p188) target = $region36
      $region35: #{basicblock2_forward.4} parent=27 // pred_region
        %p191 = scmp.lt.s32.totalorder %s11, 1
        %s192 = scalar_select %p191, %s11, 1
        %s193 = smul.addr %s192, 25
        %s194 = smul.addr %s193, 8
        %s195 = scalar_lea.vmem %s1, %s194
      $region36: #{basicblock2_forward.4} parent=27 // pred_fallthru
        _
    $region28: #{basicblock2_forward.4} parent=5 // pred_fallthru
      _
    %p196 = scmp.le.s32.totalorder 1, %s11
    %p197 = scmp.lt.s32.totalorder %s11, 3
    %p198 = pnand %p196, %p197
    %p199 = pneg %p198
    // Predicated region
    $region37: #{basicblock2_forward.4} parent=5 // pred_check
      _
    $region38: #{basicblock2_forward.4} parent=5 // pred_check_branch
      %201 = sbr.rel (%p198) target = $region40
    $region39: #{basicblock2_forward.4} parent=5 // pred_region
      %s202 = ssub.s32 %s11, 1
      %p203 = scmp.lt.s32.totalorder %s16, 1
      %s204 = scalar_select %p203, %s16, 1
      %s205 = smul.addr %s204, 25
      %s206 = smul.addr %s205, 4
      %s207 = scalar_lea.vmem %s0, %s206
      %p208 = pneg %p37
      %p209 = pneg %p34
      %p210 = scmp.lt.s32.totalorder %s16, 1
      %s211 = scalar_select %p210, %s16, 1
      %s212 = smul.addr %s211, 25
      %s213 = smul.addr %s212, 8
      %s214 = scalar_lea.vmem %s1, %s213
      %p215 = pneg %p63
      %p216 = pneg %p60
      %p217 = pneg %p84
      %p218 = pneg %p81
      %p219 = pneg %p105
      %p220 = pneg %p102
      %p221 = pneg %p126
      %p222 = pneg %p123
      %p223 = pneg %p152
      %p224 = pneg %p149
      %p225 = scmp.lt.s32.totalorder %s16, 1
      %s226 = scalar_select %p225, %s16, 1
      %s227 = smul.addr %s226, 25
      %s228 = smul.addr %s227, 8
      %s229 = scalar_lea.vmem %s5, %s228
      %p230 = scmp.lt.s32.totalorder %s16, 1
      %s231 = scalar_select %p230, %s16, 1
      %s232 = smul.addr %s231, 25
      %s233 = smul.addr %s232, 4
      %s234 = scalar_lea.vmem %s0, %s233
      %p235 = scmp.lt.s32.totalorder %s16, 1
      %s236 = scalar_select %p235, %s16, 1
      %s237 = smul.addr %s236, 25
      %s238 = smul.addr %s237, 8
      %s239 = scalar_lea.vmem %s1, %s238
      %p240 = scmp.lt.s32.totalorder %s16, 1
      %s241 = scalar_select %p240, %s16, 1
      %s242 = smul.addr %s241, 25
      %s243 = smul.addr %s242, 8
      %s244 = scalar_lea.vmem %s5, %s243
      %v246 = vld [vmem:[%s234] sm:$0xf]
      %v247 = vld [vmem:[%s234 + $0x4] sm:$0xf]
      %v248 = vld [vmem:[%s234 + $0x8] sm:$0xf]
      %v249 = vld [vmem:[%s234 + $0xc] sm:$0xf]
      %v250 = vld [vmem:[%s234 + $0x10] sm:$0xf]
      %v251 = vld [vmem:[%s234 + $0x14] sm:$0xf]
      %v252 = vld [vmem:[%s234 + $0x18] sm:$0xf]
      %v253 = vld [vmem:[%s234 + $0x1c] sm:$0xf]
      %v254 = vld [vmem:[%s234 + $0x20] sm:$0xf]
      %v255 = vld [vmem:[%s234 + $0x24] sm:$0xf]
      %v256 = vld [vmem:[%s234 + $0x28] sm:$0xf]
      %v257 = vld [vmem:[%s234 + $0x2c] sm:$0xf]
      %v258 = vld [vmem:[%s234 + $0x30] sm:$0xf]
      %v259 = vld [vmem:[%s234 + $0x34] sm:$0xf]
      %v260 = vld [vmem:[%s234 + $0x38] sm:$0xf]
      %v261 = vld [vmem:[%s234 + $0x3c] sm:$0xf]
      %v262 = vld [vmem:[%s234 + $0x40] sm:$0xf]
      %v263 = vld [vmem:[%s234 + $0x44] sm:$0xf]
      %v264 = vld [vmem:[%s234 + $0x48] sm:$0xf]
      %v265 = vld [vmem:[%s234 + $0x4c] sm:$0xf]
      %v266 = vld [vmem:[%s234 + $0x50] sm:$0xf]
      %v267 = vld [vmem:[%s234 + $0x54] sm:$0xf]
      %v268 = vld [vmem:[%s234 + $0x58] sm:$0xf]
      %v269 = vld [vmem:[%s234 + $0x5c] sm:$0xf]
      %v270 = vld [vmem:[%s234 + $0x60] sm:$0x3]
      %v271 = vld [vmem:[%s2] sm:$0xf]
      %v272 = vld [vmem:[%s2 + $0x4] sm:$0xf]
      %v273 = vld [vmem:[%s2 + $0x8] sm:$0xf]
      %v274 = vld [vmem:[%s2 + $0xc] sm:$0xf]
      %v300 = vunpack.c.l.b16 %v246
      %v301 = vunpack.c.l.b16 %v247
      %v302 = vunpack.c.l.b16 %v248
      %v303 = vunpack.c.l.b16 %v249
      %v304 = vunpack.c.l.b16 %v250
      %v305 = vunpack.c.l.b16 %v251
      %v306 = vunpack.c.l.b16 %v252
      %v307 = vunpack.c.l.b16 %v253
      %v308 = vunpack.c.l.b16 %v254
      %v309 = vunpack.c.l.b16 %v255
      %v310 = vunpack.c.l.b16 %v256
      %v311 = vunpack.c.l.b16 %v257
      %v312 = vunpack.c.l.b16 %v258
      %v313 = vunpack.c.l.b16 %v259
      %v314 = vunpack.c.l.b16 %v260
      %v315 = vunpack.c.l.b16 %v261
      %v316 = vunpack.c.l.b16 %v262
      %v317 = vunpack.c.l.b16 %v263
      %v318 = vunpack.c.l.b16 %v264
      %v319 = vunpack.c.l.b16 %v265
      %v320 = vunpack.c.l.b16 %v266
      %v321 = vunpack.c.l.b16 %v267
      %v322 = vunpack.c.l.b16 %v268
      %v323 = vunpack.c.l.b16 %v269
      %v324 = vunpack.c.l.b16 %v270
      %v325 = vpack.c.b16 %v301, %v300
      %v326 = vpack.c.b16 %v303, %v302
      %v327 = vpack.c.b16 %v305, %v304
      %v328 = vpack.c.b16 %v307, %v306
      %v329 = vpack.c.b16 %v309, %v308
      %v330 = vpack.c.b16 %v311, %v310
      %v331 = vpack.c.b16 %v313, %v312
      %v332 = vpack.c.b16 %v315, %v314
      %v333 = vpack.c.b16 %v317, %v316
      %v334 = vpack.c.b16 %v319, %v318
      %v335 = vpack.c.b16 %v321, %v320
      %v336 = vpack.c.b16 %v323, %v322
      %v337 = vpack.c.b16 %v324, %v324
      %v342 = vunpack.c.l.b16 %v271
      %v343 = vunpack.c.l.b16 %v272
      %v344 = vunpack.c.l.b16 %v273
      %v345 = vunpack.c.l.b16 %v274
      %v346 = vpack.c.b16 %v343, %v342
      %v347 = vpack.c.b16 %v345, %v344
      %vm350 = vcmask 261120
      %v352 = vsel %vm350, %v325, 0
      %v355 = vsel %vm350, %v326, 0
      %v358 = vsel %vm350, %v327, 0
      %v361 = vsel %vm350, %v328, 0
      %v364 = vsel %vm350, %v329, 0
      %v367 = vsel %vm350, %v330, 0
      %v370 = vsel %vm350, %v331, 0
      %v373 = vsel %vm350, %v332, 0
      %v376 = vsel %vm350, %v333, 0
      %v379 = vsel %vm350, %v334, 0
      %v382 = vsel %vm350, %v335, 0
      %v385 = vsel %vm350, %v336, 0
      %v388 = vsel %vm350, %v337, 0
      %390 = vmatprep.subr.bf16.mxu0 0
      %391 = vmatpush1.bf16.msra.mxu0 %v346
      %392 = vmatprep.subr.bf16.mxu0 0
      %393 = vmatpush1.bf16.msra.mxu0 %v347
      %394 = vmatprep.subr.bf16.mxu0 0
      %395 = vmatpush1.bf16.msra.mxu0 0
      %396 = vmatprep.subr.bf16.mxu0 0
      %397 = vmatpush1.bf16.msra.mxu0 0
      %398 = vmatprep.subr.bf16.mxu0 0
      %399 = vmatpush1.bf16.msra.mxu0 0
      %400 = vmatprep.subr.bf16.mxu0 0
      %401 = vmatpush1.bf16.msra.mxu0 0
      %402 = vmatprep.subr.bf16.mxu0 0
      %403 = vmatpush1.bf16.msra.mxu0 0
      %404 = vmatprep.subr.bf16.mxu0 0
      %405 = vmatpush1.bf16.msra.mxu0 0
      %406 = vmatprep.subr.bf16.mxu0 0
      %407 = vmatpush1.bf16.msra.mxu0 0
      %408 = vmatprep.subr.bf16.mxu0 0
      %409 = vmatpush1.bf16.msra.mxu0 0
      %410 = vmatprep.subr.bf16.mxu0 0
      %411 = vmatpush1.bf16.msra.mxu0 0
      %412 = vmatprep.subr.bf16.mxu0 0
      %413 = vmatpush1.bf16.msra.mxu0 0
      %414 = vmatprep.subr.bf16.mxu0 0
      %415 = vmatpush1.bf16.msra.mxu0 0
      %416 = vmatprep.subr.bf16.mxu0 0
      %417 = vmatpush1.bf16.msra.mxu0 0
      %418 = vmatprep.subr.bf16.mxu0 0
      %419 = vmatpush1.bf16.msra.mxu0 0
      %420 = vmatprep.subr.bf16.mxu0 0
      %421 = vmatpush1.bf16.msra.mxu0 0
      %422 = vmatprep.mubr.bf16.mxu0 0
      %423 = vmatmul.mubr.bf16.gmra.mrb[0].mxu0 %v352
      %v424 = vpop.f32.mrb[0].mxu0
      %v425 = vadd.f32 0.0, %v424
      %v426 = vpop.f32.mrb[0].mxu0
      %v427 = vpop.f32.mrb[0].mxu0
      %v428 = vadd.f32 0.0, %v427
      %v429 = vpop.f32.mrb[0].mxu0
      %430 = vmatprep.mubr.bf16.mxu0 0
      %431 = vmatmul.mubr.bf16.gmra.mrb[0].mxu0 %v355
      %v432 = vpop.f32.mrb[0].mxu0
      %v433 = vadd.f32 0.0, %v432
      %v434 = vpop.f32.mrb[0].mxu0
      %v435 = vpop.f32.mrb[0].mxu0
      %v436 = vadd.f32 0.0, %v435
      %v437 = vpop.f32.mrb[0].mxu0
      %438 = vmatprep.mubr.bf16.mxu0 0
      %439 = vmatmul.mubr.bf16.gmra.mrb[0].mxu0 %v358
      %v440 = vpop.f32.mrb[0].mxu0
      %v441 = vadd.f32 0.0, %v440
      %v442 = vpop.f32.mrb[0].mxu0
      %v443 = vpop.f32.mrb[0].mxu0
      %v444 = vadd.f32 0.0, %v443
      %v445 = vpop.f32.mrb[0].mxu0
      %446 = vmatprep.mubr.bf16.mxu0 0
      %447 = vmatmul.mubr.bf16.gmra.mrb[0].mxu0 %v361
      %v448 = vpop.f32.mrb[0].mxu0
      %v449 = vadd.f32 0.0, %v448
      %v450 = vpop.f32.mrb[0].mxu0
      %v451 = vpop.f32.mrb[0].mxu0
      %v452 = vadd.f32 0.0, %v451
      %v453 = vpop.f32.mrb[0].mxu0
      %454 = vmatprep.mubr.bf16.mxu0 0
      %455 = vmatmul.mubr.bf16.gmra.mrb[0].mxu0 %v364
      %v456 = vpop.f32.mrb[0].mxu0
      %v457 = vadd.f32 0.0, %v456
      %v458 = vpop.f32.mrb[0].mxu0
      %v459 = vpop.f32.mrb[0].mxu0
      %v460 = vadd.f32 0.0, %v459
      %v461 = vpop.f32.mrb[0].mxu0
      %462 = vmatprep.mubr.bf16.mxu0 0
      %463 = vmatmul.mubr.bf16.gmra.mrb[0].mxu0 %v367
      %v464 = vpop.f32.mrb[0].mxu0
      %v465 = vadd.f32 0.0, %v464
      %v466 = vpop.f32.mrb[0].mxu0
      %v467 = vpop.f32.mrb[0].mxu0
      %v468 = vadd.f32 0.0, %v467
      %v469 = vpop.f32.mrb[0].mxu0
      %470 = vmatprep.mubr.bf16.mxu0 0
      %471 = vmatmul.mubr.bf16.gmra.mrb[0].mxu0 %v370
      %v472 = vpop.f32.mrb[0].mxu0
      %v473 = vadd.f32 0.0, %v472
      %v474 = vpop.f32.mrb[0].mxu0
      %v475 = vpop.f32.mrb[0].mxu0
      %v476 = vadd.f32 0.0, %v475
      %v477 = vpop.f32.mrb[0].mxu0
      %478 = vmatprep.mubr.bf16.mxu0 0
      %479 = vmatmul.mubr.bf16.gmra.mrb[0].mxu0 %v373
      %v480 = vpop.f32.mrb[0].mxu0
      %v481 = vadd.f32 0.0, %v480
      %v482 = vpop.f32.mrb[0].mxu0
      %v483 = vpop.f32.mrb[0].mxu0
      %v484 = vadd.f32 0.0, %v483
      %v485 = vpop.f32.mrb[0].mxu0
      %486 = vmatprep.mubr.bf16.mxu0 0
      %487 = vmatmul.mubr.bf16.gmra.mrb[0].mxu0 %v376
      %v488 = vpop.f32.mrb[0].mxu0
      %v489 = vadd.f32 0.0, %v488
      %v490 = vpop.f32.mrb[0].mxu0
      %v491 = vpop.f32.mrb[0].mxu0
      %v492 = vadd.f32 0.0, %v491
      %v493 = vpop.f32.mrb[0].mxu0
      %494 = vmatprep.mubr.bf16.mxu0 0
      %495 = vmatmul.mubr.bf16.gmra.mrb[0].mxu0 %v379
      %v496 = vpop.f32.mrb[0].mxu0
      %v497 = vadd.f32 0.0, %v496
      %v498 = vpop.f32.mrb[0].mxu0
      %v499 = vpop.f32.mrb[0].mxu0
      %v500 = vadd.f32 0.0, %v499
      %v501 = vpop.f32.mrb[0].mxu0
      %502 = vmatprep.mubr.bf16.mxu0 0
      %503 = vmatmul.mubr.bf16.gmra.mrb[0].mxu0 %v382
      %v504 = vpop.f32.mrb[0].mxu0
      %v505 = vadd.f32 0.0, %v504
      %v506 = vpop.f32.mrb[0].mxu0
      %v507 = vpop.f32.mrb[0].mxu0
      %v508 = vadd.f32 0.0, %v507
      %v509 = vpop.f32.mrb[0].mxu0
      %510 = vmatprep.mubr.bf16.mxu0 0
      %511 = vmatmul.mubr.bf16.gmra.mrb[0].mxu0 %v385
      %v512 = vpop.f32.mrb[0].mxu0
      %v513 = vadd.f32 0.0, %v512
      %v514 = vpop.f32.mrb[0].mxu0
      %v515 = vpop.f32.mrb[0].mxu0
      %v516 = vadd.f32 0.0, %v515
      %v517 = vpop.f32.mrb[0].mxu0
      %518 = vmatprep.mubr.bf16.mxu0 0
      %519 = vmatmul.mubr.bf16.gmra.mrb[0].mxu0 %v388
      %v520 = vpop.f32.mrb[0].mxu0
      %v521 = vadd.f32 0.0, %v520
      %v522 = vpop.f32.mrb[0].mxu0
      %v523 = vpop.f32.mrb[0].mxu0
      %v524 = vpop.f32.mrb[0].mxu0
      %525 = vdwg.mxu0
      %v526 = vpack.c.bf16 %v428, %v425
      %v527 = vpack.c.bf16 %v436, %v433
      %v528 = vpack.c.bf16 %v444, %v441
      %v529 = vpack.c.bf16 %v449, %v449
      %534 = vrot.lane.b32.xlu0 %v526, 96
      %v535 = vpop.permute.xlu0 %534
      %536 = vrot.lane.b32.xlu0 %v527, 96
      %v537 = vpop.permute.xlu0 %536
      %538 = vrot.lane.b32.xlu0 %v528, 96
      %v539 = vpop.permute.xlu0 %538
      %540 = vrot.lane.b32.xlu0 %v529, 96
      %v541 = vpop.permute.xlu0 %540
      %v543 = vsel %vm350, %v526, 0
      %v546 = vsel %vm350, %v527, 0
      %v549 = vsel %vm350, %v528, 0
      %v552 = vsel %vm350, %v529, 0
      %v555 = vsel %vm350, %v535, 0
      %v558 = vsel %vm350, %v537, 0
      %v561 = vsel %vm350, %v539, 0
      %v564 = vsel %vm350, %v541, 0
      %566 = vmatprep.subr.bf16.mxu0 0
      %567 = vmatpush1.bf16.xpose.msra.mxu0 %v555
      %568 = vmatprep.subr.bf16.mxu0 0
      %569 = vmatpush1.bf16.xpose.msra.mxu0 %v558
      %570 = vmatprep.subr.bf16.mxu0 0
      %571 = vmatpush1.bf16.xpose.msra.mxu0 %v561
      %572 = vmatprep.subr.bf16.mxu0 0
      %573 = vmatpush1.bf16.xpose.msra.mxu0 %v564
      %574 = vmatprep.subr.bf16.mxu0 0
      %575 = vmatpush1.bf16.xpose.msra.mxu0 0
      %576 = vmatprep.subr.bf16.mxu0 0
      %577 = vmatpush1.bf16.xpose.msra.mxu0 0
      %578 = vmatprep.subr.bf16.mxu0 0
      %579 = vmatpush1.bf16.xpose.msra.mxu0 0
      %580 = vmatprep.subr.bf16.mxu0 0
      %581 = vmatpush1.bf16.xpose.msra.mxu0 0
      %582 = vmatprep.subr.bf16.mxu0 0
      %583 = vmatpush1.bf16.xpose.msra.mxu0 0
      %584 = vmatprep.subr.bf16.mxu0 0
      %585 = vmatpush1.bf16.xpose.msra.mxu0 0
      %586 = vmatprep.subr.bf16.mxu0 0
      %587 = vmatpush1.bf16.xpose.msra.mxu0 0
      %588 = vmatprep.subr.bf16.mxu0 0
      %589 = vmatpush1.bf16.xpose.msra.mxu0 0
      %590 = vmatprep.subr.bf16.mxu0 0
      %591 = vmatpush1.bf16.xpose.msra.mxu0 0
      %592 = vmatprep.subr.bf16.mxu0 0
      %593 = vmatpush1.bf16.xpose.msra.mxu0 0
      %594 = vmatprep.subr.bf16.mxu0 0
      %595 = vmatpush1.bf16.xpose.msra.mxu0 0
      %596 = vmatprep.subr.bf16.mxu0 0
      %597 = vmatpush1.bf16.xpose.msra.mxu0 0
      %598 = vmatprep.mubr.bf16.mxu0 0
      %599 = vmatmul.mubr.bf16.gmra.mrb[0].mxu0 %v543
      %v600 = vpop.f32.mrb[0].mxu0
      %v601 = vadd.f32 0.0, %v600
      %v602 = vpop.f32.mrb[0].mxu0
      %v603 = vpop.f32.mrb[0].mxu0
      %v604 = vadd.f32 0.0, %v603
      %v605 = vpop.f32.mrb[0].mxu0
      %606 = vmatprep.mubr.bf16.mxu0 0
      %607 = vmatmul.mubr.bf16.gmra.mrb[0].mxu0 %v546
      %v608 = vpop.f32.mrb[0].mxu0
      %v609 = vadd.f32 0.0, %v608
      %v610 = vpop.f32.mrb[0].mxu0
      %v611 = vpop.f32.mrb[0].mxu0
      %v612 = vadd.f32 0.0, %v611
      %v613 = vpop.f32.mrb[0].mxu0
      %614 = vmatprep.mubr.bf16.mxu0 0
      %615 = vmatmul.mubr.bf16.gmra.mrb[0].mxu0 %v549
      %v616 = vpop.f32.mrb[0].mxu0
      %v617 = vadd.f32 0.0, %v616
      %v618 = vpop.f32.mrb[0].mxu0
      %v619 = vpop.f32.mrb[0].mxu0
      %v620 = vadd.f32 0.0, %v619
      %v621 = vpop.f32.mrb[0].mxu0
      %622 = vmatprep.mubr.bf16.mxu0 0
      %623 = vmatmul.mubr.bf16.gmra.mrb[0].mxu0 %v552
      %v624 = vpop.f32.mrb[0].mxu0
      %v625 = vadd.f32 0.0, %v624
      %v626 = vpop.f32.mrb[0].mxu0
      %v627 = vpop.f32.mrb[0].mxu0
      %v628 = vpop.f32.mrb[0].mxu0
      %629 = vdwg.mxu0
      %v630 = vmul.f32 %v601, 0.17677669
      %v631 = vmul.f32 %v604, 0.17677669
      %v632 = vmul.f32 %v609, 0.17677669
      %v633 = vmul.f32 %v612, 0.17677669
      %v634 = vmul.f32 %v617, 0.17677669
      %v635 = vmul.f32 %v620, 0.17677669
      %v636 = vmul.f32 %v625, 0.17677669
      %vm637 = vcmask 400384
      %v638 = vsel %vm637, %v630, -inf
      %639 = vmax.xlane.f32.xlu0 %v638
      %v640 = vpop.xlane.xlu0 %639
      %v641 = vsel %vm637, %v631, -inf
      %642 = vmax.xlane.f32.xlu0 %v641
      %v643 = vpop.xlane.xlu0 %642
      %v644 = vsel %vm637, %v632, -inf
      %645 = vmax.xlane.f32.xlu0 %v644
      %v646 = vpop.xlane.xlu0 %645
      %v647 = vsel %vm637, %v633, -inf
      %648 = vmax.xlane.f32.xlu0 %v647
      %v649 = vpop.xlane.xlu0 %648
      %v650 = vsel %vm637, %v634, -inf
      %651 = vmax.xlane.f32.xlu0 %v650
      %v652 = vpop.xlane.xlu0 %651
      %v653 = vsel %vm637, %v635, -inf
      %654 = vmax.xlane.f32.xlu0 %v653
      %v655 = vpop.xlane.xlu0 %654
      %vm656 = vcmask 393216
      %v657 = vsel %vm656, %v636, -inf
      %658 = vmax.xlane.f32.xlu0 %v657
      %v659 = vpop.xlane.xlu0 %658
      %v660 = vsub.f32 %v630, %v640
      %v661 = vsub.f32 %v631, %v643
      %v662 = vsub.f32 %v632, %v646
      %v663 = vsub.f32 %v633, %v649
      %v664 = vsub.f32 %v634, %v652
      %v665 = vsub.f32 %v635, %v655
      %v666 = vsub.f32 %v636, %v659
      %v667 = vmul.f32 %v660, 1.442695
      %v668 = vpow.pop %v667
      %v669 = vmul.f32 %v661, 1.442695
      %v670 = vpow.pop %v669
      %v671 = vmul.f32 %v662, 1.442695
      %v672 = vpow.pop %v671
      %v673 = vmul.f32 %v663, 1.442695
      %v674 = vpow.pop %v673
      %v675 = vmul.f32 %v664, 1.442695
      %v676 = vpow.pop %v675
      %v677 = vmul.f32 %v665, 1.442695
      %v678 = vpow.pop %v677
      %v679 = vmul.f32 %v666, 1.442695
      %v680 = vpow.pop %v679
      %v681 = vsel %vm637, %v668, 0.0
      %682 = vadd.xlane.f32.xlu0 %v681
      %v683 = vpop.xlane.xlu0 %682
      %v684 = vsel %vm637, %v670, 0.0
      %685 = vadd.xlane.f32.xlu0 %v684
      %v686 = vpop.xlane.xlu0 %685
      %v687 = vsel %vm637, %v672, 0.0
      %688 = vadd.xlane.f32.xlu0 %v687
      %v689 = vpop.xlane.xlu0 %688
      %v690 = vsel %vm637, %v674, 0.0
      %691 = vadd.xlane.f32.xlu0 %v690
      %v692 = vpop.xlane.xlu0 %691
      %v693 = vsel %vm637, %v676, 0.0
      %694 = vadd.xlane.f32.xlu0 %v693
      %v695 = vpop.xlane.xlu0 %694
      %v696 = vsel %vm637, %v678, 0.0
      %697 = vadd.xlane.f32.xlu0 %v696
      %v698 = vpop.xlane.xlu0 %697
      %v699 = vsel %vm656, %v680, 0.0
      %700 = vadd.xlane.f32.xlu0 %v699
      %v701 = vpop.xlane.xlu0 %700
      %v702 = vrcp.pop %v683
      %v703 = vmul.f32 %v668, %v702
      %v704 = vrcp.pop %v686
      %v705 = vmul.f32 %v670, %v704
      %v706 = vrcp.pop %v689
      %v707 = vmul.f32 %v672, %v706
      %v708 = vrcp.pop %v692
      %v709 = vmul.f32 %v674, %v708
      %v710 = vrcp.pop %v695
      %v711 = vmul.f32 %v676, %v710
      %v712 = vrcp.pop %v698
      %v713 = vmul.f32 %v678, %v712
      %v714 = vrcp.pop %v701
      %v715 = vmul.f32 %v680, %v714
      %v716 = vpack.c.bf16 %v705, %v703
      %v717 = vpack.c.bf16 %v709, %v707
      %v718 = vpack.c.bf16 %v713, %v711
      %v719 = vpack.c.bf16 %v715, %v715
      %720 = vrot.lane.b32.xlu0 %v526, 64
      %v721 = vpop.permute.xlu0 %720
      %722 = vrot.lane.b32.xlu0 %v527, 64
      %v723 = vpop.permute.xlu0 %722
      %724 = vrot.lane.b32.xlu0 %v528, 64
      %v725 = vpop.permute.xlu0 %724
      %726 = vrot.lane.b32.xlu0 %v529, 64
      %v727 = vpop.permute.xlu0 %726
      %v732 = vsel %vm637, %v716, 0
      %v735 = vsel %vm637, %v717, 0
      %v738 = vsel %vm637, %v718, 0
      %v741 = vsel %vm637, %v719, 0
      %vm743 = vcmask 1040384
      %v744 = vsel 0, 4294967295, 65535
      %v745 = vsel %vm743, %v744, 0
      %v747 = vand.u32 %v727, %v745
      %749 = vmatprep.subr.bf16.mxu0 0
      %750 = vmatpush1.bf16.msra.mxu0 %v721
      %751 = vmatprep.subr.bf16.mxu0 0
      %752 = vmatpush1.bf16.msra.mxu0 %v723
      %753 = vmatprep.subr.bf16.mxu0 0
      %754 = vmatpush1.bf16.msra.mxu0 %v725
      %755 = vmatprep.subr.bf16.mxu0 0
      %756 = vmatpush1.bf16.msra.mxu0 %v747
      %757 = vmatprep.subr.bf16.mxu0 0
      %758 = vmatpush1.bf16.msra.mxu0 0
      %759 = vmatprep.subr.bf16.mxu0 0
      %760 = vmatpush1.bf16.msra.mxu0 0
      %761 = vmatprep.subr.bf16.mxu0 0
      %762 = vmatpush1.bf16.msra.mxu0 0
      %763 = vmatprep.subr.bf16.mxu0 0
      %764 = vmatpush1.bf16.msra.mxu0 0
      %765 = vmatprep.subr.bf16.mxu0 0
      %766 = vmatpush1.bf16.msra.mxu0 0
      %767 = vmatprep.subr.bf16.mxu0 0
      %768 = vmatpush1.bf16.msra.mxu0 0
      %769 = vmatprep.subr.bf16.mxu0 0
      %770 = vmatpush1.bf16.msra.mxu0 0
      %771 = vmatprep.subr.bf16.mxu0 0
      %772 = vmatpush1.bf16.msra.mxu0 0
      %773 = vmatprep.subr.bf16.mxu0 0
      %774 = vmatpush1.bf16.msra.mxu0 0
      %775 = vmatprep.subr.bf16.mxu0 0
      %776 = vmatpush1.bf16.msra.mxu0 0
      %777 = vmatprep.subr.bf16.mxu0 0
      %778 = vmatpush1.bf16.msra.mxu0 0
      %779 = vmatprep.subr.bf16.mxu0 0
      %780 = vmatpush1.bf16.msra.mxu0 0
      %781 = vmatprep.mubr.bf16.mxu0 0
      %782 = vmatmul.mubr.bf16.gmra.mrb[0].mxu0 %v732
      %v783 = vpop.f32.mrb[0].mxu0
      %v784 = vadd.f32 0.0, %v783
      %v785 = vpop.f32.mrb[0].mxu0
      %v786 = vpop.f32.mrb[0].mxu0
      %v787 = vadd.f32 0.0, %v786
      %v788 = vpop.f32.mrb[0].mxu0
      %789 = vmatprep.mubr.bf16.mxu0 0
      %790 = vmatmul.mubr.bf16.gmra.mrb[0].mxu0 %v735
      %v791 = vpop.f32.mrb[0].mxu0
      %v792 = vadd.f32 0.0, %v791
      %v793 = vpop.f32.mrb[0].mxu0
      %v794 = vpop.f32.mrb[0].mxu0
      %v795 = vadd.f32 0.0, %v794
      %v796 = vpop.f32.mrb[0].mxu0
      %797 = vmatprep.mubr.bf16.mxu0 0
      %798 = vmatmul.mubr.bf16.gmra.mrb[0].mxu0 %v738
      %v799 = vpop.f32.mrb[0].mxu0
      %v800 = vadd.f32 0.0, %v799
      %v801 = vpop.f32.mrb[0].mxu0
      %v802 = vpop.f32.mrb[0].mxu0
      %v803 = vadd.f32 0.0, %v802
      %v804 = vpop.f32.mrb[0].mxu0
      %805 = vmatprep.mubr.bf16.mxu0 0
      %806 = vmatmul.mubr.bf16.gmra.mrb[0].mxu0 %v741
      %v807 = vpop.f32.mrb[0].mxu0
      %v808 = vadd.f32 0.0, %v807
      %v809 = vpop.f32.mrb[0].mxu0
      %v810 = vpop.f32.mrb[0].mxu0
      %v811 = vpop.f32.mrb[0].mxu0
      %812 = vdwg.mxu0
      %v813 = vpack.c.bf16 %v452, %v449
      %v814 = vpack.c.bf16 %v460, %v457
      %v815 = vpack.c.bf16 %v468, %v465
      %v816 = vpack.c.bf16 %v473, %v473
      %vm817 = vsmask.f32 7424
      %v819 = vshrl.u32 %v813, 16
      %v821 = vshll.u32 %v813, 16
      %v823 = vrot.slane %v821, 1
      %v824 = vor.u32 %v819, %v823
      %v826 = vshll.u32 %v814, 16
      %v828 = vrot.slane %v826, 1
      %v829 = vsel %vm817, %v824, %v828
      %v830 = vshrl.u32 %v814, 16
      %v832 = vor.u32 %v830, %v828
      %v834 = vshll.u32 %v815, 16
      %v836 = vrot.slane %v834, 1
      %v837 = vsel %vm817, %v832, %v836
      %v838 = vshrl.u32 %v815, 16
      %v840 = vor.u32 %v838, %v836
      %v842 = vshll.u32 %v816, 16
      %v844 = vrot.slane %v842, 1
      %v845 = vsel %vm817, %v840, %v844
      %v846 = vshrl.u32 %v816, 16
      %848 = vrot.lane.b32.xlu0 %v829, 96
      %v849 = vpop.permute.xlu0 %848
      %850 = vrot.lane.b32.xlu0 %v837, 96
      %v851 = vpop.permute.xlu0 %850
      %852 = vrot.lane.b32.xlu0 %v845, 96
      %v853 = vpop.permute.xlu0 %852
      %854 = vrot.lane.b32.xlu0 %v846, 96
      %v855 = vpop.permute.xlu0 %854
      %v857 = vsel %vm350, %v829, 0
      %v860 = vsel %vm350, %v837, 0
      %v863 = vsel %vm350, %v845, 0
      %v866 = vsel %vm350, %v846, 0
      %v869 = vsel %vm350, %v849, 0
      %v872 = vsel %vm350, %v851, 0
      %v875 = vsel %vm350, %v853, 0
      %v878 = vsel %vm350, %v855, 0
      %880 = vmatprep.subr.bf16.mxu0 0
      %881 = vmatpush1.bf16.xpose.msra.mxu0 %v869
      %882 = vmatprep.subr.bf16.mxu0 0
      %883 = vmatpush1.bf16.xpose.msra.mxu0 %v872
      %884 = vmatprep.subr.bf16.mxu0 0
      %885 = vmatpush1.bf16.xpose.msra.mxu0 %v875
      %886 = vmatprep.subr.bf16.mxu0 0
      %887 = vmatpush1.bf16.xpose.msra.mxu0 %v878
      %888 = vmatprep.subr.bf16.mxu0 0
      %889 = vmatpush1.bf16.xpose.msra.mxu0 0
      %890 = vmatprep.subr.bf16.mxu0 0
      %891 = vmatpush1.bf16.xpose.msra.mxu0 0
      %892 = vmatprep.subr.bf16.mxu0 0
      %893 = vmatpush1.bf16.xpose.msra.mxu0 0
      %894 = vmatprep.subr.bf16.mxu0 0
      %895 = vmatpush1.bf16.xpose.msra.mxu0 0
      %896 = vmatprep.subr.bf16.mxu0 0
      %897 = vmatpush1.bf16.xpose.msra.mxu0 0
      %898 = vmatprep.subr.bf16.mxu0 0
      %899 = vmatpush1.bf16.xpose.msra.mxu0 0
      %900 = vmatprep.subr.bf16.mxu0 0
      %901 = vmatpush1.bf16.xpose.msra.mxu0 0
      %902 = vmatprep.subr.bf16.mxu0 0
      %903 = vmatpush1.bf16.xpose.msra.mxu0 0
      %904 = vmatprep.subr.bf16.mxu0 0
      %905 = vmatpush1.bf16.xpose.msra.mxu0 0
      %906 = vmatprep.subr.bf16.mxu0 0
      %907 = vmatpush1.bf16.xpose.msra.mxu0 0
      %908 = vmatprep.subr.bf16.mxu0 0
      %909 = vmatpush1.bf16.xpose.msra.mxu0 0
      %910 = vmatprep.subr.bf16.mxu0 0
      %911 = vmatpush1.bf16.xpose.msra.mxu0 0
      %912 = vmatprep.mubr.bf16.mxu0 0
      %913 = vmatmul.mubr.bf16.gmra.mrb[0].mxu0 %v857
      %v914 = vpop.f32.mrb[0].mxu0
      %v915 = vadd.f32 0.0, %v914
      %v916 = vpop.f32.mrb[0].mxu0
      %v917 = vpop.f32.mrb[0].mxu0
      %v918 = vadd.f32 0.0, %v917
      %v919 = vpop.f32.mrb[0].mxu0
      %920 = vmatprep.mubr.bf16.mxu0 0
      %921 = vmatmul.mubr.bf16.gmra.mrb[0].mxu0 %v860
      %v922 = vpop.f32.mrb[0].mxu0
      %v923 = vadd.f32 0.0, %v922
      %v924 = vpop.f32.mrb[0].mxu0
      %v925 = vpop.f32.mrb[0].mxu0
      %v926 = vadd.f32 0.0, %v925
      %v927 = vpop.f32.mrb[0].mxu0
      %928 = vmatprep.mubr.bf16.mxu0 0
      %929 = vmatmul.mubr.bf16.gmra.mrb[0].mxu0 %v863
      %v930 = vpop.f32.mrb[0].mxu0
      %v931 = vadd.f32 0.0, %v930
      %v932 = vpop.f32.mrb[0].mxu0
      %v933 = vpop.f32.mrb[0].mxu0
      %v934 = vadd.f32 0.0, %v933
      %v935 = vpop.f32.mrb[0].mxu0
      %936 = vmatprep.mubr.bf16.mxu0 0
      %937 = vmatmul.mubr.bf16.gmra.mrb[0].mxu0 %v866
      %v938 = vpop.f32.mrb[0].mxu0
      %v939 = vadd.f32 0.0, %v938
      %v940 = vpop.f32.mrb[0].mxu0
      %v941 = vpop.f32.mrb[0].mxu0
      %v942 = vpop.f32.mrb[0].mxu0
      %943 = vdwg.mxu0
      %v944 = vmul.f32 %v915, 0.17677669
      %v945 = vmul.f32 %v918, 0.17677669
      %v946 = vmul.f32 %v923, 0.17677669
      %v947 = vmul.f32 %v926, 0.17677669
      %v948 = vmul.f32 %v931, 0.17677669
      %v949 = vmul.f32 %v934, 0.17677669
      %v950 = vmul.f32 %v939, 0.17677669
      %v951 = vsel %vm637, %v944, -inf
      %952 = vmax.xlane.f32.xlu0 %v951
      %v953 = vpop.xlane.xlu0 %952
      %v954 = vsel %vm637, %v945, -inf
      %955 = vmax.xlane.f32.xlu0 %v954
      %v956 = vpop.xlane.xlu0 %955
      %v957 = vsel %vm637, %v946, -inf
      %958 = vmax.xlane.f32.xlu0 %v957
      %v959 = vpop.xlane.xlu0 %958
      %v960 = vsel %vm637, %v947, -inf
      %961 = vmax.xlane.f32.xlu0 %v960
      %v962 = vpop.xlane.xlu0 %961
      %v963 = vsel %vm637, %v948, -inf
      %964 = vmax.xlane.f32.xlu0 %v963
      %v965 = vpop.xlane.xlu0 %964
      %v966 = vsel %vm637, %v949, -inf
      %967 = vmax.xlane.f32.xlu0 %v966
      %v968 = vpop.xlane.xlu0 %967
      %v969 = vsel %vm656, %v950, -inf
      %970 = vmax.xlane.f32.xlu0 %v969
      %v971 = vpop.xlane.xlu0 %970
      %v972 = vsub.f32 %v944, %v953
      %v973 = vsub.f32 %v945, %v956
      %v974 = vsub.f32 %v946, %v959
      %v975 = vsub.f32 %v947, %v962
      %v976 = vsub.f32 %v948, %v965
      %v977 = vsub.f32 %v949, %v968
      %v978 = vsub.f32 %v950, %v971
      %v979 = vmul.f32 %v972, 1.442695
      %v980 = vpow.pop %v979
      %v981 = vmul.f32 %v973, 1.442695
      %v982 = vpow.pop %v981
      %v983 = vmul.f32 %v974, 1.442695
      %v984 = vpow.pop %v983
      %v985 = vmul.f32 %v975, 1.442695
      %v986 = vpow.pop %v985
      %v987 = vmul.f32 %v976, 1.442695
      %v988 = vpow.pop %v987
      %v989 = vmul.f32 %v977, 1.442695
      %v990 = vpow.pop %v989
      %v991 = vmul.f32 %v978, 1.442695
      %v992 = vpow.pop %v991
      %v993 = vsel %vm637, %v980, 0.0
      %994 = vadd.xlane.f32.xlu0 %v993
      %v995 = vpop.xlane.xlu0 %994
      %v996 = vsel %vm637, %v982, 0.0
      %997 = vadd.xlane.f32.xlu0 %v996
      %v998 = vpop.xlane.xlu0 %997
      %v999 = vsel %vm637, %v984, 0.0
      %1000 = vadd.xlane.f32.xlu0 %v999
      %v1001 = vpop.xlane.xlu0 %1000
      %v1002 = vsel %vm637, %v986, 0.0
      %1003 = vadd.xlane.f32.xlu0 %v1002
      %v1004 = vpop.xlane.xlu0 %1003
      %v1005 = vsel %vm637, %v988, 0.0
      %1006 = vadd.xlane.f32.xlu0 %v1005
      %v1007 = vpop.xlane.xlu0 %1006
      %v1008 = vsel %vm637, %v990, 0.0
      %1009 = vadd.xlane.f32.xlu0 %v1008
      %v1010 = vpop.xlane.xlu0 %1009
      %v1011 = vsel %vm656, %v992, 0.0
      %1012 = vadd.xlane.f32.xlu0 %v1011
      %v1013 = vpop.xlane.xlu0 %1012
      %v1014 = vrcp.pop %v995
      %v1015 = vmul.f32 %v980, %v1014
      %v1016 = vrcp.pop %v998
      %v1017 = vmul.f32 %v982, %v1016
      %v1018 = vrcp.pop %v1001
      %v1019 = vmul.f32 %v984, %v1018
      %v1020 = vrcp.pop %v1004
      %v1021 = vmul.f32 %v986, %v1020
      %v1022 = vrcp.pop %v1007
      %v1023 = vmul.f32 %v988, %v1022
      %v1024 = vrcp.pop %v1010
      %v1025 = vmul.f32 %v990, %v1024
      %v1026 = vrcp.pop %v1013
      %v1027 = vmul.f32 %v992, %v1026
      %v1028 = vpack.c.bf16 %v1017, %v1015
      %v1029 = vpack.c.bf16 %v1021, %v1019
      %v1030 = vpack.c.bf16 %v1025, %v1023
      %v1031 = vpack.c.bf16 %v1027, %v1027
      %1032 = vrot.lane.b32.xlu0 %v829, 64
      %v1033 = vpop.permute.xlu0 %1032
      %1034 = vrot.lane.b32.xlu0 %v837, 64
      %v1035 = vpop.permute.xlu0 %1034
      %1036 = vrot.lane.b32.xlu0 %v845, 64
      %v1037 = vpop.permute.xlu0 %1036
      %1038 = vrot.lane.b32.xlu0 %v846, 64
      %v1039 = vpop.permute.xlu0 %1038
      %v1044 = vsel %vm637, %v1028, 0
      %v1047 = vsel %vm637, %v1029, 0
      %v1050 = vsel %vm637, %v1030, 0
      %v1053 = vsel %vm637, %v1031, 0
      %v1056 = vand.u32 %v1039, %v745
      %1058 = vmatprep.subr.bf16.mxu0 0
      %1059 = vmatpush1.bf16.msra.mxu0 %v1033
      %1060 = vmatprep.subr.bf16.mxu0 0
      %1061 = vmatpush1.bf16.msra.mxu0 %v1035
      %1062 = vmatprep.subr.bf16.mxu0 0
      %1063 = vmatpush1.bf16.msra.mxu0 %v1037
      %1064 = vmatprep.subr.bf16.mxu0 0
      %1065 = vmatpush1.bf16.msra.mxu0 %v1056
      %1066 = vmatprep.subr.bf16.mxu0 0
      %1067 = vmatpush1.bf16.msra.mxu0 0
      %1068 = vmatprep.subr.bf16.mxu0 0
      %1069 = vmatpush1.bf16.msra.mxu0 0
      %1070 = vmatprep.subr.bf16.mxu0 0
      %1071 = vmatpush1.bf16.msra.mxu0 0
      %1072 = vmatprep.subr.bf16.mxu0 0
      %1073 = vmatpush1.bf16.msra.mxu0 0
      %1074 = vmatprep.subr.bf16.mxu0 0
      %1075 = vmatpush1.bf16.msra.mxu0 0
      %1076 = vmatprep.subr.bf16.mxu0 0
      %1077 = vmatpush1.bf16.msra.mxu0 0
      %1078 = vmatprep.subr.bf16.mxu0 0
      %1079 = vmatpush1.bf16.msra.mxu0 0
      %1080 = vmatprep.subr.bf16.mxu0 0
      %1081 = vmatpush1.bf16.msra.mxu0 0
      %1082 = vmatprep.subr.bf16.mxu0 0
      %1083 = vmatpush1.bf16.msra.mxu0 0
      %1084 = vmatprep.subr.bf16.mxu0 0
      %1085 = vmatpush1.bf16.msra.mxu0 0
      %1086 = vmatprep.subr.bf16.mxu0 0
      %1087 = vmatpush1.bf16.msra.mxu0 0
      %1088 = vmatprep.subr.bf16.mxu0 0
      %1089 = vmatpush1.bf16.msra.mxu0 0
      %1090 = vmatprep.mubr.bf16.mxu0 0
      %1091 = vmatmul.mubr.bf16.gmra.mrb[0].mxu0 %v1044
      %v1092 = vpop.f32.mrb[0].mxu0
      %v1093 = vadd.f32 0.0, %v1092
      %v1094 = vpop.f32.mrb[0].mxu0
      %v1095 = vpop.f32.mrb[0].mxu0
      %v1096 = vadd.f32 0.0, %v1095
      %v1097 = vpop.f32.mrb[0].mxu0
      %1098 = vmatprep.mubr.bf16.mxu0 0
      %1099 = vmatmul.mubr.bf16.gmra.mrb[0].mxu0 %v1047
      %v1100 = vpop.f32.mrb[0].mxu0
      %v1101 = vadd.f32 0.0, %v1100
      %v1102 = vpop.f32.mrb[0].mxu0
      %v1103 = vpop.f32.mrb[0].mxu0
      %v1104 = vadd.f32 0.0, %v1103
      %v1105 = vpop.f32.mrb[0].mxu0
      %1106 = vmatprep.mubr.bf16.mxu0 0
      %1107 = vmatmul.mubr.bf16.gmra.mrb[0].mxu0 %v1050
      %v1108 = vpop.f32.mrb[0].mxu0
      %v1109 = vadd.f32 0.0, %v1108
      %v1110 = vpop.f32.mrb[0].mxu0
      %v1111 = vpop.f32.mrb[0].mxu0
      %v1112 = vadd.f32 0.0, %v1111
      %v1113 = vpop.f32.mrb[0].mxu0
      %1114 = vmatprep.mubr.bf16.mxu0 0
      %1115 = vmatmul.mubr.bf16.gmra.mrb[0].mxu0 %v1053
      %v1116 = vpop.f32.mrb[0].mxu0
      %v1117 = vadd.f32 0.0, %v1116
      %v1118 = vpop.f32.mrb[0].mxu0
      %v1119 = vpop.f32.mrb[0].mxu0
      %v1120 = vpop.f32.mrb[0].mxu0
      %1121 = vdwg.mxu0
      %v1122 = vpack.c.bf16 %v476, %v473
      %v1123 = vpack.c.bf16 %v484, %v481
      %v1124 = vpack.c.bf16 %v492, %v489
      %v1125 = vpack.c.bf16 %v497, %v497
      %vm1130 = vcmask 1046528
      %v1131 = vrot.slane %v1122, 1
      %v1132 = vrot.slane %v1123, 1
      %v1133 = vsel %vm1130, %v1131, %v1132
      %v1134 = vrot.slane %v1124, 1
      %v1135 = vsel %vm1130, %v1132, %v1134
      %v1136 = vrot.slane %v1125, 1
      %v1137 = vsel %vm1130, %v1134, %v1136
      %1138 = vrot.lane.b32.xlu0 %v1133, 96
      %v1139 = vpop.permute.xlu0 %1138
      %1140 = vrot.lane.b32.xlu0 %v1135, 96
      %v1141 = vpop.permute.xlu0 %1140
      %1142 = vrot.lane.b32.xlu0 %v1137, 96
      %v1143 = vpop.permute.xlu0 %1142
      %1144 = vrot.lane.b32.xlu0 %v1136, 96
      %v1145 = vpop.permute.xlu0 %1144
      %v1147 = vsel %vm350, %v1133, 0
      %v1150 = vsel %vm350, %v1135, 0
      %v1153 = vsel %vm350, %v1137, 0
      %v1156 = vsel %vm350, %v1136, 0
      %v1159 = vsel %vm350, %v1139, 0
      %v1162 = vsel %vm350, %v1141, 0
      %v1165 = vsel %vm350, %v1143, 0
      %v1168 = vsel %vm350, %v1145, 0
      %1170 = vmatprep.subr.bf16.mxu0 0
      %1171 = vmatpush1.bf16.xpose.msra.mxu0 %v1159
      %1172 = vmatprep.subr.bf16.mxu0 0
      %1173 = vmatpush1.bf16.xpose.msra.mxu0 %v1162
      %1174 = vmatprep.subr.bf16.mxu0 0
      %1175 = vmatpush1.bf16.xpose.msra.mxu0 %v1165
      %1176 = vmatprep.subr.bf16.mxu0 0
      %1177 = vmatpush1.bf16.xpose.msra.mxu0 %v1168
      %1178 = vmatprep.subr.bf16.mxu0 0
      %1179 = vmatpush1.bf16.xpose.msra.mxu0 0
      %1180 = vmatprep.subr.bf16.mxu0 0
      %1181 = vmatpush1.bf16.xpose.msra.mxu0 0
      %1182 = vmatprep.subr.bf16.mxu0 0
      %1183 = vmatpush1.bf16.xpose.msra.mxu0 0
      %1184 = vmatprep.subr.bf16.mxu0 0
      %1185 = vmatpush1.bf16.xpose.msra.mxu0 0
      %1186 = vmatprep.subr.bf16.mxu0 0
      %1187 = vmatpush1.bf16.xpose.msra.mxu0 0
      %1188 = vmatprep.subr.bf16.mxu0 0
      %1189 = vmatpush1.bf16.xpose.msra.mxu0 0
      %1190 = vmatprep.subr.bf16.mxu0 0
      %1191 = vmatpush1.bf16.xpose.msra.mxu0 0
      %1192 = vmatprep.subr.bf16.mxu0 0
      %1193 = vmatpush1.bf16.xpose.msra.mxu0 0
      %1194 = vmatprep.subr.bf16.mxu0 0
      %1195 = vmatpush1.bf16.xpose.msra.mxu0 0
      %1196 = vmatprep.subr.bf16.mxu0 0
      %1197 = vmatpush1.bf16.xpose.msra.mxu0 0
      %1198 = vmatprep.subr.bf16.mxu0 0
      %1199 = vmatpush1.bf16.xpose.msra.mxu0 0
      %1200 = vmatprep.subr.bf16.mxu0 0
      %1201 = vmatpush1.bf16.xpose.msra.mxu0 0
      %1202 = vmatprep.mubr.bf16.mxu0 0
      %1203 = vmatmul.mubr.bf16.gmra.mrb[0].mxu0 %v1147
      %v1204 = vpop.f32.mrb[0].mxu0
      %v1205 = vadd.f32 0.0, %v1204
      %v1206 = vpop.f32.mrb[0].mxu0
      %v1207 = vpop.f32.mrb[0].mxu0
      %v1208 = vadd.f32 0.0, %v1207
      %v1209 = vpop.f32.mrb[0].mxu0
      %1210 = vmatprep.mubr.bf16.mxu0 0
      %1211 = vmatmul.mubr.bf16.gmra.mrb[0].mxu0 %v1150
      %v1212 = vpop.f32.mrb[0].mxu0
      %v1213 = vadd.f32 0.0, %v1212
      %v1214 = vpop.f32.mrb[0].mxu0
      %v1215 = vpop.f32.mrb[0].mxu0
      %v1216 = vadd.f32 0.0, %v1215
      %v1217 = vpop.f32.mrb[0].mxu0
      %1218 = vmatprep.mubr.bf16.mxu0 0
      %1219 = vmatmul.mubr.bf16.gmra.mrb[0].mxu0 %v1153
      %v1220 = vpop.f32.mrb[0].mxu0
      %v1221 = vadd.f32 0.0, %v1220
      %v1222 = vpop.f32.mrb[0].mxu0
      %v1223 = vpop.f32.mrb[0].mxu0
      %v1224 = vadd.f32 0.0, %v1223
      %v1225 = vpop.f32.mrb[0].mxu0
      %1226 = vmatprep.mubr.bf16.mxu0 0
      %1227 = vmatmul.mubr.bf16.gmra.mrb[0].mxu0 %v1156
      %v1228 = vpop.f32.mrb[0].mxu0
      %v1229 = vadd.f32 0.0, %v1228
      %v1230 = vpop.f32.mrb[0].mxu0
      %v1231 = vpop.f32.mrb[0].mxu0
      %v1232 = vpop.f32.mrb[0].mxu0
      %1233 = vdwg.mxu0
      %v1234 = vmul.f32 %v1205, 0.17677669
      %v1235 = vmul.f32 %v1208, 0.17677669
      %v1236 = vmul.f32 %v1213, 0.17677669
      %v1237 = vmul.f32 %v1216, 0.17677669
      %v1238 = vmul.f32 %v1221, 0.17677669
      %v1239 = vmul.f32 %v1224, 0.17677669
      %v1240 = vmul.f32 %v1229, 0.17677669
      %v1241 = vsel %vm637, %v1234, -inf
      %1242 = vmax.xlane.f32.xlu0 %v1241
      %v1243 = vpop.xlane.xlu0 %1242
      %v1244 = vsel %vm637, %v1235, -inf
      %1245 = vmax.xlane.f32.xlu0 %v1244
      %v1246 = vpop.xlane.xlu0 %1245
      %v1247 = vsel %vm637, %v1236, -inf
      %1248 = vmax.xlane.f32.xlu0 %v1247
      %v1249 = vpop.xlane.xlu0 %1248
      %v1250 = vsel %vm637, %v1237, -inf
      %1251 = vmax.xlane.f32.xlu0 %v1250
      %v1252 = vpop.xlane.xlu0 %1251
      %v1253 = vsel %vm637, %v1238, -inf
      %1254 = vmax.xlane.f32.xlu0 %v1253
      %v1255 = vpop.xlane.xlu0 %1254
      %v1256 = vsel %vm637, %v1239, -inf
      %1257 = vmax.xlane.f32.xlu0 %v1256
      %v1258 = vpop.xlane.xlu0 %1257
      %v1259 = vsel %vm656, %v1240, -inf
      %1260 = vmax.xlane.f32.xlu0 %v1259
      %v1261 = vpop.xlane.xlu0 %1260
      %v1262 = vsub.f32 %v1234, %v1243
      %v1263 = vsub.f32 %v1235, %v1246
      %v1264 = vsub.f32 %v1236, %v1249
      %v1265 = vsub.f32 %v1237, %v1252
      %v1266 = vsub.f32 %v1238, %v1255
      %v1267 = vsub.f32 %v1239, %v1258
      %v1268 = vsub.f32 %v1240, %v1261
      %v1269 = vmul.f32 %v1262, 1.442695
      %v1270 = vpow.pop %v1269
      %v1271 = vmul.f32 %v1263, 1.442695
      %v1272 = vpow.pop %v1271
      %v1273 = vmul.f32 %v1264, 1.442695
      %v1274 = vpow.pop %v1273
      %v1275 = vmul.f32 %v1265, 1.442695
      %v1276 = vpow.pop %v1275
      %v1277 = vmul.f32 %v1266, 1.442695
      %v1278 = vpow.pop %v1277
      %v1279 = vmul.f32 %v1267, 1.442695
      %v1280 = vpow.pop %v1279
      %v1281 = vmul.f32 %v1268, 1.442695
      %v1282 = vpow.pop %v1281
      %v1283 = vsel %vm637, %v1270, 0.0
      %1284 = vadd.xlane.f32.xlu0 %v1283
      %v1285 = vpop.xlane.xlu0 %1284
      %v1286 = vsel %vm637, %v1272, 0.0
      %1287 = vadd.xlane.f32.xlu0 %v1286
      %v1288 = vpop.xlane.xlu0 %1287
      %v1289 = vsel %vm637, %v1274, 0.0
      %1290 = vadd.xlane.f32.xlu0 %v1289
      %v1291 = vpop.xlane.xlu0 %1290
      %v1292 = vsel %vm637, %v1276, 0.0
      %1293 = vadd.xlane.f32.xlu0 %v1292
      %v1294 = vpop.xlane.xlu0 %1293
      %v1295 = vsel %vm637, %v1278, 0.0
      %1296 = vadd.xlane.f32.xlu0 %v1295
      %v1297 = vpop.xlane.xlu0 %1296
      %v1298 = vsel %vm637, %v1280, 0.0
      %1299 = vadd.xlane.f32.xlu0 %v1298
      %v1300 = vpop.xlane.xlu0 %1299
      %v1301 = vsel %vm656, %v1282, 0.0
      %1302 = vadd.xlane.f32.xlu0 %v1301
      %v1303 = vpop.xlane.xlu0 %1302
      %v1304 = vrcp.pop %v1285
      %v1305 = vmul.f32 %v1270, %v1304
      %v1306 = vrcp.pop %v1288
      %v1307 = vmul.f32 %v1272, %v1306
      %v1308 = vrcp.pop %v1291
      %v1309 = vmul.f32 %v1274, %v1308
      %v1310 = vrcp.pop %v1294
      %v1311 = vmul.f32 %v1276, %v1310
      %v1312 = vrcp.pop %v1297
      %v1313 = vmul.f32 %v1278, %v1312
      %v1314 = vrcp.pop %v1300
      %v1315 = vmul.f32 %v1280, %v1314
      %v1316 = vrcp.pop %v1303
      %v1317 = vmul.f32 %v1282, %v1316
      %v1318 = vpack.c.bf16 %v1307, %v1305
      %v1319 = vpack.c.bf16 %v1311, %v1309
      %v1320 = vpack.c.bf16 %v1315, %v1313
      %v1321 = vpack.c.bf16 %v1317, %v1317
      %1322 = vrot.lane.b32.xlu0 %v1133, 64
      %v1323 = vpop.permute.xlu0 %1322
      %1324 = vrot.lane.b32.xlu0 %v1135, 64
      %v1325 = vpop.permute.xlu0 %1324
      %1326 = vrot.lane.b32.xlu0 %v1137, 64
      %v1327 = vpop.permute.xlu0 %1326
      %1328 = vrot.lane.b32.xlu0 %v1136, 64
      %v1329 = vpop.permute.xlu0 %1328
      %v1334 = vsel %vm637, %v1318, 0
      %v1337 = vsel %vm637, %v1319, 0
      %v1340 = vsel %vm637, %v1320, 0
      %v1343 = vsel %vm637, %v1321, 0
      %v1346 = vand.u32 %v1329, %v745
      %1348 = vmatprep.subr.bf16.mxu0 0
      %1349 = vmatpush1.bf16.msra.mxu0 %v1323
      %1350 = vmatprep.subr.bf16.mxu0 0
      %1351 = vmatpush1.bf16.msra.mxu0 %v1325
      %1352 = vmatprep.subr.bf16.mxu0 0
      %1353 = vmatpush1.bf16.msra.mxu0 %v1327
      %1354 = vmatprep.subr.bf16.mxu0 0
      %1355 = vmatpush1.bf16.msra.mxu0 %v1346
      %1356 = vmatprep.subr.bf16.mxu0 0
      %1357 = vmatpush1.bf16.msra.mxu0 0
      %1358 = vmatprep.subr.bf16.mxu0 0
      %1359 = vmatpush1.bf16.msra.mxu0 0
      %1360 = vmatprep.subr.bf16.mxu0 0
      %1361 = vmatpush1.bf16.msra.mxu0 0
      %1362 = vmatprep.subr.bf16.mxu0 0
      %1363 = vmatpush1.bf16.msra.mxu0 0
      %1364 = vmatprep.subr.bf16.mxu0 0
      %1365 = vmatpush1.bf16.msra.mxu0 0
      %1366 = vmatprep.subr.bf16.mxu0 0
      %1367 = vmatpush1.bf16.msra.mxu0 0
      %1368 = vmatprep.subr.bf16.mxu0 0
      %1369 = vmatpush1.bf16.msra.mxu0 0
      %1370 = vmatprep.subr.bf16.mxu0 0
      %1371 = vmatpush1.bf16.msra.mxu0 0
      %1372 = vmatprep.subr.bf16.mxu0 0
      %1373 = vmatpush1.bf16.msra.mxu0 0
      %1374 = vmatprep.subr.bf16.mxu0 0
      %1375 = vmatpush1.bf16.msra.mxu0 0
      %1376 = vmatprep.subr.bf16.mxu0 0
      %1377 = vmatpush1.bf16.msra.mxu0 0
      %1378 = vmatprep.subr.bf16.mxu0 0
      %1379 = vmatpush1.bf16.msra.mxu0 0
      %1380 = vmatprep.mubr.bf16.mxu0 0
      %1381 = vmatmul.mubr.bf16.gmra.mrb[0].mxu0 %v1334
      %v1382 = vpop.f32.mrb[0].mxu0
      %v1383 = vadd.f32 0.0, %v1382
      %v1384 = vpop.f32.mrb[0].mxu0
      %v1385 = vpop.f32.mrb[0].mxu0
      %v1386 = vadd.f32 0.0, %v1385
      %v1387 = vpop.f32.mrb[0].mxu0
      %1388 = vmatprep.mubr.bf16.mxu0 0
      %1389 = vmatmul.mubr.bf16.gmra.mrb[0].mxu0 %v1337
      %v1390 = vpop.f32.mrb[0].mxu0
      %v1391 = vadd.f32 0.0, %v1390
      %v1392 = vpop.f32.mrb[0].mxu0
      %v1393 = vpop.f32.mrb[0].mxu0
      %v1394 = vadd.f32 0.0, %v1393
      %v1395 = vpop.f32.mrb[0].mxu0
      %1396 = vmatprep.mubr.bf16.mxu0 0
      %1397 = vmatmul.mubr.bf16.gmra.mrb[0].mxu0 %v1340
      %v1398 = vpop.f32.mrb[0].mxu0
      %v1399 = vadd.f32 0.0, %v1398
      %v1400 = vpop.f32.mrb[0].mxu0
      %v1401 = vpop.f32.mrb[0].mxu0
      %v1402 = vadd.f32 0.0, %v1401
      %v1403 = vpop.f32.mrb[0].mxu0
      %1404 = vmatprep.mubr.bf16.mxu0 0
      %1405 = vmatmul.mubr.bf16.gmra.mrb[0].mxu0 %v1343
      %v1406 = vpop.f32.mrb[0].mxu0
      %v1407 = vadd.f32 0.0, %v1406
      %v1408 = vpop.f32.mrb[0].mxu0
      %v1409 = vpop.f32.mrb[0].mxu0
      %v1410 = vpop.f32.mrb[0].mxu0
      %1411 = vdwg.mxu0
      %v1412 = vpack.c.bf16 %v500, %v497
      %v1413 = vpack.c.bf16 %v508, %v505
      %v1414 = vpack.c.bf16 %v516, %v513
      %v1415 = vpack.c.bf16 %v521, %v521
      %vm1416 = vsmask.f32 6400
      %v1418 = vshrl.u32 %v1412, 16
      %v1420 = vrot.slane %v1418, 1
      %v1421 = vshll.u32 %v1412, 16
      %v1423 = vrot.slane %v1421, 2
      %v1424 = vor.u32 %v1420, %v1423
      %v1426 = vshrl.u32 %v1413, 16
      %v1428 = vrot.slane %v1426, 1
      %v1429 = vshll.u32 %v1413, 16
      %v1431 = vrot.slane %v1429, 2
      %v1432 = vor.u32 %v1428, %v1431
      %v1433 = vsel %vm1416, %v1424, %v1432
      %v1435 = vshrl.u32 %v1414, 16
      %v1437 = vrot.slane %v1435, 1
      %v1438 = vshll.u32 %v1414, 16
      %v1440 = vrot.slane %v1438, 2
      %v1441 = vor.u32 %v1437, %v1440
      %v1442 = vsel %vm1416, %v1432, %v1441
      %v1444 = vshrl.u32 %v1415, 16
      %v1446 = vrot.slane %v1444, 1
      %v1447 = vshll.u32 %v1415, 16
      %v1449 = vrot.slane %v1447, 2
      %v1450 = vor.u32 %v1446, %v1449
      %v1451 = vsel %vm1416, %v1441, %v1450
      %1452 = vrot.lane.b32.xlu0 %v1433, 96
      %v1453 = vpop.permute.xlu0 %1452
      %1454 = vrot.lane.b32.xlu0 %v1442, 96
      %v1455 = vpop.permute.xlu0 %1454
      %1456 = vrot.lane.b32.xlu0 %v1451, 96
      %v1457 = vpop.permute.xlu0 %1456
      %1458 = vrot.lane.b32.xlu0 %v1446, 96
      %v1459 = vpop.permute.xlu0 %1458
      %v1461 = vsel %vm350, %v1433, 0
      %v1464 = vsel %vm350, %v1442, 0
      %v1467 = vsel %vm350, %v1451, 0
      %v1470 = vsel %vm350, %v1446, 0
      %v1473 = vsel %vm350, %v1453, 0
      %v1476 = vsel %vm350, %v1455, 0
      %v1479 = vsel %vm350, %v1457, 0
      %v1482 = vsel %vm350, %v1459, 0
      %1484 = vmatprep.subr.bf16.mxu0 0
      %1485 = vmatpush1.bf16.xpose.msra.mxu0 %v1473
      %1486 = vmatprep.subr.bf16.mxu0 0
      %1487 = vmatpush1.bf16.xpose.msra.mxu0 %v1476
      %1488 = vmatprep.subr.bf16.mxu0 0
      %1489 = vmatpush1.bf16.xpose.msra.mxu0 %v1479
      %1490 = vmatprep.subr.bf16.mxu0 0
      %1491 = vmatpush1.bf16.xpose.msra.mxu0 %v1482
      %1492 = vmatprep.subr.bf16.mxu0 0
      %1493 = vmatpush1.bf16.xpose.msra.mxu0 0
      %1494 = vmatprep.subr.bf16.mxu0 0
      %1495 = vmatpush1.bf16.xpose.msra.mxu0 0
      %1496 = vmatprep.subr.bf16.mxu0 0
      %1497 = vmatpush1.bf16.xpose.msra.mxu0 0
      %1498 = vmatprep.subr.bf16.mxu0 0
      %1499 = vmatpush1.bf16.xpose.msra.mxu0 0
      %1500 = vmatprep.subr.bf16.mxu0 0
      %1501 = vmatpush1.bf16.xpose.msra.mxu0 0
      %1502 = vmatprep.subr.bf16.mxu0 0
      %1503 = vmatpush1.bf16.xpose.msra.mxu0 0
      %1504 = vmatprep.subr.bf16.mxu0 0
      %1505 = vmatpush1.bf16.xpose.msra.mxu0 0
      %1506 = vmatprep.subr.bf16.mxu0 0
      %1507 = vmatpush1.bf16.xpose.msra.mxu0 0
      %1508 = vmatprep.subr.bf16.mxu0 0
      %1509 = vmatpush1.bf16.xpose.msra.mxu0 0
      %1510 = vmatprep.subr.bf16.mxu0 0
      %1511 = vmatpush1.bf16.xpose.msra.mxu0 0
      %1512 = vmatprep.subr.bf16.mxu0 0
      %1513 = vmatpush1.bf16.xpose.msra.mxu0 0
      %1514 = vmatprep.subr.bf16.mxu0 0
      %1515 = vmatpush1.bf16.xpose.msra.mxu0 0
      %1516 = vmatprep.mubr.bf16.mxu0 0
      %1517 = vmatmul.mubr.bf16.gmra.mrb[0].mxu0 %v1461
      %v1518 = vpop.f32.mrb[0].mxu0
      %v1519 = vadd.f32 0.0, %v1518
      %v1520 = vpop.f32.mrb[0].mxu0
      %v1521 = vpop.f32.mrb[0].mxu0
      %v1522 = vadd.f32 0.0, %v1521
      %v1523 = vpop.f32.mrb[0].mxu0
      %1524 = vmatprep.mubr.bf16.mxu0 0
      %1525 = vmatmul.mubr.bf16.gmra.mrb[0].mxu0 %v1464
      %v1526 = vpop.f32.mrb[0].mxu0
      %v1527 = vadd.f32 0.0, %v1526
      %v1528 = vpop.f32.mrb[0].mxu0
      %v1529 = vpop.f32.mrb[0].mxu0
      %v1530 = vadd.f32 0.0, %v1529
      %v1531 = vpop.f32.mrb[0].mxu0
      %1532 = vmatprep.mubr.bf16.mxu0 0
      %1533 = vmatmul.mubr.bf16.gmra.mrb[0].mxu0 %v1467
      %v1534 = vpop.f32.mrb[0].mxu0
      %v1535 = vadd.f32 0.0, %v1534
      %v1536 = vpop.f32.mrb[0].mxu0
      %v1537 = vpop.f32.mrb[0].mxu0
      %v1538 = vadd.f32 0.0, %v1537
      %v1539 = vpop.f32.mrb[0].mxu0
      %1540 = vmatprep.mubr.bf16.mxu0 0
      %1541 = vmatmul.mubr.bf16.gmra.mrb[0].mxu0 %v1470
      %v1542 = vpop.f32.mrb[0].mxu0
      %v1543 = vadd.f32 0.0, %v1542
      %v1544 = vpop.f32.mrb[0].mxu0
      %v1545 = vpop.f32.mrb[0].mxu0
      %v1546 = vpop.f32.mrb[0].mxu0
      %1547 = vdwg.mxu0
      %v1548 = vmul.f32 %v1519, 0.17677669
      %v1549 = vmul.f32 %v1522, 0.17677669
      %v1550 = vmul.f32 %v1527, 0.17677669
      %v1551 = vmul.f32 %v1530, 0.17677669
      %v1552 = vmul.f32 %v1535, 0.17677669
      %v1553 = vmul.f32 %v1538, 0.17677669
      %v1554 = vmul.f32 %v1543, 0.17677669
      %v1555 = vsel %vm637, %v1548, -inf
      %1556 = vmax.xlane.f32.xlu0 %v1555
      %v1557 = vpop.xlane.xlu0 %1556
      %v1558 = vsel %vm637, %v1549, -inf
      %1559 = vmax.xlane.f32.xlu0 %v1558
      %v1560 = vpop.xlane.xlu0 %1559
      %v1561 = vsel %vm637, %v1550, -inf
      %1562 = vmax.xlane.f32.xlu0 %v1561
      %v1563 = vpop.xlane.xlu0 %1562
      %v1564 = vsel %vm637, %v1551, -inf
      %1565 = vmax.xlane.f32.xlu0 %v1564
      %v1566 = vpop.xlane.xlu0 %1565
      %v1567 = vsel %vm637, %v1552, -inf
      %1568 = vmax.xlane.f32.xlu0 %v1567
      %v1569 = vpop.xlane.xlu0 %1568
      %v1570 = vsel %vm637, %v1553, -inf
      %1571 = vmax.xlane.f32.xlu0 %v1570
      %v1572 = vpop.xlane.xlu0 %1571
      %v1573 = vsel %vm656, %v1554, -inf
      %1574 = vmax.xlane.f32.xlu0 %v1573
      %v1575 = vpop.xlane.xlu0 %1574
      %v1576 = vsub.f32 %v1548, %v1557
      %v1577 = vsub.f32 %v1549, %v1560
      %v1578 = vsub.f32 %v1550, %v1563
      %v1579 = vsub.f32 %v1551, %v1566
      %v1580 = vsub.f32 %v1552, %v1569
      %v1581 = vsub.f32 %v1553, %v1572
      %v1582 = vsub.f32 %v1554, %v1575
      %v1583 = vmul.f32 %v1576, 1.442695
      %v1584 = vpow.pop %v1583
      %v1585 = vmul.f32 %v1577, 1.442695
      %v1586 = vpow.pop %v1585
      %v1587 = vmul.f32 %v1578, 1.442695
      %v1588 = vpow.pop %v1587
      %v1589 = vmul.f32 %v1579, 1.442695
      %v1590 = vpow.pop %v1589
      %v1591 = vmul.f32 %v1580, 1.442695
      %v1592 = vpow.pop %v1591
      %v1593 = vmul.f32 %v1581, 1.442695
      %v1594 = vpow.pop %v1593
      %v1595 = vmul.f32 %v1582, 1.442695
      %v1596 = vpow.pop %v1595
      %v1597 = vsel %vm637, %v1584, 0.0
      %1598 = vadd.xlane.f32.xlu0 %v1597
      %v1599 = vpop.xlane.xlu0 %1598
      %v1600 = vsel %vm637, %v1586, 0.0
      %1601 = vadd.xlane.f32.xlu0 %v1600
      %v1602 = vpop.xlane.xlu0 %1601
      %v1603 = vsel %vm637, %v1588, 0.0
      %1604 = vadd.xlane.f32.xlu0 %v1603
      %v1605 = vpop.xlane.xlu0 %1604
      %v1606 = vsel %vm637, %v1590, 0.0
      %1607 = vadd.xlane.f32.xlu0 %v1606
      %v1608 = vpop.xlane.xlu0 %1607
      %v1609 = vsel %vm637, %v1592, 0.0
      %1610 = vadd.xlane.f32.xlu0 %v1609
      %v1611 = vpop.xlane.xlu0 %1610
      %v1612 = vsel %vm637, %v1594, 0.0
      %1613 = vadd.xlane.f32.xlu0 %v1612
      %v1614 = vpop.xlane.xlu0 %1613
      %v1615 = vsel %vm656, %v1596, 0.0
      %1616 = vadd.xlane.f32.xlu0 %v1615
      %v1617 = vpop.xlane.xlu0 %1616
      %v1618 = vrcp.pop %v1599
      %v1619 = vmul.f32 %v1584, %v1618
      %v1620 = vrcp.pop %v1602
      %v1621 = vmul.f32 %v1586, %v1620
      %v1622 = vrcp.pop %v1605
      %v1623 = vmul.f32 %v1588, %v1622
      %v1624 = vrcp.pop %v1608
      %v1625 = vmul.f32 %v1590, %v1624
      %v1626 = vrcp.pop %v1611
      %v1627 = vmul.f32 %v1592, %v1626
      %v1628 = vrcp.pop %v1614
      %v1629 = vmul.f32 %v1594, %v1628
      %v1630 = vrcp.pop %v1617
      %v1631 = vmul.f32 %v1596, %v1630
      %v1632 = vpack.c.bf16 %v1621, %v1619
      %v1633 = vpack.c.bf16 %v1625, %v1623
      %v1634 = vpack.c.bf16 %v1629, %v1627
      %v1635 = vpack.c.bf16 %v1631, %v1631
      %1636 = vrot.lane.b32.xlu0 %v1433, 64
      %v1637 = vpop.permute.xlu0 %1636
      %1638 = vrot.lane.b32.xlu0 %v1442, 64
      %v1639 = vpop.permute.xlu0 %1638
      %1640 = vrot.lane.b32.xlu0 %v1451, 64
      %v1641 = vpop.permute.xlu0 %1640
      %1642 = vrot.lane.b32.xlu0 %v1446, 64
      %v1643 = vpop.permute.xlu0 %1642
      %v1648 = vsel %vm637, %v1632, 0
      %v1651 = vsel %vm637, %v1633, 0
      %v1654 = vsel %vm637, %v1634, 0
      %v1657 = vsel %vm637, %v1635, 0
      %v1660 = vand.u32 %v1643, %v745
      %1662 = vmatprep.subr.bf16.mxu0 0
      %1663 = vmatpush1.bf16.msra.mxu0 %v1637
      %1664 = vmatprep.subr.bf16.mxu0 0
      %1665 = vmatpush1.bf16.msra.mxu0 %v1639
      %1666 = vmatprep.subr.bf16.mxu0 0
      %1667 = vmatpush1.bf16.msra.mxu0 %v1641
      %1668 = vmatprep.subr.bf16.mxu0 0
      %1669 = vmatpush1.bf16.msra.mxu0 %v1660
      %1670 = vmatprep.subr.bf16.mxu0 0
      %1671 = vmatpush1.bf16.msra.mxu0 0
      %1672 = vmatprep.subr.bf16.mxu0 0
      %1673 = vmatpush1.bf16.msra.mxu0 0
      %1674 = vmatprep.subr.bf16.mxu0 0
      %1675 = vmatpush1.bf16.msra.mxu0 0
      %1676 = vmatprep.subr.bf16.mxu0 0
      %1677 = vmatpush1.bf16.msra.mxu0 0
      %1678 = vmatprep.subr.bf16.mxu0 0
      %1679 = vmatpush1.bf16.msra.mxu0 0
      %1680 = vmatprep.subr.bf16.mxu0 0
      %1681 = vmatpush1.bf16.msra.mxu0 0
      %1682 = vmatprep.subr.bf16.mxu0 0
      %1683 = vmatpush1.bf16.msra.mxu0 0
      %1684 = vmatprep.subr.bf16.mxu0 0
      %1685 = vmatpush1.bf16.msra.mxu0 0
      %1686 = vmatprep.subr.bf16.mxu0 0
      %1687 = vmatpush1.bf16.msra.mxu0 0
      %1688 = vmatprep.subr.bf16.mxu0 0
      %1689 = vmatpush1.bf16.msra.mxu0 0
      %1690 = vmatprep.subr.bf16.mxu0 0
      %1691 = vmatpush1.bf16.msra.mxu0 0
      %1692 = vmatprep.subr.bf16.mxu0 0
      %1693 = vmatpush1.bf16.msra.mxu0 0
      %1694 = vmatprep.mubr.bf16.mxu0 0
      %1695 = vmatmul.mubr.bf16.gmra.mrb[0].mxu0 %v1648
      %v1696 = vpop.f32.mrb[0].mxu0
      %v1697 = vadd.f32 0.0, %v1696
      %v1698 = vpop.f32.mrb[0].mxu0
      %v1699 = vpop.f32.mrb[0].mxu0
      %v1700 = vadd.f32 0.0, %v1699
      %v1701 = vpop.f32.mrb[0].mxu0
      %1702 = vmatprep.mubr.bf16.mxu0 0
      %1703 = vmatmul.mubr.bf16.gmra.mrb[0].mxu0 %v1651
      %v1704 = vpop.f32.mrb[0].mxu0
      %v1705 = vadd.f32 0.0, %v1704
      %v1706 = vpop.f32.mrb[0].mxu0
      %v1707 = vpop.f32.mrb[0].mxu0
      %v1708 = vadd.f32 0.0, %v1707
      %v1709 = vpop.f32.mrb[0].mxu0
      %1710 = vmatprep.mubr.bf16.mxu0 0
      %1711 = vmatmul.mubr.bf16.gmra.mrb[0].mxu0 %v1654
      %v1712 = vpop.f32.mrb[0].mxu0
      %v1713 = vadd.f32 0.0, %v1712
      %v1714 = vpop.f32.mrb[0].mxu0
      %v1715 = vpop.f32.mrb[0].mxu0
      %v1716 = vadd.f32 0.0, %v1715
      %v1717 = vpop.f32.mrb[0].mxu0
      %1718 = vmatprep.mubr.bf16.mxu0 0
      %1719 = vmatmul.mubr.bf16.gmra.mrb[0].mxu0 %v1657
      %v1720 = vpop.f32.mrb[0].mxu0
      %v1721 = vadd.f32 0.0, %v1720
      %v1722 = vpop.f32.mrb[0].mxu0
      %v1723 = vpop.f32.mrb[0].mxu0
      %v1724 = vpop.f32.mrb[0].mxu0
      %1725 = vdwg.mxu0
      %v1733 = vrot.slane %v1093, 7
      %v1734 = vrot.slane %v1096, 7
      %v1735 = vsel %vm743, %v1733, %v1734
      %v1736 = vrot.slane %v1101, 7
      %v1737 = vsel %vm743, %v1734, %v1736
      %v1738 = vrot.slane %v1104, 7
      %v1739 = vsel %vm743, %v1736, %v1738
      %v1740 = vrot.slane %v1109, 7
      %v1741 = vsel %vm743, %v1738, %v1740
      %v1742 = vrot.slane %v1112, 7
      %v1743 = vsel %vm743, %v1740, %v1742
      %v1744 = vrot.slane %v1117, 7
      %v1745 = vsel %vm743, %v1742, %v1744
      %vm1760 = vcmask 1041408
      %v1761 = vrot.slane %v1383, 6
      %v1762 = vrot.slane %v1386, 6
      %v1763 = vsel %vm1760, %v1761, %v1762
      %v1764 = vrot.slane %v1391, 6
      %v1765 = vsel %vm1760, %v1762, %v1764
      %v1766 = vrot.slane %v1394, 6
      %v1767 = vsel %vm1760, %v1764, %v1766
      %v1768 = vrot.slane %v1399, 6
      %v1769 = vsel %vm1760, %v1766, %v1768
      %v1770 = vrot.slane %v1402, 6
      %v1771 = vsel %vm1760, %v1768, %v1770
      %v1772 = vrot.slane %v1407, 6
      %v1773 = vsel %vm1760, %v1770, %v1772
      %vm1788 = vcmask 1042432
      %v1789 = vrot.slane %v1697, 5
      %v1790 = vrot.slane %v1700, 5
      %v1791 = vsel %vm1788, %v1789, %v1790
      %v1792 = vrot.slane %v1705, 5
      %v1793 = vsel %vm1788, %v1790, %v1792
      %v1794 = vrot.slane %v1708, 5
      %v1795 = vsel %vm1788, %v1792, %v1794
      %v1796 = vrot.slane %v1713, 5
      %v1797 = vsel %vm1788, %v1794, %v1796
      %v1798 = vrot.slane %v1716, 5
      %v1799 = vsel %vm1788, %v1796, %v1798
      %v1800 = vrot.slane %v1721, 5
      %v1801 = vsel %vm1788, %v1798, %v1800
      %v1809 = vsel %vm743, %v808, %v1733
      %v1810 = vsel %vm1760, %v1745, %v1761
      %v1811 = vsel %vm1788, %v1773, %v1789
      %v1812 = vpack.c.bf16 %v787, %v784
      %v1813 = vpack.c.bf16 %v795, %v792
      %v1814 = vpack.c.bf16 %v803, %v800
      %v1815 = vpack.c.bf16 %v1735, %v1809
      %v1816 = vpack.c.bf16 %v1739, %v1737
      %v1817 = vpack.c.bf16 %v1743, %v1741
      %v1818 = vpack.c.bf16 %v1763, %v1810
      %v1819 = vpack.c.bf16 %v1767, %v1765
      %v1820 = vpack.c.bf16 %v1771, %v1769
      %v1821 = vpack.c.bf16 %v1791, %v1811
      %v1822 = vpack.c.bf16 %v1795, %v1793
      %v1823 = vpack.c.bf16 %v1799, %v1797
      %v1824 = vpack.c.bf16 %v1801, %v1801
      %v1825 = vld [vmem:[%s3] sm:$0xf]
      %v1826 = vld [vmem:[%s3 + $0x4] sm:$0xf]
      %v1827 = vld [vmem:[%s3 + $0x8] sm:$0xf]
      %v1828 = vld [vmem:[%s3 + $0xc] sm:$0xf]
      %v1829 = vld [vmem:[%s239] sm:$0xff]
      %v1830 = vld [vmem:[%s239 + $0x8] sm:$0xff]
      %v1831 = vld [vmem:[%s239 + $0x10] sm:$0xff]
      %v1832 = vld [vmem:[%s239 + $0x18] sm:$0xff]
      %v1833 = vld [vmem:[%s239 + $0x20] sm:$0xff]
      %v1834 = vld [vmem:[%s239 + $0x28] sm:$0xff]
      %v1835 = vld [vmem:[%s239 + $0x30] sm:$0xff]
      %v1836 = vld [vmem:[%s239 + $0x38] sm:$0xff]
      %v1837 = vld [vmem:[%s239 + $0x40] sm:$0xff]
      %v1838 = vld [vmem:[%s239 + $0x48] sm:$0xff]
      %v1839 = vld [vmem:[%s239 + $0x50] sm:$0xff]
      %v1840 = vld [vmem:[%s239 + $0x58] sm:$0xff]
      %v1841 = vld [vmem:[%s239 + $0x60] sm:$0xff]
      %v1842 = vld [vmem:[%s239 + $0x68] sm:$0xff]
      %v1843 = vld [vmem:[%s239 + $0x70] sm:$0xff]
      %v1844 = vld [vmem:[%s239 + $0x78] sm:$0xff]
      %v1845 = vld [vmem:[%s239 + $0x80] sm:$0xff]
      %v1846 = vld [vmem:[%s239 + $0x88] sm:$0xff]
      %v1847 = vld [vmem:[%s239 + $0x90] sm:$0xff]
      %v1848 = vld [vmem:[%s239 + $0x98] sm:$0xff]
      %v1849 = vld [vmem:[%s239 + $0xa0] sm:$0xff]
      %v1850 = vld [vmem:[%s239 + $0xa8] sm:$0xff]
      %v1851 = vld [vmem:[%s239 + $0xb0] sm:$0xff]
      %v1852 = vld [vmem:[%s239 + $0xb8] sm:$0xff]
      %v1853 = vld [vmem:[%s239 + $0xc0] sm:$0xf]
      %v1854 = vld [vmem:[%s4] sm:$0x1]
      %v1856 = vlaneseq
      %v1857 = vshrl.u32 %v1856, 7
      %v1858 = vsub.s32 0, %v1857
      %v1859 = vrot.slane %v1854, %v1858
      %v1865 = vunpack.c.l.b16 %v1825
      %v1866 = vunpack.c.l.b16 %v1826
      %v1867 = vunpack.c.l.b16 %v1827
      %v1868 = vunpack.c.l.b16 %v1828
      %v1869 = vpack.c.b16 %v1866, %v1865
      %v1870 = vpack.c.b16 %v1868, %v1867
      %v1874 = vsel %vm350, %v1812, 0
      %v1877 = vsel %vm350, %v1813, 0
      %v1880 = vsel %vm350, %v1814, 0
      %v1883 = vsel %vm350, %v1815, 0
      %v1886 = vsel %vm350, %v1816, 0
      %v1889 = vsel %vm350, %v1817, 0
      %v1892 = vsel %vm350, %v1818, 0
      %v1895 = vsel %vm350, %v1819, 0
      %v1898 = vsel %vm350, %v1820, 0
      %v1901 = vsel %vm350, %v1821, 0
      %v1904 = vsel %vm350, %v1822, 0
      %v1907 = vsel %vm350, %v1823, 0
      %v1910 = vsel %vm350, %v1824, 0
      %1912 = vmatprep.subr.bf16.mxu0 0
      %1913 = vmatpush1.bf16.msra.mxu0 %v1869
      %1914 = vmatprep.subr.bf16.mxu0 0
      %1915 = vmatpush1.bf16.msra.mxu0 %v1870
      %1916 = vmatprep.subr.bf16.mxu0 0
      %1917 = vmatpush1.bf16.msra.mxu0 0
      %1918 = vmatprep.subr.bf16.mxu0 0
      %1919 = vmatpush1.bf16.msra.mxu0 0
      %1920 = vmatprep.subr.bf16.mxu0 0
      %1921 = vmatpush1.bf16.msra.mxu0 0
      %1922 = vmatprep.subr.bf16.mxu0 0
      %1923 = vmatpush1.bf16.msra.mxu0 0
      %1924 = vmatprep.subr.bf16.mxu0 0
      %1925 = vmatpush1.bf16.msra.mxu0 0
      %1926 = vmatprep.subr.bf16.mxu0 0
      %1927 = vmatpush1.bf16.msra.mxu0 0
      %1928 = vmatprep.subr.bf16.mxu0 0
      %1929 = vmatpush1.bf16.msra.mxu0 0
      %1930 = vmatprep.subr.bf16.mxu0 0
      %1931 = vmatpush1.bf16.msra.mxu0 0
      %1932 = vmatprep.subr.bf16.mxu0 0
      %1933 = vmatpush1.bf16.msra.mxu0 0
      %1934 = vmatprep.subr.bf16.mxu0 0
      %1935 = vmatpush1.bf16.msra.mxu0 0
      %1936 = vmatprep.subr.bf16.mxu0 0
      %1937 = vmatpush1.bf16.msra.mxu0 0
      %1938 = vmatprep.subr.bf16.mxu0 0
      %1939 = vmatpush1.bf16.msra.mxu0 0
      %1940 = vmatprep.subr.bf16.mxu0 0
      %1941 = vmatpush1.bf16.msra.mxu0 0
      %1942 = vmatprep.subr.bf16.mxu0 0
      %1943 = vmatpush1.bf16.msra.mxu0 0
      %1944 = vmatprep.mubr.bf16.mxu0 0
      %1945 = vmatmul.mubr.bf16.gmra.mrb[0].mxu0 %v1874
      %v1946 = vpop.f32.mrb[0].mxu0
      %v1947 = vadd.f32 %v1859, %v1946
      %v1948 = vpop.f32.mrb[0].mxu0
      %v1949 = vpop.f32.mrb[0].mxu0
      %v1950 = vadd.f32 %v1859, %v1949
      %v1951 = vpop.f32.mrb[0].mxu0
      %1952 = vmatprep.mubr.bf16.mxu0 0
      %1953 = vmatmul.mubr.bf16.gmra.mrb[0].mxu0 %v1877
      %v1954 = vpop.f32.mrb[0].mxu0
      %v1955 = vadd.f32 %v1859, %v1954
      %v1956 = vpop.f32.mrb[0].mxu0
      %v1957 = vpop.f32.mrb[0].mxu0
      %v1958 = vadd.f32 %v1859, %v1957
      %v1959 = vpop.f32.mrb[0].mxu0
      %1960 = vmatprep.mubr.bf16.mxu0 0
      %1961 = vmatmul.mubr.bf16.gmra.mrb[0].mxu0 %v1880
      %v1962 = vpop.f32.mrb[0].mxu0
      %v1963 = vadd.f32 %v1859, %v1962
      %v1964 = vpop.f32.mrb[0].mxu0
      %v1965 = vpop.f32.mrb[0].mxu0
      %v1966 = vadd.f32 %v1859, %v1965
      %v1967 = vpop.f32.mrb[0].mxu0
      %1968 = vmatprep.mubr.bf16.mxu0 0
      %1969 = vmatmul.mubr.bf16.gmra.mrb[0].mxu0 %v1883
      %v1970 = vpop.f32.mrb[0].mxu0
      %v1971 = vadd.f32 %v1859, %v1970
      %v1972 = vpop.f32.mrb[0].mxu0
      %v1973 = vpop.f32.mrb[0].mxu0
      %v1974 = vadd.f32 %v1859, %v1973
      %v1975 = vpop.f32.mrb[0].mxu0
      %1976 = vmatprep.mubr.bf16.mxu0 0
      %1977 = vmatmul.mubr.bf16.gmra.mrb[0].mxu0 %v1886
      %v1978 = vpop.f32.mrb[0].mxu0
      %v1979 = vadd.f32 %v1859, %v1978
      %v1980 = vpop.f32.mrb[0].mxu0
      %v1981 = vpop.f32.mrb[0].mxu0
      %v1982 = vadd.f32 %v1859, %v1981
      %v1983 = vpop.f32.mrb[0].mxu0
      %1984 = vmatprep.mubr.bf16.mxu0 0
      %1985 = vmatmul.mubr.bf16.gmra.mrb[0].mxu0 %v1889
      %v1986 = vpop.f32.mrb[0].mxu0
      %v1987 = vadd.f32 %v1859, %v1986
      %v1988 = vpop.f32.mrb[0].mxu0
      %v1989 = vpop.f32.mrb[0].mxu0
      %v1990 = vadd.f32 %v1859, %v1989
      %v1991 = vpop.f32.mrb[0].mxu0
      %1992 = vmatprep.mubr.bf16.mxu0 0
      %1993 = vmatmul.mubr.bf16.gmra.mrb[0].mxu0 %v1892
      %v1994 = vpop.f32.mrb[0].mxu0
      %v1995 = vadd.f32 %v1859, %v1994
      %v1996 = vpop.f32.mrb[0].mxu0
      %v1997 = vpop.f32.mrb[0].mxu0
      %v1998 = vadd.f32 %v1859, %v1997
      %v1999 = vpop.f32.mrb[0].mxu0
      %2000 = vmatprep.mubr.bf16.mxu0 0
      %2001 = vmatmul.mubr.bf16.gmra.mrb[0].mxu0 %v1895
      %v2002 = vpop.f32.mrb[0].mxu0
      %v2003 = vadd.f32 %v1859, %v2002
      %v2004 = vpop.f32.mrb[0].mxu0
      %v2005 = vpop.f32.mrb[0].mxu0
      %v2006 = vadd.f32 %v1859, %v2005
      %v2007 = vpop.f32.mrb[0].mxu0
      %2008 = vmatprep.mubr.bf16.mxu0 0
      %2009 = vmatmul.mubr.bf16.gmra.mrb[0].mxu0 %v1898
      %v2010 = vpop.f32.mrb[0].mxu0
      %v2011 = vadd.f32 %v1859, %v2010
      %v2012 = vpop.f32.mrb[0].mxu0
      %v2013 = vpop.f32.mrb[0].mxu0
      %v2014 = vadd.f32 %v1859, %v2013
      %v2015 = vpop.f32.mrb[0].mxu0
      %2016 = vmatprep.mubr.bf16.mxu0 0
      %2017 = vmatmul.mubr.bf16.gmra.mrb[0].mxu0 %v1901
      %v2018 = vpop.f32.mrb[0].mxu0
      %v2019 = vadd.f32 %v1859, %v2018
      %v2020 = vpop.f32.mrb[0].mxu0
      %v2021 = vpop.f32.mrb[0].mxu0
      %v2022 = vadd.f32 %v1859, %v2021
      %v2023 = vpop.f32.mrb[0].mxu0
      %2024 = vmatprep.mubr.bf16.mxu0 0
      %2025 = vmatmul.mubr.bf16.gmra.mrb[0].mxu0 %v1904
      %v2026 = vpop.f32.mrb[0].mxu0
      %v2027 = vadd.f32 %v1859, %v2026
      %v2028 = vpop.f32.mrb[0].mxu0
      %v2029 = vpop.f32.mrb[0].mxu0
      %v2030 = vadd.f32 %v1859, %v2029
      %v2031 = vpop.f32.mrb[0].mxu0
      %2032 = vmatprep.mubr.bf16.mxu0 0
      %2033 = vmatmul.mubr.bf16.gmra.mrb[0].mxu0 %v1907
      %v2034 = vpop.f32.mrb[0].mxu0
      %v2035 = vadd.f32 %v1859, %v2034
      %v2036 = vpop.f32.mrb[0].mxu0
      %v2037 = vpop.f32.mrb[0].mxu0
      %v2038 = vadd.f32 %v1859, %v2037
      %v2039 = vpop.f32.mrb[0].mxu0
      %2040 = vmatprep.mubr.bf16.mxu0 0
      %2041 = vmatmul.mubr.bf16.gmra.mrb[0].mxu0 %v1910
      %v2042 = vpop.f32.mrb[0].mxu0
      %v2043 = vadd.f32 %v1859, %v2042
      %v2044 = vpop.f32.mrb[0].mxu0
      %v2045 = vpop.f32.mrb[0].mxu0
      %v2046 = vpop.f32.mrb[0].mxu0
      %2047 = vdwg.mxu0
      %v2048 = vadd.f32 %v1829, %v1947
      %v2049 = vadd.f32 %v1830, %v1950
      %v2050 = vadd.f32 %v1831, %v1955
      %v2051 = vadd.f32 %v1832, %v1958
      %v2052 = vadd.f32 %v1833, %v1963
      %v2053 = vadd.f32 %v1834, %v1966
      %v2054 = vadd.f32 %v1835, %v1971
      %v2055 = vadd.f32 %v1836, %v1974
      %v2056 = vadd.f32 %v1837, %v1979
      %v2057 = vadd.f32 %v1838, %v1982
      %v2058 = vadd.f32 %v1839, %v1987
      %v2059 = vadd.f32 %v1840, %v1990
      %v2060 = vadd.f32 %v1841, %v1995
      %v2061 = vadd.f32 %v1842, %v1998
      %v2062 = vadd.f32 %v1843, %v2003
      %v2063 = vadd.f32 %v1844, %v2006
      %v2064 = vadd.f32 %v1845, %v2011
      %v2065 = vadd.f32 %v1846, %v2014
      %v2066 = vadd.f32 %v1847, %v2019
      %v2067 = vadd.f32 %v1848, %v2022
      %v2068 = vadd.f32 %v1849, %v2027
      %v2069 = vadd.f32 %v1850, %v2030
      %v2070 = vadd.f32 %v1851, %v2035
      %v2071 = vadd.f32 %v1852, %v2038
      %v2072 = vadd.f32 %v1853, %v2043
      %2073 = vst.msk [vmem:[%s244] sm:$0xff] %vm350, %v2048
      %2074 = vst.msk [vmem:[%s244 + $0x8] sm:$0xff] %vm350, %v2049
      %2075 = vst.msk [vmem:[%s244 + $0x10] sm:$0xff] %vm350, %v2050
      %2076 = vst.msk [vmem:[%s244 + $0x18] sm:$0xff] %vm350, %v2051
      %2077 = vst.msk [vmem:[%s244 + $0x20] sm:$0xff] %vm350, %v2052
      %2078 = vst.msk [vmem:[%s244 + $0x28] sm:$0xff] %vm350, %v2053
      %2079 = vst.msk [vmem:[%s244 + $0x30] sm:$0xff] %vm350, %v2054
      %2080 = vst.msk [vmem:[%s244 + $0x38] sm:$0xff] %vm350, %v2055
      %2081 = vst.msk [vmem:[%s244 + $0x40] sm:$0xff] %vm350, %v2056
      %2082 = vst.msk [vmem:[%s244 + $0x48] sm:$0xff] %vm350, %v2057
      %2083 = vst.msk [vmem:[%s244 + $0x50] sm:$0xff] %vm350, %v2058
      %2084 = vst.msk [vmem:[%s244 + $0x58] sm:$0xff] %vm350, %v2059
      %2085 = vst.msk [vmem:[%s244 + $0x60] sm:$0xff] %vm350, %v2060
      %2086 = vst.msk [vmem:[%s244 + $0x68] sm:$0xff] %vm350, %v2061
      %2087 = vst.msk [vmem:[%s244 + $0x70] sm:$0xff] %vm350, %v2062
      %2088 = vst.msk [vmem:[%s244 + $0x78] sm:$0xff] %vm350, %v2063
      %2089 = vst.msk [vmem:[%s244 + $0x80] sm:$0xff] %vm350, %v2064
      %2090 = vst.msk [vmem:[%s244 + $0x88] sm:$0xff] %vm350, %v2065
      %2091 = vst.msk [vmem:[%s244 + $0x90] sm:$0xff] %vm350, %v2066
      %2092 = vst.msk [vmem:[%s244 + $0x98] sm:$0xff] %vm350, %v2067
      %2093 = vst.msk [vmem:[%s244 + $0xa0] sm:$0xff] %vm350, %v2068
      %2094 = vst.msk [vmem:[%s244 + $0xa8] sm:$0xff] %vm350, %v2069
      %2095 = vst.msk [vmem:[%s244 + $0xb0] sm:$0xff] %vm350, %v2070
      %2096 = vst.msk [vmem:[%s244 + $0xb8] sm:$0xff] %vm350, %v2071
      %vm2097 = vcmask 257024
      %2098 = vst.msk [vmem:[%s244 + $0xc0] sm:$0xf] %vm2097, %v2072
      %p2099 = scmp.lt.s32.totalorder %s16, 1
      %s2100 = scalar_select %p2099, %s16, 1
      %s2101 = smul.addr %s2100, 25
      %s2102 = smul.addr %s2101, 8
      %s2103 = scalar_lea.vmem %s5, %s2102
      // Predicated region
      $region41: #{basicblock2_forward.4} parent=39 // pred_check
        %p2104 = pneg %p149
      $region42: #{basicblock2_forward.4} parent=39 // pred_check_branch
        %2106 = sbr.rel (%p2104) target = $region44
      $region43: #{basicblock2_forward.4} parent=39 // pred_region
        _
      $region44: #{basicblock2_forward.4} parent=39 // pred_fallthru
        _
    $region40: #{basicblock2_forward.4} parent=5 // pred_fallthru
      _
    %p2107 = scmp.le.s32.totalorder 2, %s11
    // Predicated region
    $region45: #{basicblock2_forward.4} parent=5 // pred_check
      %p2108 = pneg %p2107
    $region46: #{basicblock2_forward.4} parent=5 // pred_check_branch
      %2110 = sbr.rel (%p2108) target = $region48
    $region47: #{basicblock2_forward.4} parent=5 // pred_region
      %s2111 = ssub.s32 %s11, 2
      // Predicated region
      $region49: #{basicblock2_forward.4} parent=47 // pred_check
        %p2112 = pneg %p155
      $region50: #{basicblock2_forward.4} parent=47 // pred_check_branch
        %2114 = sbr.rel (%p2112) target = $region52
      $region51: #{basicblock2_forward.4} parent=47 // pred_region
        %p2115 = scmp.lt.s32.totalorder %s17, 1
        %s2116 = scalar_select %p2115, %s17, 1
        %s2117 = smul.addr %s2116, 25
        %s2118 = smul.addr %s2117, 8
        %s2119 = scalar_lea.vmem %s5, %s2118
      $region52: #{basicblock2_forward.4} parent=47 // pred_fallthru
        _
    $region48: #{basicblock2_forward.4} parent=5 // pred_fallthru
      _
  $region6: #{basicblock2_forward.4} parent=0 // loop_footer
    %s15 = sadd.s32 1, %s11
  $region7: #{basicblock2_forward.4} parent=0 // loop_footer_branch
    %10 = sbr.rel target = $region3
  $region8: #{basicblock2_forward.4} parent=0 // loop_exit
    _

// kernel: basicblock2_forward.5
$region0: #{basicblock2_forward.5}
  #allocation0 [shape = 'u32[]', space=smem, size = 0x4, offset = 0x4, fixed_abs, tag = 'smem constant byte address 0x4 - core index']
  #allocation1 [shape = 'u32[144,128]{1,0:T(1,128)}', space=vmem, size = 0x12000, scoped, tag = 'internal scratch']
  %s0 = inlined_call_operand.vmem [shape: f32[2,196,32], index: 0, kind: input, shape index: {}]
  %s1 = inlined_call_operand.vmem [shape: f32[2,196,32], index: 1, kind: input, shape index: {}]
  %s2 = inlined_call_operand.vmem [shape: bf16[32,64], index: 2, kind: input, shape index: {}]
  %s3 = inlined_call_operand.vmem [shape: f32[1,64], index: 3, kind: input, shape index: {}]
  %s4 = inlined_call_operand.vmem [shape: bf16[64,32], index: 4, kind: input, shape index: {}]
  %s5 = inlined_call_operand.vmem [shape: f32[1,32], index: 5, kind: input, shape index: {}]
  %s6 = inlined_call_operand.vmem [shape: f32[1,32], index: 6, kind: input, shape index: {}]
  %s7 = inlined_call_operand.vmem [shape: f32[1,32], index: 7, kind: input, shape index: {}]
  %s8 = inlined_call_operand.vmem [shape: f32[2,196,32], index: 8, kind: output, shape index: {}]
  %s9 = sld [smem:[#allocation0]]
  $region65: #{basicblock2_forward.5} parent=0
    _
  %s11 = ssub.s32 1, %s9
  %s12 = scalar_select 0, %s11, %s9
  loop: start=0, step=1, limit=4
  $region2: #{basicblock2_forward.5} parent=0 // loop_pre_header
    _
  $region3: #{basicblock2_forward.5} parent=0 // loop_header
    %s14 = sphi 0, %s18
    %p15 = scmp.ge.s32.totalorder %s14, 4
    %s24 = sphi 0, %s26
    %s27 = sphi 0, %s24
    %s28 = sphi 0, %s27
    %s44 = sphi 0, %s28
    %s50 = sphi 0, %s52
    %s53 = sphi 0, %s50
    %s54 = sphi 0, %s53
    %s70 = sphi 0, %s54
    %s74 = sphi 0, %s74
    %s76 = sphi 0, %s74
    %s77 = sphi 0, %s76
    %s91 = sphi 0, %s77
    %s95 = sphi 0, %s95
    %s97 = sphi 0, %s95
    %s98 = sphi 0, %s97
    %s112 = sphi 0, %s98
    %s116 = sphi 0, %s116
    %s118 = sphi 0, %s116
    %s119 = sphi 0, %s118
    %s133 = sphi 0, %s119
    %s137 = sphi 0, %s137
    %s139 = sphi 0, %s137
    %s140 = sphi 0, %s139
    %s154 = sphi 0, %s140
    %s158 = sphi 0, %s158
    %s160 = sphi 0, %s158
    %s161 = sphi 0, %s160
    %s175 = sphi 0, %s161
    %s179 = sphi 0, %s179
    %s181 = sphi 0, %s179
    %s182 = sphi 0, %s181
    %s196 = sphi 0, %s182
    %s202 = sphi 0, %s204
    %s205 = sphi 0, %s202
    %s206 = sphi 0, %s205
    %s222 = sphi 0, %s206
  $region4: #{basicblock2_forward.5} parent=0 // loop_header_branch
    %17 = sbr.rel (%p15) target = $region8
  $region5: #{basicblock2_forward.5} parent=0 // loop_body
    %s19 = ssub.s32 %s14, 1
    %s20 = ssub.s32 %s14, 2
    %s21 = sadd.s32 %s14, 1
    %s22 = ssub.s32 %s14, %s21
    %p23 = scmp.eq.s32.totalorder %s22, 0
    %s25 = sadd.s32 %s24, 1
    %s26 = scalar_select %p23, %s24, %s25
    %p29 = pneg %p23
    %p30 = scmp.eq.s32.totalorder %s14, 1
    %p31 = por %p29, %p30
    %p32 = scmp.ne.s32.totalorder %s24, %s27
    %p33 = scmp.eq.s32.totalorder %s14, 0
    %p34 = por %p32, %p33
    %p35 = scmp.ne.s32.totalorder %s24, %s27
    %p36 = scmp.eq.s32.totalorder %s19, 1
    %p37 = por %p35, %p36
    %p38 = scmp.ne.s32.totalorder %s27, %s28
    %p39 = scmp.eq.s32.totalorder %s19, 0
    %p40 = por %p38, %p39
    %p41 = scmp.ne.s32.totalorder %s27, %s28
    %p42 = scmp.eq.s32.totalorder %s20, 1
    %p43 = por %p41, %p42
    %p45 = scmp.ne.s32.totalorder %s28, %s44
    %p46 = scmp.eq.s32.totalorder %s20, 0
    %p47 = por %p45, %p46
    %s48 = ssub.s32 %s14, %s21
    %p49 = scmp.eq.s32.totalorder %s48, 0
    %s51 = sadd.s32 %s50, 1
    %s52 = scalar_select %p49, %s50, %s51
    %p55 = pneg %p49
    %p56 = scmp.eq.s32.totalorder %s14, 1
    %p57 = por %p55, %p56
    %p58 = scmp.ne.s32.totalorder %s50, %s53
    %p59 = scmp.eq.s32.totalorder %s14, 0
    %p60 = por %p58, %p59
    %p61 = scmp.ne.s32.totalorder %s50, %s53
    %p62 = scmp.eq.s32.totalorder %s19, 1
    %p63 = por %p61, %p62
    %p64 = scmp.ne.s32.totalorder %s53, %s54
    %p65 = scmp.eq.s32.totalorder %s19, 0
    %p66 = por %p64, %p65
    %p67 = scmp.ne.s32.totalorder %s53, %s54
    %p68 = scmp.eq.s32.totalorder %s20, 1
    %p69 = por %p67, %p68
    %p71 = scmp.ne.s32.totalorder %s54, %s70
    %p72 = scmp.eq.s32.totalorder %s20, 0
    %p73 = por %p71, %p72
    %s75 = sadd.s32 %s74, 1
    %p78 = scmp.eq.s32.totalorder %s14, 1
    %p79 = scmp.ne.s32.totalorder %s74, %s76
    %p80 = scmp.eq.s32.totalorder %s14, 0
    %p81 = por %p79, %p80
    %p82 = scmp.ne.s32.totalorder %s74, %s76
    %p83 = scmp.eq.s32.totalorder %s19, 1
    %p84 = por %p82, %p83
    %p85 = scmp.ne.s32.totalorder %s76, %s77
    %p86 = scmp.eq.s32.totalorder %s19, 0
    %p87 = por %p85, %p86
    %p88 = scmp.ne.s32.totalorder %s76, %s77
    %p89 = scmp.eq.s32.totalorder %s20, 1
    %p90 = por %p88, %p89
    %p92 = scmp.ne.s32.totalorder %s77, %s91
    %p93 = scmp.eq.s32.totalorder %s20, 0
    %p94 = por %p92, %p93
    %s96 = sadd.s32 %s95, 1
    %p99 = scmp.eq.s32.totalorder %s14, 1
    %p100 = scmp.ne.s32.totalorder %s95, %s97
    %p101 = scmp.eq.s32.totalorder %s14, 0
    %p102 = por %p100, %p101
    %p103 = scmp.ne.s32.totalorder %s95, %s97
    %p104 = scmp.eq.s32.totalorder %s19, 1
    %p105 = por %p103, %p104
    %p106 = scmp.ne.s32.totalorder %s97, %s98
    %p107 = scmp.eq.s32.totalorder %s19, 0
    %p108 = por %p106, %p107
    %p109 = scmp.ne.s32.totalorder %s97, %s98
    %p110 = scmp.eq.s32.totalorder %s20, 1
    %p111 = por %p109, %p110
    %p113 = scmp.ne.s32.totalorder %s98, %s112
    %p114 = scmp.eq.s32.totalorder %s20, 0
    %p115 = por %p113, %p114
    %s117 = sadd.s32 %s116, 1
    %p120 = scmp.eq.s32.totalorder %s14, 1
    %p121 = scmp.ne.s32.totalorder %s116, %s118
    %p122 = scmp.eq.s32.totalorder %s14, 0
    %p123 = por %p121, %p122
    %p124 = scmp.ne.s32.totalorder %s116, %s118
    %p125 = scmp.eq.s32.totalorder %s19, 1
    %p126 = por %p124, %p125
    %p127 = scmp.ne.s32.totalorder %s118, %s119
    %p128 = scmp.eq.s32.totalorder %s19, 0
    %p129 = por %p127, %p128
    %p130 = scmp.ne.s32.totalorder %s118, %s119
    %p131 = scmp.eq.s32.totalorder %s20, 1
    %p132 = por %p130, %p131
    %p134 = scmp.ne.s32.totalorder %s119, %s133
    %p135 = scmp.eq.s32.totalorder %s20, 0
    %p136 = por %p134, %p135
    %s138 = sadd.s32 %s137, 1
    %p141 = scmp.eq.s32.totalorder %s14, 1
    %p142 = scmp.ne.s32.totalorder %s137, %s139
    %p143 = scmp.eq.s32.totalorder %s14, 0
    %p144 = por %p142, %p143
    %p145 = scmp.ne.s32.totalorder %s137, %s139
    %p146 = scmp.eq.s32.totalorder %s19, 1
    %p147 = por %p145, %p146
    %p148 = scmp.ne.s32.totalorder %s139, %s140
    %p149 = scmp.eq.s32.totalorder %s19, 0
    %p150 = por %p148, %p149
    %p151 = scmp.ne.s32.totalorder %s139, %s140
    %p152 = scmp.eq.s32.totalorder %s20, 1
    %p153 = por %p151, %p152
    %p155 = scmp.ne.s32.totalorder %s140, %s154
    %p156 = scmp.eq.s32.totalorder %s20, 0
    %p157 = por %p155, %p156
    %s159 = sadd.s32 %s158, 1
    %p162 = scmp.eq.s32.totalorder %s14, 1
    %p163 = scmp.ne.s32.totalorder %s158, %s160
    %p164 = scmp.eq.s32.totalorder %s14, 0
    %p165 = por %p163, %p164
    %p166 = scmp.ne.s32.totalorder %s158, %s160
    %p167 = scmp.eq.s32.totalorder %s19, 1
    %p168 = por %p166, %p167
    %p169 = scmp.ne.s32.totalorder %s160, %s161
    %p170 = scmp.eq.s32.totalorder %s19, 0
    %p171 = por %p169, %p170
    %p172 = scmp.ne.s32.totalorder %s160, %s161
    %p173 = scmp.eq.s32.totalorder %s20, 1
    %p174 = por %p172, %p173
    %p176 = scmp.ne.s32.totalorder %s161, %s175
    %p177 = scmp.eq.s32.totalorder %s20, 0
    %p178 = por %p176, %p177
    %s180 = sadd.s32 %s179, 1
    %p183 = scmp.eq.s32.totalorder %s14, 1
    %p184 = scmp.ne.s32.totalorder %s179, %s181
    %p185 = scmp.eq.s32.totalorder %s14, 0
    %p186 = por %p184, %p185
    %p187 = scmp.ne.s32.totalorder %s179, %s181
    %p188 = scmp.eq.s32.totalorder %s19, 1
    %p189 = por %p187, %p188
    %p190 = scmp.ne.s32.totalorder %s181, %s182
    %p191 = scmp.eq.s32.totalorder %s19, 0
    %p192 = por %p190, %p191
    %p193 = scmp.ne.s32.totalorder %s181, %s182
    %p194 = scmp.eq.s32.totalorder %s20, 1
    %p195 = por %p193, %p194
    %p197 = scmp.ne.s32.totalorder %s182, %s196
    %p198 = scmp.eq.s32.totalorder %s20, 0
    %p199 = por %p197, %p198
    %s200 = ssub.s32 %s14, %s21
    %p201 = scmp.eq.s32.totalorder %s200, 0
    %s203 = sadd.s32 %s202, 1
    %s204 = scalar_select %p201, %s202, %s203
    %p207 = pneg %p201
    %p208 = scmp.eq.s32.totalorder %s14, 1
    %p209 = por %p207, %p208
    %p210 = scmp.ne.s32.totalorder %s202, %s205
    %p211 = scmp.eq.s32.totalorder %s14, 0
    %p212 = por %p210, %p211
    %p213 = scmp.ne.s32.totalorder %s202, %s205
    %p214 = scmp.eq.s32.totalorder %s19, 1
    %p215 = por %p213, %p214
    %p216 = scmp.ne.s32.totalorder %s205, %s206
    %p217 = scmp.eq.s32.totalorder %s19, 0
    %p218 = por %p216, %p217
    %p219 = scmp.ne.s32.totalorder %s205, %s206
    %p220 = scmp.eq.s32.totalorder %s20, 1
    %p221 = por %p219, %p220
    %p223 = scmp.ne.s32.totalorder %s206, %s222
    %p224 = scmp.eq.s32.totalorder %s20, 0
    %p225 = por %p223, %p224
    %p226 = scmp.le.s32.totalorder 1, %s14
    %p227 = scmp.lt.s32.totalorder %s14, 3
    %p228 = pnand %p226, %p227
    %p229 = pneg %p228
    // Predicated region
    $region9: #{basicblock2_forward.5} parent=5 // pred_check
      _
    $region10: #{basicblock2_forward.5} parent=5 // pred_check_branch
      %231 = sbr.rel (%p228) target = $region12
    $region11: #{basicblock2_forward.5} parent=5 // pred_region
      %s232 = ssub.s32 %s14, 1
      // Predicated region
      $region13: #{basicblock2_forward.5} parent=11 // pred_check
        %p233 = pneg %p87
      $region14: #{basicblock2_forward.5} parent=11 // pred_check_branch
        %235 = sbr.rel (%p233) target = $region16
      $region15: #{basicblock2_forward.5} parent=11 // pred_region
        _
      $region16: #{basicblock2_forward.5} parent=11 // pred_fallthru
        _
      // Predicated region
      $region17: #{basicblock2_forward.5} parent=11 // pred_check
        %p236 = pneg %p108
      $region18: #{basicblock2_forward.5} parent=11 // pred_check_branch
        %238 = sbr.rel (%p236) target = $region20
      $region19: #{basicblock2_forward.5} parent=11 // pred_region
        _
      $region20: #{basicblock2_forward.5} parent=11 // pred_fallthru
        _
      // Predicated region
      $region21: #{basicblock2_forward.5} parent=11 // pred_check
        %p239 = pneg %p129
      $region22: #{basicblock2_forward.5} parent=11 // pred_check_branch
        %241 = sbr.rel (%p239) target = $region24
      $region23: #{basicblock2_forward.5} parent=11 // pred_region
        _
      $region24: #{basicblock2_forward.5} parent=11 // pred_fallthru
        _
      // Predicated region
      $region25: #{basicblock2_forward.5} parent=11 // pred_check
        %p242 = pneg %p150
      $region26: #{basicblock2_forward.5} parent=11 // pred_check_branch
        %244 = sbr.rel (%p242) target = $region28
      $region27: #{basicblock2_forward.5} parent=11 // pred_region
        _
      $region28: #{basicblock2_forward.5} parent=11 // pred_fallthru
        _
      // Predicated region
      $region29: #{basicblock2_forward.5} parent=11 // pred_check
        %p245 = pneg %p171
      $region30: #{basicblock2_forward.5} parent=11 // pred_check_branch
        %247 = sbr.rel (%p245) target = $region32
      $region31: #{basicblock2_forward.5} parent=11 // pred_region
        _
      $region32: #{basicblock2_forward.5} parent=11 // pred_fallthru
        _
      // Predicated region
      $region33: #{basicblock2_forward.5} parent=11 // pred_check
        %p248 = pneg %p192
      $region34: #{basicblock2_forward.5} parent=11 // pred_check_branch
        %250 = sbr.rel (%p248) target = $region36
      $region35: #{basicblock2_forward.5} parent=11 // pred_region
        _
      $region36: #{basicblock2_forward.5} parent=11 // pred_fallthru
        _
    $region12: #{basicblock2_forward.5} parent=5 // pred_fallthru
      _
    %p251 = scmp.lt.s32.totalorder %s14, 2
    // Predicated region
    $region37: #{basicblock2_forward.5} parent=5 // pred_check
      %p252 = pneg %p251
    $region38: #{basicblock2_forward.5} parent=5 // pred_check_branch
      %254 = sbr.rel (%p252) target = $region40
    $region39: #{basicblock2_forward.5} parent=5 // pred_region
      // Predicated region
      $region41: #{basicblock2_forward.5} parent=39 // pred_check
        %p255 = pneg %p34
      $region42: #{basicblock2_forward.5} parent=39 // pred_check_branch
        %257 = sbr.rel (%p255) target = $region44
      $region43: #{basicblock2_forward.5} parent=39 // pred_region
        %p258 = scmp.lt.s32.totalorder %s14, 1
        %s259 = scalar_select %p258, %s14, 1
        %s260 = smul.addr %s259, 25
        %s261 = smul.addr %s260, 8
        %s262 = scalar_lea.vmem %s0, %s261
      $region44: #{basicblock2_forward.5} parent=39 // pred_fallthru
        _
      // Predicated region
      $region45: #{basicblock2_forward.5} parent=39 // pred_check
        %p263 = pneg %p60
      $region46: #{basicblock2_forward.5} parent=39 // pred_check_branch
        %265 = sbr.rel (%p263) target = $region48
      $region47: #{basicblock2_forward.5} parent=39 // pred_region
        %p266 = scmp.lt.s32.totalorder %s14, 1
        %s267 = scalar_select %p266, %s14, 1
        %s268 = smul.addr %s267, 25
        %s269 = smul.addr %s268, 8
        %s270 = scalar_lea.vmem %s1, %s269
      $region48: #{basicblock2_forward.5} parent=39 // pred_fallthru
        _
    $region40: #{basicblock2_forward.5} parent=5 // pred_fallthru
      _
    %p271 = scmp.le.s32.totalorder 1, %s14
    %p272 = scmp.lt.s32.totalorder %s14, 3
    %p273 = pnand %p271, %p272
    %p274 = pneg %p273
    // Predicated region
    $region49: #{basicblock2_forward.5} parent=5 // pred_check
      _
    $region50: #{basicblock2_forward.5} parent=5 // pred_check_branch
      %276 = sbr.rel (%p273) target = $region52
    $region51: #{basicblock2_forward.5} parent=5 // pred_region
      %s277 = ssub.s32 %s14, 1
      %p278 = scmp.lt.s32.totalorder %s19, 1
      %s279 = scalar_select %p278, %s19, 1
      %s280 = smul.addr %s279, 25
      %s281 = smul.addr %s280, 8
      %s282 = scalar_lea.vmem %s0, %s281
      %p283 = pneg %p40
      %p284 = pneg %p37
      %p285 = scmp.lt.s32.totalorder %s19, 1
      %s286 = scalar_select %p285, %s19, 1
      %s287 = smul.addr %s286, 25
      %s288 = smul.addr %s287, 8
      %s289 = scalar_lea.vmem %s1, %s288
      %p290 = pneg %p66
      %p291 = pneg %p63
      %p292 = pneg %p87
      %p293 = pneg %p84
      %p294 = pneg %p108
      %p295 = pneg %p105
      %p296 = pneg %p129
      %p297 = pneg %p126
      %p298 = pneg %p150
      %p299 = pneg %p147
      %p300 = pneg %p171
      %p301 = pneg %p168
      %p302 = pneg %p192
      %p303 = pneg %p189
      %p304 = pneg %p218
      %p305 = pneg %p215
      %p306 = scmp.lt.s32.totalorder %s19, 1
      %s307 = scalar_select %p306, %s19, 1
      %s308 = smul.addr %s307, 25
      %s309 = smul.addr %s308, 8
      %s310 = scalar_lea.vmem %s8, %s309
      %p311 = scmp.lt.s32.totalorder %s19, 1
      %s312 = scalar_select %p311, %s19, 1
      %s313 = smul.addr %s312, 25
      %s314 = smul.addr %s313, 8
      %s315 = scalar_lea.vmem %s0, %s314
      %p316 = scmp.lt.s32.totalorder %s19, 1
      %s317 = scalar_select %p316, %s19, 1
      %s318 = smul.addr %s317, 25
      %s319 = smul.addr %s318, 8
      %s320 = scalar_lea.vmem %s1, %s319
      %p321 = scmp.lt.s32.totalorder %s19, 1
      %s322 = scalar_select %p321, %s19, 1
      %s323 = smul.addr %s322, 25
      %s324 = smul.addr %s323, 8
      %s325 = scalar_lea.vmem %s8, %s324
      %v327 = vld [vmem:[%s315] sm:$0xff]
      %v328 = vld [vmem:[%s315 + $0x8] sm:$0xff]
      %v329 = vld [vmem:[%s315 + $0x10] sm:$0xff]
      %v330 = vld [vmem:[%s315 + $0x18] sm:$0xff]
      %v331 = vld [vmem:[%s315 + $0x20] sm:$0xff]
      %v332 = vld [vmem:[%s315 + $0x28] sm:$0xff]
      %v333 = vld [vmem:[%s315 + $0x30] sm:$0xff]
      %v334 = vld [vmem:[%s315 + $0x38] sm:$0xff]
      %v335 = vld [vmem:[%s315 + $0x40] sm:$0xff]
      %v336 = vld [vmem:[%s315 + $0x48] sm:$0xff]
      %v337 = vld [vmem:[%s315 + $0x50] sm:$0xff]
      %v338 = vld [vmem:[%s315 + $0x58] sm:$0xff]
      %v339 = vld [vmem:[%s315 + $0x60] sm:$0xff]
      %v340 = vld [vmem:[%s315 + $0x68] sm:$0xff]
      %v341 = vld [vmem:[%s315 + $0x70] sm:$0xff]
      %v342 = vld [vmem:[%s315 + $0x78] sm:$0xff]
      %v343 = vld [vmem:[%s315 + $0x80] sm:$0xff]
      %v344 = vld [vmem:[%s315 + $0x88] sm:$0xff]
      %v345 = vld [vmem:[%s315 + $0x90] sm:$0xff]
      %v346 = vld [vmem:[%s315 + $0x98] sm:$0xff]
      %v347 = vld [vmem:[%s315 + $0xa0] sm:$0xff]
      %v348 = vld [vmem:[%s315 + $0xa8] sm:$0xff]
      %v349 = vld [vmem:[%s315 + $0xb0] sm:$0xff]
      %v350 = vld [vmem:[%s315 + $0xb8] sm:$0xff]
      %v351 = vld [vmem:[%s315 + $0xc0] sm:$0xf]
      %v352 = vpack.c.bf16 %v328, %v327
      %v353 = vpack.c.bf16 %v330, %v329
      %v354 = vpack.c.bf16 %v332, %v331
      %v355 = vpack.c.bf16 %v334, %v333
      %v356 = vpack.c.bf16 %v336, %v335
      %v357 = vpack.c.bf16 %v338, %v337
      %v358 = vpack.c.bf16 %v340, %v339
      %v359 = vpack.c.bf16 %v342, %v341
      %v360 = vpack.c.bf16 %v344, %v343
      %v361 = vpack.c.bf16 %v346, %v345
      %v362 = vpack.c.bf16 %v348, %v347
      %v363 = vpack.c.bf16 %v350, %v349
      %v364 = vpack.c.bf16 %v351, %v351
      %v365 = vld [vmem:[%s2] sm:$0xf]
      %v366 = vld [vmem:[%s2 + $0x4] sm:$0xf]
      %v367 = vld [vmem:[%s2 + $0x8] sm:$0xf]
      %v368 = vld [vmem:[%s2 + $0xc] sm:$0xf]
      %v369 = vld [vmem:[%s3] sm:$0x1]
      %v371 = vlaneseq
      %v372 = vshrl.u32 %v371, 7
      %v373 = vsub.s32 0, %v372
      %v374 = vrot.slane %v369, %v373
      %v380 = vunpack.c.l.b16 %v365
      %v381 = vunpack.c.l.b16 %v366
      %v382 = vunpack.c.l.b16 %v367
      %v383 = vunpack.c.l.b16 %v368
      %v384 = vpack.c.b16 %v381, %v380
      %v385 = vpack.c.b16 %v383, %v382
      %vm388 = vcmask 261120
      %v390 = vsel %vm388, %v352, 0
      %v393 = vsel %vm388, %v353, 0
      %v396 = vsel %vm388, %v354, 0
      %v399 = vsel %vm388, %v355, 0
      %v402 = vsel %vm388, %v356, 0
      %v405 = vsel %vm388, %v357, 0
      %v408 = vsel %vm388, %v358, 0
      %v411 = vsel %vm388, %v359, 0
      %v414 = vsel %vm388, %v360, 0
      %v417 = vsel %vm388, %v361, 0
      %v420 = vsel %vm388, %v362, 0
      %v423 = vsel %vm388, %v363, 0
      %v426 = vsel %vm388, %v364, 0
      %428 = vmatprep.subr.bf16.mxu0 0
      %429 = vmatpush1.bf16.msra.mxu0 %v384
      %430 = vmatprep.subr.bf16.mxu0 0
      %431 = vmatpush1.bf16.msra.mxu0 %v385
      %432 = vmatprep.subr.bf16.mxu0 0
      %433 = vmatpush1.bf16.msra.mxu0 0
      %434 = vmatprep.subr.bf16.mxu0 0
      %435 = vmatpush1.bf16.msra.mxu0 0
      %436 = vmatprep.subr.bf16.mxu0 0
      %437 = vmatpush1.bf16.msra.mxu0 0
      %438 = vmatprep.subr.bf16.mxu0 0
      %439 = vmatpush1.bf16.msra.mxu0 0
      %440 = vmatprep.subr.bf16.mxu0 0
      %441 = vmatpush1.bf16.msra.mxu0 0
      %442 = vmatprep.subr.bf16.mxu0 0
      %443 = vmatpush1.bf16.msra.mxu0 0
      %444 = vmatprep.subr.bf16.mxu0 0
      %445 = vmatpush1.bf16.msra.mxu0 0
      %446 = vmatprep.subr.bf16.mxu0 0
      %447 = vmatpush1.bf16.msra.mxu0 0
      %448 = vmatprep.subr.bf16.mxu0 0
      %449 = vmatpush1.bf16.msra.mxu0 0
      %450 = vmatprep.subr.bf16.mxu0 0
      %451 = vmatpush1.bf16.msra.mxu0 0
      %452 = vmatprep.subr.bf16.mxu0 0
      %453 = vmatpush1.bf16.msra.mxu0 0
      %454 = vmatprep.subr.bf16.mxu0 0
      %455 = vmatpush1.bf16.msra.mxu0 0
      %456 = vmatprep.subr.bf16.mxu0 0
      %457 = vmatpush1.bf16.msra.mxu0 0
      %458 = vmatprep.subr.bf16.mxu0 0
      %459 = vmatpush1.bf16.msra.mxu0 0
      %460 = vmatprep.mubr.bf16.mxu0 0
      %461 = vmatmul.mubr.bf16.gmra.mrb[0].mxu0 %v390
      %v462 = vpop.f32.mrb[0].mxu0
      %v463 = vadd.f32 %v374, %v462
      %v464 = vpop.f32.mrb[0].mxu0
      %v465 = vpop.f32.mrb[0].mxu0
      %v466 = vadd.f32 %v374, %v465
      %v467 = vpop.f32.mrb[0].mxu0
      %468 = vmatprep.mubr.bf16.mxu0 0
      %469 = vmatmul.mubr.bf16.gmra.mrb[0].mxu0 %v393
      %v470 = vpop.f32.mrb[0].mxu0
      %v471 = vadd.f32 %v374, %v470
      %v472 = vpop.f32.mrb[0].mxu0
      %v473 = vpop.f32.mrb[0].mxu0
      %v474 = vadd.f32 %v374, %v473
      %v475 = vpop.f32.mrb[0].mxu0
      %476 = vmatprep.mubr.bf16.mxu0 0
      %477 = vmatmul.mubr.bf16.gmra.mrb[0].mxu0 %v396
      %v478 = vpop.f32.mrb[0].mxu0
      %v479 = vadd.f32 %v374, %v478
      %v480 = vpop.f32.mrb[0].mxu0
      %v481 = vpop.f32.mrb[0].mxu0
      %v482 = vadd.f32 %v374, %v481
      %v483 = vpop.f32.mrb[0].mxu0
      %484 = vmatprep.mubr.bf16.mxu0 0
      %485 = vmatmul.mubr.bf16.gmra.mrb[0].mxu0 %v399
      %v486 = vpop.f32.mrb[0].mxu0
      %v487 = vadd.f32 %v374, %v486
      %v488 = vpop.f32.mrb[0].mxu0
      %v489 = vpop.f32.mrb[0].mxu0
      %v490 = vadd.f32 %v374, %v489
      %v491 = vpop.f32.mrb[0].mxu0
      %492 = vmatprep.mubr.bf16.mxu0 0
      %493 = vmatmul.mubr.bf16.gmra.mrb[0].mxu0 %v402
      %v494 = vpop.f32.mrb[0].mxu0
      %v495 = vadd.f32 %v374, %v494
      %v496 = vpop.f32.mrb[0].mxu0
      %v497 = vpop.f32.mrb[0].mxu0
      %v498 = vadd.f32 %v374, %v497
      %v499 = vpop.f32.mrb[0].mxu0
      %500 = vmatprep.mubr.bf16.mxu0 0
      %501 = vmatmul.mubr.bf16.gmra.mrb[0].mxu0 %v405
      %v502 = vpop.f32.mrb[0].mxu0
      %v503 = vadd.f32 %v374, %v502
      %v504 = vpop.f32.mrb[0].mxu0
      %v505 = vpop.f32.mrb[0].mxu0
      %v506 = vadd.f32 %v374, %v505
      %v507 = vpop.f32.mrb[0].mxu0
      %508 = vmatprep.mubr.bf16.mxu0 0
      %509 = vmatmul.mubr.bf16.gmra.mrb[0].mxu0 %v408
      %v510 = vpop.f32.mrb[0].mxu0
      %v511 = vadd.f32 %v374, %v510
      %v512 = vpop.f32.mrb[0].mxu0
      %v513 = vpop.f32.mrb[0].mxu0
      %v514 = vadd.f32 %v374, %v513
      %v515 = vpop.f32.mrb[0].mxu0
      %516 = vmatprep.mubr.bf16.mxu0 0
      %517 = vmatmul.mubr.bf16.gmra.mrb[0].mxu0 %v411
      %v518 = vpop.f32.mrb[0].mxu0
      %v519 = vadd.f32 %v374, %v518
      %v520 = vpop.f32.mrb[0].mxu0
      %v521 = vpop.f32.mrb[0].mxu0
      %v522 = vadd.f32 %v374, %v521
      %v523 = vpop.f32.mrb[0].mxu0
      %524 = vmatprep.mubr.bf16.mxu0 0
      %525 = vmatmul.mubr.bf16.gmra.mrb[0].mxu0 %v414
      %v526 = vpop.f32.mrb[0].mxu0
      %v527 = vadd.f32 %v374, %v526
      %v528 = vpop.f32.mrb[0].mxu0
      %v529 = vpop.f32.mrb[0].mxu0
      %v530 = vadd.f32 %v374, %v529
      %v531 = vpop.f32.mrb[0].mxu0
      %532 = vmatprep.mubr.bf16.mxu0 0
      %533 = vmatmul.mubr.bf16.gmra.mrb[0].mxu0 %v417
      %v534 = vpop.f32.mrb[0].mxu0
      %v535 = vadd.f32 %v374, %v534
      %v536 = vpop.f32.mrb[0].mxu0
      %v537 = vpop.f32.mrb[0].mxu0
      %v538 = vadd.f32 %v374, %v537
      %v539 = vpop.f32.mrb[0].mxu0
      %540 = vmatprep.mubr.bf16.mxu0 0
      %541 = vmatmul.mubr.bf16.gmra.mrb[0].mxu0 %v420
      %v542 = vpop.f32.mrb[0].mxu0
      %v543 = vadd.f32 %v374, %v542
      %v544 = vpop.f32.mrb[0].mxu0
      %v545 = vpop.f32.mrb[0].mxu0
      %v546 = vadd.f32 %v374, %v545
      %v547 = vpop.f32.mrb[0].mxu0
      %548 = vmatprep.mubr.bf16.mxu0 0
      %549 = vmatmul.mubr.bf16.gmra.mrb[0].mxu0 %v423
      %v550 = vpop.f32.mrb[0].mxu0
      %v551 = vadd.f32 %v374, %v550
      %v552 = vpop.f32.mrb[0].mxu0
      %v553 = vpop.f32.mrb[0].mxu0
      %v554 = vadd.f32 %v374, %v553
      %v555 = vpop.f32.mrb[0].mxu0
      %556 = vmatprep.mubr.bf16.mxu0 0
      %557 = vmatmul.mubr.bf16.gmra.mrb[0].mxu0 %v426
      %v558 = vpop.f32.mrb[0].mxu0
      %v559 = vadd.f32 %v374, %v558
      %v560 = vpop.f32.mrb[0].mxu0
      %v561 = vpop.f32.mrb[0].mxu0
      %v562 = vpop.f32.mrb[0].mxu0
      %563 = vdwg.mxu0
      %v564 = vmul.f32 %v463, 0.5
      %v565 = vmul.f32 %v466, 0.5
      %v566 = vmul.f32 %v471, 0.5
      %v567 = vmul.f32 %v474, 0.5
      %v568 = vmul.f32 %v479, 0.5
      %v569 = vmul.f32 %v482, 0.5
      %v570 = vmul.f32 %v487, 0.5
      %v571 = vmul.f32 %v490, 0.5
      %v572 = vmul.f32 %v495, 0.5
      %v573 = vmul.f32 %v498, 0.5
      %v574 = vmul.f32 %v503, 0.5
      %v575 = vmul.f32 %v506, 0.5
      %v576 = vmul.f32 %v511, 0.5
      %v577 = vmul.f32 %v514, 0.5
      %v578 = vmul.f32 %v519, 0.5
      %v579 = vmul.f32 %v522, 0.5
      %v580 = vmul.f32 %v527, 0.5
      %v581 = vmul.f32 %v530, 0.5
      %v582 = vmul.f32 %v535, 0.5
      %v583 = vmul.f32 %v538, 0.5
      %v584 = vmul.f32 %v543, 0.5
      %v585 = vmul.f32 %v546, 0.5
      %v586 = vmul.f32 %v551, 0.5
      %v587 = vmul.f32 %v554, 0.5
      %v588 = vmul.f32 %v559, 0.5
      %v589 = vmul.f32 %v463, %v463
      %v590 = vmul.f32 %v466, %v466
      %v591 = vmul.f32 %v471, %v471
      %v592 = vmul.f32 %v474, %v474
      %v593 = vmul.f32 %v479, %v479
      %v594 = vmul.f32 %v482, %v482
      %v595 = vmul.f32 %v487, %v487
      %v596 = vmul.f32 %v490, %v490
      %v597 = vmul.f32 %v495, %v495
      %v598 = vmul.f32 %v498, %v498
      %v599 = vmul.f32 %v503, %v503
      %v600 = vmul.f32 %v506, %v506
      %v601 = vmul.f32 %v511, %v511
      %v602 = vmul.f32 %v514, %v514
      %v603 = vmul.f32 %v519, %v519
      %v604 = vmul.f32 %v522, %v522
      %v605 = vmul.f32 %v527, %v527
      %v606 = vmul.f32 %v530, %v530
      %v607 = vmul.f32 %v535, %v535
      %v608 = vmul.f32 %v538, %v538
      %v609 = vmul.f32 %v543, %v543
      %v610 = vmul.f32 %v546, %v546
      %v611 = vmul.f32 %v551, %v551
      %v612 = vmul.f32 %v554, %v554
      %v613 = vmul.f32 %v559, %v559
      %v614 = vmul.f32 %v589, %v463
      %v615 = vmul.f32 %v590, %v466
      %v616 = vmul.f32 %v591, %v471
      %v617 = vmul.f32 %v592, %v474
      %v618 = vmul.f32 %v593, %v479
      %v619 = vmul.f32 %v594, %v482
      %v620 = vmul.f32 %v595, %v487
      %v621 = vmul.f32 %v596, %v490
      %v622 = vmul.f32 %v597, %v495
      %v623 = vmul.f32 %v598, %v498
      %v624 = vmul.f32 %v599, %v503
      %v625 = vmul.f32 %v600, %v506
      %v626 = vmul.f32 %v601, %v511
      %v627 = vmul.f32 %v602, %v514
      %v628 = vmul.f32 %v603, %v519
      %v629 = vmul.f32 %v604, %v522
      %v630 = vmul.f32 %v605, %v527
      %v631 = vmul.f32 %v606, %v530
      %v632 = vmul.f32 %v607, %v535
      %v633 = vmul.f32 %v608, %v538
      %v634 = vmul.f32 %v609, %v543
      %v635 = vmul.f32 %v610, %v546
      %v636 = vmul.f32 %v611, %v551
      %v637 = vmul.f32 %v612, %v554
      %v638 = vmul.f32 %v613, %v559
      %v639 = vmul.f32 %v614, 0.044715
      %v640 = vmul.f32 %v615, 0.044715
      %v641 = vmul.f32 %v616, 0.044715
      %v642 = vmul.f32 %v617, 0.044715
      %v643 = vmul.f32 %v618, 0.044715
      %v644 = vmul.f32 %v619, 0.044715
      %v645 = vmul.f32 %v620, 0.044715
      %v646 = vmul.f32 %v621, 0.044715
      %v647 = vmul.f32 %v622, 0.044715
      %v648 = vmul.f32 %v623, 0.044715
      %v649 = vmul.f32 %v624, 0.044715
      %v650 = vmul.f32 %v625, 0.044715
      %v651 = vmul.f32 %v626, 0.044715
      %v652 = vmul.f32 %v627, 0.044715
      %v653 = vmul.f32 %v628, 0.044715
      %v654 = vmul.f32 %v629, 0.044715
      %v655 = vmul.f32 %v630, 0.044715
      %v656 = vmul.f32 %v631, 0.044715
      %v657 = vmul.f32 %v632, 0.044715
      %v658 = vmul.f32 %v633, 0.044715
      %v659 = vmul.f32 %v634, 0.044715
      %v660 = vmul.f32 %v635, 0.044715
      %v661 = vmul.f32 %v636, 0.044715
      %v662 = vmul.f32 %v637, 0.044715
      %v663 = vmul.f32 %v638, 0.044715
      %v664 = vadd.f32 %v463, %v639
      %v665 = vadd.f32 %v466, %v640
      %v666 = vadd.f32 %v471, %v641
      %v667 = vadd.f32 %v474, %v642
      %v668 = vadd.f32 %v479, %v643
      %v669 = vadd.f32 %v482, %v644
      %v670 = vadd.f32 %v487, %v645
      %v671 = vadd.f32 %v490, %v646
      %v672 = vadd.f32 %v495, %v647
      %v673 = vadd.f32 %v498, %v648
      %v674 = vadd.f32 %v503, %v649
      %v675 = vadd.f32 %v506, %v650
      %v676 = vadd.f32 %v511, %v651
      %v677 = vadd.f32 %v514, %v652
      %v678 = vadd.f32 %v519, %v653
      %v679 = vadd.f32 %v522, %v654
      %v680 = vadd.f32 %v527, %v655
      %v681 = vadd.f32 %v530, %v656
      %v682 = vadd.f32 %v535, %v657
      %v683 = vadd.f32 %v538, %v658
      %v684 = vadd.f32 %v543, %v659
      %v685 = vadd.f32 %v546, %v660
      %v686 = vadd.f32 %v551, %v661
      %v687 = vadd.f32 %v554, %v662
      %v688 = vadd.f32 %v559, %v663
      %v689 = vmul.f32 %v664, 0.7978846
      %v690 = vmul.f32 %v665, 0.7978846
      %v691 = vmul.f32 %v666, 0.7978846
      %v692 = vmul.f32 %v667, 0.7978846
      %v693 = vmul.f32 %v668, 0.7978846
      %v694 = vmul.f32 %v669, 0.7978846
      %v695 = vmul.f32 %v670, 0.7978846
      %v696 = vmul.f32 %v671, 0.7978846
      %v697 = vmul.f32 %v672, 0.7978846
      %v698 = vmul.f32 %v673, 0.7978846
      %v699 = vmul.f32 %v674, 0.7978846
      %v700 = vmul.f32 %v675, 0.7978846
      %v701 = vmul.f32 %v676, 0.7978846
      %v702 = vmul.f32 %v677, 0.7978846
      %v703 = vmul.f32 %v678, 0.7978846
      %v704 = vmul.f32 %v679, 0.7978846
      %v705 = vmul.f32 %v680, 0.7978846
      %v706 = vmul.f32 %v681, 0.7978846
      %v707 = vmul.f32 %v682, 0.7978846
      %v708 = vmul.f32 %v683, 0.7978846
      %v709 = vmul.f32 %v684, 0.7978846
      %v710 = vmul.f32 %v685, 0.7978846
      %v711 = vmul.f32 %v686, 0.7978846
      %v712 = vmul.f32 %v687, 0.7978846
      %v713 = vmul.f32 %v688, 0.7978846
      %v714 = vtanh.pop %v689
      %v715 = vtanh.pop %v690
      %v716 = vtanh.pop %v691
      %v717 = vtanh.pop %v692
      %v718 = vtanh.pop %v693
      %v719 = vtanh.pop %v694
      %v720 = vtanh.pop %v695
      %v721 = vtanh.pop %v696
      %v722 = vtanh.pop %v697
      %v723 = vtanh.pop %v698
      %v724 = vtanh.pop %v699
      %v725 = vtanh.pop %v700
      %v726 = vtanh.pop %v701
      %v727 = vtanh.pop %v702
      %v728 = vtanh.pop %v703
      %v729 = vtanh.pop %v704
      %v730 = vtanh.pop %v705
      %v731 = vtanh.pop %v706
      %v732 = vtanh.pop %v707
      %v733 = vtanh.pop %v708
      %v734 = vtanh.pop %v709
      %v735 = vtanh.pop %v710
      %v736 = vtanh.pop %v711
      %v737 = vtanh.pop %v712
      %v738 = vtanh.pop %v713
      %v739 = vadd.f32 %v714, 1.0
      %v740 = vadd.f32 %v715, 1.0
      %v741 = vadd.f32 %v716, 1.0
      %v742 = vadd.f32 %v717, 1.0
      %v743 = vadd.f32 %v718, 1.0
      %v744 = vadd.f32 %v719, 1.0
      %v745 = vadd.f32 %v720, 1.0
      %v746 = vadd.f32 %v721, 1.0
      %v747 = vadd.f32 %v722, 1.0
      %v748 = vadd.f32 %v723, 1.0
      %v749 = vadd.f32 %v724, 1.0
      %v750 = vadd.f32 %v725, 1.0
      %v751 = vadd.f32 %v726, 1.0
      %v752 = vadd.f32 %v727, 1.0
      %v753 = vadd.f32 %v728, 1.0
      %v754 = vadd.f32 %v729, 1.0
      %v755 = vadd.f32 %v730, 1.0
      %v756 = vadd.f32 %v731, 1.0
      %v757 = vadd.f32 %v732, 1.0
      %v758 = vadd.f32 %v733, 1.0
      %v759 = vadd.f32 %v734, 1.0
      %v760 = vadd.f32 %v735, 1.0
      %v761 = vadd.f32 %v736, 1.0
      %v762 = vadd.f32 %v737, 1.0
      %v763 = vadd.f32 %v738, 1.0
      %v764 = vmul.f32 %v564, %v739
      %v765 = vmul.f32 %v565, %v740
      %v766 = vmul.f32 %v566, %v741
      %v767 = vmul.f32 %v567, %v742
      %v768 = vmul.f32 %v568, %v743
      %v769 = vmul.f32 %v569, %v744
      %v770 = vmul.f32 %v570, %v745
      %v771 = vmul.f32 %v571, %v746
      %v772 = vmul.f32 %v572, %v747
      %v773 = vmul.f32 %v573, %v748
      %v774 = vmul.f32 %v574, %v749
      %v775 = vmul.f32 %v575, %v750
      %v776 = vmul.f32 %v576, %v751
      %v777 = vmul.f32 %v577, %v752
      %v778 = vmul.f32 %v578, %v753
      %v779 = vmul.f32 %v579, %v754
      %v780 = vmul.f32 %v580, %v755
      %v781 = vmul.f32 %v581, %v756
      %v782 = vmul.f32 %v582, %v757
      %v783 = vmul.f32 %v583, %v758
      %v784 = vmul.f32 %v584, %v759
      %v785 = vmul.f32 %v585, %v760
      %v786 = vmul.f32 %v586, %v761
      %v787 = vmul.f32 %v587, %v762
      %v788 = vmul.f32 %v588, %v763
      %v789 = vpack.c.bf16 %v765, %v764
      %v790 = vpack.c.bf16 %v767, %v766
      %v791 = vpack.c.bf16 %v769, %v768
      %v792 = vpack.c.bf16 %v771, %v770
      %v793 = vpack.c.bf16 %v773, %v772
      %v794 = vpack.c.bf16 %v775, %v774
      %v795 = vpack.c.bf16 %v777, %v776
      %v796 = vpack.c.bf16 %v779, %v778
      %v797 = vpack.c.bf16 %v781, %v780
      %v798 = vpack.c.bf16 %v783, %v782
      %v799 = vpack.c.bf16 %v785, %v784
      %v800 = vpack.c.bf16 %v787, %v786
      %v801 = vpack.c.bf16 %v788, %v788
      %v802 = vld [vmem:[%s4] sm:$0xf]
      %v803 = vld [vmem:[%s4 + $0x4] sm:$0xf]
      %v804 = vld [vmem:[%s4 + $0x8] sm:$0xf]
      %v805 = vld [vmem:[%s4 + $0xc] sm:$0xf]
      %v806 = vld [vmem:[%s4 + $0x10] sm:$0xf]
      %v807 = vld [vmem:[%s4 + $0x14] sm:$0xf]
      %v808 = vld [vmem:[%s4 + $0x18] sm:$0xf]
      %v809 = vld [vmem:[%s4 + $0x1c] sm:$0xf]
      %v810 = vld [vmem:[%s5] sm:$0x1]
      %v812 = vlaneseq
      %v813 = vshrl.u32 %v812, 7
      %v814 = vsub.s32 0, %v813
      %v815 = vrot.slane %v810, %v814
      %v825 = vunpack.c.l.b16 %v802
      %v826 = vunpack.c.l.b16 %v803
      %v827 = vunpack.c.l.b16 %v804
      %v828 = vunpack.c.l.b16 %v805
      %v829 = vunpack.c.l.b16 %v806
      %v830 = vunpack.c.l.b16 %v807
      %v831 = vunpack.c.l.b16 %v808
      %v832 = vunpack.c.l.b16 %v809
      %v833 = vpack.c.b16 %v826, %v825
      %v834 = vpack.c.b16 %v828, %v827
      %v835 = vpack.c.b16 %v830, %v829
      %v836 = vpack.c.b16 %v832, %v831
      %vm841 = vcmask 523264
      %v843 = vsel %vm841, %v789, 0
      %v846 = vsel %vm841, %v790, 0
      %v849 = vsel %vm841, %v791, 0
      %v852 = vsel %vm841, %v792, 0
      %v855 = vsel %vm841, %v793, 0
      %v858 = vsel %vm841, %v794, 0
      %v861 = vsel %vm841, %v795, 0
      %v864 = vsel %vm841, %v796, 0
      %v867 = vsel %vm841, %v797, 0
      %v870 = vsel %vm841, %v798, 0
      %v873 = vsel %vm841, %v799, 0
      %v876 = vsel %vm841, %v800, 0
      %v879 = vsel %vm841, %v801, 0
      %881 = vmatprep.subr.bf16.mxu0 0
      %882 = vmatpush1.bf16.msra.mxu0 %v833
      %883 = vmatprep.subr.bf16.mxu0 0
      %884 = vmatpush1.bf16.msra.mxu0 %v834
      %885 = vmatprep.subr.bf16.mxu0 0
      %886 = vmatpush1.bf16.msra.mxu0 %v835
      %887 = vmatprep.subr.bf16.mxu0 0
      %888 = vmatpush1.bf16.msra.mxu0 %v836
      %889 = vmatprep.subr.bf16.mxu0 0
      %890 = vmatpush1.bf16.msra.mxu0 0
      %891 = vmatprep.subr.bf16.mxu0 0
      %892 = vmatpush1.bf16.msra.mxu0 0
      %893 = vmatprep.subr.bf16.mxu0 0
      %894 = vmatpush1.bf16.msra.mxu0 0
      %895 = vmatprep.subr.bf16.mxu0 0
      %896 = vmatpush1.bf16.msra.mxu0 0
      %897 = vmatprep.subr.bf16.mxu0 0
      %898 = vmatpush1.bf16.msra.mxu0 0
      %899 = vmatprep.subr.bf16.mxu0 0
      %900 = vmatpush1.bf16.msra.mxu0 0
      %901 = vmatprep.subr.bf16.mxu0 0
      %902 = vmatpush1.bf16.msra.mxu0 0
      %903 = vmatprep.subr.bf16.mxu0 0
      %904 = vmatpush1.bf16.msra.mxu0 0
      %905 = vmatprep.subr.bf16.mxu0 0
      %906 = vmatpush1.bf16.msra.mxu0 0
      %907 = vmatprep.subr.bf16.mxu0 0
      %908 = vmatpush1.bf16.msra.mxu0 0
      %909 = vmatprep.subr.bf16.mxu0 0
      %910 = vmatpush1.bf16.msra.mxu0 0
      %911 = vmatprep.subr.bf16.mxu0 0
      %912 = vmatpush1.bf16.msra.mxu0 0
      %913 = vmatprep.mubr.bf16.mxu0 0
      %914 = vmatmul.mubr.bf16.gmra.mrb[0].mxu0 %v843
      %v915 = vpop.f32.mrb[0].mxu0
      %v916 = vadd.f32 %v815, %v915
      %v917 = vpop.f32.mrb[0].mxu0
      %v918 = vpop.f32.mrb[0].mxu0
      %v919 = vadd.f32 %v815, %v918
      %v920 = vpop.f32.mrb[0].mxu0
      %921 = vmatprep.mubr.bf16.mxu0 0
      %922 = vmatmul.mubr.bf16.gmra.mrb[0].mxu0 %v846
      %v923 = vpop.f32.mrb[0].mxu0
      %v924 = vadd.f32 %v815, %v923
      %v925 = vpop.f32.mrb[0].mxu0
      %v926 = vpop.f32.mrb[0].mxu0
      %v927 = vadd.f32 %v815, %v926
      %v928 = vpop.f32.mrb[0].mxu0
      %929 = vmatprep.mubr.bf16.mxu0 0
      %930 = vmatmul.mubr.bf16.gmra.mrb[0].mxu0 %v849
      %v931 = vpop.f32.mrb[0].mxu0
      %v932 = vadd.f32 %v815, %v931
      %v933 = vpop.f32.mrb[0].mxu0
      %v934 = vpop.f32.mrb[0].mxu0
      %v935 = vadd.f32 %v815, %v934
      %v936 = vpop.f32.mrb[0].mxu0
      %937 = vmatprep.mubr.bf16.mxu0 0
      %938 = vmatmul.mubr.bf16.gmra.mrb[0].mxu0 %v852
      %v939 = vpop.f32.mrb[0].mxu0
      %v940 = vadd.f32 %v815, %v939
      %v941 = vpop.f32.mrb[0].mxu0
      %v942 = vpop.f32.mrb[0].mxu0
      %v943 = vadd.f32 %v815, %v942
      %v944 = vpop.f32.mrb[0].mxu0
      %945 = vmatprep.mubr.bf16.mxu0 0
      %946 = vmatmul.mubr.bf16.gmra.mrb[0].mxu0 %v855
      %v947 = vpop.f32.mrb[0].mxu0
      %v948 = vadd.f32 %v815, %v947
      %v949 = vpop.f32.mrb[0].mxu0
      %v950 = vpop.f32.mrb[0].mxu0
      %v951 = vadd.f32 %v815, %v950
      %v952 = vpop.f32.mrb[0].mxu0
      %953 = vmatprep.mubr.bf16.mxu0 0
      %954 = vmatmul.mubr.bf16.gmra.mrb[0].mxu0 %v858
      %v955 = vpop.f32.mrb[0].mxu0
      %v956 = vadd.f32 %v815, %v955
      %v957 = vpop.f32.mrb[0].mxu0
      %v958 = vpop.f32.mrb[0].mxu0
      %v959 = vadd.f32 %v815, %v958
      %v960 = vpop.f32.mrb[0].mxu0
      %961 = vmatprep.mubr.bf16.mxu0 0
      %962 = vmatmul.mubr.bf16.gmra.mrb[0].mxu0 %v861
      %v963 = vpop.f32.mrb[0].mxu0
      %v964 = vadd.f32 %v815, %v963
      %v965 = vpop.f32.mrb[0].mxu0
      %v966 = vpop.f32.mrb[0].mxu0
      %v967 = vadd.f32 %v815, %v966
      %v968 = vpop.f32.mrb[0].mxu0
      %969 = vmatprep.mubr.bf16.mxu0 0
      %970 = vmatmul.mubr.bf16.gmra.mrb[0].mxu0 %v864
      %v971 = vpop.f32.mrb[0].mxu0
      %v972 = vadd.f32 %v815, %v971
      %v973 = vpop.f32.mrb[0].mxu0
      %v974 = vpop.f32.mrb[0].mxu0
      %v975 = vadd.f32 %v815, %v974
      %v976 = vpop.f32.mrb[0].mxu0
      %977 = vmatprep.mubr.bf16.mxu0 0
      %978 = vmatmul.mubr.bf16.gmra.mrb[0].mxu0 %v867
      %v979 = vpop.f32.mrb[0].mxu0
      %v980 = vadd.f32 %v815, %v979
      %v981 = vpop.f32.mrb[0].mxu0
      %v982 = vpop.f32.mrb[0].mxu0
      %v983 = vadd.f32 %v815, %v982
      %v984 = vpop.f32.mrb[0].mxu0
      %985 = vmatprep.mubr.bf16.mxu0 0
      %986 = vmatmul.mubr.bf16.gmra.mrb[0].mxu0 %v870
      %v987 = vpop.f32.mrb[0].mxu0
      %v988 = vadd.f32 %v815, %v987
      %v989 = vpop.f32.mrb[0].mxu0
      %v990 = vpop.f32.mrb[0].mxu0
      %v991 = vadd.f32 %v815, %v990
      %v992 = vpop.f32.mrb[0].mxu0
      %993 = vmatprep.mubr.bf16.mxu0 0
      %994 = vmatmul.mubr.bf16.gmra.mrb[0].mxu0 %v873
      %v995 = vpop.f32.mrb[0].mxu0
      %v996 = vadd.f32 %v815, %v995
      %v997 = vpop.f32.mrb[0].mxu0
      %v998 = vpop.f32.mrb[0].mxu0
      %v999 = vadd.f32 %v815, %v998
      %v1000 = vpop.f32.mrb[0].mxu0
      %1001 = vmatprep.mubr.bf16.mxu0 0
      %1002 = vmatmul.mubr.bf16.gmra.mrb[0].mxu0 %v876
      %v1003 = vpop.f32.mrb[0].mxu0
      %v1004 = vadd.f32 %v815, %v1003
      %v1005 = vpop.f32.mrb[0].mxu0
      %v1006 = vpop.f32.mrb[0].mxu0
      %v1007 = vadd.f32 %v815, %v1006
      %v1008 = vpop.f32.mrb[0].mxu0
      %1009 = vmatprep.mubr.bf16.mxu0 0
      %1010 = vmatmul.mubr.bf16.gmra.mrb[0].mxu0 %v879
      %v1011 = vpop.f32.mrb[0].mxu0
      %v1012 = vadd.f32 %v815, %v1011
      %v1013 = vpop.f32.mrb[0].mxu0
      %v1014 = vpop.f32.mrb[0].mxu0
      %v1015 = vpop.f32.mrb[0].mxu0
      %1016 = vdwg.mxu0
      %v1017 = vld [vmem:[%s6] sm:$0x1]
      %v1019 = vlaneseq
      %v1020 = vshrl.u32 %v1019, 7
      %v1021 = vsub.s32 0, %v1020
      %v1022 = vrot.slane %v1017, %v1021
      %v1024 = vmul.f32 %v916, %v1022
      %v1025 = vmul.f32 %v919, %v1022
      %v1026 = vmul.f32 %v924, %v1022
      %v1027 = vmul.f32 %v927, %v1022
      %v1028 = vmul.f32 %v932, %v1022
      %v1029 = vmul.f32 %v935, %v1022
      %v1030 = vmul.f32 %v940, %v1022
      %v1031 = vmul.f32 %v943, %v1022
      %v1032 = vmul.f32 %v948, %v1022
      %v1033 = vmul.f32 %v951, %v1022
      %v1034 = vmul.f32 %v956, %v1022
      %v1035 = vmul.f32 %v959, %v1022
      %v1036 = vmul.f32 %v964, %v1022
      %v1037 = vmul.f32 %v967, %v1022
      %v1038 = vmul.f32 %v972, %v1022
      %v1039 = vmul.f32 %v975, %v1022
      %v1040 = vmul.f32 %v980, %v1022
      %v1041 = vmul.f32 %v983, %v1022
      %v1042 = vmul.f32 %v988, %v1022
      %v1043 = vmul.f32 %v991, %v1022
      %v1044 = vmul.f32 %v996, %v1022
      %v1045 = vmul.f32 %v999, %v1022
      %v1046 = vmul.f32 %v1004, %v1022
      %v1047 = vmul.f32 %v1007, %v1022
      %v1048 = vmul.f32 %v1012, %v1022
      %v1049 = vld [vmem:[%s7] sm:$0x1]
      %v1051 = vlaneseq
      %v1052 = vshrl.u32 %v1051, 7
      %v1053 = vsub.s32 0, %v1052
      %v1054 = vrot.slane %v1049, %v1053
      %v1056 = vadd.f32 %v1024, %v1054
      %v1057 = vadd.f32 %v1025, %v1054
      %v1058 = vadd.f32 %v1026, %v1054
      %v1059 = vadd.f32 %v1027, %v1054
      %v1060 = vadd.f32 %v1028, %v1054
      %v1061 = vadd.f32 %v1029, %v1054
      %v1062 = vadd.f32 %v1030, %v1054
      %v1063 = vadd.f32 %v1031, %v1054
      %v1064 = vadd.f32 %v1032, %v1054
      %v1065 = vadd.f32 %v1033, %v1054
      %v1066 = vadd.f32 %v1034, %v1054
      %v1067 = vadd.f32 %v1035, %v1054
      %v1068 = vadd.f32 %v1036, %v1054
      %v1069 = vadd.f32 %v1037, %v1054
      %v1070 = vadd.f32 %v1038, %v1054
      %v1071 = vadd.f32 %v1039, %v1054
      %v1072 = vadd.f32 %v1040, %v1054
      %v1073 = vadd.f32 %v1041, %v1054
      %v1074 = vadd.f32 %v1042, %v1054
      %v1075 = vadd.f32 %v1043, %v1054
      %v1076 = vadd.f32 %v1044, %v1054
      %v1077 = vadd.f32 %v1045, %v1054
      %v1078 = vadd.f32 %v1046, %v1054
      %v1079 = vadd.f32 %v1047, %v1054
      %v1080 = vadd.f32 %v1048, %v1054
      %v1081 = vld [vmem:[%s320] sm:$0xff]
      %v1082 = vld [vmem:[%s320 + $0x8] sm:$0xff]
      %v1083 = vld [vmem:[%s320 + $0x10] sm:$0xff]
      %v1084 = vld [vmem:[%s320 + $0x18] sm:$0xff]
      %v1085 = vld [vmem:[%s320 + $0x20] sm:$0xff]
      %v1086 = vld [vmem:[%s320 + $0x28] sm:$0xff]
      %v1087 = vld [vmem:[%s320 + $0x30] sm:$0xff]
      %v1088 = vld [vmem:[%s320 + $0x38] sm:$0xff]
      %v1089 = vld [vmem:[%s320 + $0x40] sm:$0xff]
      %v1090 = vld [vmem:[%s320 + $0x48] sm:$0xff]
      %v1091 = vld [vmem:[%s320 + $0x50] sm:$0xff]
      %v1092 = vld [vmem:[%s320 + $0x58] sm:$0xff]
      %v1093 = vld [vmem:[%s320 + $0x60] sm:$0xff]
      %v1094 = vld [vmem:[%s320 + $0x68] sm:$0xff]
      %v1095 = vld [vmem:[%s320 + $0x70] sm:$0xff]
      %v1096 = vld [vmem:[%s320 + $0x78] sm:$0xff]
      %v1097 = vld [vmem:[%s320 + $0x80] sm:$0xff]
      %v1098 = vld [vmem:[%s320 + $0x88] sm:$0xff]
      %v1099 = vld [vmem:[%s320 + $0x90] sm:$0xff]
      %v1100 = vld [vmem:[%s320 + $0x98] sm:$0xff]
      %v1101 = vld [vmem:[%s320 + $0xa0] sm:$0xff]
      %v1102 = vld [vmem:[%s320 + $0xa8] sm:$0xff]
      %v1103 = vld [vmem:[%s320 + $0xb0] sm:$0xff]
      %v1104 = vld [vmem:[%s320 + $0xb8] sm:$0xff]
      %v1105 = vld [vmem:[%s320 + $0xc0] sm:$0xf]
      %v1106 = vadd.f32 %v1081, %v1056
      %v1107 = vadd.f32 %v1082, %v1057
      %v1108 = vadd.f32 %v1083, %v1058
      %v1109 = vadd.f32 %v1084, %v1059
      %v1110 = vadd.f32 %v1085, %v1060
      %v1111 = vadd.f32 %v1086, %v1061
      %v1112 = vadd.f32 %v1087, %v1062
      %v1113 = vadd.f32 %v1088, %v1063
      %v1114 = vadd.f32 %v1089, %v1064
      %v1115 = vadd.f32 %v1090, %v1065
      %v1116 = vadd.f32 %v1091, %v1066
      %v1117 = vadd.f32 %v1092, %v1067
      %v1118 = vadd.f32 %v1093, %v1068
      %v1119 = vadd.f32 %v1094, %v1069
      %v1120 = vadd.f32 %v1095, %v1070
      %v1121 = vadd.f32 %v1096, %v1071
      %v1122 = vadd.f32 %v1097, %v1072
      %v1123 = vadd.f32 %v1098, %v1073
      %v1124 = vadd.f32 %v1099, %v1074
      %v1125 = vadd.f32 %v1100, %v1075
      %v1126 = vadd.f32 %v1101, %v1076
      %v1127 = vadd.f32 %v1102, %v1077
      %v1128 = vadd.f32 %v1103, %v1078
      %v1129 = vadd.f32 %v1104, %v1079
      %v1130 = vadd.f32 %v1105, %v1080
      %1131 = vst.msk [vmem:[%s325] sm:$0xff] %vm388, %v1106
      %1132 = vst.msk [vmem:[%s325 + $0x8] sm:$0xff] %vm388, %v1107
      %1133 = vst.msk [vmem:[%s325 + $0x10] sm:$0xff] %vm388, %v1108
      %1134 = vst.msk [vmem:[%s325 + $0x18] sm:$0xff] %vm388, %v1109
      %1135 = vst.msk [vmem:[%s325 + $0x20] sm:$0xff] %vm388, %v1110
      %1136 = vst.msk [vmem:[%s325 + $0x28] sm:$0xff] %vm388, %v1111
      %1137 = vst.msk [vmem:[%s325 + $0x30] sm:$0xff] %vm388, %v1112
      %1138 = vst.msk [vmem:[%s325 + $0x38] sm:$0xff] %vm388, %v1113
      %1139 = vst.msk [vmem:[%s325 + $0x40] sm:$0xff] %vm388, %v1114
      %1140 = vst.msk [vmem:[%s325 + $0x48] sm:$0xff] %vm388, %v1115
      %1141 = vst.msk [vmem:[%s325 + $0x50] sm:$0xff] %vm388, %v1116
      %1142 = vst.msk [vmem:[%s325 + $0x58] sm:$0xff] %vm388, %v1117
      %1143 = vst.msk [vmem:[%s325 + $0x60] sm:$0xff] %vm388, %v1118
      %1144 = vst.msk [vmem:[%s325 + $0x68] sm:$0xff] %vm388, %v1119
      %1145 = vst.msk [vmem:[%s325 + $0x70] sm:$0xff] %vm388, %v1120
      %1146 = vst.msk [vmem:[%s325 + $0x78] sm:$0xff] %vm388, %v1121
      %1147 = vst.msk [vmem:[%s325 + $0x80] sm:$0xff] %vm388, %v1122
      %1148 = vst.msk [vmem:[%s325 + $0x88] sm:$0xff] %vm388, %v1123
      %1149 = vst.msk [vmem:[%s325 + $0x90] sm:$0xff] %vm388, %v1124
      %1150 = vst.msk [vmem:[%s325 + $0x98] sm:$0xff] %vm388, %v1125
      %1151 = vst.msk [vmem:[%s325 + $0xa0] sm:$0xff] %vm388, %v1126
      %1152 = vst.msk [vmem:[%s325 + $0xa8] sm:$0xff] %vm388, %v1127
      %1153 = vst.msk [vmem:[%s325 + $0xb0] sm:$0xff] %vm388, %v1128
      %1154 = vst.msk [vmem:[%s325 + $0xb8] sm:$0xff] %vm388, %v1129
      %vm1155 = vcmask 257024
      %1156 = vst.msk [vmem:[%s325 + $0xc0] sm:$0xf] %vm1155, %v1130
      %p1157 = scmp.lt.s32.totalorder %s19, 1
      %s1158 = scalar_select %p1157, %s19, 1
      %s1159 = smul.addr %s1158, 25
      %s1160 = smul.addr %s1159, 8
      %s1161 = scalar_lea.vmem %s8, %s1160
      // Predicated region
      $region53: #{basicblock2_forward.5} parent=51 // pred_check
        %p1162 = pneg %p215
      $region54: #{basicblock2_forward.5} parent=51 // pred_check_branch
        %1164 = sbr.rel (%p1162) target = $region56
      $region55: #{basicblock2_forward.5} parent=51 // pred_region
        _
      $region56: #{basicblock2_forward.5} parent=51 // pred_fallthru
        _
    $region52: #{basicblock2_forward.5} parent=5 // pred_fallthru
      _
    %p1165 = scmp.le.s32.totalorder 2, %s14
    // Predicated region
    $region57: #{basicblock2_forward.5} parent=5 // pred_check
      %p1166 = pneg %p1165
    $region58: #{basicblock2_forward.5} parent=5 // pred_check_branch
      %1168 = sbr.rel (%p1166) target = $region60
    $region59: #{basicblock2_forward.5} parent=5 // pred_region
      %s1169 = ssub.s32 %s14, 2
      // Predicated region
      $region61: #{basicblock2_forward.5} parent=59 // pred_check
        %p1170 = pneg %p221
      $region62: #{basicblock2_forward.5} parent=59 // pred_check_branch
        %1172 = sbr.rel (%p1170) target = $region64
      $region63: #{basicblock2_forward.5} parent=59 // pred_region
        %p1173 = scmp.lt.s32.totalorder %s20, 1
        %s1174 = scalar_select %p1173, %s20, 1
        %s1175 = smul.addr %s1174, 25
        %s1176 = smul.addr %s1175, 8
        %s1177 = scalar_lea.vmem %s8, %s1176
      $region64: #{basicblock2_forward.5} parent=59 // pred_fallthru
        _
    $region60: #{basicblock2_forward.5} parent=5 // pred_fallthru
      _
  $region6: #{basicblock2_forward.5} parent=0 // loop_footer
    %s18 = sadd.s32 1, %s14
  $region7: #{basicblock2_forward.5} parent=0 // loop_footer_branch
    %13 = sbr.rel target = $region3
  $region8: #{basicblock2_forward.5} parent=0 // loop_exit
    _

// kernel: basicblock2_forward.3
$region0: #{basicblock2_forward.3}
  #allocation0 [shape = 'u32[]', space=smem, size = 0x4, offset = 0x4, fixed_abs, tag = 'smem constant byte address 0x4 - core index']
  #allocation1 [shape = 'u32[144,128]{1,0:T(1,128)}', space=vmem, size = 0x12000, scoped, tag = 'internal scratch']
  %s0 = inlined_call_operand.vmem [shape: f32[2,20,20,32], index: 0, kind: input, shape index: {}]
  %s1 = inlined_call_operand.vmem [shape: f32[49,32], index: 1, kind: input, shape index: {}]
  %s2 = inlined_call_operand.vmem [shape: f32[1,32], index: 2, kind: input, shape index: {}]
  %s3 = inlined_call_operand.vmem [shape: f32[1,32], index: 3, kind: input, shape index: {}]
  %s4 = inlined_call_operand.vmem [shape: f32[1,32], index: 4, kind: input, shape index: {}]
  %s5 = inlined_call_operand.vmem [shape: f32[2,14,14,32], index: 5, kind: output, shape index: {0}]
  %s6 = inlined_call_operand.vmem [shape: bf16[2,14,14,32], index: 6, kind: output, shape index: {1}]
  %7 = xla_tuple %s5, %s6
  %s8 = sld [smem:[#allocation0]]
  $region61: #{basicblock2_forward.3} parent=0
    _
  %s10 = ssub.s32 1, %s8
  %s11 = scalar_select 0, %s10, %s8
  loop: start=0, step=1, limit=4
  $region2: #{basicblock2_forward.3} parent=0 // loop_pre_header
    _
  $region3: #{basicblock2_forward.3} parent=0 // loop_header
    %s13 = sphi 0, %s17
    %p14 = scmp.ge.s32.totalorder %s13, 4
    %s23 = sphi 0, %s25
    %s26 = sphi 0, %s23
    %s27 = sphi 0, %s26
    %s43 = sphi 0, %s27
    %s47 = sphi 0, %s47
    %s49 = sphi 0, %s47
    %s50 = sphi 0, %s49
    %s64 = sphi 0, %s50
    %s68 = sphi 0, %s68
    %s70 = sphi 0, %s68
    %s71 = sphi 0, %s70
    %s85 = sphi 0, %s71
    %s89 = sphi 0, %s89
    %s91 = sphi 0, %s89
    %s92 = sphi 0, %s91
    %s106 = sphi 0, %s92
    %s110 = sphi 0, %s110
    %s112 = sphi 0, %s110
    %s113 = sphi 0, %s112
    %s127 = sphi 0, %s113
    %s133 = sphi 0, %s135
    %s136 = sphi 0, %s133
    %s137 = sphi 0, %s136
    %s153 = sphi 0, %s137
    %s159 = sphi 0, %s161
    %s162 = sphi 0, %s159
    %s163 = sphi 0, %s162
    %s179 = sphi 0, %s163
  $region4: #{basicblock2_forward.3} parent=0 // loop_header_branch
    %16 = sbr.rel (%p14) target = $region8
  $region5: #{basicblock2_forward.3} parent=0 // loop_body
    %s18 = ssub.s32 %s13, 1
    %s19 = ssub.s32 %s13, 2
    %s20 = sadd.s32 %s13, 1
    %s21 = ssub.s32 %s13, %s20
    %p22 = scmp.eq.s32.totalorder %s21, 0
    %s24 = sadd.s32 %s23, 1
    %s25 = scalar_select %p22, %s23, %s24
    %p28 = pneg %p22
    %p29 = scmp.eq.s32.totalorder %s13, 1
    %p30 = por %p28, %p29
    %p31 = scmp.ne.s32.totalorder %s23, %s26
    %p32 = scmp.eq.s32.totalorder %s13, 0
    %p33 = por %p31, %p32
    %p34 = scmp.ne.s32.totalorder %s23, %s26
    %p35 = scmp.eq.s32.totalorder %s18, 1
    %p36 = por %p34, %p35
    %p37 = scmp.ne.s32.totalorder %s26, %s27
    %p38 = scmp.eq.s32.totalorder %s18, 0
    %p39 = por %p37, %p38
    %p40 = scmp.ne.s32.totalorder %s26, %s27
    %p41 = scmp.eq.s32.totalorder %s19, 1
    %p42 = por %p40, %p41
    %p44 = scmp.ne.s32.totalorder %s27, %s43
    %p45 = scmp.eq.s32.totalorder %s19, 0
    %p46 = por %p44, %p45
    %s48 = sadd.s32 %s47, 1
    %p51 = scmp.eq.s32.totalorder %s13, 1
    %p52 = scmp.ne.s32.totalorder %s47, %s49
    %p53 = scmp.eq.s32.totalorder %s13, 0
    %p54 = por %p52, %p53
    %p55 = scmp.ne.s32.totalorder %s47, %s49
    %p56 = scmp.eq.s32.totalorder %s18, 1
    %p57 = por %p55, %p56
    %p58 = scmp.ne.s32.totalorder %s49, %s50
    %p59 = scmp.eq.s32.totalorder %s18, 0
    %p60 = por %p58, %p59
    %p61 = scmp.ne.s32.totalorder %s49, %s50
    %p62 = scmp.eq.s32.totalorder %s19, 1
    %p63 = por %p61, %p62
    %p65 = scmp.ne.s32.totalorder %s50, %s64
    %p66 = scmp.eq.s32.totalorder %s19, 0
    %p67 = por %p65, %p66
    %s69 = sadd.s32 %s68, 1
    %p72 = scmp.eq.s32.totalorder %s13, 1
    %p73 = scmp.ne.s32.totalorder %s68, %s70
    %p74 = scmp.eq.s32.totalorder %s13, 0
    %p75 = por %p73, %p74
    %p76 = scmp.ne.s32.totalorder %s68, %s70
    %p77 = scmp.eq.s32.totalorder %s18, 1
    %p78 = por %p76, %p77
    %p79 = scmp.ne.s32.totalorder %s70, %s71
    %p80 = scmp.eq.s32.totalorder %s18, 0
    %p81 = por %p79, %p80
    %p82 = scmp.ne.s32.totalorder %s70, %s71
    %p83 = scmp.eq.s32.totalorder %s19, 1
    %p84 = por %p82, %p83
    %p86 = scmp.ne.s32.totalorder %s71, %s85
    %p87 = scmp.eq.s32.totalorder %s19, 0
    %p88 = por %p86, %p87
    %s90 = sadd.s32 %s89, 1
    %p93 = scmp.eq.s32.totalorder %s13, 1
    %p94 = scmp.ne.s32.totalorder %s89, %s91
    %p95 = scmp.eq.s32.totalorder %s13, 0
    %p96 = por %p94, %p95
    %p97 = scmp.ne.s32.totalorder %s89, %s91
    %p98 = scmp.eq.s32.totalorder %s18, 1
    %p99 = por %p97, %p98
    %p100 = scmp.ne.s32.totalorder %s91, %s92
    %p101 = scmp.eq.s32.totalorder %s18, 0
    %p102 = por %p100, %p101
    %p103 = scmp.ne.s32.totalorder %s91, %s92
    %p104 = scmp.eq.s32.totalorder %s19, 1
    %p105 = por %p103, %p104
    %p107 = scmp.ne.s32.totalorder %s92, %s106
    %p108 = scmp.eq.s32.totalorder %s19, 0
    %p109 = por %p107, %p108
    %s111 = sadd.s32 %s110, 1
    %p114 = scmp.eq.s32.totalorder %s13, 1
    %p115 = scmp.ne.s32.totalorder %s110, %s112
    %p116 = scmp.eq.s32.totalorder %s13, 0
    %p117 = por %p115, %p116
    %p118 = scmp.ne.s32.totalorder %s110, %s112
    %p119 = scmp.eq.s32.totalorder %s18, 1
    %p120 = por %p118, %p119
    %p121 = scmp.ne.s32.totalorder %s112, %s113
    %p122 = scmp.eq.s32.totalorder %s18, 0
    %p123 = por %p121, %p122
    %p124 = scmp.ne.s32.totalorder %s112, %s113
    %p125 = scmp.eq.s32.totalorder %s19, 1
    %p126 = por %p124, %p125
    %p128 = scmp.ne.s32.totalorder %s113, %s127
    %p129 = scmp.eq.s32.totalorder %s19, 0
    %p130 = por %p128, %p129
    %s131 = ssub.s32 %s13, %s20
    %p132 = scmp.eq.s32.totalorder %s131, 0
    %s134 = sadd.s32 %s133, 1
    %s135 = scalar_select %p132, %s133, %s134
    %p138 = pneg %p132
    %p139 = scmp.eq.s32.totalorder %s13, 1
    %p140 = por %p138, %p139
    %p141 = scmp.ne.s32.totalorder %s133, %s136
    %p142 = scmp.eq.s32.totalorder %s13, 0
    %p143 = por %p141, %p142
    %p144 = scmp.ne.s32.totalorder %s133, %s136
    %p145 = scmp.eq.s32.totalorder %s18, 1
    %p146 = por %p144, %p145
    %p147 = scmp.ne.s32.totalorder %s136, %s137
    %p148 = scmp.eq.s32.totalorder %s18, 0
    %p149 = por %p147, %p148
    %p150 = scmp.ne.s32.totalorder %s136, %s137
    %p151 = scmp.eq.s32.totalorder %s19, 1
    %p152 = por %p150, %p151
    %p154 = scmp.ne.s32.totalorder %s137, %s153
    %p155 = scmp.eq.s32.totalorder %s19, 0
    %p156 = por %p154, %p155
    %s157 = ssub.s32 %s13, %s20
    %p158 = scmp.eq.s32.totalorder %s157, 0
    %s160 = sadd.s32 %s159, 1
    %s161 = scalar_select %p158, %s159, %s160
    %p164 = pneg %p158
    %p165 = scmp.eq.s32.totalorder %s13, 1
    %p166 = por %p164, %p165
    %p167 = scmp.ne.s32.totalorder %s159, %s162
    %p168 = scmp.eq.s32.totalorder %s13, 0
    %p169 = por %p167, %p168
    %p170 = scmp.ne.s32.totalorder %s159, %s162
    %p171 = scmp.eq.s32.totalorder %s18, 1
    %p172 = por %p170, %p171
    %p173 = scmp.ne.s32.totalorder %s162, %s163
    %p174 = scmp.eq.s32.totalorder %s18, 0
    %p175 = por %p173, %p174
    %p176 = scmp.ne.s32.totalorder %s162, %s163
    %p177 = scmp.eq.s32.totalorder %s19, 1
    %p178 = por %p176, %p177
    %p180 = scmp.ne.s32.totalorder %s163, %s179
    %p181 = scmp.eq.s32.totalorder %s19, 0
    %p182 = por %p180, %p181
    %p183 = scmp.le.s32.totalorder 1, %s13
    %p184 = scmp.lt.s32.totalorder %s13, 3
    %p185 = pnand %p183, %p184
    %p186 = pneg %p185
    // Predicated region
    $region9: #{basicblock2_forward.3} parent=5 // pred_check
      _
    $region10: #{basicblock2_forward.3} parent=5 // pred_check_branch
      %188 = sbr.rel (%p185) target = $region12
    $region11: #{basicblock2_forward.3} parent=5 // pred_region
      %s189 = ssub.s32 %s13, 1
      // Predicated region
      $region13: #{basicblock2_forward.3} parent=11 // pred_check
        %p190 = pneg %p60
      $region14: #{basicblock2_forward.3} parent=11 // pred_check_branch
        %192 = sbr.rel (%p190) target = $region16
      $region15: #{basicblock2_forward.3} parent=11 // pred_region
        _
      $region16: #{basicblock2_forward.3} parent=11 // pred_fallthru
        _
      // Predicated region
      $region17: #{basicblock2_forward.3} parent=11 // pred_check
        %p193 = pneg %p81
      $region18: #{basicblock2_forward.3} parent=11 // pred_check_branch
        %195 = sbr.rel (%p193) target = $region20
      $region19: #{basicblock2_forward.3} parent=11 // pred_region
        _
      $region20: #{basicblock2_forward.3} parent=11 // pred_fallthru
        _
      // Predicated region
      $region21: #{basicblock2_forward.3} parent=11 // pred_check
        %p196 = pneg %p102
      $region22: #{basicblock2_forward.3} parent=11 // pred_check_branch
        %198 = sbr.rel (%p196) target = $region24
      $region23: #{basicblock2_forward.3} parent=11 // pred_region
        _
      $region24: #{basicblock2_forward.3} parent=11 // pred_fallthru
        _
      // Predicated region
      $region25: #{basicblock2_forward.3} parent=11 // pred_check
        %p199 = pneg %p123
      $region26: #{basicblock2_forward.3} parent=11 // pred_check_branch
        %201 = sbr.rel (%p199) target = $region28
      $region27: #{basicblock2_forward.3} parent=11 // pred_region
        _
      $region28: #{basicblock2_forward.3} parent=11 // pred_fallthru
        _
    $region12: #{basicblock2_forward.3} parent=5 // pred_fallthru
      _
    %p202 = scmp.lt.s32.totalorder %s13, 2
    // Predicated region
    $region29: #{basicblock2_forward.3} parent=5 // pred_check
      %p203 = pneg %p202
    $region30: #{basicblock2_forward.3} parent=5 // pred_check_branch
      %205 = sbr.rel (%p203) target = $region32
    $region31: #{basicblock2_forward.3} parent=5 // pred_region
      // Predicated region
      $region33: #{basicblock2_forward.3} parent=31 // pred_check
        %p206 = pneg %p33
      $region34: #{basicblock2_forward.3} parent=31 // pred_check_branch
        %208 = sbr.rel (%p206) target = $region36
      $region35: #{basicblock2_forward.3} parent=31 // pred_region
        %p209 = scmp.lt.s32.totalorder %s13, 1
        %s210 = scalar_select %p209, %s13, 1
        %s211 = smul.addr %s210, 60
        %s212 = smul.addr %s211, 8
        %s213 = scalar_lea.vmem %s0, %s212
      $region36: #{basicblock2_forward.3} parent=31 // pred_fallthru
        _
    $region32: #{basicblock2_forward.3} parent=5 // pred_fallthru
      _
    %p214 = scmp.le.s32.totalorder 1, %s13
    %p215 = scmp.lt.s32.totalorder %s13, 3
    %p216 = pnand %p214, %p215
    %p217 = pneg %p216
    // Predicated region
    $region37: #{basicblock2_forward.3} parent=5 // pred_check
      _
    $region38: #{basicblock2_forward.3} parent=5 // pred_check_branch
      %219 = sbr.rel (%p216) target = $region40
    $region39: #{basicblock2_forward.3} parent=5 // pred_region
      %s220 = ssub.s32 %s13, 1
      %p221 = scmp.lt.s32.totalorder %s18, 1
      %s222 = scalar_select %p221, %s18, 1
      %s223 = smul.addr %s222, 60
      %s224 = smul.addr %s223, 8
      %s225 = scalar_lea.vmem %s0, %s224
      %p226 = pneg %p39
      %p227 = pneg %p36
      %p228 = pneg %p60
      %p229 = pneg %p57
      %p230 = pneg %p81
      %p231 = pneg %p78
      %p232 = pneg %p102
      %p233 = pneg %p99
      %p234 = pneg %p123
      %p235 = pneg %p120
      %p236 = pneg %p149
      %p237 = pneg %p146
      %p238 = scmp.lt.s32.totalorder %s18, 1
      %s239 = scalar_select %p238, %s18, 1
      %s240 = smul.addr %s239, 28
      %s241 = smul.addr %s240, 8
      %s242 = scalar_lea.vmem %s5, %s241
      %p243 = pneg %p175
      %p244 = pneg %p172
      %p245 = scmp.lt.s32.totalorder %s18, 1
      %s246 = scalar_select %p245, %s18, 1
      %s247 = smul.addr %s246, 28
      %s248 = smul.addr %s247, 4
      %s249 = scalar_lea.vmem %s6, %s248
      %p250 = scmp.lt.s32.totalorder %s18, 1
      %s251 = scalar_select %p250, %s18, 1
      %s252 = smul.addr %s251, 60
      %s253 = smul.addr %s252, 8
      %s254 = scalar_lea.vmem %s0, %s253
      %p255 = scmp.lt.s32.totalorder %s18, 1
      %s256 = scalar_select %p255, %s18, 1
      %s257 = smul.addr %s256, 28
      %s258 = smul.addr %s257, 8
      %s259 = scalar_lea.vmem %s5, %s258
      %p260 = scmp.lt.s32.totalorder %s18, 1
      %s261 = scalar_select %p260, %s18, 1
      %s262 = smul.addr %s261, 28
      %s263 = smul.addr %s262, 4
      %s264 = scalar_lea.vmem %s6, %s263
      %v265 = vld [vmem:[%s254] sm:$0xff]
      %v266 = vld [vmem:[%s254 + $0x8] sm:$0xff]
      %v267 = vld [vmem:[%s254 + $0x10] sm:$0xf]
      %v268 = vld [vmem:[%s254 + $0x18] sm:$0xff]
      %v269 = vld [vmem:[%s254 + $0x20] sm:$0xff]
      %v270 = vld [vmem:[%s254 + $0x28] sm:$0xf]
      %v271 = vld [vmem:[%s254 + $0x30] sm:$0xff]
      %v272 = vld [vmem:[%s254 + $0x38] sm:$0xff]
      %v273 = vld [vmem:[%s254 + $0x40] sm:$0xf]
      %v274 = vld [vmem:[%s254 + $0x48] sm:$0xff]
      %v275 = vld [vmem:[%s254 + $0x50] sm:$0xff]
      %v276 = vld [vmem:[%s254 + $0x58] sm:$0xf]
      %v277 = vld [vmem:[%s254 + $0x60] sm:$0xff]
      %v278 = vld [vmem:[%s254 + $0x68] sm:$0xff]
      %v279 = vld [vmem:[%s254 + $0x70] sm:$0xf]
      %v280 = vld [vmem:[%s254 + $0x78] sm:$0xff]
      %v281 = vld [vmem:[%s254 + $0x80] sm:$0xff]
      %v282 = vld [vmem:[%s254 + $0x88] sm:$0xf]
      %v283 = vld [vmem:[%s254 + $0x90] sm:$0xff]
      %v284 = vld [vmem:[%s254 + $0x98] sm:$0xff]
      %v285 = vld [vmem:[%s254 + $0xa0] sm:$0xf]
      %v286 = vld [vmem:[%s254 + $0xa8] sm:$0xff]
      %v287 = vld [vmem:[%s254 + $0xb0] sm:$0xff]
      %v288 = vld [vmem:[%s254 + $0xb8] sm:$0xf]
      %v289 = vld [vmem:[%s254 + $0xc0] sm:$0xff]
      %v290 = vld [vmem:[%s254 + $0xc8] sm:$0xff]
      %v291 = vld [vmem:[%s254 + $0xd0] sm:$0xf]
      %v292 = vld [vmem:[%s254 + $0xd8] sm:$0xff]
      %v293 = vld [vmem:[%s254 + $0xe0] sm:$0xff]
      %v294 = vld [vmem:[%s254 + $0xe8] sm:$0xf]
      %v295 = vld [vmem:[%s254 + $0xf0] sm:$0xff]
      %v296 = vld [vmem:[%s254 + $0xf8] sm:$0xff]
      %v297 = vld [vmem:[%s254 + $0x100] sm:$0xf]
      %v298 = vld [vmem:[%s254 + $0x108] sm:$0xff]
      %v299 = vld [vmem:[%s254 + $0x110] sm:$0xff]
      %v300 = vld [vmem:[%s254 + $0x118] sm:$0xf]
      %v301 = vld [vmem:[%s254 + $0x120] sm:$0xff]
      %v302 = vld [vmem:[%s254 + $0x128] sm:$0xff]
      %v303 = vld [vmem:[%s254 + $0x130] sm:$0xf]
      %v304 = vld [vmem:[%s254 + $0x138] sm:$0xff]
      %v305 = vld [vmem:[%s254 + $0x140] sm:$0xff]
      %v306 = vld [vmem:[%s254 + $0x148] sm:$0xf]
      %v307 = vld [vmem:[%s254 + $0x150] sm:$0xff]
      %v308 = vld [vmem:[%s254 + $0x158] sm:$0xff]
      %v309 = vld [vmem:[%s254 + $0x160] sm:$0xf]
      %v310 = vld [vmem:[%s254 + $0x168] sm:$0xff]
      %v311 = vld [vmem:[%s254 + $0x170] sm:$0xff]
      %v312 = vld [vmem:[%s254 + $0x178] sm:$0xf]
      %v313 = vld [vmem:[%s254 + $0x180] sm:$0xff]
      %v314 = vld [vmem:[%s254 + $0x188] sm:$0xff]
      %v315 = vld [vmem:[%s254 + $0x190] sm:$0xf]
      %v316 = vld [vmem:[%s254 + $0x198] sm:$0xff]
      %v317 = vld [vmem:[%s254 + $0x1a0] sm:$0xff]
      %v318 = vld [vmem:[%s254 + $0x1a8] sm:$0xf]
      %v319 = vld [vmem:[%s254 + $0x1b0] sm:$0xff]
      %v320 = vld [vmem:[%s254 + $0x1b8] sm:$0xff]
      %v321 = vld [vmem:[%s254 + $0x1c0] sm:$0xf]
      %v322 = vld [vmem:[%s254 + $0x1c8] sm:$0xff]
      %v323 = vld [vmem:[%s254 + $0x1d0] sm:$0xff]
      %v324 = vld [vmem:[%s254 + $0x1d8] sm:$0xf]
      %v325 = vld [vmem:[%s1] sm:$0xff]
      %v326 = vld [vmem:[%s1 + $0x8] sm:$0xff]
      %v327 = vld [vmem:[%s1 + $0x10] sm:$0xff]
      %v328 = vld [vmem:[%s1 + $0x18] sm:$0xff]
      %v329 = vld [vmem:[%s1 + $0x20] sm:$0xff]
      %v330 = vld [vmem:[%s1 + $0x28] sm:$0xff]
      %v331 = vld [vmem:[%s1 + $0x30] sm:$0x1]
      %v332 = vlaneseq
      %v333 = vshrl.u32 %v332, 7
      %v334 = vsub.s32 0, %v333
      %v335 = vrot.slane %v325, %v334
      %v336 = vmul.f32 %v265, %v335
      %v337 = vmul.f32 %v266, %v335
      %v338 = vmul.f32 %v268, %v335
      %v339 = vmul.f32 %v269, %v335
      %v340 = vmul.f32 %v271, %v335
      %v341 = vmul.f32 %v272, %v335
      %v342 = vmul.f32 %v274, %v335
      %v343 = vmul.f32 %v275, %v335
      %v344 = vmul.f32 %v277, %v335
      %v345 = vmul.f32 %v278, %v335
      %v346 = vmul.f32 %v280, %v335
      %v347 = vmul.f32 %v281, %v335
      %v348 = vmul.f32 %v283, %v335
      %v349 = vmul.f32 %v284, %v335
      %v350 = vmul.f32 %v286, %v335
      %v351 = vmul.f32 %v287, %v335
      %v352 = vmul.f32 %v289, %v335
      %v353 = vmul.f32 %v290, %v335
      %v354 = vmul.f32 %v292, %v335
      %v355 = vmul.f32 %v293, %v335
      %v356 = vmul.f32 %v295, %v335
      %v357 = vmul.f32 %v296, %v335
      %v358 = vmul.f32 %v298, %v335
      %v359 = vmul.f32 %v299, %v335
      %v360 = vmul.f32 %v301, %v335
      %v361 = vmul.f32 %v302, %v335
      %v362 = vmul.f32 %v304, %v335
      %v363 = vmul.f32 %v305, %v335
      %v364 = vadd.f32 %v336, 0.0
      %v365 = vadd.f32 %v337, 0.0
      %v366 = vadd.f32 %v338, 0.0
      %v367 = vadd.f32 %v339, 0.0
      %v368 = vadd.f32 %v340, 0.0
      %v369 = vadd.f32 %v341, 0.0
      %v370 = vadd.f32 %v342, 0.0
      %v371 = vadd.f32 %v343, 0.0
      %v372 = vadd.f32 %v344, 0.0
      %v373 = vadd.f32 %v345, 0.0
      %v374 = vadd.f32 %v346, 0.0
      %v375 = vadd.f32 %v347, 0.0
      %v376 = vadd.f32 %v348, 0.0
      %v377 = vadd.f32 %v349, 0.0
      %v378 = vadd.f32 %v350, 0.0
      %v379 = vadd.f32 %v351, 0.0
      %v380 = vadd.f32 %v352, 0.0
      %v381 = vadd.f32 %v353, 0.0
      %v382 = vadd.f32 %v354, 0.0
      %v383 = vadd.f32 %v355, 0.0
      %v384 = vadd.f32 %v356, 0.0
      %v385 = vadd.f32 %v357, 0.0
      %v386 = vadd.f32 %v358, 0.0
      %v387 = vadd.f32 %v359, 0.0
      %v388 = vadd.f32 %v360, 0.0
      %v389 = vadd.f32 %v361, 0.0
      %v390 = vadd.f32 %v362, 0.0
      %v391 = vadd.f32 %v363, 0.0
      %v392 = vlaneseq
      %v393 = vshrl.u32 %v392, 7
      %v394 = vsub.s32 1, %v393
      %v395 = vrot.slane %v325, %v394
      %v396 = vmul.f32 %v265, %v395
      %v397 = vmul.f32 %v266, %v395
      %v398 = vmul.f32 %v268, %v395
      %v399 = vmul.f32 %v269, %v395
      %v400 = vmul.f32 %v271, %v395
      %v401 = vmul.f32 %v272, %v395
      %v402 = vmul.f32 %v274, %v395
      %v403 = vmul.f32 %v275, %v395
      %v404 = vmul.f32 %v277, %v395
      %v405 = vmul.f32 %v278, %v395
      %v406 = vmul.f32 %v280, %v395
      %v407 = vmul.f32 %v281, %v395
      %v408 = vmul.f32 %v283, %v395
      %v409 = vmul.f32 %v284, %v395
      %v410 = vmul.f32 %v286, %v395
      %v411 = vmul.f32 %v287, %v395
      %v412 = vmul.f32 %v289, %v395
      %v413 = vmul.f32 %v290, %v395
      %v414 = vmul.f32 %v292, %v395
      %v415 = vmul.f32 %v293, %v395
      %v416 = vmul.f32 %v295, %v395
      %v417 = vmul.f32 %v296, %v395
      %v418 = vmul.f32 %v298, %v395
      %v419 = vmul.f32 %v299, %v395
      %v420 = vmul.f32 %v301, %v395
      %v421 = vmul.f32 %v302, %v395
      %v422 = vmul.f32 %v304, %v395
      %v423 = vmul.f32 %v305, %v395
      %vm452 = vcmask 1046528
      %v453 = vrot.slane %v396, 1
      %v454 = vrot.slane %v397, 1
      %v455 = vsel %vm452, %v453, %v454
      %v456 = vrot.slane %v398, 1
      %v457 = vrot.slane %v399, 1
      %v458 = vsel %vm452, %v456, %v457
      %v459 = vrot.slane %v400, 1
      %v460 = vrot.slane %v401, 1
      %v461 = vsel %vm452, %v459, %v460
      %v462 = vrot.slane %v402, 1
      %v463 = vrot.slane %v403, 1
      %v464 = vsel %vm452, %v462, %v463
      %v465 = vrot.slane %v404, 1
      %v466 = vrot.slane %v405, 1
      %v467 = vsel %vm452, %v465, %v466
      %v468 = vrot.slane %v406, 1
      %v469 = vrot.slane %v407, 1
      %v470 = vsel %vm452, %v468, %v469
      %v471 = vrot.slane %v408, 1
      %v472 = vrot.slane %v409, 1
      %v473 = vsel %vm452, %v471, %v472
      %v474 = vrot.slane %v410, 1
      %v475 = vrot.slane %v411, 1
      %v476 = vsel %vm452, %v474, %v475
      %v477 = vrot.slane %v412, 1
      %v478 = vrot.slane %v413, 1
      %v479 = vsel %vm452, %v477, %v478
      %v480 = vrot.slane %v414, 1
      %v481 = vrot.slane %v415, 1
      %v482 = vsel %vm452, %v480, %v481
      %v483 = vrot.slane %v416, 1
      %v484 = vrot.slane %v417, 1
      %v485 = vsel %vm452, %v483, %v484
      %v486 = vrot.slane %v418, 1
      %v487 = vrot.slane %v419, 1
      %v488 = vsel %vm452, %v486, %v487
      %v489 = vrot.slane %v420, 1
      %v490 = vrot.slane %v421, 1
      %v491 = vsel %vm452, %v489, %v490
      %v492 = vrot.slane %v422, 1
      %v493 = vrot.slane %v423, 1
      %v494 = vsel %vm452, %v492, %v493
      %v523 = vadd.f32 %v364, %v455
      %v524 = vadd.f32 %v365, %v454
      %v525 = vadd.f32 %v366, %v458
      %v526 = vadd.f32 %v367, %v457
      %v527 = vadd.f32 %v368, %v461
      %v528 = vadd.f32 %v369, %v460
      %v529 = vadd.f32 %v370, %v464
      %v530 = vadd.f32 %v371, %v463
      %v531 = vadd.f32 %v372, %v467
      %v532 = vadd.f32 %v373, %v466
      %v533 = vadd.f32 %v374, %v470
      %v534 = vadd.f32 %v375, %v469
      %v535 = vadd.f32 %v376, %v473
      %v536 = vadd.f32 %v377, %v472
      %v537 = vadd.f32 %v378, %v476
      %v538 = vadd.f32 %v379, %v475
      %v539 = vadd.f32 %v380, %v479
      %v540 = vadd.f32 %v381, %v478
      %v541 = vadd.f32 %v382, %v482
      %v542 = vadd.f32 %v383, %v481
      %v543 = vadd.f32 %v384, %v485
      %v544 = vadd.f32 %v385, %v484
      %v545 = vadd.f32 %v386, %v488
      %v546 = vadd.f32 %v387, %v487
      %v547 = vadd.f32 %v388, %v491
      %v548 = vadd.f32 %v389, %v490
      %v549 = vadd.f32 %v390, %v494
      %v550 = vadd.f32 %v391, %v493
      %v551 = vlaneseq
      %v552 = vshrl.u32 %v551, 7
      %v553 = vsub.s32 2, %v552
      %v554 = vrot.slane %v325, %v553
      %v555 = vmul.f32 %v265, %v554
      %v556 = vmul.f32 %v266, %v554
      %v557 = vmul.f32 %v268, %v554
      %v558 = vmul.f32 %v269, %v554
      %v559 = vmul.f32 %v271, %v554
      %v560 = vmul.f32 %v272, %v554
      %v561 = vmul.f32 %v274, %v554
      %v562 = vmul.f32 %v275, %v554
      %v563 = vmul.f32 %v277, %v554
      %v564 = vmul.f32 %v278, %v554
      %v565 = vmul.f32 %v280, %v554
      %v566 = vmul.f32 %v281, %v554
      %v567 = vmul.f32 %v283, %v554
      %v568 = vmul.f32 %v284, %v554
      %v569 = vmul.f32 %v286, %v554
      %v570 = vmul.f32 %v287, %v554
      %v571 = vmul.f32 %v289, %v554
      %v572 = vmul.f32 %v290, %v554
      %v573 = vmul.f32 %v292, %v554
      %v574 = vmul.f32 %v293, %v554
      %v575 = vmul.f32 %v295, %v554
      %v576 = vmul.f32 %v296, %v554
      %v577 = vmul.f32 %v298, %v554
      %v578 = vmul.f32 %v299, %v554
      %v579 = vmul.f32 %v301, %v554
      %v580 = vmul.f32 %v302, %v554
      %v581 = vmul.f32 %v304, %v554
      %v582 = vmul.f32 %v305, %v554
      %vm611 = vcmask 1045504
      %v612 = vrot.slane %v555, 2
      %v613 = vrot.slane %v556, 2
      %v614 = vsel %vm611, %v612, %v613
      %v615 = vrot.slane %v557, 2
      %v616 = vrot.slane %v558, 2
      %v617 = vsel %vm611, %v615, %v616
      %v618 = vrot.slane %v559, 2
      %v619 = vrot.slane %v560, 2
      %v620 = vsel %vm611, %v618, %v619
      %v621 = vrot.slane %v561, 2
      %v622 = vrot.slane %v562, 2
      %v623 = vsel %vm611, %v621, %v622
      %v624 = vrot.slane %v563, 2
      %v625 = vrot.slane %v564, 2
      %v626 = vsel %vm611, %v624, %v625
      %v627 = vrot.slane %v565, 2
      %v628 = vrot.slane %v566, 2
      %v629 = vsel %vm611, %v627, %v628
      %v630 = vrot.slane %v567, 2
      %v631 = vrot.slane %v568, 2
      %v632 = vsel %vm611, %v630, %v631
      %v633 = vrot.slane %v569, 2
      %v634 = vrot.slane %v570, 2
      %v635 = vsel %vm611, %v633, %v634
      %v636 = vrot.slane %v571, 2
      %v637 = vrot.slane %v572, 2
      %v638 = vsel %vm611, %v636, %v637
      %v639 = vrot.slane %v573, 2
      %v640 = vrot.slane %v574, 2
      %v641 = vsel %vm611, %v639, %v640
      %v642 = vrot.slane %v575, 2
      %v643 = vrot.slane %v576, 2
      %v644 = vsel %vm611, %v642, %v643
      %v645 = vrot.slane %v577, 2
      %v646 = vrot.slane %v578, 2
      %v647 = vsel %vm611, %v645, %v646
      %v648 = vrot.slane %v579, 2
      %v649 = vrot.slane %v580, 2
      %v650 = vsel %vm611, %v648, %v649
      %v651 = vrot.slane %v581, 2
      %v652 = vrot.slane %v582, 2
      %v653 = vsel %vm611, %v651, %v652
      %v682 = vadd.f32 %v523, %v614
      %v683 = vadd.f32 %v524, %v613
      %v684 = vadd.f32 %v525, %v617
      %v685 = vadd.f32 %v526, %v616
      %v686 = vadd.f32 %v527, %v620
      %v687 = vadd.f32 %v528, %v619
      %v688 = vadd.f32 %v529, %v623
      %v689 = vadd.f32 %v530, %v622
      %v690 = vadd.f32 %v531, %v626
      %v691 = vadd.f32 %v532, %v625
      %v692 = vadd.f32 %v533, %v629
      %v693 = vadd.f32 %v534, %v628
      %v694 = vadd.f32 %v535, %v632
      %v695 = vadd.f32 %v536, %v631
      %v696 = vadd.f32 %v537, %v635
      %v697 = vadd.f32 %v538, %v634
      %v698 = vadd.f32 %v539, %v638
      %v699 = vadd.f32 %v540, %v637
      %v700 = vadd.f32 %v541, %v641
      %v701 = vadd.f32 %v542, %v640
      %v702 = vadd.f32 %v543, %v644
      %v703 = vadd.f32 %v544, %v643
      %v704 = vadd.f32 %v545, %v647
      %v705 = vadd.f32 %v546, %v646
      %v706 = vadd.f32 %v547, %v650
      %v707 = vadd.f32 %v548, %v649
      %v708 = vadd.f32 %v549, %v653
      %v709 = vadd.f32 %v550, %v652
      %v710 = vlaneseq
      %v711 = vshrl.u32 %v710, 7
      %v712 = vsub.s32 3, %v711
      %v713 = vrot.slane %v325, %v712
      %v714 = vmul.f32 %v265, %v713
      %v715 = vmul.f32 %v266, %v713
      %v716 = vmul.f32 %v267, %v713
      %v717 = vmul.f32 %v268, %v713
      %v718 = vmul.f32 %v269, %v713
      %v719 = vmul.f32 %v270, %v713
      %v720 = vmul.f32 %v271, %v713
      %v721 = vmul.f32 %v272, %v713
      %v722 = vmul.f32 %v273, %v713
      %v723 = vmul.f32 %v274, %v713
      %v724 = vmul.f32 %v275, %v713
      %v725 = vmul.f32 %v276, %v713
      %v726 = vmul.f32 %v277, %v713
      %v727 = vmul.f32 %v278, %v713
      %v728 = vmul.f32 %v279, %v713
      %v729 = vmul.f32 %v280, %v713
      %v730 = vmul.f32 %v281, %v713
      %v731 = vmul.f32 %v282, %v713
      %v732 = vmul.f32 %v283, %v713
      %v733 = vmul.f32 %v284, %v713
      %v734 = vmul.f32 %v285, %v713
      %v735 = vmul.f32 %v286, %v713
      %v736 = vmul.f32 %v287, %v713
      %v737 = vmul.f32 %v288, %v713
      %v738 = vmul.f32 %v289, %v713
      %v739 = vmul.f32 %v290, %v713
      %v740 = vmul.f32 %v291, %v713
      %v741 = vmul.f32 %v292, %v713
      %v742 = vmul.f32 %v293, %v713
      %v743 = vmul.f32 %v294, %v713
      %v744 = vmul.f32 %v295, %v713
      %v745 = vmul.f32 %v296, %v713
      %v746 = vmul.f32 %v297, %v713
      %v747 = vmul.f32 %v298, %v713
      %v748 = vmul.f32 %v299, %v713
      %v749 = vmul.f32 %v300, %v713
      %v750 = vmul.f32 %v301, %v713
      %v751 = vmul.f32 %v302, %v713
      %v752 = vmul.f32 %v303, %v713
      %v753 = vmul.f32 %v304, %v713
      %v754 = vmul.f32 %v305, %v713
      %v755 = vmul.f32 %v306, %v713
      %vm798 = vcmask 1044480
      %v799 = vrot.slane %v714, 3
      %v800 = vrot.slane %v715, 3
      %v801 = vsel %vm798, %v799, %v800
      %v802 = vrot.slane %v716, 3
      %v803 = vsel %vm798, %v800, %v802
      %v804 = vrot.slane %v717, 3
      %v805 = vrot.slane %v718, 3
      %v806 = vsel %vm798, %v804, %v805
      %v807 = vrot.slane %v719, 3
      %v808 = vsel %vm798, %v805, %v807
      %v809 = vrot.slane %v720, 3
      %v810 = vrot.slane %v721, 3
      %v811 = vsel %vm798, %v809, %v810
      %v812 = vrot.slane %v722, 3
      %v813 = vsel %vm798, %v810, %v812
      %v814 = vrot.slane %v723, 3
      %v815 = vrot.slane %v724, 3
      %v816 = vsel %vm798, %v814, %v815
      %v817 = vrot.slane %v725, 3
      %v818 = vsel %vm798, %v815, %v817
      %v819 = vrot.slane %v726, 3
      %v820 = vrot.slane %v727, 3
      %v821 = vsel %vm798, %v819, %v820
      %v822 = vrot.slane %v728, 3
      %v823 = vsel %vm798, %v820, %v822
      %v824 = vrot.slane %v729, 3
      %v825 = vrot.slane %v730, 3
      %v826 = vsel %vm798, %v824, %v825
      %v827 = vrot.slane %v731, 3
      %v828 = vsel %vm798, %v825, %v827
      %v829 = vrot.slane %v732, 3
      %v830 = vrot.slane %v733, 3
      %v831 = vsel %vm798, %v829, %v830
      %v832 = vrot.slane %v734, 3
      %v833 = vsel %vm798, %v830, %v832
      %v834 = vrot.slane %v735, 3
      %v835 = vrot.slane %v736, 3
      %v836 = vsel %vm798, %v834, %v835
      %v837 = vrot.slane %v737, 3
      %v838 = vsel %vm798, %v835, %v837
      %v839 = vrot.slane %v738, 3
      %v840 = vrot.slane %v739, 3
      %v841 = vsel %vm798, %v839, %v840
      %v842 = vrot.slane %v740, 3
      %v843 = vsel %vm798, %v840, %v842
      %v844 = vrot.slane %v741, 3
      %v845 = vrot.slane %v742, 3
      %v846 = vsel %vm798, %v844, %v845
      %v847 = vrot.slane %v743, 3
      %v848 = vsel %vm798, %v845, %v847
      %v849 = vrot.slane %v744, 3
      %v850 = vrot.slane %v745, 3
      %v851 = vsel %vm798, %v849, %v850
      %v852 = vrot.slane %v746, 3
      %v853 = vsel %vm798, %v850, %v852
      %v854 = vrot.slane %v747, 3
      %v855 = vrot.slane %v748, 3
      %v856 = vsel %vm798, %v854, %v855
      %v857 = vrot.slane %v749, 3
      %v858 = vsel %vm798, %v855, %v857
      %v859 = vrot.slane %v750, 3
      %v860 = vrot.slane %v751, 3
      %v861 = vsel %vm798, %v859, %v860
      %v862 = vrot.slane %v752, 3
      %v863 = vsel %vm798, %v860, %v862
      %v864 = vrot.slane %v753, 3
      %v865 = vrot.slane %v754, 3
      %v866 = vsel %vm798, %v864, %v865
      %v867 = vrot.slane %v755, 3
      %v868 = vsel %vm798, %v865, %v867
      %v897 = vadd.f32 %v682, %v801
      %v898 = vadd.f32 %v683, %v803
      %v899 = vadd.f32 %v684, %v806
      %v900 = vadd.f32 %v685, %v808
      %v901 = vadd.f32 %v686, %v811
      %v902 = vadd.f32 %v687, %v813
      %v903 = vadd.f32 %v688, %v816
      %v904 = vadd.f32 %v689, %v818
      %v905 = vadd.f32 %v690, %v821
      %v906 = vadd.f32 %v691, %v823
      %v907 = vadd.f32 %v692, %v826
      %v908 = vadd.f32 %v693, %v828
      %v909 = vadd.f32 %v694, %v831
      %v910 = vadd.f32 %v695, %v833
      %v911 = vadd.f32 %v696, %v836
      %v912 = vadd.f32 %v697, %v838
      %v913 = vadd.f32 %v698, %v841
      %v914 = vadd.f32 %v699, %v843
      %v915 = vadd.f32 %v700, %v846
      %v916 = vadd.f32 %v701, %v848
      %v917 = vadd.f32 %v702, %v851
      %v918 = vadd.f32 %v703, %v853
      %v919 = vadd.f32 %v704, %v856
      %v920 = vadd.f32 %v705, %v858
      %v921 = vadd.f32 %v706, %v861
      %v922 = vadd.f32 %v707, %v863
      %v923 = vadd.f32 %v708, %v866
      %v924 = vadd.f32 %v709, %v868
      %v925 = vlaneseq
      %v926 = vshrl.u32 %v925, 7
      %v927 = vsub.s32 4, %v926
      %v928 = vrot.slane %v325, %v927
      %v929 = vmul.f32 %v265, %v928
      %v930 = vmul.f32 %v266, %v928
      %v931 = vmul.f32 %v267, %v928
      %v932 = vmul.f32 %v268, %v928
      %v933 = vmul.f32 %v269, %v928
      %v934 = vmul.f32 %v270, %v928
      %v935 = vmul.f32 %v271, %v928
      %v936 = vmul.f32 %v272, %v928
      %v937 = vmul.f32 %v273, %v928
      %v938 = vmul.f32 %v274, %v928
      %v939 = vmul.f32 %v275, %v928
      %v940 = vmul.f32 %v276, %v928
      %v941 = vmul.f32 %v277, %v928
      %v942 = vmul.f32 %v278, %v928
      %v943 = vmul.f32 %v279, %v928
      %v944 = vmul.f32 %v280, %v928
      %v945 = vmul.f32 %v281, %v928
      %v946 = vmul.f32 %v282, %v928
      %v947 = vmul.f32 %v283, %v928
      %v948 = vmul.f32 %v284, %v928
      %v949 = vmul.f32 %v285, %v928
      %v950 = vmul.f32 %v286, %v928
      %v951 = vmul.f32 %v287, %v928
      %v952 = vmul.f32 %v288, %v928
      %v953 = vmul.f32 %v289, %v928
      %v954 = vmul.f32 %v290, %v928
      %v955 = vmul.f32 %v291, %v928
      %v956 = vmul.f32 %v292, %v928
      %v957 = vmul.f32 %v293, %v928
      %v958 = vmul.f32 %v294, %v928
      %v959 = vmul.f32 %v295, %v928
      %v960 = vmul.f32 %v296, %v928
      %v961 = vmul.f32 %v297, %v928
      %v962 = vmul.f32 %v298, %v928
      %v963 = vmul.f32 %v299, %v928
      %v964 = vmul.f32 %v300, %v928
      %v965 = vmul.f32 %v301, %v928
      %v966 = vmul.f32 %v302, %v928
      %v967 = vmul.f32 %v303, %v928
      %v968 = vmul.f32 %v304, %v928
      %v969 = vmul.f32 %v305, %v928
      %v970 = vmul.f32 %v306, %v928
      %vm1013 = vcmask 1043456
      %v1014 = vrot.slane %v929, 4
      %v1015 = vrot.slane %v930, 4
      %v1016 = vsel %vm1013, %v1014, %v1015
      %v1017 = vrot.slane %v931, 4
      %v1018 = vsel %vm1013, %v1015, %v1017
      %v1019 = vrot.slane %v932, 4
      %v1020 = vrot.slane %v933, 4
      %v1021 = vsel %vm1013, %v1019, %v1020
      %v1022 = vrot.slane %v934, 4
      %v1023 = vsel %vm1013, %v1020, %v1022
      %v1024 = vrot.slane %v935, 4
      %v1025 = vrot.slane %v936, 4
      %v1026 = vsel %vm1013, %v1024, %v1025
      %v1027 = vrot.slane %v937, 4
      %v1028 = vsel %vm1013, %v1025, %v1027
      %v1029 = vrot.slane %v938, 4
      %v1030 = vrot.slane %v939, 4
      %v1031 = vsel %vm1013, %v1029, %v1030
      %v1032 = vrot.slane %v940, 4
      %v1033 = vsel %vm1013, %v1030, %v1032
      %v1034 = vrot.slane %v941, 4
      %v1035 = vrot.slane %v942, 4
      %v1036 = vsel %vm1013, %v1034, %v1035
      %v1037 = vrot.slane %v943, 4
      %v1038 = vsel %vm1013, %v1035, %v1037
      %v1039 = vrot.slane %v944, 4
      %v1040 = vrot.slane %v945, 4
      %v1041 = vsel %vm1013, %v1039, %v1040
      %v1042 = vrot.slane %v946, 4
      %v1043 = vsel %vm1013, %v1040, %v1042
      %v1044 = vrot.slane %v947, 4
      %v1045 = vrot.slane %v948, 4
      %v1046 = vsel %vm1013, %v1044, %v1045
      %v1047 = vrot.slane %v949, 4
      %v1048 = vsel %vm1013, %v1045, %v1047
      %v1049 = vrot.slane %v950, 4
      %v1050 = vrot.slane %v951, 4
      %v1051 = vsel %vm1013, %v1049, %v1050
      %v1052 = vrot.slane %v952, 4
      %v1053 = vsel %vm1013, %v1050, %v1052
      %v1054 = vrot.slane %v953, 4
      %v1055 = vrot.slane %v954, 4
      %v1056 = vsel %vm1013, %v1054, %v1055
      %v1057 = vrot.slane %v955, 4
      %v1058 = vsel %vm1013, %v1055, %v1057
      %v1059 = vrot.slane %v956, 4
      %v1060 = vrot.slane %v957, 4
      %v1061 = vsel %vm1013, %v1059, %v1060
      %v1062 = vrot.slane %v958, 4
      %v1063 = vsel %vm1013, %v1060, %v1062
      %v1064 = vrot.slane %v959, 4
      %v1065 = vrot.slane %v960, 4
      %v1066 = vsel %vm1013, %v1064, %v1065
      %v1067 = vrot.slane %v961, 4
      %v1068 = vsel %vm1013, %v1065, %v1067
      %v1069 = vrot.slane %v962, 4
      %v1070 = vrot.slane %v963, 4
      %v1071 = vsel %vm1013, %v1069, %v1070
      %v1072 = vrot.slane %v964, 4
      %v1073 = vsel %vm1013, %v1070, %v1072
      %v1074 = vrot.slane %v965, 4
      %v1075 = vrot.slane %v966, 4
      %v1076 = vsel %vm1013, %v1074, %v1075
      %v1077 = vrot.slane %v967, 4
      %v1078 = vsel %vm1013, %v1075, %v1077
      %v1079 = vrot.slane %v968, 4
      %v1080 = vrot.slane %v969, 4
      %v1081 = vsel %vm1013, %v1079, %v1080
      %v1082 = vrot.slane %v970, 4
      %v1083 = vsel %vm1013, %v1080, %v1082
      %v1112 = vadd.f32 %v897, %v1016
      %v1113 = vadd.f32 %v898, %v1018
      %v1114 = vadd.f32 %v899, %v1021
      %v1115 = vadd.f32 %v900, %v1023
      %v1116 = vadd.f32 %v901, %v1026
      %v1117 = vadd.f32 %v902, %v1028
      %v1118 = vadd.f32 %v903, %v1031
      %v1119 = vadd.f32 %v904, %v1033
      %v1120 = vadd.f32 %v905, %v1036
      %v1121 = vadd.f32 %v906, %v1038
      %v1122 = vadd.f32 %v907, %v1041
      %v1123 = vadd.f32 %v908, %v1043
      %v1124 = vadd.f32 %v909, %v1046
      %v1125 = vadd.f32 %v910, %v1048
      %v1126 = vadd.f32 %v911, %v1051
      %v1127 = vadd.f32 %v912, %v1053
      %v1128 = vadd.f32 %v913, %v1056
      %v1129 = vadd.f32 %v914, %v1058
      %v1130 = vadd.f32 %v915, %v1061
      %v1131 = vadd.f32 %v916, %v1063
      %v1132 = vadd.f32 %v917, %v1066
      %v1133 = vadd.f32 %v918, %v1068
      %v1134 = vadd.f32 %v919, %v1071
      %v1135 = vadd.f32 %v920, %v1073
      %v1136 = vadd.f32 %v921, %v1076
      %v1137 = vadd.f32 %v922, %v1078
      %v1138 = vadd.f32 %v923, %v1081
      %v1139 = vadd.f32 %v924, %v1083
      %v1140 = vlaneseq
      %v1141 = vshrl.u32 %v1140, 7
      %v1142 = vsub.s32 5, %v1141
      %v1143 = vrot.slane %v325, %v1142
      %v1144 = vmul.f32 %v265, %v1143
      %v1145 = vmul.f32 %v266, %v1143
      %v1146 = vmul.f32 %v267, %v1143
      %v1147 = vmul.f32 %v268, %v1143
      %v1148 = vmul.f32 %v269, %v1143
      %v1149 = vmul.f32 %v270, %v1143
      %v1150 = vmul.f32 %v271, %v1143
      %v1151 = vmul.f32 %v272, %v1143
      %v1152 = vmul.f32 %v273, %v1143
      %v1153 = vmul.f32 %v274, %v1143
      %v1154 = vmul.f32 %v275, %v1143
      %v1155 = vmul.f32 %v276, %v1143
      %v1156 = vmul.f32 %v277, %v1143
      %v1157 = vmul.f32 %v278, %v1143
      %v1158 = vmul.f32 %v279, %v1143
      %v1159 = vmul.f32 %v280, %v1143
      %v1160 = vmul.f32 %v281, %v1143
      %v1161 = vmul.f32 %v282, %v1143
      %v1162 = vmul.f32 %v283, %v1143
      %v1163 = vmul.f32 %v284, %v1143
      %v1164 = vmul.f32 %v285, %v1143
      %v1165 = vmul.f32 %v286, %v1143
      %v1166 = vmul.f32 %v287, %v1143
      %v1167 = vmul.f32 %v288, %v1143
      %v1168 = vmul.f32 %v289, %v1143
      %v1169 = vmul.f32 %v290, %v1143
      %v1170 = vmul.f32 %v291, %v1143
      %v1171 = vmul.f32 %v292, %v1143
      %v1172 = vmul.f32 %v293, %v1143
      %v1173 = vmul.f32 %v294, %v1143
      %v1174 = vmul.f32 %v295, %v1143
      %v1175 = vmul.f32 %v296, %v1143
      %v1176 = vmul.f32 %v297, %v1143
      %v1177 = vmul.f32 %v298, %v1143
      %v1178 = vmul.f32 %v299, %v1143
      %v1179 = vmul.f32 %v300, %v1143
      %v1180 = vmul.f32 %v301, %v1143
      %v1181 = vmul.f32 %v302, %v1143
      %v1182 = vmul.f32 %v303, %v1143
      %v1183 = vmul.f32 %v304, %v1143
      %v1184 = vmul.f32 %v305, %v1143
      %v1185 = vmul.f32 %v306, %v1143
      %vm1228 = vcmask 1042432
      %v1229 = vrot.slane %v1144, 5
      %v1230 = vrot.slane %v1145, 5
      %v1231 = vsel %vm1228, %v1229, %v1230
      %v1232 = vrot.slane %v1146, 5
      %v1233 = vsel %vm1228, %v1230, %v1232
      %v1234 = vrot.slane %v1147, 5
      %v1235 = vrot.slane %v1148, 5
      %v1236 = vsel %vm1228, %v1234, %v1235
      %v1237 = vrot.slane %v1149, 5
      %v1238 = vsel %vm1228, %v1235, %v1237
      %v1239 = vrot.slane %v1150, 5
      %v1240 = vrot.slane %v1151, 5
      %v1241 = vsel %vm1228, %v1239, %v1240
      %v1242 = vrot.slane %v1152, 5
      %v1243 = vsel %vm1228, %v1240, %v1242
      %v1244 = vrot.slane %v1153, 5
      %v1245 = vrot.slane %v1154, 5
      %v1246 = vsel %vm1228, %v1244, %v1245
      %v1247 = vrot.slane %v1155, 5
      %v1248 = vsel %vm1228, %v1245, %v1247
      %v1249 = vrot.slane %v1156, 5
      %v1250 = vrot.slane %v1157, 5
      %v1251 = vsel %vm1228, %v1249, %v1250
      %v1252 = vrot.slane %v1158, 5
      %v1253 = vsel %vm1228, %v1250, %v1252
      %v1254 = vrot.slane %v1159, 5
      %v1255 = vrot.slane %v1160, 5
      %v1256 = vsel %vm1228, %v1254, %v1255
      %v1257 = vrot.slane %v1161, 5
      %v1258 = vsel %vm1228, %v1255, %v1257
      %v1259 = vrot.slane %v1162, 5
      %v1260 = vrot.slane %v1163, 5
      %v1261 = vsel %vm1228, %v1259, %v1260
      %v1262 = vrot.slane %v1164, 5
      %v1263 = vsel %vm1228, %v1260, %v1262
      %v1264 = vrot.slane %v1165, 5
      %v1265 = vrot.slane %v1166, 5
      %v1266 = vsel %vm1228, %v1264, %v1265
      %v1267 = vrot.slane %v1167, 5
      %v1268 = vsel %vm1228, %v1265, %v1267
      %v1269 = vrot.slane %v1168, 5
      %v1270 = vrot.slane %v1169, 5
      %v1271 = vsel %vm1228, %v1269, %v1270
      %v1272 = vrot.slane %v1170, 5
      %v1273 = vsel %vm1228, %v1270, %v1272
      %v1274 = vrot.slane %v1171, 5
      %v1275 = vrot.slane %v1172, 5
      %v1276 = vsel %vm1228, %v1274, %v1275
      %v1277 = vrot.slane %v1173, 5
      %v1278 = vsel %vm1228, %v1275, %v1277
      %v1279 = vrot.slane %v1174, 5
      %v1280 = vrot.slane %v1175, 5
      %v1281 = vsel %vm1228, %v1279, %v1280
      %v1282 = vrot.slane %v1176, 5
      %v1283 = vsel %vm1228, %v1280, %v1282
      %v1284 = vrot.slane %v1177, 5
      %v1285 = vrot.slane %v1178, 5
      %v1286 = vsel %vm1228, %v1284, %v1285
      %v1287 = vrot.slane %v1179, 5
      %v1288 = vsel %vm1228, %v1285, %v1287
      %v1289 = vrot.slane %v1180, 5
      %v1290 = vrot.slane %v1181, 5
      %v1291 = vsel %vm1228, %v1289, %v1290
      %v1292 = vrot.slane %v1182, 5
      %v1293 = vsel %vm1228, %v1290, %v1292
      %v1294 = vrot.slane %v1183, 5
      %v1295 = vrot.slane %v1184, 5
      %v1296 = vsel %vm1228, %v1294, %v1295
      %v1297 = vrot.slane %v1185, 5
      %v1298 = vsel %vm1228, %v1295, %v1297
      %v1327 = vadd.f32 %v1112, %v1231
      %v1328 = vadd.f32 %v1113, %v1233
      %v1329 = vadd.f32 %v1114, %v1236
      %v1330 = vadd.f32 %v1115, %v1238
      %v1331 = vadd.f32 %v1116, %v1241
      %v1332 = vadd.f32 %v1117, %v1243
      %v1333 = vadd.f32 %v1118, %v1246
      %v1334 = vadd.f32 %v1119, %v1248
      %v1335 = vadd.f32 %v1120, %v1251
      %v1336 = vadd.f32 %v1121, %v1253
      %v1337 = vadd.f32 %v1122, %v1256
      %v1338 = vadd.f32 %v1123, %v1258
      %v1339 = vadd.f32 %v1124, %v1261
      %v1340 = vadd.f32 %v1125, %v1263
      %v1341 = vadd.f32 %v1126, %v1266
      %v1342 = vadd.f32 %v1127, %v1268
      %v1343 = vadd.f32 %v1128, %v1271
      %v1344 = vadd.f32 %v1129, %v1273
      %v1345 = vadd.f32 %v1130, %v1276
      %v1346 = vadd.f32 %v1131, %v1278
      %v1347 = vadd.f32 %v1132, %v1281
      %v1348 = vadd.f32 %v1133, %v1283
      %v1349 = vadd.f32 %v1134, %v1286
      %v1350 = vadd.f32 %v1135, %v1288
      %v1351 = vadd.f32 %v1136, %v1291
      %v1352 = vadd.f32 %v1137, %v1293
      %v1353 = vadd.f32 %v1138, %v1296
      %v1354 = vadd.f32 %v1139, %v1298
      %v1355 = vlaneseq
      %v1356 = vshrl.u32 %v1355, 7
      %v1357 = vsub.s32 6, %v1356
      %v1358 = vrot.slane %v325, %v1357
      %v1359 = vmul.f32 %v265, %v1358
      %v1360 = vmul.f32 %v266, %v1358
      %v1361 = vmul.f32 %v267, %v1358
      %v1362 = vmul.f32 %v268, %v1358
      %v1363 = vmul.f32 %v269, %v1358
      %v1364 = vmul.f32 %v270, %v1358
      %v1365 = vmul.f32 %v271, %v1358
      %v1366 = vmul.f32 %v272, %v1358
      %v1367 = vmul.f32 %v273, %v1358
      %v1368 = vmul.f32 %v274, %v1358
      %v1369 = vmul.f32 %v275, %v1358
      %v1370 = vmul.f32 %v276, %v1358
      %v1371 = vmul.f32 %v277, %v1358
      %v1372 = vmul.f32 %v278, %v1358
      %v1373 = vmul.f32 %v279, %v1358
      %v1374 = vmul.f32 %v280, %v1358
      %v1375 = vmul.f32 %v281, %v1358
      %v1376 = vmul.f32 %v282, %v1358
      %v1377 = vmul.f32 %v283, %v1358
      %v1378 = vmul.f32 %v284, %v1358
      %v1379 = vmul.f32 %v285, %v1358
      %v1380 = vmul.f32 %v286, %v1358
      %v1381 = vmul.f32 %v287, %v1358
      %v1382 = vmul.f32 %v288, %v1358
      %v1383 = vmul.f32 %v289, %v1358
      %v1384 = vmul.f32 %v290, %v1358
      %v1385 = vmul.f32 %v291, %v1358
      %v1386 = vmul.f32 %v292, %v1358
      %v1387 = vmul.f32 %v293, %v1358
      %v1388 = vmul.f32 %v294, %v1358
      %v1389 = vmul.f32 %v295, %v1358
      %v1390 = vmul.f32 %v296, %v1358
      %v1391 = vmul.f32 %v297, %v1358
      %v1392 = vmul.f32 %v298, %v1358
      %v1393 = vmul.f32 %v299, %v1358
      %v1394 = vmul.f32 %v300, %v1358
      %v1395 = vmul.f32 %v301, %v1358
      %v1396 = vmul.f32 %v302, %v1358
      %v1397 = vmul.f32 %v303, %v1358
      %v1398 = vmul.f32 %v304, %v1358
      %v1399 = vmul.f32 %v305, %v1358
      %v1400 = vmul.f32 %v306, %v1358
      %vm1443 = vcmask 1041408
      %v1444 = vrot.slane %v1359, 6
      %v1445 = vrot.slane %v1360, 6
      %v1446 = vsel %vm1443, %v1444, %v1445
      %v1447 = vrot.slane %v1361, 6
      %v1448 = vsel %vm1443, %v1445, %v1447
      %v1449 = vrot.slane %v1362, 6
      %v1450 = vrot.slane %v1363, 6
      %v1451 = vsel %vm1443, %v1449, %v1450
      %v1452 = vrot.slane %v1364, 6
      %v1453 = vsel %vm1443, %v1450, %v1452
      %v1454 = vrot.slane %v1365, 6
      %v1455 = vrot.slane %v1366, 6
      %v1456 = vsel %vm1443, %v1454, %v1455
      %v1457 = vrot.slane %v1367, 6
      %v1458 = vsel %vm1443, %v1455, %v1457
      %v1459 = vrot.slane %v1368, 6
      %v1460 = vrot.slane %v1369, 6
      %v1461 = vsel %vm1443, %v1459, %v1460
      %v1462 = vrot.slane %v1370, 6
      %v1463 = vsel %vm1443, %v1460, %v1462
      %v1464 = vrot.slane %v1371, 6
      %v1465 = vrot.slane %v1372, 6
      %v1466 = vsel %vm1443, %v1464, %v1465
      %v1467 = vrot.slane %v1373, 6
      %v1468 = vsel %vm1443, %v1465, %v1467
      %v1469 = vrot.slane %v1374, 6
      %v1470 = vrot.slane %v1375, 6
      %v1471 = vsel %vm1443, %v1469, %v1470
      %v1472 = vrot.slane %v1376, 6
      %v1473 = vsel %vm1443, %v1470, %v1472
      %v1474 = vrot.slane %v1377, 6
      %v1475 = vrot.slane %v1378, 6
      %v1476 = vsel %vm1443, %v1474, %v1475
      %v1477 = vrot.slane %v1379, 6
      %v1478 = vsel %vm1443, %v1475, %v1477
      %v1479 = vrot.slane %v1380, 6
      %v1480 = vrot.slane %v1381, 6
      %v1481 = vsel %vm1443, %v1479, %v1480
      %v1482 = vrot.slane %v1382, 6
      %v1483 = vsel %vm1443, %v1480, %v1482
      %v1484 = vrot.slane %v1383, 6
      %v1485 = vrot.slane %v1384, 6
      %v1486 = vsel %vm1443, %v1484, %v1485
      %v1487 = vrot.slane %v1385, 6
      %v1488 = vsel %vm1443, %v1485, %v1487
      %v1489 = vrot.slane %v1386, 6
      %v1490 = vrot.slane %v1387, 6
      %v1491 = vsel %vm1443, %v1489, %v1490
      %v1492 = vrot.slane %v1388, 6
      %v1493 = vsel %vm1443, %v1490, %v1492
      %v1494 = vrot.slane %v1389, 6
      %v1495 = vrot.slane %v1390, 6
      %v1496 = vsel %vm1443, %v1494, %v1495
      %v1497 = vrot.slane %v1391, 6
      %v1498 = vsel %vm1443, %v1495, %v1497
      %v1499 = vrot.slane %v1392, 6
      %v1500 = vrot.slane %v1393, 6
      %v1501 = vsel %vm1443, %v1499, %v1500
      %v1502 = vrot.slane %v1394, 6
      %v1503 = vsel %vm1443, %v1500, %v1502
      %v1504 = vrot.slane %v1395, 6
      %v1505 = vrot.slane %v1396, 6
      %v1506 = vsel %vm1443, %v1504, %v1505
      %v1507 = vrot.slane %v1397, 6
      %v1508 = vsel %vm1443, %v1505, %v1507
      %v1509 = vrot.slane %v1398, 6
      %v1510 = vrot.slane %v1399, 6
      %v1511 = vsel %vm1443, %v1509, %v1510
      %v1512 = vrot.slane %v1400, 6
      %v1513 = vsel %vm1443, %v1510, %v1512
      %v1542 = vadd.f32 %v1327, %v1446
      %v1543 = vadd.f32 %v1328, %v1448
      %v1544 = vadd.f32 %v1329, %v1451
      %v1545 = vadd.f32 %v1330, %v1453
      %v1546 = vadd.f32 %v1331, %v1456
      %v1547 = vadd.f32 %v1332, %v1458
      %v1548 = vadd.f32 %v1333, %v1461
      %v1549 = vadd.f32 %v1334, %v1463
      %v1550 = vadd.f32 %v1335, %v1466
      %v1551 = vadd.f32 %v1336, %v1468
      %v1552 = vadd.f32 %v1337, %v1471
      %v1553 = vadd.f32 %v1338, %v1473
      %v1554 = vadd.f32 %v1339, %v1476
      %v1555 = vadd.f32 %v1340, %v1478
      %v1556 = vadd.f32 %v1341, %v1481
      %v1557 = vadd.f32 %v1342, %v1483
      %v1558 = vadd.f32 %v1343, %v1486
      %v1559 = vadd.f32 %v1344, %v1488
      %v1560 = vadd.f32 %v1345, %v1491
      %v1561 = vadd.f32 %v1346, %v1493
      %v1562 = vadd.f32 %v1347, %v1496
      %v1563 = vadd.f32 %v1348, %v1498
      %v1564 = vadd.f32 %v1349, %v1501
      %v1565 = vadd.f32 %v1350, %v1503
      %v1566 = vadd.f32 %v1351, %v1506
      %v1567 = vadd.f32 %v1352, %v1508
      %v1568 = vadd.f32 %v1353, %v1511
      %v1569 = vadd.f32 %v1354, %v1513
      %v1570 = vlaneseq
      %v1571 = vshrl.u32 %v1570, 7
      %v1572 = vsub.s32 7, %v1571
      %v1573 = vrot.slane %v325, %v1572
      %v1574 = vmul.f32 %v268, %v1573
      %v1575 = vmul.f32 %v269, %v1573
      %v1576 = vmul.f32 %v271, %v1573
      %v1577 = vmul.f32 %v272, %v1573
      %v1578 = vmul.f32 %v274, %v1573
      %v1579 = vmul.f32 %v275, %v1573
      %v1580 = vmul.f32 %v277, %v1573
      %v1581 = vmul.f32 %v278, %v1573
      %v1582 = vmul.f32 %v280, %v1573
      %v1583 = vmul.f32 %v281, %v1573
      %v1584 = vmul.f32 %v283, %v1573
      %v1585 = vmul.f32 %v284, %v1573
      %v1586 = vmul.f32 %v286, %v1573
      %v1587 = vmul.f32 %v287, %v1573
      %v1588 = vmul.f32 %v289, %v1573
      %v1589 = vmul.f32 %v290, %v1573
      %v1590 = vmul.f32 %v292, %v1573
      %v1591 = vmul.f32 %v293, %v1573
      %v1592 = vmul.f32 %v295, %v1573
      %v1593 = vmul.f32 %v296, %v1573
      %v1594 = vmul.f32 %v298, %v1573
      %v1595 = vmul.f32 %v299, %v1573
      %v1596 = vmul.f32 %v301, %v1573
      %v1597 = vmul.f32 %v302, %v1573
      %v1598 = vmul.f32 %v304, %v1573
      %v1599 = vmul.f32 %v305, %v1573
      %v1600 = vmul.f32 %v307, %v1573
      %v1601 = vmul.f32 %v308, %v1573
      %v1602 = vadd.f32 %v1542, %v1574
      %v1603 = vadd.f32 %v1543, %v1575
      %v1604 = vadd.f32 %v1544, %v1576
      %v1605 = vadd.f32 %v1545, %v1577
      %v1606 = vadd.f32 %v1546, %v1578
      %v1607 = vadd.f32 %v1547, %v1579
      %v1608 = vadd.f32 %v1548, %v1580
      %v1609 = vadd.f32 %v1549, %v1581
      %v1610 = vadd.f32 %v1550, %v1582
      %v1611 = vadd.f32 %v1551, %v1583
      %v1612 = vadd.f32 %v1552, %v1584
      %v1613 = vadd.f32 %v1553, %v1585
      %v1614 = vadd.f32 %v1554, %v1586
      %v1615 = vadd.f32 %v1555, %v1587
      %v1616 = vadd.f32 %v1556, %v1588
      %v1617 = vadd.f32 %v1557, %v1589
      %v1618 = vadd.f32 %v1558, %v1590
      %v1619 = vadd.f32 %v1559, %v1591
      %v1620 = vadd.f32 %v1560, %v1592
      %v1621 = vadd.f32 %v1561, %v1593
      %v1622 = vadd.f32 %v1562, %v1594
      %v1623 = vadd.f32 %v1563, %v1595
      %v1624 = vadd.f32 %v1564, %v1596
      %v1625 = vadd.f32 %v1565, %v1597
      %v1626 = vadd.f32 %v1566, %v1598
      %v1627 = vadd.f32 %v1567, %v1599
      %v1628 = vadd.f32 %v1568, %v1600
      %v1629 = vadd.f32 %v1569, %v1601
      %v1630 = vlaneseq
      %v1631 = vshrl.u32 %v1630, 7
      %v1632 = vsub.s32 0, %v1631
      %v1633 = vrot.slane %v326, %v1632
      %v1634 = vmul.f32 %v268, %v1633
      %v1635 = vmul.f32 %v269, %v1633
      %v1636 = vmul.f32 %v271, %v1633
      %v1637 = vmul.f32 %v272, %v1633
      %v1638 = vmul.f32 %v274, %v1633
      %v1639 = vmul.f32 %v275, %v1633
      %v1640 = vmul.f32 %v277, %v1633
      %v1641 = vmul.f32 %v278, %v1633
      %v1642 = vmul.f32 %v280, %v1633
      %v1643 = vmul.f32 %v281, %v1633
      %v1644 = vmul.f32 %v283, %v1633
      %v1645 = vmul.f32 %v284, %v1633
      %v1646 = vmul.f32 %v286, %v1633
      %v1647 = vmul.f32 %v287, %v1633
      %v1648 = vmul.f32 %v289, %v1633
      %v1649 = vmul.f32 %v290, %v1633
      %v1650 = vmul.f32 %v292, %v1633
      %v1651 = vmul.f32 %v293, %v1633
      %v1652 = vmul.f32 %v295, %v1633
      %v1653 = vmul.f32 %v296, %v1633
      %v1654 = vmul.f32 %v298, %v1633
      %v1655 = vmul.f32 %v299, %v1633
      %v1656 = vmul.f32 %v301, %v1633
      %v1657 = vmul.f32 %v302, %v1633
      %v1658 = vmul.f32 %v304, %v1633
      %v1659 = vmul.f32 %v305, %v1633
      %v1660 = vmul.f32 %v307, %v1633
      %v1661 = vmul.f32 %v308, %v1633
      %v1690 = vrot.slane %v1634, 1
      %v1691 = vrot.slane %v1635, 1
      %v1692 = vsel %vm452, %v1690, %v1691
      %v1693 = vrot.slane %v1636, 1
      %v1694 = vrot.slane %v1637, 1
      %v1695 = vsel %vm452, %v1693, %v1694
      %v1696 = vrot.slane %v1638, 1
      %v1697 = vrot.slane %v1639, 1
      %v1698 = vsel %vm452, %v1696, %v1697
      %v1699 = vrot.slane %v1640, 1
      %v1700 = vrot.slane %v1641, 1
      %v1701 = vsel %vm452, %v1699, %v1700
      %v1702 = vrot.slane %v1642, 1
      %v1703 = vrot.slane %v1643, 1
      %v1704 = vsel %vm452, %v1702, %v1703
      %v1705 = vrot.slane %v1644, 1
      %v1706 = vrot.slane %v1645, 1
      %v1707 = vsel %vm452, %v1705, %v1706
      %v1708 = vrot.slane %v1646, 1
      %v1709 = vrot.slane %v1647, 1
      %v1710 = vsel %vm452, %v1708, %v1709
      %v1711 = vrot.slane %v1648, 1
      %v1712 = vrot.slane %v1649, 1
      %v1713 = vsel %vm452, %v1711, %v1712
      %v1714 = vrot.slane %v1650, 1
      %v1715 = vrot.slane %v1651, 1
      %v1716 = vsel %vm452, %v1714, %v1715
      %v1717 = vrot.slane %v1652, 1
      %v1718 = vrot.slane %v1653, 1
      %v1719 = vsel %vm452, %v1717, %v1718
      %v1720 = vrot.slane %v1654, 1
      %v1721 = vrot.slane %v1655, 1
      %v1722 = vsel %vm452, %v1720, %v1721
      %v1723 = vrot.slane %v1656, 1
      %v1724 = vrot.slane %v1657, 1
      %v1725 = vsel %vm452, %v1723, %v1724
      %v1726 = vrot.slane %v1658, 1
      %v1727 = vrot.slane %v1659, 1
      %v1728 = vsel %vm452, %v1726, %v1727
      %v1729 = vrot.slane %v1660, 1
      %v1730 = vrot.slane %v1661, 1
      %v1731 = vsel %vm452, %v1729, %v1730
      %v1760 = vadd.f32 %v1602, %v1692
      %v1761 = vadd.f32 %v1603, %v1691
      %v1762 = vadd.f32 %v1604, %v1695
      %v1763 = vadd.f32 %v1605, %v1694
      %v1764 = vadd.f32 %v1606, %v1698
      %v1765 = vadd.f32 %v1607, %v1697
      %v1766 = vadd.f32 %v1608, %v1701
      %v1767 = vadd.f32 %v1609, %v1700
      %v1768 = vadd.f32 %v1610, %v1704
      %v1769 = vadd.f32 %v1611, %v1703
      %v1770 = vadd.f32 %v1612, %v1707
      %v1771 = vadd.f32 %v1613, %v1706
      %v1772 = vadd.f32 %v1614, %v1710
      %v1773 = vadd.f32 %v1615, %v1709
      %v1774 = vadd.f32 %v1616, %v1713
      %v1775 = vadd.f32 %v1617, %v1712
      %v1776 = vadd.f32 %v1618, %v1716
      %v1777 = vadd.f32 %v1619, %v1715
      %v1778 = vadd.f32 %v1620, %v1719
      %v1779 = vadd.f32 %v1621, %v1718
      %v1780 = vadd.f32 %v1622, %v1722
      %v1781 = vadd.f32 %v1623, %v1721
      %v1782 = vadd.f32 %v1624, %v1725
      %v1783 = vadd.f32 %v1625, %v1724
      %v1784 = vadd.f32 %v1626, %v1728
      %v1785 = vadd.f32 %v1627, %v1727
      %v1786 = vadd.f32 %v1628, %v1731
      %v1787 = vadd.f32 %v1629, %v1730
      %v1788 = vlaneseq
      %v1789 = vshrl.u32 %v1788, 7
      %v1790 = vsub.s32 1, %v1789
      %v1791 = vrot.slane %v326, %v1790
      %v1792 = vmul.f32 %v268, %v1791
      %v1793 = vmul.f32 %v269, %v1791
      %v1794 = vmul.f32 %v271, %v1791
      %v1795 = vmul.f32 %v272, %v1791
      %v1796 = vmul.f32 %v274, %v1791
      %v1797 = vmul.f32 %v275, %v1791
      %v1798 = vmul.f32 %v277, %v1791
      %v1799 = vmul.f32 %v278, %v1791
      %v1800 = vmul.f32 %v280, %v1791
      %v1801 = vmul.f32 %v281, %v1791
      %v1802 = vmul.f32 %v283, %v1791
      %v1803 = vmul.f32 %v284, %v1791
      %v1804 = vmul.f32 %v286, %v1791
      %v1805 = vmul.f32 %v287, %v1791
      %v1806 = vmul.f32 %v289, %v1791
      %v1807 = vmul.f32 %v290, %v1791
      %v1808 = vmul.f32 %v292, %v1791
      %v1809 = vmul.f32 %v293, %v1791
      %v1810 = vmul.f32 %v295, %v1791
      %v1811 = vmul.f32 %v296, %v1791
      %v1812 = vmul.f32 %v298, %v1791
      %v1813 = vmul.f32 %v299, %v1791
      %v1814 = vmul.f32 %v301, %v1791
      %v1815 = vmul.f32 %v302, %v1791
      %v1816 = vmul.f32 %v304, %v1791
      %v1817 = vmul.f32 %v305, %v1791
      %v1818 = vmul.f32 %v307, %v1791
      %v1819 = vmul.f32 %v308, %v1791
      %v1848 = vrot.slane %v1792, 2
      %v1849 = vrot.slane %v1793, 2
      %v1850 = vsel %vm611, %v1848, %v1849
      %v1851 = vrot.slane %v1794, 2
      %v1852 = vrot.slane %v1795, 2
      %v1853 = vsel %vm611, %v1851, %v1852
      %v1854 = vrot.slane %v1796, 2
      %v1855 = vrot.slane %v1797, 2
      %v1856 = vsel %vm611, %v1854, %v1855
      %v1857 = vrot.slane %v1798, 2
      %v1858 = vrot.slane %v1799, 2
      %v1859 = vsel %vm611, %v1857, %v1858
      %v1860 = vrot.slane %v1800, 2
      %v1861 = vrot.slane %v1801, 2
      %v1862 = vsel %vm611, %v1860, %v1861
      %v1863 = vrot.slane %v1802, 2
      %v1864 = vrot.slane %v1803, 2
      %v1865 = vsel %vm611, %v1863, %v1864
      %v1866 = vrot.slane %v1804, 2
      %v1867 = vrot.slane %v1805, 2
      %v1868 = vsel %vm611, %v1866, %v1867
      %v1869 = vrot.slane %v1806, 2
      %v1870 = vrot.slane %v1807, 2
      %v1871 = vsel %vm611, %v1869, %v1870
      %v1872 = vrot.slane %v1808, 2
      %v1873 = vrot.slane %v1809, 2
      %v1874 = vsel %vm611, %v1872, %v1873
      %v1875 = vrot.slane %v1810, 2
      %v1876 = vrot.slane %v1811, 2
      %v1877 = vsel %vm611, %v1875, %v1876
      %v1878 = vrot.slane %v1812, 2
      %v1879 = vrot.slane %v1813, 2
      %v1880 = vsel %vm611, %v1878, %v1879
      %v1881 = vrot.slane %v1814, 2
      %v1882 = vrot.slane %v1815, 2
      %v1883 = vsel %vm611, %v1881, %v1882
      %v1884 = vrot.slane %v1816, 2
      %v1885 = vrot.slane %v1817, 2
      %v1886 = vsel %vm611, %v1884, %v1885
      %v1887 = vrot.slane %v1818, 2
      %v1888 = vrot.slane %v1819, 2
      %v1889 = vsel %vm611, %v1887, %v1888
      %v1918 = vadd.f32 %v1760, %v1850
      %v1919 = vadd.f32 %v1761, %v1849
      %v1920 = vadd.f32 %v1762, %v1853
      %v1921 = vadd.f32 %v1763, %v1852
      %v1922 = vadd.f32 %v1764, %v1856
      %v1923 = vadd.f32 %v1765, %v1855
      %v1924 = vadd.f32 %v1766, %v1859
      %v1925 = vadd.f32 %v1767, %v1858
      %v1926 = vadd.f32 %v1768, %v1862
      %v1927 = vadd.f32 %v1769, %v1861
      %v1928 = vadd.f32 %v1770, %v1865
      %v1929 = vadd.f32 %v1771, %v1864
      %v1930 = vadd.f32 %v1772, %v1868
      %v1931 = vadd.f32 %v1773, %v1867
      %v1932 = vadd.f32 %v1774, %v1871
      %v1933 = vadd.f32 %v1775, %v1870
      %v1934 = vadd.f32 %v1776, %v1874
      %v1935 = vadd.f32 %v1777, %v1873
      %v1936 = vadd.f32 %v1778, %v1877
      %v1937 = vadd.f32 %v1779, %v1876
      %v1938 = vadd.f32 %v1780, %v1880
      %v1939 = vadd.f32 %v1781, %v1879
      %v1940 = vadd.f32 %v1782, %v1883
      %v1941 = vadd.f32 %v1783, %v1882
      %v1942 = vadd.f32 %v1784, %v1886
      %v1943 = vadd.f32 %v1785, %v1885
      %v1944 = vadd.f32 %v1786, %v1889
      %v1945 = vadd.f32 %v1787, %v1888
      %v1946 = vlaneseq
      %v1947 = vshrl.u32 %v1946, 7
      %v1948 = vsub.s32 2, %v1947
      %v1949 = vrot.slane %v326, %v1948
      %v1950 = vmul.f32 %v268, %v1949
      %v1951 = vmul.f32 %v269, %v1949
      %v1952 = vmul.f32 %v270, %v1949
      %v1953 = vmul.f32 %v271, %v1949
      %v1954 = vmul.f32 %v272, %v1949
      %v1955 = vmul.f32 %v273, %v1949
      %v1956 = vmul.f32 %v274, %v1949
      %v1957 = vmul.f32 %v275, %v1949
      %v1958 = vmul.f32 %v276, %v1949
      %v1959 = vmul.f32 %v277, %v1949
      %v1960 = vmul.f32 %v278, %v1949
      %v1961 = vmul.f32 %v279, %v1949
      %v1962 = vmul.f32 %v280, %v1949
      %v1963 = vmul.f32 %v281, %v1949
      %v1964 = vmul.f32 %v282, %v1949
      %v1965 = vmul.f32 %v283, %v1949
      %v1966 = vmul.f32 %v284, %v1949
      %v1967 = vmul.f32 %v285, %v1949
      %v1968 = vmul.f32 %v286, %v1949
      %v1969 = vmul.f32 %v287, %v1949
      %v1970 = vmul.f32 %v288, %v1949
      %v1971 = vmul.f32 %v289, %v1949
      %v1972 = vmul.f32 %v290, %v1949
      %v1973 = vmul.f32 %v291, %v1949
      %v1974 = vmul.f32 %v292, %v1949
      %v1975 = vmul.f32 %v293, %v1949
      %v1976 = vmul.f32 %v294, %v1949
      %v1977 = vmul.f32 %v295, %v1949
      %v1978 = vmul.f32 %v296, %v1949
      %v1979 = vmul.f32 %v297, %v1949
      %v1980 = vmul.f32 %v298, %v1949
      %v1981 = vmul.f32 %v299, %v1949
      %v1982 = vmul.f32 %v300, %v1949
      %v1983 = vmul.f32 %v301, %v1949
      %v1984 = vmul.f32 %v302, %v1949
      %v1985 = vmul.f32 %v303, %v1949
      %v1986 = vmul.f32 %v304, %v1949
      %v1987 = vmul.f32 %v305, %v1949
      %v1988 = vmul.f32 %v306, %v1949
      %v1989 = vmul.f32 %v307, %v1949
      %v1990 = vmul.f32 %v308, %v1949
      %v1991 = vmul.f32 %v309, %v1949
      %v2034 = vrot.slane %v1950, 3
      %v2035 = vrot.slane %v1951, 3
      %v2036 = vsel %vm798, %v2034, %v2035
      %v2037 = vrot.slane %v1952, 3
      %v2038 = vsel %vm798, %v2035, %v2037
      %v2039 = vrot.slane %v1953, 3
      %v2040 = vrot.slane %v1954, 3
      %v2041 = vsel %vm798, %v2039, %v2040
      %v2042 = vrot.slane %v1955, 3
      %v2043 = vsel %vm798, %v2040, %v2042
      %v2044 = vrot.slane %v1956, 3
      %v2045 = vrot.slane %v1957, 3
      %v2046 = vsel %vm798, %v2044, %v2045
      %v2047 = vrot.slane %v1958, 3
      %v2048 = vsel %vm798, %v2045, %v2047
      %v2049 = vrot.slane %v1959, 3
      %v2050 = vrot.slane %v1960, 3
      %v2051 = vsel %vm798, %v2049, %v2050
      %v2052 = vrot.slane %v1961, 3
      %v2053 = vsel %vm798, %v2050, %v2052
      %v2054 = vrot.slane %v1962, 3
      %v2055 = vrot.slane %v1963, 3
      %v2056 = vsel %vm798, %v2054, %v2055
      %v2057 = vrot.slane %v1964, 3
      %v2058 = vsel %vm798, %v2055, %v2057
      %v2059 = vrot.slane %v1965, 3
      %v2060 = vrot.slane %v1966, 3
      %v2061 = vsel %vm798, %v2059, %v2060
      %v2062 = vrot.slane %v1967, 3
      %v2063 = vsel %vm798, %v2060, %v2062
      %v2064 = vrot.slane %v1968, 3
      %v2065 = vrot.slane %v1969, 3
      %v2066 = vsel %vm798, %v2064, %v2065
      %v2067 = vrot.slane %v1970, 3
      %v2068 = vsel %vm798, %v2065, %v2067
      %v2069 = vrot.slane %v1971, 3
      %v2070 = vrot.slane %v1972, 3
      %v2071 = vsel %vm798, %v2069, %v2070
      %v2072 = vrot.slane %v1973, 3
      %v2073 = vsel %vm798, %v2070, %v2072
      %v2074 = vrot.slane %v1974, 3
      %v2075 = vrot.slane %v1975, 3
      %v2076 = vsel %vm798, %v2074, %v2075
      %v2077 = vrot.slane %v1976, 3
      %v2078 = vsel %vm798, %v2075, %v2077
      %v2079 = vrot.slane %v1977, 3
      %v2080 = vrot.slane %v1978, 3
      %v2081 = vsel %vm798, %v2079, %v2080
      %v2082 = vrot.slane %v1979, 3
      %v2083 = vsel %vm798, %v2080, %v2082
      %v2084 = vrot.slane %v1980, 3
      %v2085 = vrot.slane %v1981, 3
      %v2086 = vsel %vm798, %v2084, %v2085
      %v2087 = vrot.slane %v1982, 3
      %v2088 = vsel %vm798, %v2085, %v2087
      %v2089 = vrot.slane %v1983, 3
      %v2090 = vrot.slane %v1984, 3
      %v2091 = vsel %vm798, %v2089, %v2090
      %v2092 = vrot.slane %v1985, 3
      %v2093 = vsel %vm798, %v2090, %v2092
      %v2094 = vrot.slane %v1986, 3
      %v2095 = vrot.slane %v1987, 3
      %v2096 = vsel %vm798, %v2094, %v2095
      %v2097 = vrot.slane %v1988, 3
      %v2098 = vsel %vm798, %v2095, %v2097
      %v2099 = vrot.slane %v1989, 3
      %v2100 = vrot.slane %v1990, 3
      %v2101 = vsel %vm798, %v2099, %v2100
      %v2102 = vrot.slane %v1991, 3
      %v2103 = vsel %vm798, %v2100, %v2102
      %v2132 = vadd.f32 %v1918, %v2036
      %v2133 = vadd.f32 %v1919, %v2038
      %v2134 = vadd.f32 %v1920, %v2041
      %v2135 = vadd.f32 %v1921, %v2043
      %v2136 = vadd.f32 %v1922, %v2046
      %v2137 = vadd.f32 %v1923, %v2048
      %v2138 = vadd.f32 %v1924, %v2051
      %v2139 = vadd.f32 %v1925, %v2053
      %v2140 = vadd.f32 %v1926, %v2056
      %v2141 = vadd.f32 %v1927, %v2058
      %v2142 = vadd.f32 %v1928, %v2061
      %v2143 = vadd.f32 %v1929, %v2063
      %v2144 = vadd.f32 %v1930, %v2066
      %v2145 = vadd.f32 %v1931, %v2068
      %v2146 = vadd.f32 %v1932, %v2071
      %v2147 = vadd.f32 %v1933, %v2073
      %v2148 = vadd.f32 %v1934, %v2076
      %v2149 = vadd.f32 %v1935, %v2078
      %v2150 = vadd.f32 %v1936, %v2081
      %v2151 = vadd.f32 %v1937, %v2083
      %v2152 = vadd.f32 %v1938, %v2086
      %v2153 = vadd.f32 %v1939, %v2088
      %v2154 = vadd.f32 %v1940, %v2091
      %v2155 = vadd.f32 %v1941, %v2093
      %v2156 = vadd.f32 %v1942, %v2096
      %v2157 = vadd.f32 %v1943, %v2098
      %v2158 = vadd.f32 %v1944, %v2101
      %v2159 = vadd.f32 %v1945, %v2103
      %v2160 = vlaneseq
      %v2161 = vshrl.u32 %v2160, 7
      %v2162 = vsub.s32 3, %v2161
      %v2163 = vrot.slane %v326, %v2162
      %v2164 = vmul.f32 %v268, %v2163
      %v2165 = vmul.f32 %v269, %v2163
      %v2166 = vmul.f32 %v270, %v2163
      %v2167 = vmul.f32 %v271, %v2163
      %v2168 = vmul.f32 %v272, %v2163
      %v2169 = vmul.f32 %v273, %v2163
      %v2170 = vmul.f32 %v274, %v2163
      %v2171 = vmul.f32 %v275, %v2163
      %v2172 = vmul.f32 %v276, %v2163
      %v2173 = vmul.f32 %v277, %v2163
      %v2174 = vmul.f32 %v278, %v2163
      %v2175 = vmul.f32 %v279, %v2163
      %v2176 = vmul.f32 %v280, %v2163
      %v2177 = vmul.f32 %v281, %v2163
      %v2178 = vmul.f32 %v282, %v2163
      %v2179 = vmul.f32 %v283, %v2163
      %v2180 = vmul.f32 %v284, %v2163
      %v2181 = vmul.f32 %v285, %v2163
      %v2182 = vmul.f32 %v286, %v2163
      %v2183 = vmul.f32 %v287, %v2163
      %v2184 = vmul.f32 %v288, %v2163
      %v2185 = vmul.f32 %v289, %v2163
      %v2186 = vmul.f32 %v290, %v2163
      %v2187 = vmul.f32 %v291, %v2163
      %v2188 = vmul.f32 %v292, %v2163
      %v2189 = vmul.f32 %v293, %v2163
      %v2190 = vmul.f32 %v294, %v2163
      %v2191 = vmul.f32 %v295, %v2163
      %v2192 = vmul.f32 %v296, %v2163
      %v2193 = vmul.f32 %v297, %v2163
      %v2194 = vmul.f32 %v298, %v2163
      %v2195 = vmul.f32 %v299, %v2163
      %v2196 = vmul.f32 %v300, %v2163
      %v2197 = vmul.f32 %v301, %v2163
      %v2198 = vmul.f32 %v302, %v2163
      %v2199 = vmul.f32 %v303, %v2163
      %v2200 = vmul.f32 %v304, %v2163
      %v2201 = vmul.f32 %v305, %v2163
      %v2202 = vmul.f32 %v306, %v2163
      %v2203 = vmul.f32 %v307, %v2163
      %v2204 = vmul.f32 %v308, %v2163
      %v2205 = vmul.f32 %v309, %v2163
      %v2248 = vrot.slane %v2164, 4
      %v2249 = vrot.slane %v2165, 4
      %v2250 = vsel %vm1013, %v2248, %v2249
      %v2251 = vrot.slane %v2166, 4
      %v2252 = vsel %vm1013, %v2249, %v2251
      %v2253 = vrot.slane %v2167, 4
      %v2254 = vrot.slane %v2168, 4
      %v2255 = vsel %vm1013, %v2253, %v2254
      %v2256 = vrot.slane %v2169, 4
      %v2257 = vsel %vm1013, %v2254, %v2256
      %v2258 = vrot.slane %v2170, 4
      %v2259 = vrot.slane %v2171, 4
      %v2260 = vsel %vm1013, %v2258, %v2259
      %v2261 = vrot.slane %v2172, 4
      %v2262 = vsel %vm1013, %v2259, %v2261
      %v2263 = vrot.slane %v2173, 4
      %v2264 = vrot.slane %v2174, 4
      %v2265 = vsel %vm1013, %v2263, %v2264
      %v2266 = vrot.slane %v2175, 4
      %v2267 = vsel %vm1013, %v2264, %v2266
      %v2268 = vrot.slane %v2176, 4
      %v2269 = vrot.slane %v2177, 4
      %v2270 = vsel %vm1013, %v2268, %v2269
      %v2271 = vrot.slane %v2178, 4
      %v2272 = vsel %vm1013, %v2269, %v2271
      %v2273 = vrot.slane %v2179, 4
      %v2274 = vrot.slane %v2180, 4
      %v2275 = vsel %vm1013, %v2273, %v2274
      %v2276 = vrot.slane %v2181, 4
      %v2277 = vsel %vm1013, %v2274, %v2276
      %v2278 = vrot.slane %v2182, 4
      %v2279 = vrot.slane %v2183, 4
      %v2280 = vsel %vm1013, %v2278, %v2279
      %v2281 = vrot.slane %v2184, 4
      %v2282 = vsel %vm1013, %v2279, %v2281
      %v2283 = vrot.slane %v2185, 4
      %v2284 = vrot.slane %v2186, 4
      %v2285 = vsel %vm1013, %v2283, %v2284
      %v2286 = vrot.slane %v2187, 4
      %v2287 = vsel %vm1013, %v2284, %v2286
      %v2288 = vrot.slane %v2188, 4
      %v2289 = vrot.slane %v2189, 4
      %v2290 = vsel %vm1013, %v2288, %v2289
      %v2291 = vrot.slane %v2190, 4
      %v2292 = vsel %vm1013, %v2289, %v2291
      %v2293 = vrot.slane %v2191, 4
      %v2294 = vrot.slane %v2192, 4
      %v2295 = vsel %vm1013, %v2293, %v2294
      %v2296 = vrot.slane %v2193, 4
      %v2297 = vsel %vm1013, %v2294, %v2296
      %v2298 = vrot.slane %v2194, 4
      %v2299 = vrot.slane %v2195, 4
      %v2300 = vsel %vm1013, %v2298, %v2299
      %v2301 = vrot.slane %v2196, 4
      %v2302 = vsel %vm1013, %v2299, %v2301
      %v2303 = vrot.slane %v2197, 4
      %v2304 = vrot.slane %v2198, 4
      %v2305 = vsel %vm1013, %v2303, %v2304
      %v2306 = vrot.slane %v2199, 4
      %v2307 = vsel %vm1013, %v2304, %v2306
      %v2308 = vrot.slane %v2200, 4
      %v2309 = vrot.slane %v2201, 4
      %v2310 = vsel %vm1013, %v2308, %v2309
      %v2311 = vrot.slane %v2202, 4
      %v2312 = vsel %vm1013, %v2309, %v2311
      %v2313 = vrot.slane %v2203, 4
      %v2314 = vrot.slane %v2204, 4
      %v2315 = vsel %vm1013, %v2313, %v2314
      %v2316 = vrot.slane %v2205, 4
      %v2317 = vsel %vm1013, %v2314, %v2316
      %v2346 = vadd.f32 %v2132, %v2250
      %v2347 = vadd.f32 %v2133, %v2252
      %v2348 = vadd.f32 %v2134, %v2255
      %v2349 = vadd.f32 %v2135, %v2257
      %v2350 = vadd.f32 %v2136, %v2260
      %v2351 = vadd.f32 %v2137, %v2262
      %v2352 = vadd.f32 %v2138, %v2265
      %v2353 = vadd.f32 %v2139, %v2267
      %v2354 = vadd.f32 %v2140, %v2270
      %v2355 = vadd.f32 %v2141, %v2272
      %v2356 = vadd.f32 %v2142, %v2275
      %v2357 = vadd.f32 %v2143, %v2277
      %v2358 = vadd.f32 %v2144, %v2280
      %v2359 = vadd.f32 %v2145, %v2282
      %v2360 = vadd.f32 %v2146, %v2285
      %v2361 = vadd.f32 %v2147, %v2287
      %v2362 = vadd.f32 %v2148, %v2290
      %v2363 = vadd.f32 %v2149, %v2292
      %v2364 = vadd.f32 %v2150, %v2295
      %v2365 = vadd.f32 %v2151, %v2297
      %v2366 = vadd.f32 %v2152, %v2300
      %v2367 = vadd.f32 %v2153, %v2302
      %v2368 = vadd.f32 %v2154, %v2305
      %v2369 = vadd.f32 %v2155, %v2307
      %v2370 = vadd.f32 %v2156, %v2310
      %v2371 = vadd.f32 %v2157, %v2312
      %v2372 = vadd.f32 %v2158, %v2315
      %v2373 = vadd.f32 %v2159, %v2317
      %v2374 = vlaneseq
      %v2375 = vshrl.u32 %v2374, 7
      %v2376 = vsub.s32 4, %v2375
      %v2377 = vrot.slane %v326, %v2376
      %v2378 = vmul.f32 %v268, %v2377
      %v2379 = vmul.f32 %v269, %v2377
      %v2380 = vmul.f32 %v270, %v2377
      %v2381 = vmul.f32 %v271, %v2377
      %v2382 = vmul.f32 %v272, %v2377
      %v2383 = vmul.f32 %v273, %v2377
      %v2384 = vmul.f32 %v274, %v2377
      %v2385 = vmul.f32 %v275, %v2377
      %v2386 = vmul.f32 %v276, %v2377
      %v2387 = vmul.f32 %v277, %v2377
      %v2388 = vmul.f32 %v278, %v2377
      %v2389 = vmul.f32 %v279, %v2377
      %v2390 = vmul.f32 %v280, %v2377
      %v2391 = vmul.f32 %v281, %v2377
      %v2392 = vmul.f32 %v282, %v2377
      %v2393 = vmul.f32 %v283, %v2377
      %v2394 = vmul.f32 %v284, %v2377
      %v2395 = vmul.f32 %v285, %v2377
      %v2396 = vmul.f32 %v286, %v2377
      %v2397 = vmul.f32 %v287, %v2377
      %v2398 = vmul.f32 %v288, %v2377
      %v2399 = vmul.f32 %v289, %v2377
      %v2400 = vmul.f32 %v290, %v2377
      %v2401 = vmul.f32 %v291, %v2377
      %v2402 = vmul.f32 %v292, %v2377
      %v2403 = vmul.f32 %v293, %v2377
      %v2404 = vmul.f32 %v294, %v2377
      %v2405 = vmul.f32 %v295, %v2377
      %v2406 = vmul.f32 %v296, %v2377
      %v2407 = vmul.f32 %v297, %v2377
      %v2408 = vmul.f32 %v298, %v2377
      %v2409 = vmul.f32 %v299, %v2377
      %v2410 = vmul.f32 %v300, %v2377
      %v2411 = vmul.f32 %v301, %v2377
      %v2412 = vmul.f32 %v302, %v2377
      %v2413 = vmul.f32 %v303, %v2377
      %v2414 = vmul.f32 %v304, %v2377
      %v2415 = vmul.f32 %v305, %v2377
      %v2416 = vmul.f32 %v306, %v2377
      %v2417 = vmul.f32 %v307, %v2377
      %v2418 = vmul.f32 %v308, %v2377
      %v2419 = vmul.f32 %v309, %v2377
      %v2462 = vrot.slane %v2378, 5
      %v2463 = vrot.slane %v2379, 5
      %v2464 = vsel %vm1228, %v2462, %v2463
      %v2465 = vrot.slane %v2380, 5
      %v2466 = vsel %vm1228, %v2463, %v2465
      %v2467 = vrot.slane %v2381, 5
      %v2468 = vrot.slane %v2382, 5
      %v2469 = vsel %vm1228, %v2467, %v2468
      %v2470 = vrot.slane %v2383, 5
      %v2471 = vsel %vm1228, %v2468, %v2470
      %v2472 = vrot.slane %v2384, 5
      %v2473 = vrot.slane %v2385, 5
      %v2474 = vsel %vm1228, %v2472, %v2473
      %v2475 = vrot.slane %v2386, 5
      %v2476 = vsel %vm1228, %v2473, %v2475
      %v2477 = vrot.slane %v2387, 5
      %v2478 = vrot.slane %v2388, 5
      %v2479 = vsel %vm1228, %v2477, %v2478
      %v2480 = vrot.slane %v2389, 5
      %v2481 = vsel %vm1228, %v2478, %v2480
      %v2482 = vrot.slane %v2390, 5
      %v2483 = vrot.slane %v2391, 5
      %v2484 = vsel %vm1228, %v2482, %v2483
      %v2485 = vrot.slane %v2392, 5
      %v2486 = vsel %vm1228, %v2483, %v2485
      %v2487 = vrot.slane %v2393, 5
      %v2488 = vrot.slane %v2394, 5
      %v2489 = vsel %vm1228, %v2487, %v2488
      %v2490 = vrot.slane %v2395, 5
      %v2491 = vsel %vm1228, %v2488, %v2490
      %v2492 = vrot.slane %v2396, 5
      %v2493 = vrot.slane %v2397, 5
      %v2494 = vsel %vm1228, %v2492, %v2493
      %v2495 = vrot.slane %v2398, 5
      %v2496 = vsel %vm1228, %v2493, %v2495
      %v2497 = vrot.slane %v2399, 5
      %v2498 = vrot.slane %v2400, 5
      %v2499 = vsel %vm1228, %v2497, %v2498
      %v2500 = vrot.slane %v2401, 5
      %v2501 = vsel %vm1228, %v2498, %v2500
      %v2502 = vrot.slane %v2402, 5
      %v2503 = vrot.slane %v2403, 5
      %v2504 = vsel %vm1228, %v2502, %v2503
      %v2505 = vrot.slane %v2404, 5
      %v2506 = vsel %vm1228, %v2503, %v2505
      %v2507 = vrot.slane %v2405, 5
      %v2508 = vrot.slane %v2406, 5
      %v2509 = vsel %vm1228, %v2507, %v2508
      %v2510 = vrot.slane %v2407, 5
      %v2511 = vsel %vm1228, %v2508, %v2510
      %v2512 = vrot.slane %v2408, 5
      %v2513 = vrot.slane %v2409, 5
      %v2514 = vsel %vm1228, %v2512, %v2513
      %v2515 = vrot.slane %v2410, 5
      %v2516 = vsel %vm1228, %v2513, %v2515
      %v2517 = vrot.slane %v2411, 5
      %v2518 = vrot.slane %v2412, 5
      %v2519 = vsel %vm1228, %v2517, %v2518
      %v2520 = vrot.slane %v2413, 5
      %v2521 = vsel %vm1228, %v2518, %v2520
      %v2522 = vrot.slane %v2414, 5
      %v2523 = vrot.slane %v2415, 5
      %v2524 = vsel %vm1228, %v2522, %v2523
      %v2525 = vrot.slane %v2416, 5
      %v2526 = vsel %vm1228, %v2523, %v2525
      %v2527 = vrot.slane %v2417, 5
      %v2528 = vrot.slane %v2418, 5
      %v2529 = vsel %vm1228, %v2527, %v2528
      %v2530 = vrot.slane %v2419, 5
      %v2531 = vsel %vm1228, %v2528, %v2530
      %v2560 = vadd.f32 %v2346, %v2464
      %v2561 = vadd.f32 %v2347, %v2466
      %v2562 = vadd.f32 %v2348, %v2469
      %v2563 = vadd.f32 %v2349, %v2471
      %v2564 = vadd.f32 %v2350, %v2474
      %v2565 = vadd.f32 %v2351, %v2476
      %v2566 = vadd.f32 %v2352, %v2479
      %v2567 = vadd.f32 %v2353, %v2481
      %v2568 = vadd.f32 %v2354, %v2484
      %v2569 = vadd.f32 %v2355, %v2486
      %v2570 = vadd.f32 %v2356, %v2489
      %v2571 = vadd.f32 %v2357, %v2491
      %v2572 = vadd.f32 %v2358, %v2494
      %v2573 = vadd.f32 %v2359, %v2496
      %v2574 = vadd.f32 %v2360, %v2499
      %v2575 = vadd.f32 %v2361, %v2501
      %v2576 = vadd.f32 %v2362, %v2504
      %v2577 = vadd.f32 %v2363, %v2506
      %v2578 = vadd.f32 %v2364, %v2509
      %v2579 = vadd.f32 %v2365, %v2511
      %v2580 = vadd.f32 %v2366, %v2514
      %v2581 = vadd.f32 %v2367, %v2516
      %v2582 = vadd.f32 %v2368, %v2519
      %v2583 = vadd.f32 %v2369, %v2521
      %v2584 = vadd.f32 %v2370, %v2524
      %v2585 = vadd.f32 %v2371, %v2526
      %v2586 = vadd.f32 %v2372, %v2529
      %v2587 = vadd.f32 %v2373, %v2531
      %v2588 = vlaneseq
      %v2589 = vshrl.u32 %v2588, 7
      %v2590 = vsub.s32 5, %v2589
      %v2591 = vrot.slane %v326, %v2590
      %v2592 = vmul.f32 %v268, %v2591
      %v2593 = vmul.f32 %v269, %v2591
      %v2594 = vmul.f32 %v270, %v2591
      %v2595 = vmul.f32 %v271, %v2591
      %v2596 = vmul.f32 %v272, %v2591
      %v2597 = vmul.f32 %v273, %v2591
      %v2598 = vmul.f32 %v274, %v2591
      %v2599 = vmul.f32 %v275, %v2591
      %v2600 = vmul.f32 %v276, %v2591
      %v2601 = vmul.f32 %v277, %v2591
      %v2602 = vmul.f32 %v278, %v2591
      %v2603 = vmul.f32 %v279, %v2591
      %v2604 = vmul.f32 %v280, %v2591
      %v2605 = vmul.f32 %v281, %v2591
      %v2606 = vmul.f32 %v282, %v2591
      %v2607 = vmul.f32 %v283, %v2591
      %v2608 = vmul.f32 %v284, %v2591
      %v2609 = vmul.f32 %v285, %v2591
      %v2610 = vmul.f32 %v286, %v2591
      %v2611 = vmul.f32 %v287, %v2591
      %v2612 = vmul.f32 %v288, %v2591
      %v2613 = vmul.f32 %v289, %v2591
      %v2614 = vmul.f32 %v290, %v2591
      %v2615 = vmul.f32 %v291, %v2591
      %v2616 = vmul.f32 %v292, %v2591
      %v2617 = vmul.f32 %v293, %v2591
      %v2618 = vmul.f32 %v294, %v2591
      %v2619 = vmul.f32 %v295, %v2591
      %v2620 = vmul.f32 %v296, %v2591
      %v2621 = vmul.f32 %v297, %v2591
      %v2622 = vmul.f32 %v298, %v2591
      %v2623 = vmul.f32 %v299, %v2591
      %v2624 = vmul.f32 %v300, %v2591
      %v2625 = vmul.f32 %v301, %v2591
      %v2626 = vmul.f32 %v302, %v2591
      %v2627 = vmul.f32 %v303, %v2591
      %v2628 = vmul.f32 %v304, %v2591
      %v2629 = vmul.f32 %v305, %v2591
      %v2630 = vmul.f32 %v306, %v2591
      %v2631 = vmul.f32 %v307, %v2591
      %v2632 = vmul.f32 %v308, %v2591
      %v2633 = vmul.f32 %v309, %v2591
      %v2676 = vrot.slane %v2592, 6
      %v2677 = vrot.slane %v2593, 6
      %v2678 = vsel %vm1443, %v2676, %v2677
      %v2679 = vrot.slane %v2594, 6
      %v2680 = vsel %vm1443, %v2677, %v2679
      %v2681 = vrot.slane %v2595, 6
      %v2682 = vrot.slane %v2596, 6
      %v2683 = vsel %vm1443, %v2681, %v2682
      %v2684 = vrot.slane %v2597, 6
      %v2685 = vsel %vm1443, %v2682, %v2684
      %v2686 = vrot.slane %v2598, 6
      %v2687 = vrot.slane %v2599, 6
      %v2688 = vsel %vm1443, %v2686, %v2687
      %v2689 = vrot.slane %v2600, 6
      %v2690 = vsel %vm1443, %v2687, %v2689
      %v2691 = vrot.slane %v2601, 6
      %v2692 = vrot.slane %v2602, 6
      %v2693 = vsel %vm1443, %v2691, %v2692
      %v2694 = vrot.slane %v2603, 6
      %v2695 = vsel %vm1443, %v2692, %v2694
      %v2696 = vrot.slane %v2604, 6
      %v2697 = vrot.slane %v2605, 6
      %v2698 = vsel %vm1443, %v2696, %v2697
      %v2699 = vrot.slane %v2606, 6
      %v2700 = vsel %vm1443, %v2697, %v2699
      %v2701 = vrot.slane %v2607, 6
      %v2702 = vrot.slane %v2608, 6
      %v2703 = vsel %vm1443, %v2701, %v2702
      %v2704 = vrot.slane %v2609, 6
      %v2705 = vsel %vm1443, %v2702, %v2704
      %v2706 = vrot.slane %v2610, 6
      %v2707 = vrot.slane %v2611, 6
      %v2708 = vsel %vm1443, %v2706, %v2707
      %v2709 = vrot.slane %v2612, 6
      %v2710 = vsel %vm1443, %v2707, %v2709
      %v2711 = vrot.slane %v2613, 6
      %v2712 = vrot.slane %v2614, 6
      %v2713 = vsel %vm1443, %v2711, %v2712
      %v2714 = vrot.slane %v2615, 6
      %v2715 = vsel %vm1443, %v2712, %v2714
      %v2716 = vrot.slane %v2616, 6
      %v2717 = vrot.slane %v2617, 6
      %v2718 = vsel %vm1443, %v2716, %v2717
      %v2719 = vrot.slane %v2618, 6
      %v2720 = vsel %vm1443, %v2717, %v2719
      %v2721 = vrot.slane %v2619, 6
      %v2722 = vrot.slane %v2620, 6
      %v2723 = vsel %vm1443, %v2721, %v2722
      %v2724 = vrot.slane %v2621, 6
      %v2725 = vsel %vm1443, %v2722, %v2724
      %v2726 = vrot.slane %v2622, 6
      %v2727 = vrot.slane %v2623, 6
      %v2728 = vsel %vm1443, %v2726, %v2727
      %v2729 = vrot.slane %v2624, 6
      %v2730 = vsel %vm1443, %v2727, %v2729
      %v2731 = vrot.slane %v2625, 6
      %v2732 = vrot.slane %v2626, 6
      %v2733 = vsel %vm1443, %v2731, %v2732
      %v2734 = vrot.slane %v2627, 6
      %v2735 = vsel %vm1443, %v2732, %v2734
      %v2736 = vrot.slane %v2628, 6
      %v2737 = vrot.slane %v2629, 6
      %v2738 = vsel %vm1443, %v2736, %v2737
      %v2739 = vrot.slane %v2630, 6
      %v2740 = vsel %vm1443, %v2737, %v2739
      %v2741 = vrot.slane %v2631, 6
      %v2742 = vrot.slane %v2632, 6
      %v2743 = vsel %vm1443, %v2741, %v2742
      %v2744 = vrot.slane %v2633, 6
      %v2745 = vsel %vm1443, %v2742, %v2744
      %v2774 = vadd.f32 %v2560, %v2678
      %v2775 = vadd.f32 %v2561, %v2680
      %v2776 = vadd.f32 %v2562, %v2683
      %v2777 = vadd.f32 %v2563, %v2685
      %v2778 = vadd.f32 %v2564, %v2688
      %v2779 = vadd.f32 %v2565, %v2690
      %v2780 = vadd.f32 %v2566, %v2693
      %v2781 = vadd.f32 %v2567, %v2695
      %v2782 = vadd.f32 %v2568, %v2698
      %v2783 = vadd.f32 %v2569, %v2700
      %v2784 = vadd.f32 %v2570, %v2703
      %v2785 = vadd.f32 %v2571, %v2705
      %v2786 = vadd.f32 %v2572, %v2708
      %v2787 = vadd.f32 %v2573, %v2710
      %v2788 = vadd.f32 %v2574, %v2713
      %v2789 = vadd.f32 %v2575, %v2715
      %v2790 = vadd.f32 %v2576, %v2718
      %v2791 = vadd.f32 %v2577, %v2720
      %v2792 = vadd.f32 %v2578, %v2723
      %v2793 = vadd.f32 %v2579, %v2725
      %v2794 = vadd.f32 %v2580, %v2728
      %v2795 = vadd.f32 %v2581, %v2730
      %v2796 = vadd.f32 %v2582, %v2733
      %v2797 = vadd.f32 %v2583, %v2735
      %v2798 = vadd.f32 %v2584, %v2738
      %v2799 = vadd.f32 %v2585, %v2740
      %v2800 = vadd.f32 %v2586, %v2743
      %v2801 = vadd.f32 %v2587, %v2745
      %v2802 = vlaneseq
      %v2803 = vshrl.u32 %v2802, 7
      %v2804 = vsub.s32 6, %v2803
      %v2805 = vrot.slane %v326, %v2804
      %v2806 = vmul.f32 %v271, %v2805
      %v2807 = vmul.f32 %v272, %v2805
      %v2808 = vmul.f32 %v274, %v2805
      %v2809 = vmul.f32 %v275, %v2805
      %v2810 = vmul.f32 %v277, %v2805
      %v2811 = vmul.f32 %v278, %v2805
      %v2812 = vmul.f32 %v280, %v2805
      %v2813 = vmul.f32 %v281, %v2805
      %v2814 = vmul.f32 %v283, %v2805
      %v2815 = vmul.f32 %v284, %v2805
      %v2816 = vmul.f32 %v286, %v2805
      %v2817 = vmul.f32 %v287, %v2805
      %v2818 = vmul.f32 %v289, %v2805
      %v2819 = vmul.f32 %v290, %v2805
      %v2820 = vmul.f32 %v292, %v2805
      %v2821 = vmul.f32 %v293, %v2805
      %v2822 = vmul.f32 %v295, %v2805
      %v2823 = vmul.f32 %v296, %v2805
      %v2824 = vmul.f32 %v298, %v2805
      %v2825 = vmul.f32 %v299, %v2805
      %v2826 = vmul.f32 %v301, %v2805
      %v2827 = vmul.f32 %v302, %v2805
      %v2828 = vmul.f32 %v304, %v2805
      %v2829 = vmul.f32 %v305, %v2805
      %v2830 = vmul.f32 %v307, %v2805
      %v2831 = vmul.f32 %v308, %v2805
      %v2832 = vmul.f32 %v310, %v2805
      %v2833 = vmul.f32 %v311, %v2805
      %v2834 = vadd.f32 %v2774, %v2806
      %v2835 = vadd.f32 %v2775, %v2807
      %v2836 = vadd.f32 %v2776, %v2808
      %v2837 = vadd.f32 %v2777, %v2809
      %v2838 = vadd.f32 %v2778, %v2810
      %v2839 = vadd.f32 %v2779, %v2811
      %v2840 = vadd.f32 %v2780, %v2812
      %v2841 = vadd.f32 %v2781, %v2813
      %v2842 = vadd.f32 %v2782, %v2814
      %v2843 = vadd.f32 %v2783, %v2815
      %v2844 = vadd.f32 %v2784, %v2816
      %v2845 = vadd.f32 %v2785, %v2817
      %v2846 = vadd.f32 %v2786, %v2818
      %v2847 = vadd.f32 %v2787, %v2819
      %v2848 = vadd.f32 %v2788, %v2820
      %v2849 = vadd.f32 %v2789, %v2821
      %v2850 = vadd.f32 %v2790, %v2822
      %v2851 = vadd.f32 %v2791, %v2823
      %v2852 = vadd.f32 %v2792, %v2824
      %v2853 = vadd.f32 %v2793, %v2825
      %v2854 = vadd.f32 %v2794, %v2826
      %v2855 = vadd.f32 %v2795, %v2827
      %v2856 = vadd.f32 %v2796, %v2828
      %v2857 = vadd.f32 %v2797, %v2829
      %v2858 = vadd.f32 %v2798, %v2830
      %v2859 = vadd.f32 %v2799, %v2831
      %v2860 = vadd.f32 %v2800, %v2832
      %v2861 = vadd.f32 %v2801, %v2833
      %v2862 = vlaneseq
      %v2863 = vshrl.u32 %v2862, 7
      %v2864 = vsub.s32 7, %v2863
      %v2865 = vrot.slane %v326, %v2864
      %v2866 = vmul.f32 %v271, %v2865
      %v2867 = vmul.f32 %v272, %v2865
      %v2868 = vmul.f32 %v274, %v2865
      %v2869 = vmul.f32 %v275, %v2865
      %v2870 = vmul.f32 %v277, %v2865
      %v2871 = vmul.f32 %v278, %v2865
      %v2872 = vmul.f32 %v280, %v2865
      %v2873 = vmul.f32 %v281, %v2865
      %v2874 = vmul.f32 %v283, %v2865
      %v2875 = vmul.f32 %v284, %v2865
      %v2876 = vmul.f32 %v286, %v2865
      %v2877 = vmul.f32 %v287, %v2865
      %v2878 = vmul.f32 %v289, %v2865
      %v2879 = vmul.f32 %v290, %v2865
      %v2880 = vmul.f32 %v292, %v2865
      %v2881 = vmul.f32 %v293, %v2865
      %v2882 = vmul.f32 %v295, %v2865
      %v2883 = vmul.f32 %v296, %v2865
      %v2884 = vmul.f32 %v298, %v2865
      %v2885 = vmul.f32 %v299, %v2865
      %v2886 = vmul.f32 %v301, %v2865
      %v2887 = vmul.f32 %v302, %v2865
      %v2888 = vmul.f32 %v304, %v2865
      %v2889 = vmul.f32 %v305, %v2865
      %v2890 = vmul.f32 %v307, %v2865
      %v2891 = vmul.f32 %v308, %v2865
      %v2892 = vmul.f32 %v310, %v2865
      %v2893 = vmul.f32 %v311, %v2865
      %v2922 = vrot.slane %v2866, 1
      %v2923 = vrot.slane %v2867, 1
      %v2924 = vsel %vm452, %v2922, %v2923
      %v2925 = vrot.slane %v2868, 1
      %v2926 = vrot.slane %v2869, 1
      %v2927 = vsel %vm452, %v2925, %v2926
      %v2928 = vrot.slane %v2870, 1
      %v2929 = vrot.slane %v2871, 1
      %v2930 = vsel %vm452, %v2928, %v2929
      %v2931 = vrot.slane %v2872, 1
      %v2932 = vrot.slane %v2873, 1
      %v2933 = vsel %vm452, %v2931, %v2932
      %v2934 = vrot.slane %v2874, 1
      %v2935 = vrot.slane %v2875, 1
      %v2936 = vsel %vm452, %v2934, %v2935
      %v2937 = vrot.slane %v2876, 1
      %v2938 = vrot.slane %v2877, 1
      %v2939 = vsel %vm452, %v2937, %v2938
      %v2940 = vrot.slane %v2878, 1
      %v2941 = vrot.slane %v2879, 1
      %v2942 = vsel %vm452, %v2940, %v2941
      %v2943 = vrot.slane %v2880, 1
      %v2944 = vrot.slane %v2881, 1
      %v2945 = vsel %vm452, %v2943, %v2944
      %v2946 = vrot.slane %v2882, 1
      %v2947 = vrot.slane %v2883, 1
      %v2948 = vsel %vm452, %v2946, %v2947
      %v2949 = vrot.slane %v2884, 1
      %v2950 = vrot.slane %v2885, 1
      %v2951 = vsel %vm452, %v2949, %v2950
      %v2952 = vrot.slane %v2886, 1
      %v2953 = vrot.slane %v2887, 1
      %v2954 = vsel %vm452, %v2952, %v2953
      %v2955 = vrot.slane %v2888, 1
      %v2956 = vrot.slane %v2889, 1
      %v2957 = vsel %vm452, %v2955, %v2956
      %v2958 = vrot.slane %v2890, 1
      %v2959 = vrot.slane %v2891, 1
      %v2960 = vsel %vm452, %v2958, %v2959
      %v2961 = vrot.slane %v2892, 1
      %v2962 = vrot.slane %v2893, 1
      %v2963 = vsel %vm452, %v2961, %v2962
      %v2992 = vadd.f32 %v2834, %v2924
      %v2993 = vadd.f32 %v2835, %v2923
      %v2994 = vadd.f32 %v2836, %v2927
      %v2995 = vadd.f32 %v2837, %v2926
      %v2996 = vadd.f32 %v2838, %v2930
      %v2997 = vadd.f32 %v2839, %v2929
      %v2998 = vadd.f32 %v2840, %v2933
      %v2999 = vadd.f32 %v2841, %v2932
      %v3000 = vadd.f32 %v2842, %v2936
      %v3001 = vadd.f32 %v2843, %v2935
      %v3002 = vadd.f32 %v2844, %v2939
      %v3003 = vadd.f32 %v2845, %v2938
      %v3004 = vadd.f32 %v2846, %v2942
      %v3005 = vadd.f32 %v2847, %v2941
      %v3006 = vadd.f32 %v2848, %v2945
      %v3007 = vadd.f32 %v2849, %v2944
      %v3008 = vadd.f32 %v2850, %v2948
      %v3009 = vadd.f32 %v2851, %v2947
      %v3010 = vadd.f32 %v2852, %v2951
      %v3011 = vadd.f32 %v2853, %v2950
      %v3012 = vadd.f32 %v2854, %v2954
      %v3013 = vadd.f32 %v2855, %v2953
      %v3014 = vadd.f32 %v2856, %v2957
      %v3015 = vadd.f32 %v2857, %v2956
      %v3016 = vadd.f32 %v2858, %v2960
      %v3017 = vadd.f32 %v2859, %v2959
      %v3018 = vadd.f32 %v2860, %v2963
      %v3019 = vadd.f32 %v2861, %v2962
      %v3020 = vlaneseq
      %v3021 = vshrl.u32 %v3020, 7
      %v3022 = vsub.s32 0, %v3021
      %v3023 = vrot.slane %v327, %v3022
      %v3024 = vmul.f32 %v271, %v3023
      %v3025 = vmul.f32 %v272, %v3023
      %v3026 = vmul.f32 %v274, %v3023
      %v3027 = vmul.f32 %v275, %v3023
      %v3028 = vmul.f32 %v277, %v3023
      %v3029 = vmul.f32 %v278, %v3023
      %v3030 = vmul.f32 %v280, %v3023
      %v3031 = vmul.f32 %v281, %v3023
      %v3032 = vmul.f32 %v283, %v3023
      %v3033 = vmul.f32 %v284, %v3023
      %v3034 = vmul.f32 %v286, %v3023
      %v3035 = vmul.f32 %v287, %v3023
      %v3036 = vmul.f32 %v289, %v3023
      %v3037 = vmul.f32 %v290, %v3023
      %v3038 = vmul.f32 %v292, %v3023
      %v3039 = vmul.f32 %v293, %v3023
      %v3040 = vmul.f32 %v295, %v3023
      %v3041 = vmul.f32 %v296, %v3023
      %v3042 = vmul.f32 %v298, %v3023
      %v3043 = vmul.f32 %v299, %v3023
      %v3044 = vmul.f32 %v301, %v3023
      %v3045 = vmul.f32 %v302, %v3023
      %v3046 = vmul.f32 %v304, %v3023
      %v3047 = vmul.f32 %v305, %v3023
      %v3048 = vmul.f32 %v307, %v3023
      %v3049 = vmul.f32 %v308, %v3023
      %v3050 = vmul.f32 %v310, %v3023
      %v3051 = vmul.f32 %v311, %v3023
      %v3080 = vrot.slane %v3024, 2
      %v3081 = vrot.slane %v3025, 2
      %v3082 = vsel %vm611, %v3080, %v3081
      %v3083 = vrot.slane %v3026, 2
      %v3084 = vrot.slane %v3027, 2
      %v3085 = vsel %vm611, %v3083, %v3084
      %v3086 = vrot.slane %v3028, 2
      %v3087 = vrot.slane %v3029, 2
      %v3088 = vsel %vm611, %v3086, %v3087
      %v3089 = vrot.slane %v3030, 2
      %v3090 = vrot.slane %v3031, 2
      %v3091 = vsel %vm611, %v3089, %v3090
      %v3092 = vrot.slane %v3032, 2
      %v3093 = vrot.slane %v3033, 2
      %v3094 = vsel %vm611, %v3092, %v3093
      %v3095 = vrot.slane %v3034, 2
      %v3096 = vrot.slane %v3035, 2
      %v3097 = vsel %vm611, %v3095, %v3096
      %v3098 = vrot.slane %v3036, 2
      %v3099 = vrot.slane %v3037, 2
      %v3100 = vsel %vm611, %v3098, %v3099
      %v3101 = vrot.slane %v3038, 2
      %v3102 = vrot.slane %v3039, 2
      %v3103 = vsel %vm611, %v3101, %v3102
      %v3104 = vrot.slane %v3040, 2
      %v3105 = vrot.slane %v3041, 2
      %v3106 = vsel %vm611, %v3104, %v3105
      %v3107 = vrot.slane %v3042, 2
      %v3108 = vrot.slane %v3043, 2
      %v3109 = vsel %vm611, %v3107, %v3108
      %v3110 = vrot.slane %v3044, 2
      %v3111 = vrot.slane %v3045, 2
      %v3112 = vsel %vm611, %v3110, %v3111
      %v3113 = vrot.slane %v3046, 2
      %v3114 = vrot.slane %v3047, 2
      %v3115 = vsel %vm611, %v3113, %v3114
      %v3116 = vrot.slane %v3048, 2
      %v3117 = vrot.slane %v3049, 2
      %v3118 = vsel %vm611, %v3116, %v3117
      %v3119 = vrot.slane %v3050, 2
      %v3120 = vrot.slane %v3051, 2
      %v3121 = vsel %vm611, %v3119, %v3120
      %v3150 = vadd.f32 %v2992, %v3082
      %v3151 = vadd.f32 %v2993, %v3081
      %v3152 = vadd.f32 %v2994, %v3085
      %v3153 = vadd.f32 %v2995, %v3084
      %v3154 = vadd.f32 %v2996, %v3088
      %v3155 = vadd.f32 %v2997, %v3087
      %v3156 = vadd.f32 %v2998, %v3091
      %v3157 = vadd.f32 %v2999, %v3090
      %v3158 = vadd.f32 %v3000, %v3094
      %v3159 = vadd.f32 %v3001, %v3093
      %v3160 = vadd.f32 %v3002, %v3097
      %v3161 = vadd.f32 %v3003, %v3096
      %v3162 = vadd.f32 %v3004, %v3100
      %v3163 = vadd.f32 %v3005, %v3099
      %v3164 = vadd.f32 %v3006, %v3103
      %v3165 = vadd.f32 %v3007, %v3102
      %v3166 = vadd.f32 %v3008, %v3106
      %v3167 = vadd.f32 %v3009, %v3105
      %v3168 = vadd.f32 %v3010, %v3109
      %v3169 = vadd.f32 %v3011, %v3108
      %v3170 = vadd.f32 %v3012, %v3112
      %v3171 = vadd.f32 %v3013, %v3111
      %v3172 = vadd.f32 %v3014, %v3115
      %v3173 = vadd.f32 %v3015, %v3114
      %v3174 = vadd.f32 %v3016, %v3118
      %v3175 = vadd.f32 %v3017, %v3117
      %v3176 = vadd.f32 %v3018, %v3121
      %v3177 = vadd.f32 %v3019, %v3120
      %v3178 = vlaneseq
      %v3179 = vshrl.u32 %v3178, 7
      %v3180 = vsub.s32 1, %v3179
      %v3181 = vrot.slane %v327, %v3180
      %v3182 = vmul.f32 %v271, %v3181
      %v3183 = vmul.f32 %v272, %v3181
      %v3184 = vmul.f32 %v273, %v3181
      %v3185 = vmul.f32 %v274, %v3181
      %v3186 = vmul.f32 %v275, %v3181
      %v3187 = vmul.f32 %v276, %v3181
      %v3188 = vmul.f32 %v277, %v3181
      %v3189 = vmul.f32 %v278, %v3181
      %v3190 = vmul.f32 %v279, %v3181
      %v3191 = vmul.f32 %v280, %v3181
      %v3192 = vmul.f32 %v281, %v3181
      %v3193 = vmul.f32 %v282, %v3181
      %v3194 = vmul.f32 %v283, %v3181
      %v3195 = vmul.f32 %v284, %v3181
      %v3196 = vmul.f32 %v285, %v3181
      %v3197 = vmul.f32 %v286, %v3181
      %v3198 = vmul.f32 %v287, %v3181
      %v3199 = vmul.f32 %v288, %v3181
      %v3200 = vmul.f32 %v289, %v3181
      %v3201 = vmul.f32 %v290, %v3181
      %v3202 = vmul.f32 %v291, %v3181
      %v3203 = vmul.f32 %v292, %v3181
      %v3204 = vmul.f32 %v293, %v3181
      %v3205 = vmul.f32 %v294, %v3181
      %v3206 = vmul.f32 %v295, %v3181
      %v3207 = vmul.f32 %v296, %v3181
      %v3208 = vmul.f32 %v297, %v3181
      %v3209 = vmul.f32 %v298, %v3181
      %v3210 = vmul.f32 %v299, %v3181
      %v3211 = vmul.f32 %v300, %v3181
      %v3212 = vmul.f32 %v301, %v3181
      %v3213 = vmul.f32 %v302, %v3181
      %v3214 = vmul.f32 %v303, %v3181
      %v3215 = vmul.f32 %v304, %v3181
      %v3216 = vmul.f32 %v305, %v3181
      %v3217 = vmul.f32 %v306, %v3181
      %v3218 = vmul.f32 %v307, %v3181
      %v3219 = vmul.f32 %v308, %v3181
      %v3220 = vmul.f32 %v309, %v3181
      %v3221 = vmul.f32 %v310, %v3181
      %v3222 = vmul.f32 %v311, %v3181
      %v3223 = vmul.f32 %v312, %v3181
      %v3266 = vrot.slane %v3182, 3
      %v3267 = vrot.slane %v3183, 3
      %v3268 = vsel %vm798, %v3266, %v3267
      %v3269 = vrot.slane %v3184, 3
      %v3270 = vsel %vm798, %v3267, %v3269
      %v3271 = vrot.slane %v3185, 3
      %v3272 = vrot.slane %v3186, 3
      %v3273 = vsel %vm798, %v3271, %v3272
      %v3274 = vrot.slane %v3187, 3
      %v3275 = vsel %vm798, %v3272, %v3274
      %v3276 = vrot.slane %v3188, 3
      %v3277 = vrot.slane %v3189, 3
      %v3278 = vsel %vm798, %v3276, %v3277
      %v3279 = vrot.slane %v3190, 3
      %v3280 = vsel %vm798, %v3277, %v3279
      %v3281 = vrot.slane %v3191, 3
      %v3282 = vrot.slane %v3192, 3
      %v3283 = vsel %vm798, %v3281, %v3282
      %v3284 = vrot.slane %v3193, 3
      %v3285 = vsel %vm798, %v3282, %v3284
      %v3286 = vrot.slane %v3194, 3
      %v3287 = vrot.slane %v3195, 3
      %v3288 = vsel %vm798, %v3286, %v3287
      %v3289 = vrot.slane %v3196, 3
      %v3290 = vsel %vm798, %v3287, %v3289
      %v3291 = vrot.slane %v3197, 3
      %v3292 = vrot.slane %v3198, 3
      %v3293 = vsel %vm798, %v3291, %v3292
      %v3294 = vrot.slane %v3199, 3
      %v3295 = vsel %vm798, %v3292, %v3294
      %v3296 = vrot.slane %v3200, 3
      %v3297 = vrot.slane %v3201, 3
      %v3298 = vsel %vm798, %v3296, %v3297
      %v3299 = vrot.slane %v3202, 3
      %v3300 = vsel %vm798, %v3297, %v3299
      %v3301 = vrot.slane %v3203, 3
      %v3302 = vrot.slane %v3204, 3
      %v3303 = vsel %vm798, %v3301, %v3302
      %v3304 = vrot.slane %v3205, 3
      %v3305 = vsel %vm798, %v3302, %v3304
      %v3306 = vrot.slane %v3206, 3
      %v3307 = vrot.slane %v3207, 3
      %v3308 = vsel %vm798, %v3306, %v3307
      %v3309 = vrot.slane %v3208, 3
      %v3310 = vsel %vm798, %v3307, %v3309
      %v3311 = vrot.slane %v3209, 3
      %v3312 = vrot.slane %v3210, 3
      %v3313 = vsel %vm798, %v3311, %v3312
      %v3314 = vrot.slane %v3211, 3
      %v3315 = vsel %vm798, %v3312, %v3314
      %v3316 = vrot.slane %v3212, 3
      %v3317 = vrot.slane %v3213, 3
      %v3318 = vsel %vm798, %v3316, %v3317
      %v3319 = vrot.slane %v3214, 3
      %v3320 = vsel %vm798, %v3317, %v3319
      %v3321 = vrot.slane %v3215, 3
      %v3322 = vrot.slane %v3216, 3
      %v3323 = vsel %vm798, %v3321, %v3322
      %v3324 = vrot.slane %v3217, 3
      %v3325 = vsel %vm798, %v3322, %v3324
      %v3326 = vrot.slane %v3218, 3
      %v3327 = vrot.slane %v3219, 3
      %v3328 = vsel %vm798, %v3326, %v3327
      %v3329 = vrot.slane %v3220, 3
      %v3330 = vsel %vm798, %v3327, %v3329
      %v3331 = vrot.slane %v3221, 3
      %v3332 = vrot.slane %v3222, 3
      %v3333 = vsel %vm798, %v3331, %v3332
      %v3334 = vrot.slane %v3223, 3
      %v3335 = vsel %vm798, %v3332, %v3334
      %v3364 = vadd.f32 %v3150, %v3268
      %v3365 = vadd.f32 %v3151, %v3270
      %v3366 = vadd.f32 %v3152, %v3273
      %v3367 = vadd.f32 %v3153, %v3275
      %v3368 = vadd.f32 %v3154, %v3278
      %v3369 = vadd.f32 %v3155, %v3280
      %v3370 = vadd.f32 %v3156, %v3283
      %v3371 = vadd.f32 %v3157, %v3285
      %v3372 = vadd.f32 %v3158, %v3288
      %v3373 = vadd.f32 %v3159, %v3290
      %v3374 = vadd.f32 %v3160, %v3293
      %v3375 = vadd.f32 %v3161, %v3295
      %v3376 = vadd.f32 %v3162, %v3298
      %v3377 = vadd.f32 %v3163, %v3300
      %v3378 = vadd.f32 %v3164, %v3303
      %v3379 = vadd.f32 %v3165, %v3305
      %v3380 = vadd.f32 %v3166, %v3308
      %v3381 = vadd.f32 %v3167, %v3310
      %v3382 = vadd.f32 %v3168, %v3313
      %v3383 = vadd.f32 %v3169, %v3315
      %v3384 = vadd.f32 %v3170, %v3318
      %v3385 = vadd.f32 %v3171, %v3320
      %v3386 = vadd.f32 %v3172, %v3323
      %v3387 = vadd.f32 %v3173, %v3325
      %v3388 = vadd.f32 %v3174, %v3328
      %v3389 = vadd.f32 %v3175, %v3330
      %v3390 = vadd.f32 %v3176, %v3333
      %v3391 = vadd.f32 %v3177, %v3335
      %v3392 = vlaneseq
      %v3393 = vshrl.u32 %v3392, 7
      %v3394 = vsub.s32 2, %v3393
      %v3395 = vrot.slane %v327, %v3394
      %v3396 = vmul.f32 %v271, %v3395
      %v3397 = vmul.f32 %v272, %v3395
      %v3398 = vmul.f32 %v273, %v3395
      %v3399 = vmul.f32 %v274, %v3395
      %v3400 = vmul.f32 %v275, %v3395
      %v3401 = vmul.f32 %v276, %v3395
      %v3402 = vmul.f32 %v277, %v3395
      %v3403 = vmul.f32 %v278, %v3395
      %v3404 = vmul.f32 %v279, %v3395
      %v3405 = vmul.f32 %v280, %v3395
      %v3406 = vmul.f32 %v281, %v3395
      %v3407 = vmul.f32 %v282, %v3395
      %v3408 = vmul.f32 %v283, %v3395
      %v3409 = vmul.f32 %v284, %v3395
      %v3410 = vmul.f32 %v285, %v3395
      %v3411 = vmul.f32 %v286, %v3395
      %v3412 = vmul.f32 %v287, %v3395
      %v3413 = vmul.f32 %v288, %v3395
      %v3414 = vmul.f32 %v289, %v3395
      %v3415 = vmul.f32 %v290, %v3395
      %v3416 = vmul.f32 %v291, %v3395
      %v3417 = vmul.f32 %v292, %v3395
      %v3418 = vmul.f32 %v293, %v3395
      %v3419 = vmul.f32 %v294, %v3395
      %v3420 = vmul.f32 %v295, %v3395
      %v3421 = vmul.f32 %v296, %v3395
      %v3422 = vmul.f32 %v297, %v3395
      %v3423 = vmul.f32 %v298, %v3395
      %v3424 = vmul.f32 %v299, %v3395
      %v3425 = vmul.f32 %v300, %v3395
      %v3426 = vmul.f32 %v301, %v3395
      %v3427 = vmul.f32 %v302, %v3395
      %v3428 = vmul.f32 %v303, %v3395
      %v3429 = vmul.f32 %v304, %v3395
      %v3430 = vmul.f32 %v305, %v3395
      %v3431 = vmul.f32 %v306, %v3395
      %v3432 = vmul.f32 %v307, %v3395
      %v3433 = vmul.f32 %v308, %v3395
      %v3434 = vmul.f32 %v309, %v3395
      %v3435 = vmul.f32 %v310, %v3395
      %v3436 = vmul.f32 %v311, %v3395
      %v3437 = vmul.f32 %v312, %v3395
      %v3480 = vrot.slane %v3396, 4
      %v3481 = vrot.slane %v3397, 4
      %v3482 = vsel %vm1013, %v3480, %v3481
      %v3483 = vrot.slane %v3398, 4
      %v3484 = vsel %vm1013, %v3481, %v3483
      %v3485 = vrot.slane %v3399, 4
      %v3486 = vrot.slane %v3400, 4
      %v3487 = vsel %vm1013, %v3485, %v3486
      %v3488 = vrot.slane %v3401, 4
      %v3489 = vsel %vm1013, %v3486, %v3488
      %v3490 = vrot.slane %v3402, 4
      %v3491 = vrot.slane %v3403, 4
      %v3492 = vsel %vm1013, %v3490, %v3491
      %v3493 = vrot.slane %v3404, 4
      %v3494 = vsel %vm1013, %v3491, %v3493
      %v3495 = vrot.slane %v3405, 4
      %v3496 = vrot.slane %v3406, 4
      %v3497 = vsel %vm1013, %v3495, %v3496
      %v3498 = vrot.slane %v3407, 4
      %v3499 = vsel %vm1013, %v3496, %v3498
      %v3500 = vrot.slane %v3408, 4
      %v3501 = vrot.slane %v3409, 4
      %v3502 = vsel %vm1013, %v3500, %v3501
      %v3503 = vrot.slane %v3410, 4
      %v3504 = vsel %vm1013, %v3501, %v3503
      %v3505 = vrot.slane %v3411, 4
      %v3506 = vrot.slane %v3412, 4
      %v3507 = vsel %vm1013, %v3505, %v3506
      %v3508 = vrot.slane %v3413, 4
      %v3509 = vsel %vm1013, %v3506, %v3508
      %v3510 = vrot.slane %v3414, 4
      %v3511 = vrot.slane %v3415, 4
      %v3512 = vsel %vm1013, %v3510, %v3511
      %v3513 = vrot.slane %v3416, 4
      %v3514 = vsel %vm1013, %v3511, %v3513
      %v3515 = vrot.slane %v3417, 4
      %v3516 = vrot.slane %v3418, 4
      %v3517 = vsel %vm1013, %v3515, %v3516
      %v3518 = vrot.slane %v3419, 4
      %v3519 = vsel %vm1013, %v3516, %v3518
      %v3520 = vrot.slane %v3420, 4
      %v3521 = vrot.slane %v3421, 4
      %v3522 = vsel %vm1013, %v3520, %v3521
      %v3523 = vrot.slane %v3422, 4
      %v3524 = vsel %vm1013, %v3521, %v3523
      %v3525 = vrot.slane %v3423, 4
      %v3526 = vrot.slane %v3424, 4
      %v3527 = vsel %vm1013, %v3525, %v3526
      %v3528 = vrot.slane %v3425, 4
      %v3529 = vsel %vm1013, %v3526, %v3528
      %v3530 = vrot.slane %v3426, 4
      %v3531 = vrot.slane %v3427, 4
      %v3532 = vsel %vm1013, %v3530, %v3531
      %v3533 = vrot.slane %v3428, 4
      %v3534 = vsel %vm1013, %v3531, %v3533
      %v3535 = vrot.slane %v3429, 4
      %v3536 = vrot.slane %v3430, 4
      %v3537 = vsel %vm1013, %v3535, %v3536
      %v3538 = vrot.slane %v3431, 4
      %v3539 = vsel %vm1013, %v3536, %v3538
      %v3540 = vrot.slane %v3432, 4
      %v3541 = vrot.slane %v3433, 4
      %v3542 = vsel %vm1013, %v3540, %v3541
      %v3543 = vrot.slane %v3434, 4
      %v3544 = vsel %vm1013, %v3541, %v3543
      %v3545 = vrot.slane %v3435, 4
      %v3546 = vrot.slane %v3436, 4
      %v3547 = vsel %vm1013, %v3545, %v3546
      %v3548 = vrot.slane %v3437, 4
      %v3549 = vsel %vm1013, %v3546, %v3548
      %v3578 = vadd.f32 %v3364, %v3482
      %v3579 = vadd.f32 %v3365, %v3484
      %v3580 = vadd.f32 %v3366, %v3487
      %v3581 = vadd.f32 %v3367, %v3489
      %v3582 = vadd.f32 %v3368, %v3492
      %v3583 = vadd.f32 %v3369, %v3494
      %v3584 = vadd.f32 %v3370, %v3497
      %v3585 = vadd.f32 %v3371, %v3499
      %v3586 = vadd.f32 %v3372, %v3502
      %v3587 = vadd.f32 %v3373, %v3504
      %v3588 = vadd.f32 %v3374, %v3507
      %v3589 = vadd.f32 %v3375, %v3509
      %v3590 = vadd.f32 %v3376, %v3512
      %v3591 = vadd.f32 %v3377, %v3514
      %v3592 = vadd.f32 %v3378, %v3517
      %v3593 = vadd.f32 %v3379, %v3519
      %v3594 = vadd.f32 %v3380, %v3522
      %v3595 = vadd.f32 %v3381, %v3524
      %v3596 = vadd.f32 %v3382, %v3527
      %v3597 = vadd.f32 %v3383, %v3529
      %v3598 = vadd.f32 %v3384, %v3532
      %v3599 = vadd.f32 %v3385, %v3534
      %v3600 = vadd.f32 %v3386, %v3537
      %v3601 = vadd.f32 %v3387, %v3539
      %v3602 = vadd.f32 %v3388, %v3542
      %v3603 = vadd.f32 %v3389, %v3544
      %v3604 = vadd.f32 %v3390, %v3547
      %v3605 = vadd.f32 %v3391, %v3549
      %v3606 = vlaneseq
      %v3607 = vshrl.u32 %v3606, 7
      %v3608 = vsub.s32 3, %v3607
      %v3609 = vrot.slane %v327, %v3608
      %v3610 = vmul.f32 %v271, %v3609
      %v3611 = vmul.f32 %v272, %v3609
      %v3612 = vmul.f32 %v273, %v3609
      %v3613 = vmul.f32 %v274, %v3609
      %v3614 = vmul.f32 %v275, %v3609
      %v3615 = vmul.f32 %v276, %v3609
      %v3616 = vmul.f32 %v277, %v3609
      %v3617 = vmul.f32 %v278, %v3609
      %v3618 = vmul.f32 %v279, %v3609
      %v3619 = vmul.f32 %v280, %v3609
      %v3620 = vmul.f32 %v281, %v3609
      %v3621 = vmul.f32 %v282, %v3609
      %v3622 = vmul.f32 %v283, %v3609
      %v3623 = vmul.f32 %v284, %v3609
      %v3624 = vmul.f32 %v285, %v3609
      %v3625 = vmul.f32 %v286, %v3609
      %v3626 = vmul.f32 %v287, %v3609
      %v3627 = vmul.f32 %v288, %v3609
      %v3628 = vmul.f32 %v289, %v3609
      %v3629 = vmul.f32 %v290, %v3609
      %v3630 = vmul.f32 %v291, %v3609
      %v3631 = vmul.f32 %v292, %v3609
      %v3632 = vmul.f32 %v293, %v3609
      %v3633 = vmul.f32 %v294, %v3609
      %v3634 = vmul.f32 %v295, %v3609
      %v3635 = vmul.f32 %v296, %v3609
      %v3636 = vmul.f32 %v297, %v3609
      %v3637 = vmul.f32 %v298, %v3609
      %v3638 = vmul.f32 %v299, %v3609
      %v3639 = vmul.f32 %v300, %v3609
      %v3640 = vmul.f32 %v301, %v3609
      %v3641 = vmul.f32 %v302, %v3609
      %v3642 = vmul.f32 %v303, %v3609
      %v3643 = vmul.f32 %v304, %v3609
      %v3644 = vmul.f32 %v305, %v3609
      %v3645 = vmul.f32 %v306, %v3609
      %v3646 = vmul.f32 %v307, %v3609
      %v3647 = vmul.f32 %v308, %v3609
      %v3648 = vmul.f32 %v309, %v3609
      %v3649 = vmul.f32 %v310, %v3609
      %v3650 = vmul.f32 %v311, %v3609
      %v3651 = vmul.f32 %v312, %v3609
      %v3694 = vrot.slane %v3610, 5
      %v3695 = vrot.slane %v3611, 5
      %v3696 = vsel %vm1228, %v3694, %v3695
      %v3697 = vrot.slane %v3612, 5
      %v3698 = vsel %vm1228, %v3695, %v3697
      %v3699 = vrot.slane %v3613, 5
      %v3700 = vrot.slane %v3614, 5
      %v3701 = vsel %vm1228, %v3699, %v3700
      %v3702 = vrot.slane %v3615, 5
      %v3703 = vsel %vm1228, %v3700, %v3702
      %v3704 = vrot.slane %v3616, 5
      %v3705 = vrot.slane %v3617, 5
      %v3706 = vsel %vm1228, %v3704, %v3705
      %v3707 = vrot.slane %v3618, 5
      %v3708 = vsel %vm1228, %v3705, %v3707
      %v3709 = vrot.slane %v3619, 5
      %v3710 = vrot.slane %v3620, 5
      %v3711 = vsel %vm1228, %v3709, %v3710
      %v3712 = vrot.slane %v3621, 5
      %v3713 = vsel %vm1228, %v3710, %v3712
      %v3714 = vrot.slane %v3622, 5
      %v3715 = vrot.slane %v3623, 5
      %v3716 = vsel %vm1228, %v3714, %v3715
      %v3717 = vrot.slane %v3624, 5
      %v3718 = vsel %vm1228, %v3715, %v3717
      %v3719 = vrot.slane %v3625, 5
      %v3720 = vrot.slane %v3626, 5
      %v3721 = vsel %vm1228, %v3719, %v3720
      %v3722 = vrot.slane %v3627, 5
      %v3723 = vsel %vm1228, %v3720, %v3722
      %v3724 = vrot.slane %v3628, 5
      %v3725 = vrot.slane %v3629, 5
      %v3726 = vsel %vm1228, %v3724, %v3725
      %v3727 = vrot.slane %v3630, 5
      %v3728 = vsel %vm1228, %v3725, %v3727
      %v3729 = vrot.slane %v3631, 5
      %v3730 = vrot.slane %v3632, 5
      %v3731 = vsel %vm1228, %v3729, %v3730
      %v3732 = vrot.slane %v3633, 5
      %v3733 = vsel %vm1228, %v3730, %v3732
      %v3734 = vrot.slane %v3634, 5
      %v3735 = vrot.slane %v3635, 5
      %v3736 = vsel %vm1228, %v3734, %v3735
      %v3737 = vrot.slane %v3636, 5
      %v3738 = vsel %vm1228, %v3735, %v3737
      %v3739 = vrot.slane %v3637, 5
      %v3740 = vrot.slane %v3638, 5
      %v3741 = vsel %vm1228, %v3739, %v3740
      %v3742 = vrot.slane %v3639, 5
      %v3743 = vsel %vm1228, %v3740, %v3742
      %v3744 = vrot.slane %v3640, 5
      %v3745 = vrot.slane %v3641, 5
      %v3746 = vsel %vm1228, %v3744, %v3745
      %v3747 = vrot.slane %v3642, 5
      %v3748 = vsel %vm1228, %v3745, %v3747
      %v3749 = vrot.slane %v3643, 5
      %v3750 = vrot.slane %v3644, 5
      %v3751 = vsel %vm1228, %v3749, %v3750
      %v3752 = vrot.slane %v3645, 5
      %v3753 = vsel %vm1228, %v3750, %v3752
      %v3754 = vrot.slane %v3646, 5
      %v3755 = vrot.slane %v3647, 5
      %v3756 = vsel %vm1228, %v3754, %v3755
      %v3757 = vrot.slane %v3648, 5
      %v3758 = vsel %vm1228, %v3755, %v3757
      %v3759 = vrot.slane %v3649, 5
      %v3760 = vrot.slane %v3650, 5
      %v3761 = vsel %vm1228, %v3759, %v3760
      %v3762 = vrot.slane %v3651, 5
      %v3763 = vsel %vm1228, %v3760, %v3762
      %v3792 = vadd.f32 %v3578, %v3696
      %v3793 = vadd.f32 %v3579, %v3698
      %v3794 = vadd.f32 %v3580, %v3701
      %v3795 = vadd.f32 %v3581, %v3703
      %v3796 = vadd.f32 %v3582, %v3706
      %v3797 = vadd.f32 %v3583, %v3708
      %v3798 = vadd.f32 %v3584, %v3711
      %v3799 = vadd.f32 %v3585, %v3713
      %v3800 = vadd.f32 %v3586, %v3716
      %v3801 = vadd.f32 %v3587, %v3718
      %v3802 = vadd.f32 %v3588, %v3721
      %v3803 = vadd.f32 %v3589, %v3723
      %v3804 = vadd.f32 %v3590, %v3726
      %v3805 = vadd.f32 %v3591, %v3728
      %v3806 = vadd.f32 %v3592, %v3731
      %v3807 = vadd.f32 %v3593, %v3733
      %v3808 = vadd.f32 %v3594, %v3736
      %v3809 = vadd.f32 %v3595, %v3738
      %v3810 = vadd.f32 %v3596, %v3741
      %v3811 = vadd.f32 %v3597, %v3743
      %v3812 = vadd.f32 %v3598, %v3746
      %v3813 = vadd.f32 %v3599, %v3748
      %v3814 = vadd.f32 %v3600, %v3751
      %v3815 = vadd.f32 %v3601, %v3753
      %v3816 = vadd.f32 %v3602, %v3756
      %v3817 = vadd.f32 %v3603, %v3758
      %v3818 = vadd.f32 %v3604, %v3761
      %v3819 = vadd.f32 %v3605, %v3763
      %v3820 = vlaneseq
      %v3821 = vshrl.u32 %v3820, 7
      %v3822 = vsub.s32 4, %v3821
      %v3823 = vrot.slane %v327, %v3822
      %v3824 = vmul.f32 %v271, %v3823
      %v3825 = vmul.f32 %v272, %v3823
      %v3826 = vmul.f32 %v273, %v3823
      %v3827 = vmul.f32 %v274, %v3823
      %v3828 = vmul.f32 %v275, %v3823
      %v3829 = vmul.f32 %v276, %v3823
      %v3830 = vmul.f32 %v277, %v3823
      %v3831 = vmul.f32 %v278, %v3823
      %v3832 = vmul.f32 %v279, %v3823
      %v3833 = vmul.f32 %v280, %v3823
      %v3834 = vmul.f32 %v281, %v3823
      %v3835 = vmul.f32 %v282, %v3823
      %v3836 = vmul.f32 %v283, %v3823
      %v3837 = vmul.f32 %v284, %v3823
      %v3838 = vmul.f32 %v285, %v3823
      %v3839 = vmul.f32 %v286, %v3823
      %v3840 = vmul.f32 %v287, %v3823
      %v3841 = vmul.f32 %v288, %v3823
      %v3842 = vmul.f32 %v289, %v3823
      %v3843 = vmul.f32 %v290, %v3823
      %v3844 = vmul.f32 %v291, %v3823
      %v3845 = vmul.f32 %v292, %v3823
      %v3846 = vmul.f32 %v293, %v3823
      %v3847 = vmul.f32 %v294, %v3823
      %v3848 = vmul.f32 %v295, %v3823
      %v3849 = vmul.f32 %v296, %v3823
      %v3850 = vmul.f32 %v297, %v3823
      %v3851 = vmul.f32 %v298, %v3823
      %v3852 = vmul.f32 %v299, %v3823
      %v3853 = vmul.f32 %v300, %v3823
      %v3854 = vmul.f32 %v301, %v3823
      %v3855 = vmul.f32 %v302, %v3823
      %v3856 = vmul.f32 %v303, %v3823
      %v3857 = vmul.f32 %v304, %v3823
      %v3858 = vmul.f32 %v305, %v3823
      %v3859 = vmul.f32 %v306, %v3823
      %v3860 = vmul.f32 %v307, %v3823
      %v3861 = vmul.f32 %v308, %v3823
      %v3862 = vmul.f32 %v309, %v3823
      %v3863 = vmul.f32 %v310, %v3823
      %v3864 = vmul.f32 %v311, %v3823
      %v3865 = vmul.f32 %v312, %v3823
      %v3908 = vrot.slane %v3824, 6
      %v3909 = vrot.slane %v3825, 6
      %v3910 = vsel %vm1443, %v3908, %v3909
      %v3911 = vrot.slane %v3826, 6
      %v3912 = vsel %vm1443, %v3909, %v3911
      %v3913 = vrot.slane %v3827, 6
      %v3914 = vrot.slane %v3828, 6
      %v3915 = vsel %vm1443, %v3913, %v3914
      %v3916 = vrot.slane %v3829, 6
      %v3917 = vsel %vm1443, %v3914, %v3916
      %v3918 = vrot.slane %v3830, 6
      %v3919 = vrot.slane %v3831, 6
      %v3920 = vsel %vm1443, %v3918, %v3919
      %v3921 = vrot.slane %v3832, 6
      %v3922 = vsel %vm1443, %v3919, %v3921
      %v3923 = vrot.slane %v3833, 6
      %v3924 = vrot.slane %v3834, 6
      %v3925 = vsel %vm1443, %v3923, %v3924
      %v3926 = vrot.slane %v3835, 6
      %v3927 = vsel %vm1443, %v3924, %v3926
      %v3928 = vrot.slane %v3836, 6
      %v3929 = vrot.slane %v3837, 6
      %v3930 = vsel %vm1443, %v3928, %v3929
      %v3931 = vrot.slane %v3838, 6
      %v3932 = vsel %vm1443, %v3929, %v3931
      %v3933 = vrot.slane %v3839, 6
      %v3934 = vrot.slane %v3840, 6
      %v3935 = vsel %vm1443, %v3933, %v3934
      %v3936 = vrot.slane %v3841, 6
      %v3937 = vsel %vm1443, %v3934, %v3936
      %v3938 = vrot.slane %v3842, 6
      %v3939 = vrot.slane %v3843, 6
      %v3940 = vsel %vm1443, %v3938, %v3939
      %v3941 = vrot.slane %v3844, 6
      %v3942 = vsel %vm1443, %v3939, %v3941
      %v3943 = vrot.slane %v3845, 6
      %v3944 = vrot.slane %v3846, 6
      %v3945 = vsel %vm1443, %v3943, %v3944
      %v3946 = vrot.slane %v3847, 6
      %v3947 = vsel %vm1443, %v3944, %v3946
      %v3948 = vrot.slane %v3848, 6
      %v3949 = vrot.slane %v3849, 6
      %v3950 = vsel %vm1443, %v3948, %v3949
      %v3951 = vrot.slane %v3850, 6
      %v3952 = vsel %vm1443, %v3949, %v3951
      %v3953 = vrot.slane %v3851, 6
      %v3954 = vrot.slane %v3852, 6
      %v3955 = vsel %vm1443, %v3953, %v3954
      %v3956 = vrot.slane %v3853, 6
      %v3957 = vsel %vm1443, %v3954, %v3956
      %v3958 = vrot.slane %v3854, 6
      %v3959 = vrot.slane %v3855, 6
      %v3960 = vsel %vm1443, %v3958, %v3959
      %v3961 = vrot.slane %v3856, 6
      %v3962 = vsel %vm1443, %v3959, %v3961
      %v3963 = vrot.slane %v3857, 6
      %v3964 = vrot.slane %v3858, 6
      %v3965 = vsel %vm1443, %v3963, %v3964
      %v3966 = vrot.slane %v3859, 6
      %v3967 = vsel %vm1443, %v3964, %v3966
      %v3968 = vrot.slane %v3860, 6
      %v3969 = vrot.slane %v3861, 6
      %v3970 = vsel %vm1443, %v3968, %v3969
      %v3971 = vrot.slane %v3862, 6
      %v3972 = vsel %vm1443, %v3969, %v3971
      %v3973 = vrot.slane %v3863, 6
      %v3974 = vrot.slane %v3864, 6
      %v3975 = vsel %vm1443, %v3973, %v3974
      %v3976 = vrot.slane %v3865, 6
      %v3977 = vsel %vm1443, %v3974, %v3976
      %v4006 = vadd.f32 %v3792, %v3910
      %v4007 = vadd.f32 %v3793, %v3912
      %v4008 = vadd.f32 %v3794, %v3915
      %v4009 = vadd.f32 %v3795, %v3917
      %v4010 = vadd.f32 %v3796, %v3920
      %v4011 = vadd.f32 %v3797, %v3922
      %v4012 = vadd.f32 %v3798, %v3925
      %v4013 = vadd.f32 %v3799, %v3927
      %v4014 = vadd.f32 %v3800, %v3930
      %v4015 = vadd.f32 %v3801, %v3932
      %v4016 = vadd.f32 %v3802, %v3935
      %v4017 = vadd.f32 %v3803, %v3937
      %v4018 = vadd.f32 %v3804, %v3940
      %v4019 = vadd.f32 %v3805, %v3942
      %v4020 = vadd.f32 %v3806, %v3945
      %v4021 = vadd.f32 %v3807, %v3947
      %v4022 = vadd.f32 %v3808, %v3950
      %v4023 = vadd.f32 %v3809, %v3952
      %v4024 = vadd.f32 %v3810, %v3955
      %v4025 = vadd.f32 %v3811, %v3957
      %v4026 = vadd.f32 %v3812, %v3960
      %v4027 = vadd.f32 %v3813, %v3962
      %v4028 = vadd.f32 %v3814, %v3965
      %v4029 = vadd.f32 %v3815, %v3967
      %v4030 = vadd.f32 %v3816, %v3970
      %v4031 = vadd.f32 %v3817, %v3972
      %v4032 = vadd.f32 %v3818, %v3975
      %v4033 = vadd.f32 %v3819, %v3977
      %v4034 = vlaneseq
      %v4035 = vshrl.u32 %v4034, 7
      %v4036 = vsub.s32 5, %v4035
      %v4037 = vrot.slane %v327, %v4036
      %v4038 = vmul.f32 %v274, %v4037
      %v4039 = vmul.f32 %v275, %v4037
      %v4040 = vmul.f32 %v277, %v4037
      %v4041 = vmul.f32 %v278, %v4037
      %v4042 = vmul.f32 %v280, %v4037
      %v4043 = vmul.f32 %v281, %v4037
      %v4044 = vmul.f32 %v283, %v4037
      %v4045 = vmul.f32 %v284, %v4037
      %v4046 = vmul.f32 %v286, %v4037
      %v4047 = vmul.f32 %v287, %v4037
      %v4048 = vmul.f32 %v289, %v4037
      %v4049 = vmul.f32 %v290, %v4037
      %v4050 = vmul.f32 %v292, %v4037
      %v4051 = vmul.f32 %v293, %v4037
      %v4052 = vmul.f32 %v295, %v4037
      %v4053 = vmul.f32 %v296, %v4037
      %v4054 = vmul.f32 %v298, %v4037
      %v4055 = vmul.f32 %v299, %v4037
      %v4056 = vmul.f32 %v301, %v4037
      %v4057 = vmul.f32 %v302, %v4037
      %v4058 = vmul.f32 %v304, %v4037
      %v4059 = vmul.f32 %v305, %v4037
      %v4060 = vmul.f32 %v307, %v4037
      %v4061 = vmul.f32 %v308, %v4037
      %v4062 = vmul.f32 %v310, %v4037
      %v4063 = vmul.f32 %v311, %v4037
      %v4064 = vmul.f32 %v313, %v4037
      %v4065 = vmul.f32 %v314, %v4037
      %v4066 = vadd.f32 %v4006, %v4038
      %v4067 = vadd.f32 %v4007, %v4039
      %v4068 = vadd.f32 %v4008, %v4040
      %v4069 = vadd.f32 %v4009, %v4041
      %v4070 = vadd.f32 %v4010, %v4042
      %v4071 = vadd.f32 %v4011, %v4043
      %v4072 = vadd.f32 %v4012, %v4044
      %v4073 = vadd.f32 %v4013, %v4045
      %v4074 = vadd.f32 %v4014, %v4046
      %v4075 = vadd.f32 %v4015, %v4047
      %v4076 = vadd.f32 %v4016, %v4048
      %v4077 = vadd.f32 %v4017, %v4049
      %v4078 = vadd.f32 %v4018, %v4050
      %v4079 = vadd.f32 %v4019, %v4051
      %v4080 = vadd.f32 %v4020, %v4052
      %v4081 = vadd.f32 %v4021, %v4053
      %v4082 = vadd.f32 %v4022, %v4054
      %v4083 = vadd.f32 %v4023, %v4055
      %v4084 = vadd.f32 %v4024, %v4056
      %v4085 = vadd.f32 %v4025, %v4057
      %v4086 = vadd.f32 %v4026, %v4058
      %v4087 = vadd.f32 %v4027, %v4059
      %v4088 = vadd.f32 %v4028, %v4060
      %v4089 = vadd.f32 %v4029, %v4061
      %v4090 = vadd.f32 %v4030, %v4062
      %v4091 = vadd.f32 %v4031, %v4063
      %v4092 = vadd.f32 %v4032, %v4064
      %v4093 = vadd.f32 %v4033, %v4065
      %v4094 = vlaneseq
      %v4095 = vshrl.u32 %v4094, 7
      %v4096 = vsub.s32 6, %v4095
      %v4097 = vrot.slane %v327, %v4096
      %v4098 = vmul.f32 %v274, %v4097
      %v4099 = vmul.f32 %v275, %v4097
      %v4100 = vmul.f32 %v277, %v4097
      %v4101 = vmul.f32 %v278, %v4097
      %v4102 = vmul.f32 %v280, %v4097
      %v4103 = vmul.f32 %v281, %v4097
      %v4104 = vmul.f32 %v283, %v4097
      %v4105 = vmul.f32 %v284, %v4097
      %v4106 = vmul.f32 %v286, %v4097
      %v4107 = vmul.f32 %v287, %v4097
      %v4108 = vmul.f32 %v289, %v4097
      %v4109 = vmul.f32 %v290, %v4097
      %v4110 = vmul.f32 %v292, %v4097
      %v4111 = vmul.f32 %v293, %v4097
      %v4112 = vmul.f32 %v295, %v4097
      %v4113 = vmul.f32 %v296, %v4097
      %v4114 = vmul.f32 %v298, %v4097
      %v4115 = vmul.f32 %v299, %v4097
      %v4116 = vmul.f32 %v301, %v4097
      %v4117 = vmul.f32 %v302, %v4097
      %v4118 = vmul.f32 %v304, %v4097
      %v4119 = vmul.f32 %v305, %v4097
      %v4120 = vmul.f32 %v307, %v4097
      %v4121 = vmul.f32 %v308, %v4097
      %v4122 = vmul.f32 %v310, %v4097
      %v4123 = vmul.f32 %v311, %v4097
      %v4124 = vmul.f32 %v313, %v4097
      %v4125 = vmul.f32 %v314, %v4097
      %v4154 = vrot.slane %v4098, 1
      %v4155 = vrot.slane %v4099, 1
      %v4156 = vsel %vm452, %v4154, %v4155
      %v4157 = vrot.slane %v4100, 1
      %v4158 = vrot.slane %v4101, 1
      %v4159 = vsel %vm452, %v4157, %v4158
      %v4160 = vrot.slane %v4102, 1
      %v4161 = vrot.slane %v4103, 1
      %v4162 = vsel %vm452, %v4160, %v4161
      %v4163 = vrot.slane %v4104, 1
      %v4164 = vrot.slane %v4105, 1
      %v4165 = vsel %vm452, %v4163, %v4164
      %v4166 = vrot.slane %v4106, 1
      %v4167 = vrot.slane %v4107, 1
      %v4168 = vsel %vm452, %v4166, %v4167
      %v4169 = vrot.slane %v4108, 1
      %v4170 = vrot.slane %v4109, 1
      %v4171 = vsel %vm452, %v4169, %v4170
      %v4172 = vrot.slane %v4110, 1
      %v4173 = vrot.slane %v4111, 1
      %v4174 = vsel %vm452, %v4172, %v4173
      %v4175 = vrot.slane %v4112, 1
      %v4176 = vrot.slane %v4113, 1
      %v4177 = vsel %vm452, %v4175, %v4176
      %v4178 = vrot.slane %v4114, 1
      %v4179 = vrot.slane %v4115, 1
      %v4180 = vsel %vm452, %v4178, %v4179
      %v4181 = vrot.slane %v4116, 1
      %v4182 = vrot.slane %v4117, 1
      %v4183 = vsel %vm452, %v4181, %v4182
      %v4184 = vrot.slane %v4118, 1
      %v4185 = vrot.slane %v4119, 1
      %v4186 = vsel %vm452, %v4184, %v4185
      %v4187 = vrot.slane %v4120, 1
      %v4188 = vrot.slane %v4121, 1
      %v4189 = vsel %vm452, %v4187, %v4188
      %v4190 = vrot.slane %v4122, 1
      %v4191 = vrot.slane %v4123, 1
      %v4192 = vsel %vm452, %v4190, %v4191
      %v4193 = vrot.slane %v4124, 1
      %v4194 = vrot.slane %v4125, 1
      %v4195 = vsel %vm452, %v4193, %v4194
      %v4224 = vadd.f32 %v4066, %v4156
      %v4225 = vadd.f32 %v4067, %v4155
      %v4226 = vadd.f32 %v4068, %v4159
      %v4227 = vadd.f32 %v4069, %v4158
      %v4228 = vadd.f32 %v4070, %v4162
      %v4229 = vadd.f32 %v4071, %v4161
      %v4230 = vadd.f32 %v4072, %v4165
      %v4231 = vadd.f32 %v4073, %v4164
      %v4232 = vadd.f32 %v4074, %v4168
      %v4233 = vadd.f32 %v4075, %v4167
      %v4234 = vadd.f32 %v4076, %v4171
      %v4235 = vadd.f32 %v4077, %v4170
      %v4236 = vadd.f32 %v4078, %v4174
      %v4237 = vadd.f32 %v4079, %v4173
      %v4238 = vadd.f32 %v4080, %v4177
      %v4239 = vadd.f32 %v4081, %v4176
      %v4240 = vadd.f32 %v4082, %v4180
      %v4241 = vadd.f32 %v4083, %v4179
      %v4242 = vadd.f32 %v4084, %v4183
      %v4243 = vadd.f32 %v4085, %v4182
      %v4244 = vadd.f32 %v4086, %v4186
      %v4245 = vadd.f32 %v4087, %v4185
      %v4246 = vadd.f32 %v4088, %v4189
      %v4247 = vadd.f32 %v4089, %v4188
      %v4248 = vadd.f32 %v4090, %v4192
      %v4249 = vadd.f32 %v4091, %v4191
      %v4250 = vadd.f32 %v4092, %v4195
      %v4251 = vadd.f32 %v4093, %v4194
      %v4252 = vlaneseq
      %v4253 = vshrl.u32 %v4252, 7
      %v4254 = vsub.s32 7, %v4253
      %v4255 = vrot.slane %v327, %v4254
      %v4256 = vmul.f32 %v274, %v4255
      %v4257 = vmul.f32 %v275, %v4255
      %v4258 = vmul.f32 %v277, %v4255
      %v4259 = vmul.f32 %v278, %v4255
      %v4260 = vmul.f32 %v280, %v4255
      %v4261 = vmul.f32 %v281, %v4255
      %v4262 = vmul.f32 %v283, %v4255
      %v4263 = vmul.f32 %v284, %v4255
      %v4264 = vmul.f32 %v286, %v4255
      %v4265 = vmul.f32 %v287, %v4255
      %v4266 = vmul.f32 %v289, %v4255
      %v4267 = vmul.f32 %v290, %v4255
      %v4268 = vmul.f32 %v292, %v4255
      %v4269 = vmul.f32 %v293, %v4255
      %v4270 = vmul.f32 %v295, %v4255
      %v4271 = vmul.f32 %v296, %v4255
      %v4272 = vmul.f32 %v298, %v4255
      %v4273 = vmul.f32 %v299, %v4255
      %v4274 = vmul.f32 %v301, %v4255
      %v4275 = vmul.f32 %v302, %v4255
      %v4276 = vmul.f32 %v304, %v4255
      %v4277 = vmul.f32 %v305, %v4255
      %v4278 = vmul.f32 %v307, %v4255
      %v4279 = vmul.f32 %v308, %v4255
      %v4280 = vmul.f32 %v310, %v4255
      %v4281 = vmul.f32 %v311, %v4255
      %v4282 = vmul.f32 %v313, %v4255
      %v4283 = vmul.f32 %v314, %v4255
      %v4312 = vrot.slane %v4256, 2
      %v4313 = vrot.slane %v4257, 2
      %v4314 = vsel %vm611, %v4312, %v4313
      %v4315 = vrot.slane %v4258, 2
      %v4316 = vrot.slane %v4259, 2
      %v4317 = vsel %vm611, %v4315, %v4316
      %v4318 = vrot.slane %v4260, 2
      %v4319 = vrot.slane %v4261, 2
      %v4320 = vsel %vm611, %v4318, %v4319
      %v4321 = vrot.slane %v4262, 2
      %v4322 = vrot.slane %v4263, 2
      %v4323 = vsel %vm611, %v4321, %v4322
      %v4324 = vrot.slane %v4264, 2
      %v4325 = vrot.slane %v4265, 2
      %v4326 = vsel %vm611, %v4324, %v4325
      %v4327 = vrot.slane %v4266, 2
      %v4328 = vrot.slane %v4267, 2
      %v4329 = vsel %vm611, %v4327, %v4328
      %v4330 = vrot.slane %v4268, 2
      %v4331 = vrot.slane %v4269, 2
      %v4332 = vsel %vm611, %v4330, %v4331
      %v4333 = vrot.slane %v4270, 2
      %v4334 = vrot.slane %v4271, 2
      %v4335 = vsel %vm611, %v4333, %v4334
      %v4336 = vrot.slane %v4272, 2
      %v4337 = vrot.slane %v4273, 2
      %v4338 = vsel %vm611, %v4336, %v4337
      %v4339 = vrot.slane %v4274, 2
      %v4340 = vrot.slane %v4275, 2
      %v4341 = vsel %vm611, %v4339, %v4340
      %v4342 = vrot.slane %v4276, 2
      %v4343 = vrot.slane %v4277, 2
      %v4344 = vsel %vm611, %v4342, %v4343
      %v4345 = vrot.slane %v4278, 2
      %v4346 = vrot.slane %v4279, 2
      %v4347 = vsel %vm611, %v4345, %v4346
      %v4348 = vrot.slane %v4280, 2
      %v4349 = vrot.slane %v4281, 2
      %v4350 = vsel %vm611, %v4348, %v4349
      %v4351 = vrot.slane %v4282, 2
      %v4352 = vrot.slane %v4283, 2
      %v4353 = vsel %vm611, %v4351, %v4352
      %v4382 = vadd.f32 %v4224, %v4314
      %v4383 = vadd.f32 %v4225, %v4313
      %v4384 = vadd.f32 %v4226, %v4317
      %v4385 = vadd.f32 %v4227, %v4316
      %v4386 = vadd.f32 %v4228, %v4320
      %v4387 = vadd.f32 %v4229, %v4319
      %v4388 = vadd.f32 %v4230, %v4323
      %v4389 = vadd.f32 %v4231, %v4322
      %v4390 = vadd.f32 %v4232, %v4326
      %v4391 = vadd.f32 %v4233, %v4325
      %v4392 = vadd.f32 %v4234, %v4329
      %v4393 = vadd.f32 %v4235, %v4328
      %v4394 = vadd.f32 %v4236, %v4332
      %v4395 = vadd.f32 %v4237, %v4331
      %v4396 = vadd.f32 %v4238, %v4335
      %v4397 = vadd.f32 %v4239, %v4334
      %v4398 = vadd.f32 %v4240, %v4338
      %v4399 = vadd.f32 %v4241, %v4337
      %v4400 = vadd.f32 %v4242, %v4341
      %v4401 = vadd.f32 %v4243, %v4340
      %v4402 = vadd.f32 %v4244, %v4344
      %v4403 = vadd.f32 %v4245, %v4343
      %v4404 = vadd.f32 %v4246, %v4347
      %v4405 = vadd.f32 %v4247, %v4346
      %v4406 = vadd.f32 %v4248, %v4350
      %v4407 = vadd.f32 %v4249, %v4349
      %v4408 = vadd.f32 %v4250, %v4353
      %v4409 = vadd.f32 %v4251, %v4352
      %v4410 = vlaneseq
      %v4411 = vshrl.u32 %v4410, 7
      %v4412 = vsub.s32 0, %v4411
      %v4413 = vrot.slane %v328, %v4412
      %v4414 = vmul.f32 %v274, %v4413
      %v4415 = vmul.f32 %v275, %v4413
      %v4416 = vmul.f32 %v276, %v4413
      %v4417 = vmul.f32 %v277, %v4413
      %v4418 = vmul.f32 %v278, %v4413
      %v4419 = vmul.f32 %v279, %v4413
      %v4420 = vmul.f32 %v280, %v4413
      %v4421 = vmul.f32 %v281, %v4413
      %v4422 = vmul.f32 %v282, %v4413
      %v4423 = vmul.f32 %v283, %v4413
      %v4424 = vmul.f32 %v284, %v4413
      %v4425 = vmul.f32 %v285, %v4413
      %v4426 = vmul.f32 %v286, %v4413
      %v4427 = vmul.f32 %v287, %v4413
      %v4428 = vmul.f32 %v288, %v4413
      %v4429 = vmul.f32 %v289, %v4413
      %v4430 = vmul.f32 %v290, %v4413
      %v4431 = vmul.f32 %v291, %v4413
      %v4432 = vmul.f32 %v292, %v4413
      %v4433 = vmul.f32 %v293, %v4413
      %v4434 = vmul.f32 %v294, %v4413
      %v4435 = vmul.f32 %v295, %v4413
      %v4436 = vmul.f32 %v296, %v4413
      %v4437 = vmul.f32 %v297, %v4413
      %v4438 = vmul.f32 %v298, %v4413
      %v4439 = vmul.f32 %v299, %v4413
      %v4440 = vmul.f32 %v300, %v4413
      %v4441 = vmul.f32 %v301, %v4413
      %v4442 = vmul.f32 %v302, %v4413
      %v4443 = vmul.f32 %v303, %v4413
      %v4444 = vmul.f32 %v304, %v4413
      %v4445 = vmul.f32 %v305, %v4413
      %v4446 = vmul.f32 %v306, %v4413
      %v4447 = vmul.f32 %v307, %v4413
      %v4448 = vmul.f32 %v308, %v4413
      %v4449 = vmul.f32 %v309, %v4413
      %v4450 = vmul.f32 %v310, %v4413
      %v4451 = vmul.f32 %v311, %v4413
      %v4452 = vmul.f32 %v312, %v4413
      %v4453 = vmul.f32 %v313, %v4413
      %v4454 = vmul.f32 %v314, %v4413
      %v4455 = vmul.f32 %v315, %v4413
      %v4498 = vrot.slane %v4414, 3
      %v4499 = vrot.slane %v4415, 3
      %v4500 = vsel %vm798, %v4498, %v4499
      %v4501 = vrot.slane %v4416, 3
      %v4502 = vsel %vm798, %v4499, %v4501
      %v4503 = vrot.slane %v4417, 3
      %v4504 = vrot.slane %v4418, 3
      %v4505 = vsel %vm798, %v4503, %v4504
      %v4506 = vrot.slane %v4419, 3
      %v4507 = vsel %vm798, %v4504, %v4506
      %v4508 = vrot.slane %v4420, 3
      %v4509 = vrot.slane %v4421, 3
      %v4510 = vsel %vm798, %v4508, %v4509
      %v4511 = vrot.slane %v4422, 3
      %v4512 = vsel %vm798, %v4509, %v4511
      %v4513 = vrot.slane %v4423, 3
      %v4514 = vrot.slane %v4424, 3
      %v4515 = vsel %vm798, %v4513, %v4514
      %v4516 = vrot.slane %v4425, 3
      %v4517 = vsel %vm798, %v4514, %v4516
      %v4518 = vrot.slane %v4426, 3
      %v4519 = vrot.slane %v4427, 3
      %v4520 = vsel %vm798, %v4518, %v4519
      %v4521 = vrot.slane %v4428, 3
      %v4522 = vsel %vm798, %v4519, %v4521
      %v4523 = vrot.slane %v4429, 3
      %v4524 = vrot.slane %v4430, 3
      %v4525 = vsel %vm798, %v4523, %v4524
      %v4526 = vrot.slane %v4431, 3
      %v4527 = vsel %vm798, %v4524, %v4526
      %v4528 = vrot.slane %v4432, 3
      %v4529 = vrot.slane %v4433, 3
      %v4530 = vsel %vm798, %v4528, %v4529
      %v4531 = vrot.slane %v4434, 3
      %v4532 = vsel %vm798, %v4529, %v4531
      %v4533 = vrot.slane %v4435, 3
      %v4534 = vrot.slane %v4436, 3
      %v4535 = vsel %vm798, %v4533, %v4534
      %v4536 = vrot.slane %v4437, 3
      %v4537 = vsel %vm798, %v4534, %v4536
      %v4538 = vrot.slane %v4438, 3
      %v4539 = vrot.slane %v4439, 3
      %v4540 = vsel %vm798, %v4538, %v4539
      %v4541 = vrot.slane %v4440, 3
      %v4542 = vsel %vm798, %v4539, %v4541
      %v4543 = vrot.slane %v4441, 3
      %v4544 = vrot.slane %v4442, 3
      %v4545 = vsel %vm798, %v4543, %v4544
      %v4546 = vrot.slane %v4443, 3
      %v4547 = vsel %vm798, %v4544, %v4546
      %v4548 = vrot.slane %v4444, 3
      %v4549 = vrot.slane %v4445, 3
      %v4550 = vsel %vm798, %v4548, %v4549
      %v4551 = vrot.slane %v4446, 3
      %v4552 = vsel %vm798, %v4549, %v4551
      %v4553 = vrot.slane %v4447, 3
      %v4554 = vrot.slane %v4448, 3
      %v4555 = vsel %vm798, %v4553, %v4554
      %v4556 = vrot.slane %v4449, 3
      %v4557 = vsel %vm798, %v4554, %v4556
      %v4558 = vrot.slane %v4450, 3
      %v4559 = vrot.slane %v4451, 3
      %v4560 = vsel %vm798, %v4558, %v4559
      %v4561 = vrot.slane %v4452, 3
      %v4562 = vsel %vm798, %v4559, %v4561
      %v4563 = vrot.slane %v4453, 3
      %v4564 = vrot.slane %v4454, 3
      %v4565 = vsel %vm798, %v4563, %v4564
      %v4566 = vrot.slane %v4455, 3
      %v4567 = vsel %vm798, %v4564, %v4566
      %v4596 = vadd.f32 %v4382, %v4500
      %v4597 = vadd.f32 %v4383, %v4502
      %v4598 = vadd.f32 %v4384, %v4505
      %v4599 = vadd.f32 %v4385, %v4507
      %v4600 = vadd.f32 %v4386, %v4510
      %v4601 = vadd.f32 %v4387, %v4512
      %v4602 = vadd.f32 %v4388, %v4515
      %v4603 = vadd.f32 %v4389, %v4517
      %v4604 = vadd.f32 %v4390, %v4520
      %v4605 = vadd.f32 %v4391, %v4522
      %v4606 = vadd.f32 %v4392, %v4525
      %v4607 = vadd.f32 %v4393, %v4527
      %v4608 = vadd.f32 %v4394, %v4530
      %v4609 = vadd.f32 %v4395, %v4532
      %v4610 = vadd.f32 %v4396, %v4535
      %v4611 = vadd.f32 %v4397, %v4537
      %v4612 = vadd.f32 %v4398, %v4540
      %v4613 = vadd.f32 %v4399, %v4542
      %v4614 = vadd.f32 %v4400, %v4545
      %v4615 = vadd.f32 %v4401, %v4547
      %v4616 = vadd.f32 %v4402, %v4550
      %v4617 = vadd.f32 %v4403, %v4552
      %v4618 = vadd.f32 %v4404, %v4555
      %v4619 = vadd.f32 %v4405, %v4557
      %v4620 = vadd.f32 %v4406, %v4560
      %v4621 = vadd.f32 %v4407, %v4562
      %v4622 = vadd.f32 %v4408, %v4565
      %v4623 = vadd.f32 %v4409, %v4567
      %v4624 = vlaneseq
      %v4625 = vshrl.u32 %v4624, 7
      %v4626 = vsub.s32 1, %v4625
      %v4627 = vrot.slane %v328, %v4626
      %v4628 = vmul.f32 %v274, %v4627
      %v4629 = vmul.f32 %v275, %v4627
      %v4630 = vmul.f32 %v276, %v4627
      %v4631 = vmul.f32 %v277, %v4627
      %v4632 = vmul.f32 %v278, %v4627
      %v4633 = vmul.f32 %v279, %v4627
      %v4634 = vmul.f32 %v280, %v4627
      %v4635 = vmul.f32 %v281, %v4627
      %v4636 = vmul.f32 %v282, %v4627
      %v4637 = vmul.f32 %v283, %v4627
      %v4638 = vmul.f32 %v284, %v4627
      %v4639 = vmul.f32 %v285, %v4627
      %v4640 = vmul.f32 %v286, %v4627
      %v4641 = vmul.f32 %v287, %v4627
      %v4642 = vmul.f32 %v288, %v4627
      %v4643 = vmul.f32 %v289, %v4627
      %v4644 = vmul.f32 %v290, %v4627
      %v4645 = vmul.f32 %v291, %v4627
      %v4646 = vmul.f32 %v292, %v4627
      %v4647 = vmul.f32 %v293, %v4627
      %v4648 = vmul.f32 %v294, %v4627
      %v4649 = vmul.f32 %v295, %v4627
      %v4650 = vmul.f32 %v296, %v4627
      %v4651 = vmul.f32 %v297, %v4627
      %v4652 = vmul.f32 %v298, %v4627
      %v4653 = vmul.f32 %v299, %v4627
      %v4654 = vmul.f32 %v300, %v4627
      %v4655 = vmul.f32 %v301, %v4627
      %v4656 = vmul.f32 %v302, %v4627
      %v4657 = vmul.f32 %v303, %v4627
      %v4658 = vmul.f32 %v304, %v4627
      %v4659 = vmul.f32 %v305, %v4627
      %v4660 = vmul.f32 %v306, %v4627
      %v4661 = vmul.f32 %v307, %v4627
      %v4662 = vmul.f32 %v308, %v4627
      %v4663 = vmul.f32 %v309, %v4627
      %v4664 = vmul.f32 %v310, %v4627
      %v4665 = vmul.f32 %v311, %v4627
      %v4666 = vmul.f32 %v312, %v4627
      %v4667 = vmul.f32 %v313, %v4627
      %v4668 = vmul.f32 %v314, %v4627
      %v4669 = vmul.f32 %v315, %v4627
      %v4712 = vrot.slane %v4628, 4
      %v4713 = vrot.slane %v4629, 4
      %v4714 = vsel %vm1013, %v4712, %v4713
      %v4715 = vrot.slane %v4630, 4
      %v4716 = vsel %vm1013, %v4713, %v4715
      %v4717 = vrot.slane %v4631, 4
      %v4718 = vrot.slane %v4632, 4
      %v4719 = vsel %vm1013, %v4717, %v4718
      %v4720 = vrot.slane %v4633, 4
      %v4721 = vsel %vm1013, %v4718, %v4720
      %v4722 = vrot.slane %v4634, 4
      %v4723 = vrot.slane %v4635, 4
      %v4724 = vsel %vm1013, %v4722, %v4723
      %v4725 = vrot.slane %v4636, 4
      %v4726 = vsel %vm1013, %v4723, %v4725
      %v4727 = vrot.slane %v4637, 4
      %v4728 = vrot.slane %v4638, 4
      %v4729 = vsel %vm1013, %v4727, %v4728
      %v4730 = vrot.slane %v4639, 4
      %v4731 = vsel %vm1013, %v4728, %v4730
      %v4732 = vrot.slane %v4640, 4
      %v4733 = vrot.slane %v4641, 4
      %v4734 = vsel %vm1013, %v4732, %v4733
      %v4735 = vrot.slane %v4642, 4
      %v4736 = vsel %vm1013, %v4733, %v4735
      %v4737 = vrot.slane %v4643, 4
      %v4738 = vrot.slane %v4644, 4
      %v4739 = vsel %vm1013, %v4737, %v4738
      %v4740 = vrot.slane %v4645, 4
      %v4741 = vsel %vm1013, %v4738, %v4740
      %v4742 = vrot.slane %v4646, 4
      %v4743 = vrot.slane %v4647, 4
      %v4744 = vsel %vm1013, %v4742, %v4743
      %v4745 = vrot.slane %v4648, 4
      %v4746 = vsel %vm1013, %v4743, %v4745
      %v4747 = vrot.slane %v4649, 4
      %v4748 = vrot.slane %v4650, 4
      %v4749 = vsel %vm1013, %v4747, %v4748
      %v4750 = vrot.slane %v4651, 4
      %v4751 = vsel %vm1013, %v4748, %v4750
      %v4752 = vrot.slane %v4652, 4
      %v4753 = vrot.slane %v4653, 4
      %v4754 = vsel %vm1013, %v4752, %v4753
      %v4755 = vrot.slane %v4654, 4
      %v4756 = vsel %vm1013, %v4753, %v4755
      %v4757 = vrot.slane %v4655, 4
      %v4758 = vrot.slane %v4656, 4
      %v4759 = vsel %vm1013, %v4757, %v4758
      %v4760 = vrot.slane %v4657, 4
      %v4761 = vsel %vm1013, %v4758, %v4760
      %v4762 = vrot.slane %v4658, 4
      %v4763 = vrot.slane %v4659, 4
      %v4764 = vsel %vm1013, %v4762, %v4763
      %v4765 = vrot.slane %v4660, 4
      %v4766 = vsel %vm1013, %v4763, %v4765
      %v4767 = vrot.slane %v4661, 4
      %v4768 = vrot.slane %v4662, 4
      %v4769 = vsel %vm1013, %v4767, %v4768
      %v4770 = vrot.slane %v4663, 4
      %v4771 = vsel %vm1013, %v4768, %v4770
      %v4772 = vrot.slane %v4664, 4
      %v4773 = vrot.slane %v4665, 4
      %v4774 = vsel %vm1013, %v4772, %v4773
      %v4775 = vrot.slane %v4666, 4
      %v4776 = vsel %vm1013, %v4773, %v4775
      %v4777 = vrot.slane %v4667, 4
      %v4778 = vrot.slane %v4668, 4
      %v4779 = vsel %vm1013, %v4777, %v4778
      %v4780 = vrot.slane %v4669, 4
      %v4781 = vsel %vm1013, %v4778, %v4780
      %v4810 = vadd.f32 %v4596, %v4714
      %v4811 = vadd.f32 %v4597, %v4716
      %v4812 = vadd.f32 %v4598, %v4719
      %v4813 = vadd.f32 %v4599, %v4721
      %v4814 = vadd.f32 %v4600, %v4724
      %v4815 = vadd.f32 %v4601, %v4726
      %v4816 = vadd.f32 %v4602, %v4729
      %v4817 = vadd.f32 %v4603, %v4731
      %v4818 = vadd.f32 %v4604, %v4734
      %v4819 = vadd.f32 %v4605, %v4736
      %v4820 = vadd.f32 %v4606, %v4739
      %v4821 = vadd.f32 %v4607, %v4741
      %v4822 = vadd.f32 %v4608, %v4744
      %v4823 = vadd.f32 %v4609, %v4746
      %v4824 = vadd.f32 %v4610, %v4749
      %v4825 = vadd.f32 %v4611, %v4751
      %v4826 = vadd.f32 %v4612, %v4754
      %v4827 = vadd.f32 %v4613, %v4756
      %v4828 = vadd.f32 %v4614, %v4759
      %v4829 = vadd.f32 %v4615, %v4761
      %v4830 = vadd.f32 %v4616, %v4764
      %v4831 = vadd.f32 %v4617, %v4766
      %v4832 = vadd.f32 %v4618, %v4769
      %v4833 = vadd.f32 %v4619, %v4771
      %v4834 = vadd.f32 %v4620, %v4774
      %v4835 = vadd.f32 %v4621, %v4776
      %v4836 = vadd.f32 %v4622, %v4779
      %v4837 = vadd.f32 %v4623, %v4781
      %v4838 = vlaneseq
      %v4839 = vshrl.u32 %v4838, 7
      %v4840 = vsub.s32 2, %v4839
      %v4841 = vrot.slane %v328, %v4840
      %v4842 = vmul.f32 %v274, %v4841
      %v4843 = vmul.f32 %v275, %v4841
      %v4844 = vmul.f32 %v276, %v4841
      %v4845 = vmul.f32 %v277, %v4841
      %v4846 = vmul.f32 %v278, %v4841
      %v4847 = vmul.f32 %v279, %v4841
      %v4848 = vmul.f32 %v280, %v4841
      %v4849 = vmul.f32 %v281, %v4841
      %v4850 = vmul.f32 %v282, %v4841
      %v4851 = vmul.f32 %v283, %v4841
      %v4852 = vmul.f32 %v284, %v4841
      %v4853 = vmul.f32 %v285, %v4841
      %v4854 = vmul.f32 %v286, %v4841
      %v4855 = vmul.f32 %v287, %v4841
      %v4856 = vmul.f32 %v288, %v4841
      %v4857 = vmul.f32 %v289, %v4841
      %v4858 = vmul.f32 %v290, %v4841
      %v4859 = vmul.f32 %v291, %v4841
      %v4860 = vmul.f32 %v292, %v4841
      %v4861 = vmul.f32 %v293, %v4841
      %v4862 = vmul.f32 %v294, %v4841
      %v4863 = vmul.f32 %v295, %v4841
      %v4864 = vmul.f32 %v296, %v4841
      %v4865 = vmul.f32 %v297, %v4841
      %v4866 = vmul.f32 %v298, %v4841
      %v4867 = vmul.f32 %v299, %v4841
      %v4868 = vmul.f32 %v300, %v4841
      %v4869 = vmul.f32 %v301, %v4841
      %v4870 = vmul.f32 %v302, %v4841
      %v4871 = vmul.f32 %v303, %v4841
      %v4872 = vmul.f32 %v304, %v4841
      %v4873 = vmul.f32 %v305, %v4841
      %v4874 = vmul.f32 %v306, %v4841
      %v4875 = vmul.f32 %v307, %v4841
      %v4876 = vmul.f32 %v308, %v4841
      %v4877 = vmul.f32 %v309, %v4841
      %v4878 = vmul.f32 %v310, %v4841
      %v4879 = vmul.f32 %v311, %v4841
      %v4880 = vmul.f32 %v312, %v4841
      %v4881 = vmul.f32 %v313, %v4841
      %v4882 = vmul.f32 %v314, %v4841
      %v4883 = vmul.f32 %v315, %v4841
      %v4926 = vrot.slane %v4842, 5
      %v4927 = vrot.slane %v4843, 5
      %v4928 = vsel %vm1228, %v4926, %v4927
      %v4929 = vrot.slane %v4844, 5
      %v4930 = vsel %vm1228, %v4927, %v4929
      %v4931 = vrot.slane %v4845, 5
      %v4932 = vrot.slane %v4846, 5
      %v4933 = vsel %vm1228, %v4931, %v4932
      %v4934 = vrot.slane %v4847, 5
      %v4935 = vsel %vm1228, %v4932, %v4934
      %v4936 = vrot.slane %v4848, 5
      %v4937 = vrot.slane %v4849, 5
      %v4938 = vsel %vm1228, %v4936, %v4937
      %v4939 = vrot.slane %v4850, 5
      %v4940 = vsel %vm1228, %v4937, %v4939
      %v4941 = vrot.slane %v4851, 5
      %v4942 = vrot.slane %v4852, 5
      %v4943 = vsel %vm1228, %v4941, %v4942
      %v4944 = vrot.slane %v4853, 5
      %v4945 = vsel %vm1228, %v4942, %v4944
      %v4946 = vrot.slane %v4854, 5
      %v4947 = vrot.slane %v4855, 5
      %v4948 = vsel %vm1228, %v4946, %v4947
      %v4949 = vrot.slane %v4856, 5
      %v4950 = vsel %vm1228, %v4947, %v4949
      %v4951 = vrot.slane %v4857, 5
      %v4952 = vrot.slane %v4858, 5
      %v4953 = vsel %vm1228, %v4951, %v4952
      %v4954 = vrot.slane %v4859, 5
      %v4955 = vsel %vm1228, %v4952, %v4954
      %v4956 = vrot.slane %v4860, 5
      %v4957 = vrot.slane %v4861, 5
      %v4958 = vsel %vm1228, %v4956, %v4957
      %v4959 = vrot.slane %v4862, 5
      %v4960 = vsel %vm1228, %v4957, %v4959
      %v4961 = vrot.slane %v4863, 5
      %v4962 = vrot.slane %v4864, 5
      %v4963 = vsel %vm1228, %v4961, %v4962
      %v4964 = vrot.slane %v4865, 5
      %v4965 = vsel %vm1228, %v4962, %v4964
      %v4966 = vrot.slane %v4866, 5
      %v4967 = vrot.slane %v4867, 5
      %v4968 = vsel %vm1228, %v4966, %v4967
      %v4969 = vrot.slane %v4868, 5
      %v4970 = vsel %vm1228, %v4967, %v4969
      %v4971 = vrot.slane %v4869, 5
      %v4972 = vrot.slane %v4870, 5
      %v4973 = vsel %vm1228, %v4971, %v4972
      %v4974 = vrot.slane %v4871, 5
      %v4975 = vsel %vm1228, %v4972, %v4974
      %v4976 = vrot.slane %v4872, 5
      %v4977 = vrot.slane %v4873, 5
      %v4978 = vsel %vm1228, %v4976, %v4977
      %v4979 = vrot.slane %v4874, 5
      %v4980 = vsel %vm1228, %v4977, %v4979
      %v4981 = vrot.slane %v4875, 5
      %v4982 = vrot.slane %v4876, 5
      %v4983 = vsel %vm1228, %v4981, %v4982
      %v4984 = vrot.slane %v4877, 5
      %v4985 = vsel %vm1228, %v4982, %v4984
      %v4986 = vrot.slane %v4878, 5
      %v4987 = vrot.slane %v4879, 5
      %v4988 = vsel %vm1228, %v4986, %v4987
      %v4989 = vrot.slane %v4880, 5
      %v4990 = vsel %vm1228, %v4987, %v4989
      %v4991 = vrot.slane %v4881, 5
      %v4992 = vrot.slane %v4882, 5
      %v4993 = vsel %vm1228, %v4991, %v4992
      %v4994 = vrot.slane %v4883, 5
      %v4995 = vsel %vm1228, %v4992, %v4994
      %v5024 = vadd.f32 %v4810, %v4928
      %v5025 = vadd.f32 %v4811, %v4930
      %v5026 = vadd.f32 %v4812, %v4933
      %v5027 = vadd.f32 %v4813, %v4935
      %v5028 = vadd.f32 %v4814, %v4938
      %v5029 = vadd.f32 %v4815, %v4940
      %v5030 = vadd.f32 %v4816, %v4943
      %v5031 = vadd.f32 %v4817, %v4945
      %v5032 = vadd.f32 %v4818, %v4948
      %v5033 = vadd.f32 %v4819, %v4950
      %v5034 = vadd.f32 %v4820, %v4953
      %v5035 = vadd.f32 %v4821, %v4955
      %v5036 = vadd.f32 %v4822, %v4958
      %v5037 = vadd.f32 %v4823, %v4960
      %v5038 = vadd.f32 %v4824, %v4963
      %v5039 = vadd.f32 %v4825, %v4965
      %v5040 = vadd.f32 %v4826, %v4968
      %v5041 = vadd.f32 %v4827, %v4970
      %v5042 = vadd.f32 %v4828, %v4973
      %v5043 = vadd.f32 %v4829, %v4975
      %v5044 = vadd.f32 %v4830, %v4978
      %v5045 = vadd.f32 %v4831, %v4980
      %v5046 = vadd.f32 %v4832, %v4983
      %v5047 = vadd.f32 %v4833, %v4985
      %v5048 = vadd.f32 %v4834, %v4988
      %v5049 = vadd.f32 %v4835, %v4990
      %v5050 = vadd.f32 %v4836, %v4993
      %v5051 = vadd.f32 %v4837, %v4995
      %v5052 = vlaneseq
      %v5053 = vshrl.u32 %v5052, 7
      %v5054 = vsub.s32 3, %v5053
      %v5055 = vrot.slane %v328, %v5054
      %v5056 = vmul.f32 %v274, %v5055
      %v5057 = vmul.f32 %v275, %v5055
      %v5058 = vmul.f32 %v276, %v5055
      %v5059 = vmul.f32 %v277, %v5055
      %v5060 = vmul.f32 %v278, %v5055
      %v5061 = vmul.f32 %v279, %v5055
      %v5062 = vmul.f32 %v280, %v5055
      %v5063 = vmul.f32 %v281, %v5055
      %v5064 = vmul.f32 %v282, %v5055
      %v5065 = vmul.f32 %v283, %v5055
      %v5066 = vmul.f32 %v284, %v5055
      %v5067 = vmul.f32 %v285, %v5055
      %v5068 = vmul.f32 %v286, %v5055
      %v5069 = vmul.f32 %v287, %v5055
      %v5070 = vmul.f32 %v288, %v5055
      %v5071 = vmul.f32 %v289, %v5055
      %v5072 = vmul.f32 %v290, %v5055
      %v5073 = vmul.f32 %v291, %v5055
      %v5074 = vmul.f32 %v292, %v5055
      %v5075 = vmul.f32 %v293, %v5055
      %v5076 = vmul.f32 %v294, %v5055
      %v5077 = vmul.f32 %v295, %v5055
      %v5078 = vmul.f32 %v296, %v5055
      %v5079 = vmul.f32 %v297, %v5055
      %v5080 = vmul.f32 %v298, %v5055
      %v5081 = vmul.f32 %v299, %v5055
      %v5082 = vmul.f32 %v300, %v5055
      %v5083 = vmul.f32 %v301, %v5055
      %v5084 = vmul.f32 %v302, %v5055
      %v5085 = vmul.f32 %v303, %v5055
      %v5086 = vmul.f32 %v304, %v5055
      %v5087 = vmul.f32 %v305, %v5055
      %v5088 = vmul.f32 %v306, %v5055
      %v5089 = vmul.f32 %v307, %v5055
      %v5090 = vmul.f32 %v308, %v5055
      %v5091 = vmul.f32 %v309, %v5055
      %v5092 = vmul.f32 %v310, %v5055
      %v5093 = vmul.f32 %v311, %v5055
      %v5094 = vmul.f32 %v312, %v5055
      %v5095 = vmul.f32 %v313, %v5055
      %v5096 = vmul.f32 %v314, %v5055
      %v5097 = vmul.f32 %v315, %v5055
      %v5140 = vrot.slane %v5056, 6
      %v5141 = vrot.slane %v5057, 6
      %v5142 = vsel %vm1443, %v5140, %v5141
      %v5143 = vrot.slane %v5058, 6
      %v5144 = vsel %vm1443, %v5141, %v5143
      %v5145 = vrot.slane %v5059, 6
      %v5146 = vrot.slane %v5060, 6
      %v5147 = vsel %vm1443, %v5145, %v5146
      %v5148 = vrot.slane %v5061, 6
      %v5149 = vsel %vm1443, %v5146, %v5148
      %v5150 = vrot.slane %v5062, 6
      %v5151 = vrot.slane %v5063, 6
      %v5152 = vsel %vm1443, %v5150, %v5151
      %v5153 = vrot.slane %v5064, 6
      %v5154 = vsel %vm1443, %v5151, %v5153
      %v5155 = vrot.slane %v5065, 6
      %v5156 = vrot.slane %v5066, 6
      %v5157 = vsel %vm1443, %v5155, %v5156
      %v5158 = vrot.slane %v5067, 6
      %v5159 = vsel %vm1443, %v5156, %v5158
      %v5160 = vrot.slane %v5068, 6
      %v5161 = vrot.slane %v5069, 6
      %v5162 = vsel %vm1443, %v5160, %v5161
      %v5163 = vrot.slane %v5070, 6
      %v5164 = vsel %vm1443, %v5161, %v5163
      %v5165 = vrot.slane %v5071, 6
      %v5166 = vrot.slane %v5072, 6
      %v5167 = vsel %vm1443, %v5165, %v5166
      %v5168 = vrot.slane %v5073, 6
      %v5169 = vsel %vm1443, %v5166, %v5168
      %v5170 = vrot.slane %v5074, 6
      %v5171 = vrot.slane %v5075, 6
      %v5172 = vsel %vm1443, %v5170, %v5171
      %v5173 = vrot.slane %v5076, 6
      %v5174 = vsel %vm1443, %v5171, %v5173
      %v5175 = vrot.slane %v5077, 6
      %v5176 = vrot.slane %v5078, 6
      %v5177 = vsel %vm1443, %v5175, %v5176
      %v5178 = vrot.slane %v5079, 6
      %v5179 = vsel %vm1443, %v5176, %v5178
      %v5180 = vrot.slane %v5080, 6
      %v5181 = vrot.slane %v5081, 6
      %v5182 = vsel %vm1443, %v5180, %v5181
      %v5183 = vrot.slane %v5082, 6
      %v5184 = vsel %vm1443, %v5181, %v5183
      %v5185 = vrot.slane %v5083, 6
      %v5186 = vrot.slane %v5084, 6
      %v5187 = vsel %vm1443, %v5185, %v5186
      %v5188 = vrot.slane %v5085, 6
      %v5189 = vsel %vm1443, %v5186, %v5188
      %v5190 = vrot.slane %v5086, 6
      %v5191 = vrot.slane %v5087, 6
      %v5192 = vsel %vm1443, %v5190, %v5191
      %v5193 = vrot.slane %v5088, 6
      %v5194 = vsel %vm1443, %v5191, %v5193
      %v5195 = vrot.slane %v5089, 6
      %v5196 = vrot.slane %v5090, 6
      %v5197 = vsel %vm1443, %v5195, %v5196
      %v5198 = vrot.slane %v5091, 6
      %v5199 = vsel %vm1443, %v5196, %v5198
      %v5200 = vrot.slane %v5092, 6
      %v5201 = vrot.slane %v5093, 6
      %v5202 = vsel %vm1443, %v5200, %v5201
      %v5203 = vrot.slane %v5094, 6
      %v5204 = vsel %vm1443, %v5201, %v5203
      %v5205 = vrot.slane %v5095, 6
      %v5206 = vrot.slane %v5096, 6
      %v5207 = vsel %vm1443, %v5205, %v5206
      %v5208 = vrot.slane %v5097, 6
      %v5209 = vsel %vm1443, %v5206, %v5208
      %v5238 = vadd.f32 %v5024, %v5142
      %v5239 = vadd.f32 %v5025, %v5144
      %v5240 = vadd.f32 %v5026, %v5147
      %v5241 = vadd.f32 %v5027, %v5149
      %v5242 = vadd.f32 %v5028, %v5152
      %v5243 = vadd.f32 %v5029, %v5154
      %v5244 = vadd.f32 %v5030, %v5157
      %v5245 = vadd.f32 %v5031, %v5159
      %v5246 = vadd.f32 %v5032, %v5162
      %v5247 = vadd.f32 %v5033, %v5164
      %v5248 = vadd.f32 %v5034, %v5167
      %v5249 = vadd.f32 %v5035, %v5169
      %v5250 = vadd.f32 %v5036, %v5172
      %v5251 = vadd.f32 %v5037, %v5174
      %v5252 = vadd.f32 %v5038, %v5177
      %v5253 = vadd.f32 %v5039, %v5179
      %v5254 = vadd.f32 %v5040, %v5182
      %v5255 = vadd.f32 %v5041, %v5184
      %v5256 = vadd.f32 %v5042, %v5187
      %v5257 = vadd.f32 %v5043, %v5189
      %v5258 = vadd.f32 %v5044, %v5192
      %v5259 = vadd.f32 %v5045, %v5194
      %v5260 = vadd.f32 %v5046, %v5197
      %v5261 = vadd.f32 %v5047, %v5199
      %v5262 = vadd.f32 %v5048, %v5202
      %v5263 = vadd.f32 %v5049, %v5204
      %v5264 = vadd.f32 %v5050, %v5207
      %v5265 = vadd.f32 %v5051, %v5209
      %v5266 = vlaneseq
      %v5267 = vshrl.u32 %v5266, 7
      %v5268 = vsub.s32 4, %v5267
      %v5269 = vrot.slane %v328, %v5268
      %v5270 = vmul.f32 %v277, %v5269
      %v5271 = vmul.f32 %v278, %v5269
      %v5272 = vmul.f32 %v280, %v5269
      %v5273 = vmul.f32 %v281, %v5269
      %v5274 = vmul.f32 %v283, %v5269
      %v5275 = vmul.f32 %v284, %v5269
      %v5276 = vmul.f32 %v286, %v5269
      %v5277 = vmul.f32 %v287, %v5269
      %v5278 = vmul.f32 %v289, %v5269
      %v5279 = vmul.f32 %v290, %v5269
      %v5280 = vmul.f32 %v292, %v5269
      %v5281 = vmul.f32 %v293, %v5269
      %v5282 = vmul.f32 %v295, %v5269
      %v5283 = vmul.f32 %v296, %v5269
      %v5284 = vmul.f32 %v298, %v5269
      %v5285 = vmul.f32 %v299, %v5269
      %v5286 = vmul.f32 %v301, %v5269
      %v5287 = vmul.f32 %v302, %v5269
      %v5288 = vmul.f32 %v304, %v5269
      %v5289 = vmul.f32 %v305, %v5269
      %v5290 = vmul.f32 %v307, %v5269
      %v5291 = vmul.f32 %v308, %v5269
      %v5292 = vmul.f32 %v310, %v5269
      %v5293 = vmul.f32 %v311, %v5269
      %v5294 = vmul.f32 %v313, %v5269
      %v5295 = vmul.f32 %v314, %v5269
      %v5296 = vmul.f32 %v316, %v5269
      %v5297 = vmul.f32 %v317, %v5269
      %v5298 = vadd.f32 %v5238, %v5270
      %v5299 = vadd.f32 %v5239, %v5271
      %v5300 = vadd.f32 %v5240, %v5272
      %v5301 = vadd.f32 %v5241, %v5273
      %v5302 = vadd.f32 %v5242, %v5274
      %v5303 = vadd.f32 %v5243, %v5275
      %v5304 = vadd.f32 %v5244, %v5276
      %v5305 = vadd.f32 %v5245, %v5277
      %v5306 = vadd.f32 %v5246, %v5278
      %v5307 = vadd.f32 %v5247, %v5279
      %v5308 = vadd.f32 %v5248, %v5280
      %v5309 = vadd.f32 %v5249, %v5281
      %v5310 = vadd.f32 %v5250, %v5282
      %v5311 = vadd.f32 %v5251, %v5283
      %v5312 = vadd.f32 %v5252, %v5284
      %v5313 = vadd.f32 %v5253, %v5285
      %v5314 = vadd.f32 %v5254, %v5286
      %v5315 = vadd.f32 %v5255, %v5287
      %v5316 = vadd.f32 %v5256, %v5288
      %v5317 = vadd.f32 %v5257, %v5289
      %v5318 = vadd.f32 %v5258, %v5290
      %v5319 = vadd.f32 %v5259, %v5291
      %v5320 = vadd.f32 %v5260, %v5292
      %v5321 = vadd.f32 %v5261, %v5293
      %v5322 = vadd.f32 %v5262, %v5294
      %v5323 = vadd.f32 %v5263, %v5295
      %v5324 = vadd.f32 %v5264, %v5296
      %v5325 = vadd.f32 %v5265, %v5297
      %v5326 = vlaneseq
      %v5327 = vshrl.u32 %v5326, 7
      %v5328 = vsub.s32 5, %v5327
      %v5329 = vrot.slane %v328, %v5328
      %v5330 = vmul.f32 %v277, %v5329
      %v5331 = vmul.f32 %v278, %v5329
      %v5332 = vmul.f32 %v280, %v5329
      %v5333 = vmul.f32 %v281, %v5329
      %v5334 = vmul.f32 %v283, %v5329
      %v5335 = vmul.f32 %v284, %v5329
      %v5336 = vmul.f32 %v286, %v5329
      %v5337 = vmul.f32 %v287, %v5329
      %v5338 = vmul.f32 %v289, %v5329
      %v5339 = vmul.f32 %v290, %v5329
      %v5340 = vmul.f32 %v292, %v5329
      %v5341 = vmul.f32 %v293, %v5329
      %v5342 = vmul.f32 %v295, %v5329
      %v5343 = vmul.f32 %v296, %v5329
      %v5344 = vmul.f32 %v298, %v5329
      %v5345 = vmul.f32 %v299, %v5329
      %v5346 = vmul.f32 %v301, %v5329
      %v5347 = vmul.f32 %v302, %v5329
      %v5348 = vmul.f32 %v304, %v5329
      %v5349 = vmul.f32 %v305, %v5329
      %v5350 = vmul.f32 %v307, %v5329
      %v5351 = vmul.f32 %v308, %v5329
      %v5352 = vmul.f32 %v310, %v5329
      %v5353 = vmul.f32 %v311, %v5329
      %v5354 = vmul.f32 %v313, %v5329
      %v5355 = vmul.f32 %v314, %v5329
      %v5356 = vmul.f32 %v316, %v5329
      %v5357 = vmul.f32 %v317, %v5329
      %v5386 = vrot.slane %v5330, 1
      %v5387 = vrot.slane %v5331, 1
      %v5388 = vsel %vm452, %v5386, %v5387
      %v5389 = vrot.slane %v5332, 1
      %v5390 = vrot.slane %v5333, 1
      %v5391 = vsel %vm452, %v5389, %v5390
      %v5392 = vrot.slane %v5334, 1
      %v5393 = vrot.slane %v5335, 1
      %v5394 = vsel %vm452, %v5392, %v5393
      %v5395 = vrot.slane %v5336, 1
      %v5396 = vrot.slane %v5337, 1
      %v5397 = vsel %vm452, %v5395, %v5396
      %v5398 = vrot.slane %v5338, 1
      %v5399 = vrot.slane %v5339, 1
      %v5400 = vsel %vm452, %v5398, %v5399
      %v5401 = vrot.slane %v5340, 1
      %v5402 = vrot.slane %v5341, 1
      %v5403 = vsel %vm452, %v5401, %v5402
      %v5404 = vrot.slane %v5342, 1
      %v5405 = vrot.slane %v5343, 1
      %v5406 = vsel %vm452, %v5404, %v5405
      %v5407 = vrot.slane %v5344, 1
      %v5408 = vrot.slane %v5345, 1
      %v5409 = vsel %vm452, %v5407, %v5408
      %v5410 = vrot.slane %v5346, 1
      %v5411 = vrot.slane %v5347, 1
      %v5412 = vsel %vm452, %v5410, %v5411
      %v5413 = vrot.slane %v5348, 1
      %v5414 = vrot.slane %v5349, 1
      %v5415 = vsel %vm452, %v5413, %v5414
      %v5416 = vrot.slane %v5350, 1
      %v5417 = vrot.slane %v5351, 1
      %v5418 = vsel %vm452, %v5416, %v5417
      %v5419 = vrot.slane %v5352, 1
      %v5420 = vrot.slane %v5353, 1
      %v5421 = vsel %vm452, %v5419, %v5420
      %v5422 = vrot.slane %v5354, 1
      %v5423 = vrot.slane %v5355, 1
      %v5424 = vsel %vm452, %v5422, %v5423
      %v5425 = vrot.slane %v5356, 1
      %v5426 = vrot.slane %v5357, 1
      %v5427 = vsel %vm452, %v5425, %v5426
      %v5456 = vadd.f32 %v5298, %v5388
      %v5457 = vadd.f32 %v5299, %v5387
      %v5458 = vadd.f32 %v5300, %v5391
      %v5459 = vadd.f32 %v5301, %v5390
      %v5460 = vadd.f32 %v5302, %v5394
      %v5461 = vadd.f32 %v5303, %v5393
      %v5462 = vadd.f32 %v5304, %v5397
      %v5463 = vadd.f32 %v5305, %v5396
      %v5464 = vadd.f32 %v5306, %v5400
      %v5465 = vadd.f32 %v5307, %v5399
      %v5466 = vadd.f32 %v5308, %v5403
      %v5467 = vadd.f32 %v5309, %v5402
      %v5468 = vadd.f32 %v5310, %v5406
      %v5469 = vadd.f32 %v5311, %v5405
      %v5470 = vadd.f32 %v5312, %v5409
      %v5471 = vadd.f32 %v5313, %v5408
      %v5472 = vadd.f32 %v5314, %v5412
      %v5473 = vadd.f32 %v5315, %v5411
      %v5474 = vadd.f32 %v5316, %v5415
      %v5475 = vadd.f32 %v5317, %v5414
      %v5476 = vadd.f32 %v5318, %v5418
      %v5477 = vadd.f32 %v5319, %v5417
      %v5478 = vadd.f32 %v5320, %v5421
      %v5479 = vadd.f32 %v5321, %v5420
      %v5480 = vadd.f32 %v5322, %v5424
      %v5481 = vadd.f32 %v5323, %v5423
      %v5482 = vadd.f32 %v5324, %v5427
      %v5483 = vadd.f32 %v5325, %v5426
      %v5484 = vlaneseq
      %v5485 = vshrl.u32 %v5484, 7
      %v5486 = vsub.s32 6, %v5485
      %v5487 = vrot.slane %v328, %v5486
      %v5488 = vmul.f32 %v277, %v5487
      %v5489 = vmul.f32 %v278, %v5487
      %v5490 = vmul.f32 %v280, %v5487
      %v5491 = vmul.f32 %v281, %v5487
      %v5492 = vmul.f32 %v283, %v5487
      %v5493 = vmul.f32 %v284, %v5487
      %v5494 = vmul.f32 %v286, %v5487
      %v5495 = vmul.f32 %v287, %v5487
      %v5496 = vmul.f32 %v289, %v5487
      %v5497 = vmul.f32 %v290, %v5487
      %v5498 = vmul.f32 %v292, %v5487
      %v5499 = vmul.f32 %v293, %v5487
      %v5500 = vmul.f32 %v295, %v5487
      %v5501 = vmul.f32 %v296, %v5487
      %v5502 = vmul.f32 %v298, %v5487
      %v5503 = vmul.f32 %v299, %v5487
      %v5504 = vmul.f32 %v301, %v5487
      %v5505 = vmul.f32 %v302, %v5487
      %v5506 = vmul.f32 %v304, %v5487
      %v5507 = vmul.f32 %v305, %v5487
      %v5508 = vmul.f32 %v307, %v5487
      %v5509 = vmul.f32 %v308, %v5487
      %v5510 = vmul.f32 %v310, %v5487
      %v5511 = vmul.f32 %v311, %v5487
      %v5512 = vmul.f32 %v313, %v5487
      %v5513 = vmul.f32 %v314, %v5487
      %v5514 = vmul.f32 %v316, %v5487
      %v5515 = vmul.f32 %v317, %v5487
      %v5544 = vrot.slane %v5488, 2
      %v5545 = vrot.slane %v5489, 2
      %v5546 = vsel %vm611, %v5544, %v5545
      %v5547 = vrot.slane %v5490, 2
      %v5548 = vrot.slane %v5491, 2
      %v5549 = vsel %vm611, %v5547, %v5548
      %v5550 = vrot.slane %v5492, 2
      %v5551 = vrot.slane %v5493, 2
      %v5552 = vsel %vm611, %v5550, %v5551
      %v5553 = vrot.slane %v5494, 2
      %v5554 = vrot.slane %v5495, 2
      %v5555 = vsel %vm611, %v5553, %v5554
      %v5556 = vrot.slane %v5496, 2
      %v5557 = vrot.slane %v5497, 2
      %v5558 = vsel %vm611, %v5556, %v5557
      %v5559 = vrot.slane %v5498, 2
      %v5560 = vrot.slane %v5499, 2
      %v5561 = vsel %vm611, %v5559, %v5560
      %v5562 = vrot.slane %v5500, 2
      %v5563 = vrot.slane %v5501, 2
      %v5564 = vsel %vm611, %v5562, %v5563
      %v5565 = vrot.slane %v5502, 2
      %v5566 = vrot.slane %v5503, 2
      %v5567 = vsel %vm611, %v5565, %v5566
      %v5568 = vrot.slane %v5504, 2
      %v5569 = vrot.slane %v5505, 2
      %v5570 = vsel %vm611, %v5568, %v5569
      %v5571 = vrot.slane %v5506, 2
      %v5572 = vrot.slane %v5507, 2
      %v5573 = vsel %vm611, %v5571, %v5572
      %v5574 = vrot.slane %v5508, 2
      %v5575 = vrot.slane %v5509, 2
      %v5576 = vsel %vm611, %v5574, %v5575
      %v5577 = vrot.slane %v5510, 2
      %v5578 = vrot.slane %v5511, 2
      %v5579 = vsel %vm611, %v5577, %v5578
      %v5580 = vrot.slane %v5512, 2
      %v5581 = vrot.slane %v5513, 2
      %v5582 = vsel %vm611, %v5580, %v5581
      %v5583 = vrot.slane %v5514, 2
      %v5584 = vrot.slane %v5515, 2
      %v5585 = vsel %vm611, %v5583, %v5584
      %v5614 = vadd.f32 %v5456, %v5546
      %v5615 = vadd.f32 %v5457, %v5545
      %v5616 = vadd.f32 %v5458, %v5549
      %v5617 = vadd.f32 %v5459, %v5548
      %v5618 = vadd.f32 %v5460, %v5552
      %v5619 = vadd.f32 %v5461, %v5551
      %v5620 = vadd.f32 %v5462, %v5555
      %v5621 = vadd.f32 %v5463, %v5554
      %v5622 = vadd.f32 %v5464, %v5558
      %v5623 = vadd.f32 %v5465, %v5557
      %v5624 = vadd.f32 %v5466, %v5561
      %v5625 = vadd.f32 %v5467, %v5560
      %v5626 = vadd.f32 %v5468, %v5564
      %v5627 = vadd.f32 %v5469, %v5563
      %v5628 = vadd.f32 %v5470, %v5567
      %v5629 = vadd.f32 %v5471, %v5566
      %v5630 = vadd.f32 %v5472, %v5570
      %v5631 = vadd.f32 %v5473, %v5569
      %v5632 = vadd.f32 %v5474, %v5573
      %v5633 = vadd.f32 %v5475, %v5572
      %v5634 = vadd.f32 %v5476, %v5576
      %v5635 = vadd.f32 %v5477, %v5575
      %v5636 = vadd.f32 %v5478, %v5579
      %v5637 = vadd.f32 %v5479, %v5578
      %v5638 = vadd.f32 %v5480, %v5582
      %v5639 = vadd.f32 %v5481, %v5581
      %v5640 = vadd.f32 %v5482, %v5585
      %v5641 = vadd.f32 %v5483, %v5584
      %v5642 = vlaneseq
      %v5643 = vshrl.u32 %v5642, 7
      %v5644 = vsub.s32 7, %v5643
      %v5645 = vrot.slane %v328, %v5644
      %v5646 = vmul.f32 %v277, %v5645
      %v5647 = vmul.f32 %v278, %v5645
      %v5648 = vmul.f32 %v279, %v5645
      %v5649 = vmul.f32 %v280, %v5645
      %v5650 = vmul.f32 %v281, %v5645
      %v5651 = vmul.f32 %v282, %v5645
      %v5652 = vmul.f32 %v283, %v5645
      %v5653 = vmul.f32 %v284, %v5645
      %v5654 = vmul.f32 %v285, %v5645
      %v5655 = vmul.f32 %v286, %v5645
      %v5656 = vmul.f32 %v287, %v5645
      %v5657 = vmul.f32 %v288, %v5645
      %v5658 = vmul.f32 %v289, %v5645
      %v5659 = vmul.f32 %v290, %v5645
      %v5660 = vmul.f32 %v291, %v5645
      %v5661 = vmul.f32 %v292, %v5645
      %v5662 = vmul.f32 %v293, %v5645
      %v5663 = vmul.f32 %v294, %v5645
      %v5664 = vmul.f32 %v295, %v5645
      %v5665 = vmul.f32 %v296, %v5645
      %v5666 = vmul.f32 %v297, %v5645
      %v5667 = vmul.f32 %v298, %v5645
      %v5668 = vmul.f32 %v299, %v5645
      %v5669 = vmul.f32 %v300, %v5645
      %v5670 = vmul.f32 %v301, %v5645
      %v5671 = vmul.f32 %v302, %v5645
      %v5672 = vmul.f32 %v303, %v5645
      %v5673 = vmul.f32 %v304, %v5645
      %v5674 = vmul.f32 %v305, %v5645
      %v5675 = vmul.f32 %v306, %v5645
      %v5676 = vmul.f32 %v307, %v5645
      %v5677 = vmul.f32 %v308, %v5645
      %v5678 = vmul.f32 %v309, %v5645
      %v5679 = vmul.f32 %v310, %v5645
      %v5680 = vmul.f32 %v311, %v5645
      %v5681 = vmul.f32 %v312, %v5645
      %v5682 = vmul.f32 %v313, %v5645
      %v5683 = vmul.f32 %v314, %v5645
      %v5684 = vmul.f32 %v315, %v5645
      %v5685 = vmul.f32 %v316, %v5645
      %v5686 = vmul.f32 %v317, %v5645
      %v5687 = vmul.f32 %v318, %v5645
      %v5730 = vrot.slane %v5646, 3
      %v5731 = vrot.slane %v5647, 3
      %v5732 = vsel %vm798, %v5730, %v5731
      %v5733 = vrot.slane %v5648, 3
      %v5734 = vsel %vm798, %v5731, %v5733
      %v5735 = vrot.slane %v5649, 3
      %v5736 = vrot.slane %v5650, 3
      %v5737 = vsel %vm798, %v5735, %v5736
      %v5738 = vrot.slane %v5651, 3
      %v5739 = vsel %vm798, %v5736, %v5738
      %v5740 = vrot.slane %v5652, 3
      %v5741 = vrot.slane %v5653, 3
      %v5742 = vsel %vm798, %v5740, %v5741
      %v5743 = vrot.slane %v5654, 3
      %v5744 = vsel %vm798, %v5741, %v5743
      %v5745 = vrot.slane %v5655, 3
      %v5746 = vrot.slane %v5656, 3
      %v5747 = vsel %vm798, %v5745, %v5746
      %v5748 = vrot.slane %v5657, 3
      %v5749 = vsel %vm798, %v5746, %v5748
      %v5750 = vrot.slane %v5658, 3
      %v5751 = vrot.slane %v5659, 3
      %v5752 = vsel %vm798, %v5750, %v5751
      %v5753 = vrot.slane %v5660, 3
      %v5754 = vsel %vm798, %v5751, %v5753
      %v5755 = vrot.slane %v5661, 3
      %v5756 = vrot.slane %v5662, 3
      %v5757 = vsel %vm798, %v5755, %v5756
      %v5758 = vrot.slane %v5663, 3
      %v5759 = vsel %vm798, %v5756, %v5758
      %v5760 = vrot.slane %v5664, 3
      %v5761 = vrot.slane %v5665, 3
      %v5762 = vsel %vm798, %v5760, %v5761
      %v5763 = vrot.slane %v5666, 3
      %v5764 = vsel %vm798, %v5761, %v5763
      %v5765 = vrot.slane %v5667, 3
      %v5766 = vrot.slane %v5668, 3
      %v5767 = vsel %vm798, %v5765, %v5766
      %v5768 = vrot.slane %v5669, 3
      %v5769 = vsel %vm798, %v5766, %v5768
      %v5770 = vrot.slane %v5670, 3
      %v5771 = vrot.slane %v5671, 3
      %v5772 = vsel %vm798, %v5770, %v5771
      %v5773 = vrot.slane %v5672, 3
      %v5774 = vsel %vm798, %v5771, %v5773
      %v5775 = vrot.slane %v5673, 3
      %v5776 = vrot.slane %v5674, 3
      %v5777 = vsel %vm798, %v5775, %v5776
      %v5778 = vrot.slane %v5675, 3
      %v5779 = vsel %vm798, %v5776, %v5778
      %v5780 = vrot.slane %v5676, 3
      %v5781 = vrot.slane %v5677, 3
      %v5782 = vsel %vm798, %v5780, %v5781
      %v5783 = vrot.slane %v5678, 3
      %v5784 = vsel %vm798, %v5781, %v5783
      %v5785 = vrot.slane %v5679, 3
      %v5786 = vrot.slane %v5680, 3
      %v5787 = vsel %vm798, %v5785, %v5786
      %v5788 = vrot.slane %v5681, 3
      %v5789 = vsel %vm798, %v5786, %v5788
      %v5790 = vrot.slane %v5682, 3
      %v5791 = vrot.slane %v5683, 3
      %v5792 = vsel %vm798, %v5790, %v5791
      %v5793 = vrot.slane %v5684, 3
      %v5794 = vsel %vm798, %v5791, %v5793
      %v5795 = vrot.slane %v5685, 3
      %v5796 = vrot.slane %v5686, 3
      %v5797 = vsel %vm798, %v5795, %v5796
      %v5798 = vrot.slane %v5687, 3
      %v5799 = vsel %vm798, %v5796, %v5798
      %v5828 = vadd.f32 %v5614, %v5732
      %v5829 = vadd.f32 %v5615, %v5734
      %v5830 = vadd.f32 %v5616, %v5737
      %v5831 = vadd.f32 %v5617, %v5739
      %v5832 = vadd.f32 %v5618, %v5742
      %v5833 = vadd.f32 %v5619, %v5744
      %v5834 = vadd.f32 %v5620, %v5747
      %v5835 = vadd.f32 %v5621, %v5749
      %v5836 = vadd.f32 %v5622, %v5752
      %v5837 = vadd.f32 %v5623, %v5754
      %v5838 = vadd.f32 %v5624, %v5757
      %v5839 = vadd.f32 %v5625, %v5759
      %v5840 = vadd.f32 %v5626, %v5762
      %v5841 = vadd.f32 %v5627, %v5764
      %v5842 = vadd.f32 %v5628, %v5767
      %v5843 = vadd.f32 %v5629, %v5769
      %v5844 = vadd.f32 %v5630, %v5772
      %v5845 = vadd.f32 %v5631, %v5774
      %v5846 = vadd.f32 %v5632, %v5777
      %v5847 = vadd.f32 %v5633, %v5779
      %v5848 = vadd.f32 %v5634, %v5782
      %v5849 = vadd.f32 %v5635, %v5784
      %v5850 = vadd.f32 %v5636, %v5787
      %v5851 = vadd.f32 %v5637, %v5789
      %v5852 = vadd.f32 %v5638, %v5792
      %v5853 = vadd.f32 %v5639, %v5794
      %v5854 = vadd.f32 %v5640, %v5797
      %v5855 = vadd.f32 %v5641, %v5799
      %v5856 = vlaneseq
      %v5857 = vshrl.u32 %v5856, 7
      %v5858 = vsub.s32 0, %v5857
      %v5859 = vrot.slane %v329, %v5858
      %v5860 = vmul.f32 %v277, %v5859
      %v5861 = vmul.f32 %v278, %v5859
      %v5862 = vmul.f32 %v279, %v5859
      %v5863 = vmul.f32 %v280, %v5859
      %v5864 = vmul.f32 %v281, %v5859
      %v5865 = vmul.f32 %v282, %v5859
      %v5866 = vmul.f32 %v283, %v5859
      %v5867 = vmul.f32 %v284, %v5859
      %v5868 = vmul.f32 %v285, %v5859
      %v5869 = vmul.f32 %v286, %v5859
      %v5870 = vmul.f32 %v287, %v5859
      %v5871 = vmul.f32 %v288, %v5859
      %v5872 = vmul.f32 %v289, %v5859
      %v5873 = vmul.f32 %v290, %v5859
      %v5874 = vmul.f32 %v291, %v5859
      %v5875 = vmul.f32 %v292, %v5859
      %v5876 = vmul.f32 %v293, %v5859
      %v5877 = vmul.f32 %v294, %v5859
      %v5878 = vmul.f32 %v295, %v5859
      %v5879 = vmul.f32 %v296, %v5859
      %v5880 = vmul.f32 %v297, %v5859
      %v5881 = vmul.f32 %v298, %v5859
      %v5882 = vmul.f32 %v299, %v5859
      %v5883 = vmul.f32 %v300, %v5859
      %v5884 = vmul.f32 %v301, %v5859
      %v5885 = vmul.f32 %v302, %v5859
      %v5886 = vmul.f32 %v303, %v5859
      %v5887 = vmul.f32 %v304, %v5859
      %v5888 = vmul.f32 %v305, %v5859
      %v5889 = vmul.f32 %v306, %v5859
      %v5890 = vmul.f32 %v307, %v5859
      %v5891 = vmul.f32 %v308, %v5859
      %v5892 = vmul.f32 %v309, %v5859
      %v5893 = vmul.f32 %v310, %v5859
      %v5894 = vmul.f32 %v311, %v5859
      %v5895 = vmul.f32 %v312, %v5859
      %v5896 = vmul.f32 %v313, %v5859
      %v5897 = vmul.f32 %v314, %v5859
      %v5898 = vmul.f32 %v315, %v5859
      %v5899 = vmul.f32 %v316, %v5859
      %v5900 = vmul.f32 %v317, %v5859
      %v5901 = vmul.f32 %v318, %v5859
      %v5944 = vrot.slane %v5860, 4
      %v5945 = vrot.slane %v5861, 4
      %v5946 = vsel %vm1013, %v5944, %v5945
      %v5947 = vrot.slane %v5862, 4
      %v5948 = vsel %vm1013, %v5945, %v5947
      %v5949 = vrot.slane %v5863, 4
      %v5950 = vrot.slane %v5864, 4
      %v5951 = vsel %vm1013, %v5949, %v5950
      %v5952 = vrot.slane %v5865, 4
      %v5953 = vsel %vm1013, %v5950, %v5952
      %v5954 = vrot.slane %v5866, 4
      %v5955 = vrot.slane %v5867, 4
      %v5956 = vsel %vm1013, %v5954, %v5955
      %v5957 = vrot.slane %v5868, 4
      %v5958 = vsel %vm1013, %v5955, %v5957
      %v5959 = vrot.slane %v5869, 4
      %v5960 = vrot.slane %v5870, 4
      %v5961 = vsel %vm1013, %v5959, %v5960
      %v5962 = vrot.slane %v5871, 4
      %v5963 = vsel %vm1013, %v5960, %v5962
      %v5964 = vrot.slane %v5872, 4
      %v5965 = vrot.slane %v5873, 4
      %v5966 = vsel %vm1013, %v5964, %v5965
      %v5967 = vrot.slane %v5874, 4
      %v5968 = vsel %vm1013, %v5965, %v5967
      %v5969 = vrot.slane %v5875, 4
      %v5970 = vrot.slane %v5876, 4
      %v5971 = vsel %vm1013, %v5969, %v5970
      %v5972 = vrot.slane %v5877, 4
      %v5973 = vsel %vm1013, %v5970, %v5972
      %v5974 = vrot.slane %v5878, 4
      %v5975 = vrot.slane %v5879, 4
      %v5976 = vsel %vm1013, %v5974, %v5975
      %v5977 = vrot.slane %v5880, 4
      %v5978 = vsel %vm1013, %v5975, %v5977
      %v5979 = vrot.slane %v5881, 4
      %v5980 = vrot.slane %v5882, 4
      %v5981 = vsel %vm1013, %v5979, %v5980
      %v5982 = vrot.slane %v5883, 4
      %v5983 = vsel %vm1013, %v5980, %v5982
      %v5984 = vrot.slane %v5884, 4
      %v5985 = vrot.slane %v5885, 4
      %v5986 = vsel %vm1013, %v5984, %v5985
      %v5987 = vrot.slane %v5886, 4
      %v5988 = vsel %vm1013, %v5985, %v5987
      %v5989 = vrot.slane %v5887, 4
      %v5990 = vrot.slane %v5888, 4
      %v5991 = vsel %vm1013, %v5989, %v5990
      %v5992 = vrot.slane %v5889, 4
      %v5993 = vsel %vm1013, %v5990, %v5992
      %v5994 = vrot.slane %v5890, 4
      %v5995 = vrot.slane %v5891, 4
      %v5996 = vsel %vm1013, %v5994, %v5995
      %v5997 = vrot.slane %v5892, 4
      %v5998 = vsel %vm1013, %v5995, %v5997
      %v5999 = vrot.slane %v5893, 4
      %v6000 = vrot.slane %v5894, 4
      %v6001 = vsel %vm1013, %v5999, %v6000
      %v6002 = vrot.slane %v5895, 4
      %v6003 = vsel %vm1013, %v6000, %v6002
      %v6004 = vrot.slane %v5896, 4
      %v6005 = vrot.slane %v5897, 4
      %v6006 = vsel %vm1013, %v6004, %v6005
      %v6007 = vrot.slane %v5898, 4
      %v6008 = vsel %vm1013, %v6005, %v6007
      %v6009 = vrot.slane %v5899, 4
      %v6010 = vrot.slane %v5900, 4
      %v6011 = vsel %vm1013, %v6009, %v6010
      %v6012 = vrot.slane %v5901, 4
      %v6013 = vsel %vm1013, %v6010, %v6012
      %v6042 = vadd.f32 %v5828, %v5946
      %v6043 = vadd.f32 %v5829, %v5948
      %v6044 = vadd.f32 %v5830, %v5951
      %v6045 = vadd.f32 %v5831, %v5953
      %v6046 = vadd.f32 %v5832, %v5956
      %v6047 = vadd.f32 %v5833, %v5958
      %v6048 = vadd.f32 %v5834, %v5961
      %v6049 = vadd.f32 %v5835, %v5963
      %v6050 = vadd.f32 %v5836, %v5966
      %v6051 = vadd.f32 %v5837, %v5968
      %v6052 = vadd.f32 %v5838, %v5971
      %v6053 = vadd.f32 %v5839, %v5973
      %v6054 = vadd.f32 %v5840, %v5976
      %v6055 = vadd.f32 %v5841, %v5978
      %v6056 = vadd.f32 %v5842, %v5981
      %v6057 = vadd.f32 %v5843, %v5983
      %v6058 = vadd.f32 %v5844, %v5986
      %v6059 = vadd.f32 %v5845, %v5988
      %v6060 = vadd.f32 %v5846, %v5991
      %v6061 = vadd.f32 %v5847, %v5993
      %v6062 = vadd.f32 %v5848, %v5996
      %v6063 = vadd.f32 %v5849, %v5998
      %v6064 = vadd.f32 %v5850, %v6001
      %v6065 = vadd.f32 %v5851, %v6003
      %v6066 = vadd.f32 %v5852, %v6006
      %v6067 = vadd.f32 %v5853, %v6008
      %v6068 = vadd.f32 %v5854, %v6011
      %v6069 = vadd.f32 %v5855, %v6013
      %v6070 = vlaneseq
      %v6071 = vshrl.u32 %v6070, 7
      %v6072 = vsub.s32 1, %v6071
      %v6073 = vrot.slane %v329, %v6072
      %v6074 = vmul.f32 %v277, %v6073
      %v6075 = vmul.f32 %v278, %v6073
      %v6076 = vmul.f32 %v279, %v6073
      %v6077 = vmul.f32 %v280, %v6073
      %v6078 = vmul.f32 %v281, %v6073
      %v6079 = vmul.f32 %v282, %v6073
      %v6080 = vmul.f32 %v283, %v6073
      %v6081 = vmul.f32 %v284, %v6073
      %v6082 = vmul.f32 %v285, %v6073
      %v6083 = vmul.f32 %v286, %v6073
      %v6084 = vmul.f32 %v287, %v6073
      %v6085 = vmul.f32 %v288, %v6073
      %v6086 = vmul.f32 %v289, %v6073
      %v6087 = vmul.f32 %v290, %v6073
      %v6088 = vmul.f32 %v291, %v6073
      %v6089 = vmul.f32 %v292, %v6073
      %v6090 = vmul.f32 %v293, %v6073
      %v6091 = vmul.f32 %v294, %v6073
      %v6092 = vmul.f32 %v295, %v6073
      %v6093 = vmul.f32 %v296, %v6073
      %v6094 = vmul.f32 %v297, %v6073
      %v6095 = vmul.f32 %v298, %v6073
      %v6096 = vmul.f32 %v299, %v6073
      %v6097 = vmul.f32 %v300, %v6073
      %v6098 = vmul.f32 %v301, %v6073
      %v6099 = vmul.f32 %v302, %v6073
      %v6100 = vmul.f32 %v303, %v6073
      %v6101 = vmul.f32 %v304, %v6073
      %v6102 = vmul.f32 %v305, %v6073
      %v6103 = vmul.f32 %v306, %v6073
      %v6104 = vmul.f32 %v307, %v6073
      %v6105 = vmul.f32 %v308, %v6073
      %v6106 = vmul.f32 %v309, %v6073
      %v6107 = vmul.f32 %v310, %v6073
      %v6108 = vmul.f32 %v311, %v6073
      %v6109 = vmul.f32 %v312, %v6073
      %v6110 = vmul.f32 %v313, %v6073
      %v6111 = vmul.f32 %v314, %v6073
      %v6112 = vmul.f32 %v315, %v6073
      %v6113 = vmul.f32 %v316, %v6073
      %v6114 = vmul.f32 %v317, %v6073
      %v6115 = vmul.f32 %v318, %v6073
      %v6158 = vrot.slane %v6074, 5
      %v6159 = vrot.slane %v6075, 5
      %v6160 = vsel %vm1228, %v6158, %v6159
      %v6161 = vrot.slane %v6076, 5
      %v6162 = vsel %vm1228, %v6159, %v6161
      %v6163 = vrot.slane %v6077, 5
      %v6164 = vrot.slane %v6078, 5
      %v6165 = vsel %vm1228, %v6163, %v6164
      %v6166 = vrot.slane %v6079, 5
      %v6167 = vsel %vm1228, %v6164, %v6166
      %v6168 = vrot.slane %v6080, 5
      %v6169 = vrot.slane %v6081, 5
      %v6170 = vsel %vm1228, %v6168, %v6169
      %v6171 = vrot.slane %v6082, 5
      %v6172 = vsel %vm1228, %v6169, %v6171
      %v6173 = vrot.slane %v6083, 5
      %v6174 = vrot.slane %v6084, 5
      %v6175 = vsel %vm1228, %v6173, %v6174
      %v6176 = vrot.slane %v6085, 5
      %v6177 = vsel %vm1228, %v6174, %v6176
      %v6178 = vrot.slane %v6086, 5
      %v6179 = vrot.slane %v6087, 5
      %v6180 = vsel %vm1228, %v6178, %v6179
      %v6181 = vrot.slane %v6088, 5
      %v6182 = vsel %vm1228, %v6179, %v6181
      %v6183 = vrot.slane %v6089, 5
      %v6184 = vrot.slane %v6090, 5
      %v6185 = vsel %vm1228, %v6183, %v6184
      %v6186 = vrot.slane %v6091, 5
      %v6187 = vsel %vm1228, %v6184, %v6186
      %v6188 = vrot.slane %v6092, 5
      %v6189 = vrot.slane %v6093, 5
      %v6190 = vsel %vm1228, %v6188, %v6189
      %v6191 = vrot.slane %v6094, 5
      %v6192 = vsel %vm1228, %v6189, %v6191
      %v6193 = vrot.slane %v6095, 5
      %v6194 = vrot.slane %v6096, 5
      %v6195 = vsel %vm1228, %v6193, %v6194
      %v6196 = vrot.slane %v6097, 5
      %v6197 = vsel %vm1228, %v6194, %v6196
      %v6198 = vrot.slane %v6098, 5
      %v6199 = vrot.slane %v6099, 5
      %v6200 = vsel %vm1228, %v6198, %v6199
      %v6201 = vrot.slane %v6100, 5
      %v6202 = vsel %vm1228, %v6199, %v6201
      %v6203 = vrot.slane %v6101, 5
      %v6204 = vrot.slane %v6102, 5
      %v6205 = vsel %vm1228, %v6203, %v6204
      %v6206 = vrot.slane %v6103, 5
      %v6207 = vsel %vm1228, %v6204, %v6206
      %v6208 = vrot.slane %v6104, 5
      %v6209 = vrot.slane %v6105, 5
      %v6210 = vsel %vm1228, %v6208, %v6209
      %v6211 = vrot.slane %v6106, 5
      %v6212 = vsel %vm1228, %v6209, %v6211
      %v6213 = vrot.slane %v6107, 5
      %v6214 = vrot.slane %v6108, 5
      %v6215 = vsel %vm1228, %v6213, %v6214
      %v6216 = vrot.slane %v6109, 5
      %v6217 = vsel %vm1228, %v6214, %v6216
      %v6218 = vrot.slane %v6110, 5
      %v6219 = vrot.slane %v6111, 5
      %v6220 = vsel %vm1228, %v6218, %v6219
      %v6221 = vrot.slane %v6112, 5
      %v6222 = vsel %vm1228, %v6219, %v6221
      %v6223 = vrot.slane %v6113, 5
      %v6224 = vrot.slane %v6114, 5
      %v6225 = vsel %vm1228, %v6223, %v6224
      %v6226 = vrot.slane %v6115, 5
      %v6227 = vsel %vm1228, %v6224, %v6226
      %v6256 = vadd.f32 %v6042, %v6160
      %v6257 = vadd.f32 %v6043, %v6162
      %v6258 = vadd.f32 %v6044, %v6165
      %v6259 = vadd.f32 %v6045, %v6167
      %v6260 = vadd.f32 %v6046, %v6170
      %v6261 = vadd.f32 %v6047, %v6172
      %v6262 = vadd.f32 %v6048, %v6175
      %v6263 = vadd.f32 %v6049, %v6177
      %v6264 = vadd.f32 %v6050, %v6180
      %v6265 = vadd.f32 %v6051, %v6182
      %v6266 = vadd.f32 %v6052, %v6185
      %v6267 = vadd.f32 %v6053, %v6187
      %v6268 = vadd.f32 %v6054, %v6190
      %v6269 = vadd.f32 %v6055, %v6192
      %v6270 = vadd.f32 %v6056, %v6195
      %v6271 = vadd.f32 %v6057, %v6197
      %v6272 = vadd.f32 %v6058, %v6200
      %v6273 = vadd.f32 %v6059, %v6202
      %v6274 = vadd.f32 %v6060, %v6205
      %v6275 = vadd.f32 %v6061, %v6207
      %v6276 = vadd.f32 %v6062, %v6210
      %v6277 = vadd.f32 %v6063, %v6212
      %v6278 = vadd.f32 %v6064, %v6215
      %v6279 = vadd.f32 %v6065, %v6217
      %v6280 = vadd.f32 %v6066, %v6220
      %v6281 = vadd.f32 %v6067, %v6222
      %v6282 = vadd.f32 %v6068, %v6225
      %v6283 = vadd.f32 %v6069, %v6227
      %v6284 = vlaneseq
      %v6285 = vshrl.u32 %v6284, 7
      %v6286 = vsub.s32 2, %v6285
      %v6287 = vrot.slane %v329, %v6286
      %v6288 = vmul.f32 %v277, %v6287
      %v6289 = vmul.f32 %v278, %v6287
      %v6290 = vmul.f32 %v279, %v6287
      %v6291 = vmul.f32 %v280, %v6287
      %v6292 = vmul.f32 %v281, %v6287
      %v6293 = vmul.f32 %v282, %v6287
      %v6294 = vmul.f32 %v283, %v6287
      %v6295 = vmul.f32 %v284, %v6287
      %v6296 = vmul.f32 %v285, %v6287
      %v6297 = vmul.f32 %v286, %v6287
      %v6298 = vmul.f32 %v287, %v6287
      %v6299 = vmul.f32 %v288, %v6287
      %v6300 = vmul.f32 %v289, %v6287
      %v6301 = vmul.f32 %v290, %v6287
      %v6302 = vmul.f32 %v291, %v6287
      %v6303 = vmul.f32 %v292, %v6287
      %v6304 = vmul.f32 %v293, %v6287
      %v6305 = vmul.f32 %v294, %v6287
      %v6306 = vmul.f32 %v295, %v6287
      %v6307 = vmul.f32 %v296, %v6287
      %v6308 = vmul.f32 %v297, %v6287
      %v6309 = vmul.f32 %v298, %v6287
      %v6310 = vmul.f32 %v299, %v6287
      %v6311 = vmul.f32 %v300, %v6287
      %v6312 = vmul.f32 %v301, %v6287
      %v6313 = vmul.f32 %v302, %v6287
      %v6314 = vmul.f32 %v303, %v6287
      %v6315 = vmul.f32 %v304, %v6287
      %v6316 = vmul.f32 %v305, %v6287
      %v6317 = vmul.f32 %v306, %v6287
      %v6318 = vmul.f32 %v307, %v6287
      %v6319 = vmul.f32 %v308, %v6287
      %v6320 = vmul.f32 %v309, %v6287
      %v6321 = vmul.f32 %v310, %v6287
      %v6322 = vmul.f32 %v311, %v6287
      %v6323 = vmul.f32 %v312, %v6287
      %v6324 = vmul.f32 %v313, %v6287
      %v6325 = vmul.f32 %v314, %v6287
      %v6326 = vmul.f32 %v315, %v6287
      %v6327 = vmul.f32 %v316, %v6287
      %v6328 = vmul.f32 %v317, %v6287
      %v6329 = vmul.f32 %v318, %v6287
      %v6372 = vrot.slane %v6288, 6
      %v6373 = vrot.slane %v6289, 6
      %v6374 = vsel %vm1443, %v6372, %v6373
      %v6375 = vrot.slane %v6290, 6
      %v6376 = vsel %vm1443, %v6373, %v6375
      %v6377 = vrot.slane %v6291, 6
      %v6378 = vrot.slane %v6292, 6
      %v6379 = vsel %vm1443, %v6377, %v6378
      %v6380 = vrot.slane %v6293, 6
      %v6381 = vsel %vm1443, %v6378, %v6380
      %v6382 = vrot.slane %v6294, 6
      %v6383 = vrot.slane %v6295, 6
      %v6384 = vsel %vm1443, %v6382, %v6383
      %v6385 = vrot.slane %v6296, 6
      %v6386 = vsel %vm1443, %v6383, %v6385
      %v6387 = vrot.slane %v6297, 6
      %v6388 = vrot.slane %v6298, 6
      %v6389 = vsel %vm1443, %v6387, %v6388
      %v6390 = vrot.slane %v6299, 6
      %v6391 = vsel %vm1443, %v6388, %v6390
      %v6392 = vrot.slane %v6300, 6
      %v6393 = vrot.slane %v6301, 6
      %v6394 = vsel %vm1443, %v6392, %v6393
      %v6395 = vrot.slane %v6302, 6
      %v6396 = vsel %vm1443, %v6393, %v6395
      %v6397 = vrot.slane %v6303, 6
      %v6398 = vrot.slane %v6304, 6
      %v6399 = vsel %vm1443, %v6397, %v6398
      %v6400 = vrot.slane %v6305, 6
      %v6401 = vsel %vm1443, %v6398, %v6400
      %v6402 = vrot.slane %v6306, 6
      %v6403 = vrot.slane %v6307, 6
      %v6404 = vsel %vm1443, %v6402, %v6403
      %v6405 = vrot.slane %v6308, 6
      %v6406 = vsel %vm1443, %v6403, %v6405
      %v6407 = vrot.slane %v6309, 6
      %v6408 = vrot.slane %v6310, 6
      %v6409 = vsel %vm1443, %v6407, %v6408
      %v6410 = vrot.slane %v6311, 6
      %v6411 = vsel %vm1443, %v6408, %v6410
      %v6412 = vrot.slane %v6312, 6
      %v6413 = vrot.slane %v6313, 6
      %v6414 = vsel %vm1443, %v6412, %v6413
      %v6415 = vrot.slane %v6314, 6
      %v6416 = vsel %vm1443, %v6413, %v6415
      %v6417 = vrot.slane %v6315, 6
      %v6418 = vrot.slane %v6316, 6
      %v6419 = vsel %vm1443, %v6417, %v6418
      %v6420 = vrot.slane %v6317, 6
      %v6421 = vsel %vm1443, %v6418, %v6420
      %v6422 = vrot.slane %v6318, 6
      %v6423 = vrot.slane %v6319, 6
      %v6424 = vsel %vm1443, %v6422, %v6423
      %v6425 = vrot.slane %v6320, 6
      %v6426 = vsel %vm1443, %v6423, %v6425
      %v6427 = vrot.slane %v6321, 6
      %v6428 = vrot.slane %v6322, 6
      %v6429 = vsel %vm1443, %v6427, %v6428
      %v6430 = vrot.slane %v6323, 6
      %v6431 = vsel %vm1443, %v6428, %v6430
      %v6432 = vrot.slane %v6324, 6
      %v6433 = vrot.slane %v6325, 6
      %v6434 = vsel %vm1443, %v6432, %v6433
      %v6435 = vrot.slane %v6326, 6
      %v6436 = vsel %vm1443, %v6433, %v6435
      %v6437 = vrot.slane %v6327, 6
      %v6438 = vrot.slane %v6328, 6
      %v6439 = vsel %vm1443, %v6437, %v6438
      %v6440 = vrot.slane %v6329, 6
      %v6441 = vsel %vm1443, %v6438, %v6440
      %v6470 = vadd.f32 %v6256, %v6374
      %v6471 = vadd.f32 %v6257, %v6376
      %v6472 = vadd.f32 %v6258, %v6379
      %v6473 = vadd.f32 %v6259, %v6381
      %v6474 = vadd.f32 %v6260, %v6384
      %v6475 = vadd.f32 %v6261, %v6386
      %v6476 = vadd.f32 %v6262, %v6389
      %v6477 = vadd.f32 %v6263, %v6391
      %v6478 = vadd.f32 %v6264, %v6394
      %v6479 = vadd.f32 %v6265, %v6396
      %v6480 = vadd.f32 %v6266, %v6399
      %v6481 = vadd.f32 %v6267, %v6401
      %v6482 = vadd.f32 %v6268, %v6404
      %v6483 = vadd.f32 %v6269, %v6406
      %v6484 = vadd.f32 %v6270, %v6409
      %v6485 = vadd.f32 %v6271, %v6411
      %v6486 = vadd.f32 %v6272, %v6414
      %v6487 = vadd.f32 %v6273, %v6416
      %v6488 = vadd.f32 %v6274, %v6419
      %v6489 = vadd.f32 %v6275, %v6421
      %v6490 = vadd.f32 %v6276, %v6424
      %v6491 = vadd.f32 %v6277, %v6426
      %v6492 = vadd.f32 %v6278, %v6429
      %v6493 = vadd.f32 %v6279, %v6431
      %v6494 = vadd.f32 %v6280, %v6434
      %v6495 = vadd.f32 %v6281, %v6436
      %v6496 = vadd.f32 %v6282, %v6439
      %v6497 = vadd.f32 %v6283, %v6441
      %v6498 = vlaneseq
      %v6499 = vshrl.u32 %v6498, 7
      %v6500 = vsub.s32 3, %v6499
      %v6501 = vrot.slane %v329, %v6500
      %v6502 = vmul.f32 %v280, %v6501
      %v6503 = vmul.f32 %v281, %v6501
      %v6504 = vmul.f32 %v283, %v6501
      %v6505 = vmul.f32 %v284, %v6501
      %v6506 = vmul.f32 %v286, %v6501
      %v6507 = vmul.f32 %v287, %v6501
      %v6508 = vmul.f32 %v289, %v6501
      %v6509 = vmul.f32 %v290, %v6501
      %v6510 = vmul.f32 %v292, %v6501
      %v6511 = vmul.f32 %v293, %v6501
      %v6512 = vmul.f32 %v295, %v6501
      %v6513 = vmul.f32 %v296, %v6501
      %v6514 = vmul.f32 %v298, %v6501
      %v6515 = vmul.f32 %v299, %v6501
      %v6516 = vmul.f32 %v301, %v6501
      %v6517 = vmul.f32 %v302, %v6501
      %v6518 = vmul.f32 %v304, %v6501
      %v6519 = vmul.f32 %v305, %v6501
      %v6520 = vmul.f32 %v307, %v6501
      %v6521 = vmul.f32 %v308, %v6501
      %v6522 = vmul.f32 %v310, %v6501
      %v6523 = vmul.f32 %v311, %v6501
      %v6524 = vmul.f32 %v313, %v6501
      %v6525 = vmul.f32 %v314, %v6501
      %v6526 = vmul.f32 %v316, %v6501
      %v6527 = vmul.f32 %v317, %v6501
      %v6528 = vmul.f32 %v319, %v6501
      %v6529 = vmul.f32 %v320, %v6501
      %v6530 = vadd.f32 %v6470, %v6502
      %v6531 = vadd.f32 %v6471, %v6503
      %v6532 = vadd.f32 %v6472, %v6504
      %v6533 = vadd.f32 %v6473, %v6505
      %v6534 = vadd.f32 %v6474, %v6506
      %v6535 = vadd.f32 %v6475, %v6507
      %v6536 = vadd.f32 %v6476, %v6508
      %v6537 = vadd.f32 %v6477, %v6509
      %v6538 = vadd.f32 %v6478, %v6510
      %v6539 = vadd.f32 %v6479, %v6511
      %v6540 = vadd.f32 %v6480, %v6512
      %v6541 = vadd.f32 %v6481, %v6513
      %v6542 = vadd.f32 %v6482, %v6514
      %v6543 = vadd.f32 %v6483, %v6515
      %v6544 = vadd.f32 %v6484, %v6516
      %v6545 = vadd.f32 %v6485, %v6517
      %v6546 = vadd.f32 %v6486, %v6518
      %v6547 = vadd.f32 %v6487, %v6519
      %v6548 = vadd.f32 %v6488, %v6520
      %v6549 = vadd.f32 %v6489, %v6521
      %v6550 = vadd.f32 %v6490, %v6522
      %v6551 = vadd.f32 %v6491, %v6523
      %v6552 = vadd.f32 %v6492, %v6524
      %v6553 = vadd.f32 %v6493, %v6525
      %v6554 = vadd.f32 %v6494, %v6526
      %v6555 = vadd.f32 %v6495, %v6527
      %v6556 = vadd.f32 %v6496, %v6528
      %v6557 = vadd.f32 %v6497, %v6529
      %v6558 = vlaneseq
      %v6559 = vshrl.u32 %v6558, 7
      %v6560 = vsub.s32 4, %v6559
      %v6561 = vrot.slane %v329, %v6560
      %v6562 = vmul.f32 %v280, %v6561
      %v6563 = vmul.f32 %v281, %v6561
      %v6564 = vmul.f32 %v283, %v6561
      %v6565 = vmul.f32 %v284, %v6561
      %v6566 = vmul.f32 %v286, %v6561
      %v6567 = vmul.f32 %v287, %v6561
      %v6568 = vmul.f32 %v289, %v6561
      %v6569 = vmul.f32 %v290, %v6561
      %v6570 = vmul.f32 %v292, %v6561
      %v6571 = vmul.f32 %v293, %v6561
      %v6572 = vmul.f32 %v295, %v6561
      %v6573 = vmul.f32 %v296, %v6561
      %v6574 = vmul.f32 %v298, %v6561
      %v6575 = vmul.f32 %v299, %v6561
      %v6576 = vmul.f32 %v301, %v6561
      %v6577 = vmul.f32 %v302, %v6561
      %v6578 = vmul.f32 %v304, %v6561
      %v6579 = vmul.f32 %v305, %v6561
      %v6580 = vmul.f32 %v307, %v6561
      %v6581 = vmul.f32 %v308, %v6561
      %v6582 = vmul.f32 %v310, %v6561
      %v6583 = vmul.f32 %v311, %v6561
      %v6584 = vmul.f32 %v313, %v6561
      %v6585 = vmul.f32 %v314, %v6561
      %v6586 = vmul.f32 %v316, %v6561
      %v6587 = vmul.f32 %v317, %v6561
      %v6588 = vmul.f32 %v319, %v6561
      %v6589 = vmul.f32 %v320, %v6561
      %v6618 = vrot.slane %v6562, 1
      %v6619 = vrot.slane %v6563, 1
      %v6620 = vsel %vm452, %v6618, %v6619
      %v6621 = vrot.slane %v6564, 1
      %v6622 = vrot.slane %v6565, 1
      %v6623 = vsel %vm452, %v6621, %v6622
      %v6624 = vrot.slane %v6566, 1
      %v6625 = vrot.slane %v6567, 1
      %v6626 = vsel %vm452, %v6624, %v6625
      %v6627 = vrot.slane %v6568, 1
      %v6628 = vrot.slane %v6569, 1
      %v6629 = vsel %vm452, %v6627, %v6628
      %v6630 = vrot.slane %v6570, 1
      %v6631 = vrot.slane %v6571, 1
      %v6632 = vsel %vm452, %v6630, %v6631
      %v6633 = vrot.slane %v6572, 1
      %v6634 = vrot.slane %v6573, 1
      %v6635 = vsel %vm452, %v6633, %v6634
      %v6636 = vrot.slane %v6574, 1
      %v6637 = vrot.slane %v6575, 1
      %v6638 = vsel %vm452, %v6636, %v6637
      %v6639 = vrot.slane %v6576, 1
      %v6640 = vrot.slane %v6577, 1
      %v6641 = vsel %vm452, %v6639, %v6640
      %v6642 = vrot.slane %v6578, 1
      %v6643 = vrot.slane %v6579, 1
      %v6644 = vsel %vm452, %v6642, %v6643
      %v6645 = vrot.slane %v6580, 1
      %v6646 = vrot.slane %v6581, 1
      %v6647 = vsel %vm452, %v6645, %v6646
      %v6648 = vrot.slane %v6582, 1
      %v6649 = vrot.slane %v6583, 1
      %v6650 = vsel %vm452, %v6648, %v6649
      %v6651 = vrot.slane %v6584, 1
      %v6652 = vrot.slane %v6585, 1
      %v6653 = vsel %vm452, %v6651, %v6652
      %v6654 = vrot.slane %v6586, 1
      %v6655 = vrot.slane %v6587, 1
      %v6656 = vsel %vm452, %v6654, %v6655
      %v6657 = vrot.slane %v6588, 1
      %v6658 = vrot.slane %v6589, 1
      %v6659 = vsel %vm452, %v6657, %v6658
      %v6688 = vadd.f32 %v6530, %v6620
      %v6689 = vadd.f32 %v6531, %v6619
      %v6690 = vadd.f32 %v6532, %v6623
      %v6691 = vadd.f32 %v6533, %v6622
      %v6692 = vadd.f32 %v6534, %v6626
      %v6693 = vadd.f32 %v6535, %v6625
      %v6694 = vadd.f32 %v6536, %v6629
      %v6695 = vadd.f32 %v6537, %v6628
      %v6696 = vadd.f32 %v6538, %v6632
      %v6697 = vadd.f32 %v6539, %v6631
      %v6698 = vadd.f32 %v6540, %v6635
      %v6699 = vadd.f32 %v6541, %v6634
      %v6700 = vadd.f32 %v6542, %v6638
      %v6701 = vadd.f32 %v6543, %v6637
      %v6702 = vadd.f32 %v6544, %v6641
      %v6703 = vadd.f32 %v6545, %v6640
      %v6704 = vadd.f32 %v6546, %v6644
      %v6705 = vadd.f32 %v6547, %v6643
      %v6706 = vadd.f32 %v6548, %v6647
      %v6707 = vadd.f32 %v6549, %v6646
      %v6708 = vadd.f32 %v6550, %v6650
      %v6709 = vadd.f32 %v6551, %v6649
      %v6710 = vadd.f32 %v6552, %v6653
      %v6711 = vadd.f32 %v6553, %v6652
      %v6712 = vadd.f32 %v6554, %v6656
      %v6713 = vadd.f32 %v6555, %v6655
      %v6714 = vadd.f32 %v6556, %v6659
      %v6715 = vadd.f32 %v6557, %v6658
      %v6716 = vlaneseq
      %v6717 = vshrl.u32 %v6716, 7
      %v6718 = vsub.s32 5, %v6717
      %v6719 = vrot.slane %v329, %v6718
      %v6720 = vmul.f32 %v280, %v6719
      %v6721 = vmul.f32 %v281, %v6719
      %v6722 = vmul.f32 %v283, %v6719
      %v6723 = vmul.f32 %v284, %v6719
      %v6724 = vmul.f32 %v286, %v6719
      %v6725 = vmul.f32 %v287, %v6719
      %v6726 = vmul.f32 %v289, %v6719
      %v6727 = vmul.f32 %v290, %v6719
      %v6728 = vmul.f32 %v292, %v6719
      %v6729 = vmul.f32 %v293, %v6719
      %v6730 = vmul.f32 %v295, %v6719
      %v6731 = vmul.f32 %v296, %v6719
      %v6732 = vmul.f32 %v298, %v6719
      %v6733 = vmul.f32 %v299, %v6719
      %v6734 = vmul.f32 %v301, %v6719
      %v6735 = vmul.f32 %v302, %v6719
      %v6736 = vmul.f32 %v304, %v6719
      %v6737 = vmul.f32 %v305, %v6719
      %v6738 = vmul.f32 %v307, %v6719
      %v6739 = vmul.f32 %v308, %v6719
      %v6740 = vmul.f32 %v310, %v6719
      %v6741 = vmul.f32 %v311, %v6719
      %v6742 = vmul.f32 %v313, %v6719
      %v6743 = vmul.f32 %v314, %v6719
      %v6744 = vmul.f32 %v316, %v6719
      %v6745 = vmul.f32 %v317, %v6719
      %v6746 = vmul.f32 %v319, %v6719
      %v6747 = vmul.f32 %v320, %v6719
      %v6776 = vrot.slane %v6720, 2
      %v6777 = vrot.slane %v6721, 2
      %v6778 = vsel %vm611, %v6776, %v6777
      %v6779 = vrot.slane %v6722, 2
      %v6780 = vrot.slane %v6723, 2
      %v6781 = vsel %vm611, %v6779, %v6780
      %v6782 = vrot.slane %v6724, 2
      %v6783 = vrot.slane %v6725, 2
      %v6784 = vsel %vm611, %v6782, %v6783
      %v6785 = vrot.slane %v6726, 2
      %v6786 = vrot.slane %v6727, 2
      %v6787 = vsel %vm611, %v6785, %v6786
      %v6788 = vrot.slane %v6728, 2
      %v6789 = vrot.slane %v6729, 2
      %v6790 = vsel %vm611, %v6788, %v6789
      %v6791 = vrot.slane %v6730, 2
      %v6792 = vrot.slane %v6731, 2
      %v6793 = vsel %vm611, %v6791, %v6792
      %v6794 = vrot.slane %v6732, 2
      %v6795 = vrot.slane %v6733, 2
      %v6796 = vsel %vm611, %v6794, %v6795
      %v6797 = vrot.slane %v6734, 2
      %v6798 = vrot.slane %v6735, 2
      %v6799 = vsel %vm611, %v6797, %v6798
      %v6800 = vrot.slane %v6736, 2
      %v6801 = vrot.slane %v6737, 2
      %v6802 = vsel %vm611, %v6800, %v6801
      %v6803 = vrot.slane %v6738, 2
      %v6804 = vrot.slane %v6739, 2
      %v6805 = vsel %vm611, %v6803, %v6804
      %v6806 = vrot.slane %v6740, 2
      %v6807 = vrot.slane %v6741, 2
      %v6808 = vsel %vm611, %v6806, %v6807
      %v6809 = vrot.slane %v6742, 2
      %v6810 = vrot.slane %v6743, 2
      %v6811 = vsel %vm611, %v6809, %v6810
      %v6812 = vrot.slane %v6744, 2
      %v6813 = vrot.slane %v6745, 2
      %v6814 = vsel %vm611, %v6812, %v6813
      %v6815 = vrot.slane %v6746, 2
      %v6816 = vrot.slane %v6747, 2
      %v6817 = vsel %vm611, %v6815, %v6816
      %v6846 = vadd.f32 %v6688, %v6778
      %v6847 = vadd.f32 %v6689, %v6777
      %v6848 = vadd.f32 %v6690, %v6781
      %v6849 = vadd.f32 %v6691, %v6780
      %v6850 = vadd.f32 %v6692, %v6784
      %v6851 = vadd.f32 %v6693, %v6783
      %v6852 = vadd.f32 %v6694, %v6787
      %v6853 = vadd.f32 %v6695, %v6786
      %v6854 = vadd.f32 %v6696, %v6790
      %v6855 = vadd.f32 %v6697, %v6789
      %v6856 = vadd.f32 %v6698, %v6793
      %v6857 = vadd.f32 %v6699, %v6792
      %v6858 = vadd.f32 %v6700, %v6796
      %v6859 = vadd.f32 %v6701, %v6795
      %v6860 = vadd.f32 %v6702, %v6799
      %v6861 = vadd.f32 %v6703, %v6798
      %v6862 = vadd.f32 %v6704, %v6802
      %v6863 = vadd.f32 %v6705, %v6801
      %v6864 = vadd.f32 %v6706, %v6805
      %v6865 = vadd.f32 %v6707, %v6804
      %v6866 = vadd.f32 %v6708, %v6808
      %v6867 = vadd.f32 %v6709, %v6807
      %v6868 = vadd.f32 %v6710, %v6811
      %v6869 = vadd.f32 %v6711, %v6810
      %v6870 = vadd.f32 %v6712, %v6814
      %v6871 = vadd.f32 %v6713, %v6813
      %v6872 = vadd.f32 %v6714, %v6817
      %v6873 = vadd.f32 %v6715, %v6816
      %v6874 = vlaneseq
      %v6875 = vshrl.u32 %v6874, 7
      %v6876 = vsub.s32 6, %v6875
      %v6877 = vrot.slane %v329, %v6876
      %v6878 = vmul.f32 %v280, %v6877
      %v6879 = vmul.f32 %v281, %v6877
      %v6880 = vmul.f32 %v282, %v6877
      %v6881 = vmul.f32 %v283, %v6877
      %v6882 = vmul.f32 %v284, %v6877
      %v6883 = vmul.f32 %v285, %v6877
      %v6884 = vmul.f32 %v286, %v6877
      %v6885 = vmul.f32 %v287, %v6877
      %v6886 = vmul.f32 %v288, %v6877
      %v6887 = vmul.f32 %v289, %v6877
      %v6888 = vmul.f32 %v290, %v6877
      %v6889 = vmul.f32 %v291, %v6877
      %v6890 = vmul.f32 %v292, %v6877
      %v6891 = vmul.f32 %v293, %v6877
      %v6892 = vmul.f32 %v294, %v6877
      %v6893 = vmul.f32 %v295, %v6877
      %v6894 = vmul.f32 %v296, %v6877
      %v6895 = vmul.f32 %v297, %v6877
      %v6896 = vmul.f32 %v298, %v6877
      %v6897 = vmul.f32 %v299, %v6877
      %v6898 = vmul.f32 %v300, %v6877
      %v6899 = vmul.f32 %v301, %v6877
      %v6900 = vmul.f32 %v302, %v6877
      %v6901 = vmul.f32 %v303, %v6877
      %v6902 = vmul.f32 %v304, %v6877
      %v6903 = vmul.f32 %v305, %v6877
      %v6904 = vmul.f32 %v306, %v6877
      %v6905 = vmul.f32 %v307, %v6877
      %v6906 = vmul.f32 %v308, %v6877
      %v6907 = vmul.f32 %v309, %v6877
      %v6908 = vmul.f32 %v310, %v6877
      %v6909 = vmul.f32 %v311, %v6877
      %v6910 = vmul.f32 %v312, %v6877
      %v6911 = vmul.f32 %v313, %v6877
      %v6912 = vmul.f32 %v314, %v6877
      %v6913 = vmul.f32 %v315, %v6877
      %v6914 = vmul.f32 %v316, %v6877
      %v6915 = vmul.f32 %v317, %v6877
      %v6916 = vmul.f32 %v318, %v6877
      %v6917 = vmul.f32 %v319, %v6877
      %v6918 = vmul.f32 %v320, %v6877
      %v6919 = vmul.f32 %v321, %v6877
      %v6962 = vrot.slane %v6878, 3
      %v6963 = vrot.slane %v6879, 3
      %v6964 = vsel %vm798, %v6962, %v6963
      %v6965 = vrot.slane %v6880, 3
      %v6966 = vsel %vm798, %v6963, %v6965
      %v6967 = vrot.slane %v6881, 3
      %v6968 = vrot.slane %v6882, 3
      %v6969 = vsel %vm798, %v6967, %v6968
      %v6970 = vrot.slane %v6883, 3
      %v6971 = vsel %vm798, %v6968, %v6970
      %v6972 = vrot.slane %v6884, 3
      %v6973 = vrot.slane %v6885, 3
      %v6974 = vsel %vm798, %v6972, %v6973
      %v6975 = vrot.slane %v6886, 3
      %v6976 = vsel %vm798, %v6973, %v6975
      %v6977 = vrot.slane %v6887, 3
      %v6978 = vrot.slane %v6888, 3
      %v6979 = vsel %vm798, %v6977, %v6978
      %v6980 = vrot.slane %v6889, 3
      %v6981 = vsel %vm798, %v6978, %v6980
      %v6982 = vrot.slane %v6890, 3
      %v6983 = vrot.slane %v6891, 3
      %v6984 = vsel %vm798, %v6982, %v6983
      %v6985 = vrot.slane %v6892, 3
      %v6986 = vsel %vm798, %v6983, %v6985
      %v6987 = vrot.slane %v6893, 3
      %v6988 = vrot.slane %v6894, 3
      %v6989 = vsel %vm798, %v6987, %v6988
      %v6990 = vrot.slane %v6895, 3
      %v6991 = vsel %vm798, %v6988, %v6990
      %v6992 = vrot.slane %v6896, 3
      %v6993 = vrot.slane %v6897, 3
      %v6994 = vsel %vm798, %v6992, %v6993
      %v6995 = vrot.slane %v6898, 3
      %v6996 = vsel %vm798, %v6993, %v6995
      %v6997 = vrot.slane %v6899, 3
      %v6998 = vrot.slane %v6900, 3
      %v6999 = vsel %vm798, %v6997, %v6998
      %v7000 = vrot.slane %v6901, 3
      %v7001 = vsel %vm798, %v6998, %v7000
      %v7002 = vrot.slane %v6902, 3
      %v7003 = vrot.slane %v6903, 3
      %v7004 = vsel %vm798, %v7002, %v7003
      %v7005 = vrot.slane %v6904, 3
      %v7006 = vsel %vm798, %v7003, %v7005
      %v7007 = vrot.slane %v6905, 3
      %v7008 = vrot.slane %v6906, 3
      %v7009 = vsel %vm798, %v7007, %v7008
      %v7010 = vrot.slane %v6907, 3
      %v7011 = vsel %vm798, %v7008, %v7010
      %v7012 = vrot.slane %v6908, 3
      %v7013 = vrot.slane %v6909, 3
      %v7014 = vsel %vm798, %v7012, %v7013
      %v7015 = vrot.slane %v6910, 3
      %v7016 = vsel %vm798, %v7013, %v7015
      %v7017 = vrot.slane %v6911, 3
      %v7018 = vrot.slane %v6912, 3
      %v7019 = vsel %vm798, %v7017, %v7018
      %v7020 = vrot.slane %v6913, 3
      %v7021 = vsel %vm798, %v7018, %v7020
      %v7022 = vrot.slane %v6914, 3
      %v7023 = vrot.slane %v6915, 3
      %v7024 = vsel %vm798, %v7022, %v7023
      %v7025 = vrot.slane %v6916, 3
      %v7026 = vsel %vm798, %v7023, %v7025
      %v7027 = vrot.slane %v6917, 3
      %v7028 = vrot.slane %v6918, 3
      %v7029 = vsel %vm798, %v7027, %v7028
      %v7030 = vrot.slane %v6919, 3
      %v7031 = vsel %vm798, %v7028, %v7030
      %v7060 = vadd.f32 %v6846, %v6964
      %v7061 = vadd.f32 %v6847, %v6966
      %v7062 = vadd.f32 %v6848, %v6969
      %v7063 = vadd.f32 %v6849, %v6971
      %v7064 = vadd.f32 %v6850, %v6974
      %v7065 = vadd.f32 %v6851, %v6976
      %v7066 = vadd.f32 %v6852, %v6979
      %v7067 = vadd.f32 %v6853, %v6981
      %v7068 = vadd.f32 %v6854, %v6984
      %v7069 = vadd.f32 %v6855, %v6986
      %v7070 = vadd.f32 %v6856, %v6989
      %v7071 = vadd.f32 %v6857, %v6991
      %v7072 = vadd.f32 %v6858, %v6994
      %v7073 = vadd.f32 %v6859, %v6996
      %v7074 = vadd.f32 %v6860, %v6999
      %v7075 = vadd.f32 %v6861, %v7001
      %v7076 = vadd.f32 %v6862, %v7004
      %v7077 = vadd.f32 %v6863, %v7006
      %v7078 = vadd.f32 %v6864, %v7009
      %v7079 = vadd.f32 %v6865, %v7011
      %v7080 = vadd.f32 %v6866, %v7014
      %v7081 = vadd.f32 %v6867, %v7016
      %v7082 = vadd.f32 %v6868, %v7019
      %v7083 = vadd.f32 %v6869, %v7021
      %v7084 = vadd.f32 %v6870, %v7024
      %v7085 = vadd.f32 %v6871, %v7026
      %v7086 = vadd.f32 %v6872, %v7029
      %v7087 = vadd.f32 %v6873, %v7031
      %v7088 = vlaneseq
      %v7089 = vshrl.u32 %v7088, 7
      %v7090 = vsub.s32 7, %v7089
      %v7091 = vrot.slane %v329, %v7090
      %v7092 = vmul.f32 %v280, %v7091
      %v7093 = vmul.f32 %v281, %v7091
      %v7094 = vmul.f32 %v282, %v7091
      %v7095 = vmul.f32 %v283, %v7091
      %v7096 = vmul.f32 %v284, %v7091
      %v7097 = vmul.f32 %v285, %v7091
      %v7098 = vmul.f32 %v286, %v7091
      %v7099 = vmul.f32 %v287, %v7091
      %v7100 = vmul.f32 %v288, %v7091
      %v7101 = vmul.f32 %v289, %v7091
      %v7102 = vmul.f32 %v290, %v7091
      %v7103 = vmul.f32 %v291, %v7091
      %v7104 = vmul.f32 %v292, %v7091
      %v7105 = vmul.f32 %v293, %v7091
      %v7106 = vmul.f32 %v294, %v7091
      %v7107 = vmul.f32 %v295, %v7091
      %v7108 = vmul.f32 %v296, %v7091
      %v7109 = vmul.f32 %v297, %v7091
      %v7110 = vmul.f32 %v298, %v7091
      %v7111 = vmul.f32 %v299, %v7091
      %v7112 = vmul.f32 %v300, %v7091
      %v7113 = vmul.f32 %v301, %v7091
      %v7114 = vmul.f32 %v302, %v7091
      %v7115 = vmul.f32 %v303, %v7091
      %v7116 = vmul.f32 %v304, %v7091
      %v7117 = vmul.f32 %v305, %v7091
      %v7118 = vmul.f32 %v306, %v7091
      %v7119 = vmul.f32 %v307, %v7091
      %v7120 = vmul.f32 %v308, %v7091
      %v7121 = vmul.f32 %v309, %v7091
      %v7122 = vmul.f32 %v310, %v7091
      %v7123 = vmul.f32 %v311, %v7091
      %v7124 = vmul.f32 %v312, %v7091
      %v7125 = vmul.f32 %v313, %v7091
      %v7126 = vmul.f32 %v314, %v7091
      %v7127 = vmul.f32 %v315, %v7091
      %v7128 = vmul.f32 %v316, %v7091
      %v7129 = vmul.f32 %v317, %v7091
      %v7130 = vmul.f32 %v318, %v7091
      %v7131 = vmul.f32 %v319, %v7091
      %v7132 = vmul.f32 %v320, %v7091
      %v7133 = vmul.f32 %v321, %v7091
      %v7176 = vrot.slane %v7092, 4
      %v7177 = vrot.slane %v7093, 4
      %v7178 = vsel %vm1013, %v7176, %v7177
      %v7179 = vrot.slane %v7094, 4
      %v7180 = vsel %vm1013, %v7177, %v7179
      %v7181 = vrot.slane %v7095, 4
      %v7182 = vrot.slane %v7096, 4
      %v7183 = vsel %vm1013, %v7181, %v7182
      %v7184 = vrot.slane %v7097, 4
      %v7185 = vsel %vm1013, %v7182, %v7184
      %v7186 = vrot.slane %v7098, 4
      %v7187 = vrot.slane %v7099, 4
      %v7188 = vsel %vm1013, %v7186, %v7187
      %v7189 = vrot.slane %v7100, 4
      %v7190 = vsel %vm1013, %v7187, %v7189
      %v7191 = vrot.slane %v7101, 4
      %v7192 = vrot.slane %v7102, 4
      %v7193 = vsel %vm1013, %v7191, %v7192
      %v7194 = vrot.slane %v7103, 4
      %v7195 = vsel %vm1013, %v7192, %v7194
      %v7196 = vrot.slane %v7104, 4
      %v7197 = vrot.slane %v7105, 4
      %v7198 = vsel %vm1013, %v7196, %v7197
      %v7199 = vrot.slane %v7106, 4
      %v7200 = vsel %vm1013, %v7197, %v7199
      %v7201 = vrot.slane %v7107, 4
      %v7202 = vrot.slane %v7108, 4
      %v7203 = vsel %vm1013, %v7201, %v7202
      %v7204 = vrot.slane %v7109, 4
      %v7205 = vsel %vm1013, %v7202, %v7204
      %v7206 = vrot.slane %v7110, 4
      %v7207 = vrot.slane %v7111, 4
      %v7208 = vsel %vm1013, %v7206, %v7207
      %v7209 = vrot.slane %v7112, 4
      %v7210 = vsel %vm1013, %v7207, %v7209
      %v7211 = vrot.slane %v7113, 4
      %v7212 = vrot.slane %v7114, 4
      %v7213 = vsel %vm1013, %v7211, %v7212
      %v7214 = vrot.slane %v7115, 4
      %v7215 = vsel %vm1013, %v7212, %v7214
      %v7216 = vrot.slane %v7116, 4
      %v7217 = vrot.slane %v7117, 4
      %v7218 = vsel %vm1013, %v7216, %v7217
      %v7219 = vrot.slane %v7118, 4
      %v7220 = vsel %vm1013, %v7217, %v7219
      %v7221 = vrot.slane %v7119, 4
      %v7222 = vrot.slane %v7120, 4
      %v7223 = vsel %vm1013, %v7221, %v7222
      %v7224 = vrot.slane %v7121, 4
      %v7225 = vsel %vm1013, %v7222, %v7224
      %v7226 = vrot.slane %v7122, 4
      %v7227 = vrot.slane %v7123, 4
      %v7228 = vsel %vm1013, %v7226, %v7227
      %v7229 = vrot.slane %v7124, 4
      %v7230 = vsel %vm1013, %v7227, %v7229
      %v7231 = vrot.slane %v7125, 4
      %v7232 = vrot.slane %v7126, 4
      %v7233 = vsel %vm1013, %v7231, %v7232
      %v7234 = vrot.slane %v7127, 4
      %v7235 = vsel %vm1013, %v7232, %v7234
      %v7236 = vrot.slane %v7128, 4
      %v7237 = vrot.slane %v7129, 4
      %v7238 = vsel %vm1013, %v7236, %v7237
      %v7239 = vrot.slane %v7130, 4
      %v7240 = vsel %vm1013, %v7237, %v7239
      %v7241 = vrot.slane %v7131, 4
      %v7242 = vrot.slane %v7132, 4
      %v7243 = vsel %vm1013, %v7241, %v7242
      %v7244 = vrot.slane %v7133, 4
      %v7245 = vsel %vm1013, %v7242, %v7244
      %v7274 = vadd.f32 %v7060, %v7178
      %v7275 = vadd.f32 %v7061, %v7180
      %v7276 = vadd.f32 %v7062, %v7183
      %v7277 = vadd.f32 %v7063, %v7185
      %v7278 = vadd.f32 %v7064, %v7188
      %v7279 = vadd.f32 %v7065, %v7190
      %v7280 = vadd.f32 %v7066, %v7193
      %v7281 = vadd.f32 %v7067, %v7195
      %v7282 = vadd.f32 %v7068, %v7198
      %v7283 = vadd.f32 %v7069, %v7200
      %v7284 = vadd.f32 %v7070, %v7203
      %v7285 = vadd.f32 %v7071, %v7205
      %v7286 = vadd.f32 %v7072, %v7208
      %v7287 = vadd.f32 %v7073, %v7210
      %v7288 = vadd.f32 %v7074, %v7213
      %v7289 = vadd.f32 %v7075, %v7215
      %v7290 = vadd.f32 %v7076, %v7218
      %v7291 = vadd.f32 %v7077, %v7220
      %v7292 = vadd.f32 %v7078, %v7223
      %v7293 = vadd.f32 %v7079, %v7225
      %v7294 = vadd.f32 %v7080, %v7228
      %v7295 = vadd.f32 %v7081, %v7230
      %v7296 = vadd.f32 %v7082, %v7233
      %v7297 = vadd.f32 %v7083, %v7235
      %v7298 = vadd.f32 %v7084, %v7238
      %v7299 = vadd.f32 %v7085, %v7240
      %v7300 = vadd.f32 %v7086, %v7243
      %v7301 = vadd.f32 %v7087, %v7245
      %v7302 = vlaneseq
      %v7303 = vshrl.u32 %v7302, 7
      %v7304 = vsub.s32 0, %v7303
      %v7305 = vrot.slane %v330, %v7304
      %v7306 = vmul.f32 %v280, %v7305
      %v7307 = vmul.f32 %v281, %v7305
      %v7308 = vmul.f32 %v282, %v7305
      %v7309 = vmul.f32 %v283, %v7305
      %v7310 = vmul.f32 %v284, %v7305
      %v7311 = vmul.f32 %v285, %v7305
      %v7312 = vmul.f32 %v286, %v7305
      %v7313 = vmul.f32 %v287, %v7305
      %v7314 = vmul.f32 %v288, %v7305
      %v7315 = vmul.f32 %v289, %v7305
      %v7316 = vmul.f32 %v290, %v7305
      %v7317 = vmul.f32 %v291, %v7305
      %v7318 = vmul.f32 %v292, %v7305
      %v7319 = vmul.f32 %v293, %v7305
      %v7320 = vmul.f32 %v294, %v7305
      %v7321 = vmul.f32 %v295, %v7305
      %v7322 = vmul.f32 %v296, %v7305
      %v7323 = vmul.f32 %v297, %v7305
      %v7324 = vmul.f32 %v298, %v7305
      %v7325 = vmul.f32 %v299, %v7305
      %v7326 = vmul.f32 %v300, %v7305
      %v7327 = vmul.f32 %v301, %v7305
      %v7328 = vmul.f32 %v302, %v7305
      %v7329 = vmul.f32 %v303, %v7305
      %v7330 = vmul.f32 %v304, %v7305
      %v7331 = vmul.f32 %v305, %v7305
      %v7332 = vmul.f32 %v306, %v7305
      %v7333 = vmul.f32 %v307, %v7305
      %v7334 = vmul.f32 %v308, %v7305
      %v7335 = vmul.f32 %v309, %v7305
      %v7336 = vmul.f32 %v310, %v7305
      %v7337 = vmul.f32 %v311, %v7305
      %v7338 = vmul.f32 %v312, %v7305
      %v7339 = vmul.f32 %v313, %v7305
      %v7340 = vmul.f32 %v314, %v7305
      %v7341 = vmul.f32 %v315, %v7305
      %v7342 = vmul.f32 %v316, %v7305
      %v7343 = vmul.f32 %v317, %v7305
      %v7344 = vmul.f32 %v318, %v7305
      %v7345 = vmul.f32 %v319, %v7305
      %v7346 = vmul.f32 %v320, %v7305
      %v7347 = vmul.f32 %v321, %v7305
      %v7390 = vrot.slane %v7306, 5
      %v7391 = vrot.slane %v7307, 5
      %v7392 = vsel %vm1228, %v7390, %v7391
      %v7393 = vrot.slane %v7308, 5
      %v7394 = vsel %vm1228, %v7391, %v7393
      %v7395 = vrot.slane %v7309, 5
      %v7396 = vrot.slane %v7310, 5
      %v7397 = vsel %vm1228, %v7395, %v7396
      %v7398 = vrot.slane %v7311, 5
      %v7399 = vsel %vm1228, %v7396, %v7398
      %v7400 = vrot.slane %v7312, 5
      %v7401 = vrot.slane %v7313, 5
      %v7402 = vsel %vm1228, %v7400, %v7401
      %v7403 = vrot.slane %v7314, 5
      %v7404 = vsel %vm1228, %v7401, %v7403
      %v7405 = vrot.slane %v7315, 5
      %v7406 = vrot.slane %v7316, 5
      %v7407 = vsel %vm1228, %v7405, %v7406
      %v7408 = vrot.slane %v7317, 5
      %v7409 = vsel %vm1228, %v7406, %v7408
      %v7410 = vrot.slane %v7318, 5
      %v7411 = vrot.slane %v7319, 5
      %v7412 = vsel %vm1228, %v7410, %v7411
      %v7413 = vrot.slane %v7320, 5
      %v7414 = vsel %vm1228, %v7411, %v7413
      %v7415 = vrot.slane %v7321, 5
      %v7416 = vrot.slane %v7322, 5
      %v7417 = vsel %vm1228, %v7415, %v7416
      %v7418 = vrot.slane %v7323, 5
      %v7419 = vsel %vm1228, %v7416, %v7418
      %v7420 = vrot.slane %v7324, 5
      %v7421 = vrot.slane %v7325, 5
      %v7422 = vsel %vm1228, %v7420, %v7421
      %v7423 = vrot.slane %v7326, 5
      %v7424 = vsel %vm1228, %v7421, %v7423
      %v7425 = vrot.slane %v7327, 5
      %v7426 = vrot.slane %v7328, 5
      %v7427 = vsel %vm1228, %v7425, %v7426
      %v7428 = vrot.slane %v7329, 5
      %v7429 = vsel %vm1228, %v7426, %v7428
      %v7430 = vrot.slane %v7330, 5
      %v7431 = vrot.slane %v7331, 5
      %v7432 = vsel %vm1228, %v7430, %v7431
      %v7433 = vrot.slane %v7332, 5
      %v7434 = vsel %vm1228, %v7431, %v7433
      %v7435 = vrot.slane %v7333, 5
      %v7436 = vrot.slane %v7334, 5
      %v7437 = vsel %vm1228, %v7435, %v7436
      %v7438 = vrot.slane %v7335, 5
      %v7439 = vsel %vm1228, %v7436, %v7438
      %v7440 = vrot.slane %v7336, 5
      %v7441 = vrot.slane %v7337, 5
      %v7442 = vsel %vm1228, %v7440, %v7441
      %v7443 = vrot.slane %v7338, 5
      %v7444 = vsel %vm1228, %v7441, %v7443
      %v7445 = vrot.slane %v7339, 5
      %v7446 = vrot.slane %v7340, 5
      %v7447 = vsel %vm1228, %v7445, %v7446
      %v7448 = vrot.slane %v7341, 5
      %v7449 = vsel %vm1228, %v7446, %v7448
      %v7450 = vrot.slane %v7342, 5
      %v7451 = vrot.slane %v7343, 5
      %v7452 = vsel %vm1228, %v7450, %v7451
      %v7453 = vrot.slane %v7344, 5
      %v7454 = vsel %vm1228, %v7451, %v7453
      %v7455 = vrot.slane %v7345, 5
      %v7456 = vrot.slane %v7346, 5
      %v7457 = vsel %vm1228, %v7455, %v7456
      %v7458 = vrot.slane %v7347, 5
      %v7459 = vsel %vm1228, %v7456, %v7458
      %v7488 = vadd.f32 %v7274, %v7392
      %v7489 = vadd.f32 %v7275, %v7394
      %v7490 = vadd.f32 %v7276, %v7397
      %v7491 = vadd.f32 %v7277, %v7399
      %v7492 = vadd.f32 %v7278, %v7402
      %v7493 = vadd.f32 %v7279, %v7404
      %v7494 = vadd.f32 %v7280, %v7407
      %v7495 = vadd.f32 %v7281, %v7409
      %v7496 = vadd.f32 %v7282, %v7412
      %v7497 = vadd.f32 %v7283, %v7414
      %v7498 = vadd.f32 %v7284, %v7417
      %v7499 = vadd.f32 %v7285, %v7419
      %v7500 = vadd.f32 %v7286, %v7422
      %v7501 = vadd.f32 %v7287, %v7424
      %v7502 = vadd.f32 %v7288, %v7427
      %v7503 = vadd.f32 %v7289, %v7429
      %v7504 = vadd.f32 %v7290, %v7432
      %v7505 = vadd.f32 %v7291, %v7434
      %v7506 = vadd.f32 %v7292, %v7437
      %v7507 = vadd.f32 %v7293, %v7439
      %v7508 = vadd.f32 %v7294, %v7442
      %v7509 = vadd.f32 %v7295, %v7444
      %v7510 = vadd.f32 %v7296, %v7447
      %v7511 = vadd.f32 %v7297, %v7449
      %v7512 = vadd.f32 %v7298, %v7452
      %v7513 = vadd.f32 %v7299, %v7454
      %v7514 = vadd.f32 %v7300, %v7457
      %v7515 = vadd.f32 %v7301, %v7459
      %v7516 = vlaneseq
      %v7517 = vshrl.u32 %v7516, 7
      %v7518 = vsub.s32 1, %v7517
      %v7519 = vrot.slane %v330, %v7518
      %v7520 = vmul.f32 %v280, %v7519
      %v7521 = vmul.f32 %v281, %v7519
      %v7522 = vmul.f32 %v282, %v7519
      %v7523 = vmul.f32 %v283, %v7519
      %v7524 = vmul.f32 %v284, %v7519
      %v7525 = vmul.f32 %v285, %v7519
      %v7526 = vmul.f32 %v286, %v7519
      %v7527 = vmul.f32 %v287, %v7519
      %v7528 = vmul.f32 %v288, %v7519
      %v7529 = vmul.f32 %v289, %v7519
      %v7530 = vmul.f32 %v290, %v7519
      %v7531 = vmul.f32 %v291, %v7519
      %v7532 = vmul.f32 %v292, %v7519
      %v7533 = vmul.f32 %v293, %v7519
      %v7534 = vmul.f32 %v294, %v7519
      %v7535 = vmul.f32 %v295, %v7519
      %v7536 = vmul.f32 %v296, %v7519
      %v7537 = vmul.f32 %v297, %v7519
      %v7538 = vmul.f32 %v298, %v7519
      %v7539 = vmul.f32 %v299, %v7519
      %v7540 = vmul.f32 %v300, %v7519
      %v7541 = vmul.f32 %v301, %v7519
      %v7542 = vmul.f32 %v302, %v7519
      %v7543 = vmul.f32 %v303, %v7519
      %v7544 = vmul.f32 %v304, %v7519
      %v7545 = vmul.f32 %v305, %v7519
      %v7546 = vmul.f32 %v306, %v7519
      %v7547 = vmul.f32 %v307, %v7519
      %v7548 = vmul.f32 %v308, %v7519
      %v7549 = vmul.f32 %v309, %v7519
      %v7550 = vmul.f32 %v310, %v7519
      %v7551 = vmul.f32 %v311, %v7519
      %v7552 = vmul.f32 %v312, %v7519
      %v7553 = vmul.f32 %v313, %v7519
      %v7554 = vmul.f32 %v314, %v7519
      %v7555 = vmul.f32 %v315, %v7519
      %v7556 = vmul.f32 %v316, %v7519
      %v7557 = vmul.f32 %v317, %v7519
      %v7558 = vmul.f32 %v318, %v7519
      %v7559 = vmul.f32 %v319, %v7519
      %v7560 = vmul.f32 %v320, %v7519
      %v7561 = vmul.f32 %v321, %v7519
      %v7604 = vrot.slane %v7520, 6
      %v7605 = vrot.slane %v7521, 6
      %v7606 = vsel %vm1443, %v7604, %v7605
      %v7607 = vrot.slane %v7522, 6
      %v7608 = vsel %vm1443, %v7605, %v7607
      %v7609 = vrot.slane %v7523, 6
      %v7610 = vrot.slane %v7524, 6
      %v7611 = vsel %vm1443, %v7609, %v7610
      %v7612 = vrot.slane %v7525, 6
      %v7613 = vsel %vm1443, %v7610, %v7612
      %v7614 = vrot.slane %v7526, 6
      %v7615 = vrot.slane %v7527, 6
      %v7616 = vsel %vm1443, %v7614, %v7615
      %v7617 = vrot.slane %v7528, 6
      %v7618 = vsel %vm1443, %v7615, %v7617
      %v7619 = vrot.slane %v7529, 6
      %v7620 = vrot.slane %v7530, 6
      %v7621 = vsel %vm1443, %v7619, %v7620
      %v7622 = vrot.slane %v7531, 6
      %v7623 = vsel %vm1443, %v7620, %v7622
      %v7624 = vrot.slane %v7532, 6
      %v7625 = vrot.slane %v7533, 6
      %v7626 = vsel %vm1443, %v7624, %v7625
      %v7627 = vrot.slane %v7534, 6
      %v7628 = vsel %vm1443, %v7625, %v7627
      %v7629 = vrot.slane %v7535, 6
      %v7630 = vrot.slane %v7536, 6
      %v7631 = vsel %vm1443, %v7629, %v7630
      %v7632 = vrot.slane %v7537, 6
      %v7633 = vsel %vm1443, %v7630, %v7632
      %v7634 = vrot.slane %v7538, 6
      %v7635 = vrot.slane %v7539, 6
      %v7636 = vsel %vm1443, %v7634, %v7635
      %v7637 = vrot.slane %v7540, 6
      %v7638 = vsel %vm1443, %v7635, %v7637
      %v7639 = vrot.slane %v7541, 6
      %v7640 = vrot.slane %v7542, 6
      %v7641 = vsel %vm1443, %v7639, %v7640
      %v7642 = vrot.slane %v7543, 6
      %v7643 = vsel %vm1443, %v7640, %v7642
      %v7644 = vrot.slane %v7544, 6
      %v7645 = vrot.slane %v7545, 6
      %v7646 = vsel %vm1443, %v7644, %v7645
      %v7647 = vrot.slane %v7546, 6
      %v7648 = vsel %vm1443, %v7645, %v7647
      %v7649 = vrot.slane %v7547, 6
      %v7650 = vrot.slane %v7548, 6
      %v7651 = vsel %vm1443, %v7649, %v7650
      %v7652 = vrot.slane %v7549, 6
      %v7653 = vsel %vm1443, %v7650, %v7652
      %v7654 = vrot.slane %v7550, 6
      %v7655 = vrot.slane %v7551, 6
      %v7656 = vsel %vm1443, %v7654, %v7655
      %v7657 = vrot.slane %v7552, 6
      %v7658 = vsel %vm1443, %v7655, %v7657
      %v7659 = vrot.slane %v7553, 6
      %v7660 = vrot.slane %v7554, 6
      %v7661 = vsel %vm1443, %v7659, %v7660
      %v7662 = vrot.slane %v7555, 6
      %v7663 = vsel %vm1443, %v7660, %v7662
      %v7664 = vrot.slane %v7556, 6
      %v7665 = vrot.slane %v7557, 6
      %v7666 = vsel %vm1443, %v7664, %v7665
      %v7667 = vrot.slane %v7558, 6
      %v7668 = vsel %vm1443, %v7665, %v7667
      %v7669 = vrot.slane %v7559, 6
      %v7670 = vrot.slane %v7560, 6
      %v7671 = vsel %vm1443, %v7669, %v7670
      %v7672 = vrot.slane %v7561, 6
      %v7673 = vsel %vm1443, %v7670, %v7672
      %v7702 = vadd.f32 %v7488, %v7606
      %v7703 = vadd.f32 %v7489, %v7608
      %v7704 = vadd.f32 %v7490, %v7611
      %v7705 = vadd.f32 %v7491, %v7613
      %v7706 = vadd.f32 %v7492, %v7616
      %v7707 = vadd.f32 %v7493, %v7618
      %v7708 = vadd.f32 %v7494, %v7621
      %v7709 = vadd.f32 %v7495, %v7623
      %v7710 = vadd.f32 %v7496, %v7626
      %v7711 = vadd.f32 %v7497, %v7628
      %v7712 = vadd.f32 %v7498, %v7631
      %v7713 = vadd.f32 %v7499, %v7633
      %v7714 = vadd.f32 %v7500, %v7636
      %v7715 = vadd.f32 %v7501, %v7638
      %v7716 = vadd.f32 %v7502, %v7641
      %v7717 = vadd.f32 %v7503, %v7643
      %v7718 = vadd.f32 %v7504, %v7646
      %v7719 = vadd.f32 %v7505, %v7648
      %v7720 = vadd.f32 %v7506, %v7651
      %v7721 = vadd.f32 %v7507, %v7653
      %v7722 = vadd.f32 %v7508, %v7656
      %v7723 = vadd.f32 %v7509, %v7658
      %v7724 = vadd.f32 %v7510, %v7661
      %v7725 = vadd.f32 %v7511, %v7663
      %v7726 = vadd.f32 %v7512, %v7666
      %v7727 = vadd.f32 %v7513, %v7668
      %v7728 = vadd.f32 %v7514, %v7671
      %v7729 = vadd.f32 %v7515, %v7673
      %v7730 = vlaneseq
      %v7731 = vshrl.u32 %v7730, 7
      %v7732 = vsub.s32 2, %v7731
      %v7733 = vrot.slane %v330, %v7732
      %v7734 = vmul.f32 %v283, %v7733
      %v7735 = vmul.f32 %v284, %v7733
      %v7736 = vmul.f32 %v286, %v7733
      %v7737 = vmul.f32 %v287, %v7733
      %v7738 = vmul.f32 %v289, %v7733
      %v7739 = vmul.f32 %v290, %v7733
      %v7740 = vmul.f32 %v292, %v7733
      %v7741 = vmul.f32 %v293, %v7733
      %v7742 = vmul.f32 %v295, %v7733
      %v7743 = vmul.f32 %v296, %v7733
      %v7744 = vmul.f32 %v298, %v7733
      %v7745 = vmul.f32 %v299, %v7733
      %v7746 = vmul.f32 %v301, %v7733
      %v7747 = vmul.f32 %v302, %v7733
      %v7748 = vmul.f32 %v304, %v7733
      %v7749 = vmul.f32 %v305, %v7733
      %v7750 = vmul.f32 %v307, %v7733
      %v7751 = vmul.f32 %v308, %v7733
      %v7752 = vmul.f32 %v310, %v7733
      %v7753 = vmul.f32 %v311, %v7733
      %v7754 = vmul.f32 %v313, %v7733
      %v7755 = vmul.f32 %v314, %v7733
      %v7756 = vmul.f32 %v316, %v7733
      %v7757 = vmul.f32 %v317, %v7733
      %v7758 = vmul.f32 %v319, %v7733
      %v7759 = vmul.f32 %v320, %v7733
      %v7760 = vmul.f32 %v322, %v7733
      %v7761 = vmul.f32 %v323, %v7733
      %v7762 = vadd.f32 %v7702, %v7734
      %v7763 = vadd.f32 %v7703, %v7735
      %v7764 = vadd.f32 %v7704, %v7736
      %v7765 = vadd.f32 %v7705, %v7737
      %v7766 = vadd.f32 %v7706, %v7738
      %v7767 = vadd.f32 %v7707, %v7739
      %v7768 = vadd.f32 %v7708, %v7740
      %v7769 = vadd.f32 %v7709, %v7741
      %v7770 = vadd.f32 %v7710, %v7742
      %v7771 = vadd.f32 %v7711, %v7743
      %v7772 = vadd.f32 %v7712, %v7744
      %v7773 = vadd.f32 %v7713, %v7745
      %v7774 = vadd.f32 %v7714, %v7746
      %v7775 = vadd.f32 %v7715, %v7747
      %v7776 = vadd.f32 %v7716, %v7748
      %v7777 = vadd.f32 %v7717, %v7749
      %v7778 = vadd.f32 %v7718, %v7750
      %v7779 = vadd.f32 %v7719, %v7751
      %v7780 = vadd.f32 %v7720, %v7752
      %v7781 = vadd.f32 %v7721, %v7753
      %v7782 = vadd.f32 %v7722, %v7754
      %v7783 = vadd.f32 %v7723, %v7755
      %v7784 = vadd.f32 %v7724, %v7756
      %v7785 = vadd.f32 %v7725, %v7757
      %v7786 = vadd.f32 %v7726, %v7758
      %v7787 = vadd.f32 %v7727, %v7759
      %v7788 = vadd.f32 %v7728, %v7760
      %v7789 = vadd.f32 %v7729, %v7761
      %v7790 = vlaneseq
      %v7791 = vshrl.u32 %v7790, 7
      %v7792 = vsub.s32 3, %v7791
      %v7793 = vrot.slane %v330, %v7792
      %v7794 = vmul.f32 %v283, %v7793
      %v7795 = vmul.f32 %v284, %v7793
      %v7796 = vmul.f32 %v286, %v7793
      %v7797 = vmul.f32 %v287, %v7793
      %v7798 = vmul.f32 %v289, %v7793
      %v7799 = vmul.f32 %v290, %v7793
      %v7800 = vmul.f32 %v292, %v7793
      %v7801 = vmul.f32 %v293, %v7793
      %v7802 = vmul.f32 %v295, %v7793
      %v7803 = vmul.f32 %v296, %v7793
      %v7804 = vmul.f32 %v298, %v7793
      %v7805 = vmul.f32 %v299, %v7793
      %v7806 = vmul.f32 %v301, %v7793
      %v7807 = vmul.f32 %v302, %v7793
      %v7808 = vmul.f32 %v304, %v7793
      %v7809 = vmul.f32 %v305, %v7793
      %v7810 = vmul.f32 %v307, %v7793
      %v7811 = vmul.f32 %v308, %v7793
      %v7812 = vmul.f32 %v310, %v7793
      %v7813 = vmul.f32 %v311, %v7793
      %v7814 = vmul.f32 %v313, %v7793
      %v7815 = vmul.f32 %v314, %v7793
      %v7816 = vmul.f32 %v316, %v7793
      %v7817 = vmul.f32 %v317, %v7793
      %v7818 = vmul.f32 %v319, %v7793
      %v7819 = vmul.f32 %v320, %v7793
      %v7820 = vmul.f32 %v322, %v7793
      %v7821 = vmul.f32 %v323, %v7793
      %v7850 = vrot.slane %v7794, 1
      %v7851 = vrot.slane %v7795, 1
      %v7852 = vsel %vm452, %v7850, %v7851
      %v7853 = vrot.slane %v7796, 1
      %v7854 = vrot.slane %v7797, 1
      %v7855 = vsel %vm452, %v7853, %v7854
      %v7856 = vrot.slane %v7798, 1
      %v7857 = vrot.slane %v7799, 1
      %v7858 = vsel %vm452, %v7856, %v7857
      %v7859 = vrot.slane %v7800, 1
      %v7860 = vrot.slane %v7801, 1
      %v7861 = vsel %vm452, %v7859, %v7860
      %v7862 = vrot.slane %v7802, 1
      %v7863 = vrot.slane %v7803, 1
      %v7864 = vsel %vm452, %v7862, %v7863
      %v7865 = vrot.slane %v7804, 1
      %v7866 = vrot.slane %v7805, 1
      %v7867 = vsel %vm452, %v7865, %v7866
      %v7868 = vrot.slane %v7806, 1
      %v7869 = vrot.slane %v7807, 1
      %v7870 = vsel %vm452, %v7868, %v7869
      %v7871 = vrot.slane %v7808, 1
      %v7872 = vrot.slane %v7809, 1
      %v7873 = vsel %vm452, %v7871, %v7872
      %v7874 = vrot.slane %v7810, 1
      %v7875 = vrot.slane %v7811, 1
      %v7876 = vsel %vm452, %v7874, %v7875
      %v7877 = vrot.slane %v7812, 1
      %v7878 = vrot.slane %v7813, 1
      %v7879 = vsel %vm452, %v7877, %v7878
      %v7880 = vrot.slane %v7814, 1
      %v7881 = vrot.slane %v7815, 1
      %v7882 = vsel %vm452, %v7880, %v7881
      %v7883 = vrot.slane %v7816, 1
      %v7884 = vrot.slane %v7817, 1
      %v7885 = vsel %vm452, %v7883, %v7884
      %v7886 = vrot.slane %v7818, 1
      %v7887 = vrot.slane %v7819, 1
      %v7888 = vsel %vm452, %v7886, %v7887
      %v7889 = vrot.slane %v7820, 1
      %v7890 = vrot.slane %v7821, 1
      %v7891 = vsel %vm452, %v7889, %v7890
      %v7920 = vadd.f32 %v7762, %v7852
      %v7921 = vadd.f32 %v7763, %v7851
      %v7922 = vadd.f32 %v7764, %v7855
      %v7923 = vadd.f32 %v7765, %v7854
      %v7924 = vadd.f32 %v7766, %v7858
      %v7925 = vadd.f32 %v7767, %v7857
      %v7926 = vadd.f32 %v7768, %v7861
      %v7927 = vadd.f32 %v7769, %v7860
      %v7928 = vadd.f32 %v7770, %v7864
      %v7929 = vadd.f32 %v7771, %v7863
      %v7930 = vadd.f32 %v7772, %v7867
      %v7931 = vadd.f32 %v7773, %v7866
      %v7932 = vadd.f32 %v7774, %v7870
      %v7933 = vadd.f32 %v7775, %v7869
      %v7934 = vadd.f32 %v7776, %v7873
      %v7935 = vadd.f32 %v7777, %v7872
      %v7936 = vadd.f32 %v7778, %v7876
      %v7937 = vadd.f32 %v7779, %v7875
      %v7938 = vadd.f32 %v7780, %v7879
      %v7939 = vadd.f32 %v7781, %v7878
      %v7940 = vadd.f32 %v7782, %v7882
      %v7941 = vadd.f32 %v7783, %v7881
      %v7942 = vadd.f32 %v7784, %v7885
      %v7943 = vadd.f32 %v7785, %v7884
      %v7944 = vadd.f32 %v7786, %v7888
      %v7945 = vadd.f32 %v7787, %v7887
      %v7946 = vadd.f32 %v7788, %v7891
      %v7947 = vadd.f32 %v7789, %v7890
      %v7948 = vlaneseq
      %v7949 = vshrl.u32 %v7948, 7
      %v7950 = vsub.s32 4, %v7949
      %v7951 = vrot.slane %v330, %v7950
      %v7952 = vmul.f32 %v283, %v7951
      %v7953 = vmul.f32 %v284, %v7951
      %v7954 = vmul.f32 %v286, %v7951
      %v7955 = vmul.f32 %v287, %v7951
      %v7956 = vmul.f32 %v289, %v7951
      %v7957 = vmul.f32 %v290, %v7951
      %v7958 = vmul.f32 %v292, %v7951
      %v7959 = vmul.f32 %v293, %v7951
      %v7960 = vmul.f32 %v295, %v7951
      %v7961 = vmul.f32 %v296, %v7951
      %v7962 = vmul.f32 %v298, %v7951
      %v7963 = vmul.f32 %v299, %v7951
      %v7964 = vmul.f32 %v301, %v7951
      %v7965 = vmul.f32 %v302, %v7951
      %v7966 = vmul.f32 %v304, %v7951
      %v7967 = vmul.f32 %v305, %v7951
      %v7968 = vmul.f32 %v307, %v7951
      %v7969 = vmul.f32 %v308, %v7951
      %v7970 = vmul.f32 %v310, %v7951
      %v7971 = vmul.f32 %v311, %v7951
      %v7972 = vmul.f32 %v313, %v7951
      %v7973 = vmul.f32 %v314, %v7951
      %v7974 = vmul.f32 %v316, %v7951
      %v7975 = vmul.f32 %v317, %v7951
      %v7976 = vmul.f32 %v319, %v7951
      %v7977 = vmul.f32 %v320, %v7951
      %v7978 = vmul.f32 %v322, %v7951
      %v7979 = vmul.f32 %v323, %v7951
      %v8008 = vrot.slane %v7952, 2
      %v8009 = vrot.slane %v7953, 2
      %v8010 = vsel %vm611, %v8008, %v8009
      %v8011 = vrot.slane %v7954, 2
      %v8012 = vrot.slane %v7955, 2
      %v8013 = vsel %vm611, %v8011, %v8012
      %v8014 = vrot.slane %v7956, 2
      %v8015 = vrot.slane %v7957, 2
      %v8016 = vsel %vm611, %v8014, %v8015
      %v8017 = vrot.slane %v7958, 2
      %v8018 = vrot.slane %v7959, 2
      %v8019 = vsel %vm611, %v8017, %v8018
      %v8020 = vrot.slane %v7960, 2
      %v8021 = vrot.slane %v7961, 2
      %v8022 = vsel %vm611, %v8020, %v8021
      %v8023 = vrot.slane %v7962, 2
      %v8024 = vrot.slane %v7963, 2
      %v8025 = vsel %vm611, %v8023, %v8024
      %v8026 = vrot.slane %v7964, 2
      %v8027 = vrot.slane %v7965, 2
      %v8028 = vsel %vm611, %v8026, %v8027
      %v8029 = vrot.slane %v7966, 2
      %v8030 = vrot.slane %v7967, 2
      %v8031 = vsel %vm611, %v8029, %v8030
      %v8032 = vrot.slane %v7968, 2
      %v8033 = vrot.slane %v7969, 2
      %v8034 = vsel %vm611, %v8032, %v8033
      %v8035 = vrot.slane %v7970, 2
      %v8036 = vrot.slane %v7971, 2
      %v8037 = vsel %vm611, %v8035, %v8036
      %v8038 = vrot.slane %v7972, 2
      %v8039 = vrot.slane %v7973, 2
      %v8040 = vsel %vm611, %v8038, %v8039
      %v8041 = vrot.slane %v7974, 2
      %v8042 = vrot.slane %v7975, 2
      %v8043 = vsel %vm611, %v8041, %v8042
      %v8044 = vrot.slane %v7976, 2
      %v8045 = vrot.slane %v7977, 2
      %v8046 = vsel %vm611, %v8044, %v8045
      %v8047 = vrot.slane %v7978, 2
      %v8048 = vrot.slane %v7979, 2
      %v8049 = vsel %vm611, %v8047, %v8048
      %v8078 = vadd.f32 %v7920, %v8010
      %v8079 = vadd.f32 %v7921, %v8009
      %v8080 = vadd.f32 %v7922, %v8013
      %v8081 = vadd.f32 %v7923, %v8012
      %v8082 = vadd.f32 %v7924, %v8016
      %v8083 = vadd.f32 %v7925, %v8015
      %v8084 = vadd.f32 %v7926, %v8019
      %v8085 = vadd.f32 %v7927, %v8018
      %v8086 = vadd.f32 %v7928, %v8022
      %v8087 = vadd.f32 %v7929, %v8021
      %v8088 = vadd.f32 %v7930, %v8025
      %v8089 = vadd.f32 %v7931, %v8024
      %v8090 = vadd.f32 %v7932, %v8028
      %v8091 = vadd.f32 %v7933, %v8027
      %v8092 = vadd.f32 %v7934, %v8031
      %v8093 = vadd.f32 %v7935, %v8030
      %v8094 = vadd.f32 %v7936, %v8034
      %v8095 = vadd.f32 %v7937, %v8033
      %v8096 = vadd.f32 %v7938, %v8037
      %v8097 = vadd.f32 %v7939, %v8036
      %v8098 = vadd.f32 %v7940, %v8040
      %v8099 = vadd.f32 %v7941, %v8039
      %v8100 = vadd.f32 %v7942, %v8043
      %v8101 = vadd.f32 %v7943, %v8042
      %v8102 = vadd.f32 %v7944, %v8046
      %v8103 = vadd.f32 %v7945, %v8045
      %v8104 = vadd.f32 %v7946, %v8049
      %v8105 = vadd.f32 %v7947, %v8048
      %v8106 = vlaneseq
      %v8107 = vshrl.u32 %v8106, 7
      %v8108 = vsub.s32 5, %v8107
      %v8109 = vrot.slane %v330, %v8108
      %v8110 = vmul.f32 %v283, %v8109
      %v8111 = vmul.f32 %v284, %v8109
      %v8112 = vmul.f32 %v285, %v8109
      %v8113 = vmul.f32 %v286, %v8109
      %v8114 = vmul.f32 %v287, %v8109
      %v8115 = vmul.f32 %v288, %v8109
      %v8116 = vmul.f32 %v289, %v8109
      %v8117 = vmul.f32 %v290, %v8109
      %v8118 = vmul.f32 %v291, %v8109
      %v8119 = vmul.f32 %v292, %v8109
      %v8120 = vmul.f32 %v293, %v8109
      %v8121 = vmul.f32 %v294, %v8109
      %v8122 = vmul.f32 %v295, %v8109
      %v8123 = vmul.f32 %v296, %v8109
      %v8124 = vmul.f32 %v297, %v8109
      %v8125 = vmul.f32 %v298, %v8109
      %v8126 = vmul.f32 %v299, %v8109
      %v8127 = vmul.f32 %v300, %v8109
      %v8128 = vmul.f32 %v301, %v8109
      %v8129 = vmul.f32 %v302, %v8109
      %v8130 = vmul.f32 %v303, %v8109
      %v8131 = vmul.f32 %v304, %v8109
      %v8132 = vmul.f32 %v305, %v8109
      %v8133 = vmul.f32 %v306, %v8109
      %v8134 = vmul.f32 %v307, %v8109
      %v8135 = vmul.f32 %v308, %v8109
      %v8136 = vmul.f32 %v309, %v8109
      %v8137 = vmul.f32 %v310, %v8109
      %v8138 = vmul.f32 %v311, %v8109
      %v8139 = vmul.f32 %v312, %v8109
      %v8140 = vmul.f32 %v313, %v8109
      %v8141 = vmul.f32 %v314, %v8109
      %v8142 = vmul.f32 %v315, %v8109
      %v8143 = vmul.f32 %v316, %v8109
      %v8144 = vmul.f32 %v317, %v8109
      %v8145 = vmul.f32 %v318, %v8109
      %v8146 = vmul.f32 %v319, %v8109
      %v8147 = vmul.f32 %v320, %v8109
      %v8148 = vmul.f32 %v321, %v8109
      %v8149 = vmul.f32 %v322, %v8109
      %v8150 = vmul.f32 %v323, %v8109
      %v8151 = vmul.f32 %v324, %v8109
      %v8194 = vrot.slane %v8110, 3
      %v8195 = vrot.slane %v8111, 3
      %v8196 = vsel %vm798, %v8194, %v8195
      %v8197 = vrot.slane %v8112, 3
      %v8198 = vsel %vm798, %v8195, %v8197
      %v8199 = vrot.slane %v8113, 3
      %v8200 = vrot.slane %v8114, 3
      %v8201 = vsel %vm798, %v8199, %v8200
      %v8202 = vrot.slane %v8115, 3
      %v8203 = vsel %vm798, %v8200, %v8202
      %v8204 = vrot.slane %v8116, 3
      %v8205 = vrot.slane %v8117, 3
      %v8206 = vsel %vm798, %v8204, %v8205
      %v8207 = vrot.slane %v8118, 3
      %v8208 = vsel %vm798, %v8205, %v8207
      %v8209 = vrot.slane %v8119, 3
      %v8210 = vrot.slane %v8120, 3
      %v8211 = vsel %vm798, %v8209, %v8210
      %v8212 = vrot.slane %v8121, 3
      %v8213 = vsel %vm798, %v8210, %v8212
      %v8214 = vrot.slane %v8122, 3
      %v8215 = vrot.slane %v8123, 3
      %v8216 = vsel %vm798, %v8214, %v8215
      %v8217 = vrot.slane %v8124, 3
      %v8218 = vsel %vm798, %v8215, %v8217
      %v8219 = vrot.slane %v8125, 3
      %v8220 = vrot.slane %v8126, 3
      %v8221 = vsel %vm798, %v8219, %v8220
      %v8222 = vrot.slane %v8127, 3
      %v8223 = vsel %vm798, %v8220, %v8222
      %v8224 = vrot.slane %v8128, 3
      %v8225 = vrot.slane %v8129, 3
      %v8226 = vsel %vm798, %v8224, %v8225
      %v8227 = vrot.slane %v8130, 3
      %v8228 = vsel %vm798, %v8225, %v8227
      %v8229 = vrot.slane %v8131, 3
      %v8230 = vrot.slane %v8132, 3
      %v8231 = vsel %vm798, %v8229, %v8230
      %v8232 = vrot.slane %v8133, 3
      %v8233 = vsel %vm798, %v8230, %v8232
      %v8234 = vrot.slane %v8134, 3
      %v8235 = vrot.slane %v8135, 3
      %v8236 = vsel %vm798, %v8234, %v8235
      %v8237 = vrot.slane %v8136, 3
      %v8238 = vsel %vm798, %v8235, %v8237
      %v8239 = vrot.slane %v8137, 3
      %v8240 = vrot.slane %v8138, 3
      %v8241 = vsel %vm798, %v8239, %v8240
      %v8242 = vrot.slane %v8139, 3
      %v8243 = vsel %vm798, %v8240, %v8242
      %v8244 = vrot.slane %v8140, 3
      %v8245 = vrot.slane %v8141, 3
      %v8246 = vsel %vm798, %v8244, %v8245
      %v8247 = vrot.slane %v8142, 3
      %v8248 = vsel %vm798, %v8245, %v8247
      %v8249 = vrot.slane %v8143, 3
      %v8250 = vrot.slane %v8144, 3
      %v8251 = vsel %vm798, %v8249, %v8250
      %v8252 = vrot.slane %v8145, 3
      %v8253 = vsel %vm798, %v8250, %v8252
      %v8254 = vrot.slane %v8146, 3
      %v8255 = vrot.slane %v8147, 3
      %v8256 = vsel %vm798, %v8254, %v8255
      %v8257 = vrot.slane %v8148, 3
      %v8258 = vsel %vm798, %v8255, %v8257
      %v8259 = vrot.slane %v8149, 3
      %v8260 = vrot.slane %v8150, 3
      %v8261 = vsel %vm798, %v8259, %v8260
      %v8262 = vrot.slane %v8151, 3
      %v8263 = vsel %vm798, %v8260, %v8262
      %v8292 = vadd.f32 %v8078, %v8196
      %v8293 = vadd.f32 %v8079, %v8198
      %v8294 = vadd.f32 %v8080, %v8201
      %v8295 = vadd.f32 %v8081, %v8203
      %v8296 = vadd.f32 %v8082, %v8206
      %v8297 = vadd.f32 %v8083, %v8208
      %v8298 = vadd.f32 %v8084, %v8211
      %v8299 = vadd.f32 %v8085, %v8213
      %v8300 = vadd.f32 %v8086, %v8216
      %v8301 = vadd.f32 %v8087, %v8218
      %v8302 = vadd.f32 %v8088, %v8221
      %v8303 = vadd.f32 %v8089, %v8223
      %v8304 = vadd.f32 %v8090, %v8226
      %v8305 = vadd.f32 %v8091, %v8228
      %v8306 = vadd.f32 %v8092, %v8231
      %v8307 = vadd.f32 %v8093, %v8233
      %v8308 = vadd.f32 %v8094, %v8236
      %v8309 = vadd.f32 %v8095, %v8238
      %v8310 = vadd.f32 %v8096, %v8241
      %v8311 = vadd.f32 %v8097, %v8243
      %v8312 = vadd.f32 %v8098, %v8246
      %v8313 = vadd.f32 %v8099, %v8248
      %v8314 = vadd.f32 %v8100, %v8251
      %v8315 = vadd.f32 %v8101, %v8253
      %v8316 = vadd.f32 %v8102, %v8256
      %v8317 = vadd.f32 %v8103, %v8258
      %v8318 = vadd.f32 %v8104, %v8261
      %v8319 = vadd.f32 %v8105, %v8263
      %v8320 = vlaneseq
      %v8321 = vshrl.u32 %v8320, 7
      %v8322 = vsub.s32 6, %v8321
      %v8323 = vrot.slane %v330, %v8322
      %v8324 = vmul.f32 %v283, %v8323
      %v8325 = vmul.f32 %v284, %v8323
      %v8326 = vmul.f32 %v285, %v8323
      %v8327 = vmul.f32 %v286, %v8323
      %v8328 = vmul.f32 %v287, %v8323
      %v8329 = vmul.f32 %v288, %v8323
      %v8330 = vmul.f32 %v289, %v8323
      %v8331 = vmul.f32 %v290, %v8323
      %v8332 = vmul.f32 %v291, %v8323
      %v8333 = vmul.f32 %v292, %v8323
      %v8334 = vmul.f32 %v293, %v8323
      %v8335 = vmul.f32 %v294, %v8323
      %v8336 = vmul.f32 %v295, %v8323
      %v8337 = vmul.f32 %v296, %v8323
      %v8338 = vmul.f32 %v297, %v8323
      %v8339 = vmul.f32 %v298, %v8323
      %v8340 = vmul.f32 %v299, %v8323
      %v8341 = vmul.f32 %v300, %v8323
      %v8342 = vmul.f32 %v301, %v8323
      %v8343 = vmul.f32 %v302, %v8323
      %v8344 = vmul.f32 %v303, %v8323
      %v8345 = vmul.f32 %v304, %v8323
      %v8346 = vmul.f32 %v305, %v8323
      %v8347 = vmul.f32 %v306, %v8323
      %v8348 = vmul.f32 %v307, %v8323
      %v8349 = vmul.f32 %v308, %v8323
      %v8350 = vmul.f32 %v309, %v8323
      %v8351 = vmul.f32 %v310, %v8323
      %v8352 = vmul.f32 %v311, %v8323
      %v8353 = vmul.f32 %v312, %v8323
      %v8354 = vmul.f32 %v313, %v8323
      %v8355 = vmul.f32 %v314, %v8323
      %v8356 = vmul.f32 %v315, %v8323
      %v8357 = vmul.f32 %v316, %v8323
      %v8358 = vmul.f32 %v317, %v8323
      %v8359 = vmul.f32 %v318, %v8323
      %v8360 = vmul.f32 %v319, %v8323
      %v8361 = vmul.f32 %v320, %v8323
      %v8362 = vmul.f32 %v321, %v8323
      %v8363 = vmul.f32 %v322, %v8323
      %v8364 = vmul.f32 %v323, %v8323
      %v8365 = vmul.f32 %v324, %v8323
      %v8408 = vrot.slane %v8324, 4
      %v8409 = vrot.slane %v8325, 4
      %v8410 = vsel %vm1013, %v8408, %v8409
      %v8411 = vrot.slane %v8326, 4
      %v8412 = vsel %vm1013, %v8409, %v8411
      %v8413 = vrot.slane %v8327, 4
      %v8414 = vrot.slane %v8328, 4
      %v8415 = vsel %vm1013, %v8413, %v8414
      %v8416 = vrot.slane %v8329, 4
      %v8417 = vsel %vm1013, %v8414, %v8416
      %v8418 = vrot.slane %v8330, 4
      %v8419 = vrot.slane %v8331, 4
      %v8420 = vsel %vm1013, %v8418, %v8419
      %v8421 = vrot.slane %v8332, 4
      %v8422 = vsel %vm1013, %v8419, %v8421
      %v8423 = vrot.slane %v8333, 4
      %v8424 = vrot.slane %v8334, 4
      %v8425 = vsel %vm1013, %v8423, %v8424
      %v8426 = vrot.slane %v8335, 4
      %v8427 = vsel %vm1013, %v8424, %v8426
      %v8428 = vrot.slane %v8336, 4
      %v8429 = vrot.slane %v8337, 4
      %v8430 = vsel %vm1013, %v8428, %v8429
      %v8431 = vrot.slane %v8338, 4
      %v8432 = vsel %vm1013, %v8429, %v8431
      %v8433 = vrot.slane %v8339, 4
      %v8434 = vrot.slane %v8340, 4
      %v8435 = vsel %vm1013, %v8433, %v8434
      %v8436 = vrot.slane %v8341, 4
      %v8437 = vsel %vm1013, %v8434, %v8436
      %v8438 = vrot.slane %v8342, 4
      %v8439 = vrot.slane %v8343, 4
      %v8440 = vsel %vm1013, %v8438, %v8439
      %v8441 = vrot.slane %v8344, 4
      %v8442 = vsel %vm1013, %v8439, %v8441
      %v8443 = vrot.slane %v8345, 4
      %v8444 = vrot.slane %v8346, 4
      %v8445 = vsel %vm1013, %v8443, %v8444
      %v8446 = vrot.slane %v8347, 4
      %v8447 = vsel %vm1013, %v8444, %v8446
      %v8448 = vrot.slane %v8348, 4
      %v8449 = vrot.slane %v8349, 4
      %v8450 = vsel %vm1013, %v8448, %v8449
      %v8451 = vrot.slane %v8350, 4
      %v8452 = vsel %vm1013, %v8449, %v8451
      %v8453 = vrot.slane %v8351, 4
      %v8454 = vrot.slane %v8352, 4
      %v8455 = vsel %vm1013, %v8453, %v8454
      %v8456 = vrot.slane %v8353, 4
      %v8457 = vsel %vm1013, %v8454, %v8456
      %v8458 = vrot.slane %v8354, 4
      %v8459 = vrot.slane %v8355, 4
      %v8460 = vsel %vm1013, %v8458, %v8459
      %v8461 = vrot.slane %v8356, 4
      %v8462 = vsel %vm1013, %v8459, %v8461
      %v8463 = vrot.slane %v8357, 4
      %v8464 = vrot.slane %v8358, 4
      %v8465 = vsel %vm1013, %v8463, %v8464
      %v8466 = vrot.slane %v8359, 4
      %v8467 = vsel %vm1013, %v8464, %v8466
      %v8468 = vrot.slane %v8360, 4
      %v8469 = vrot.slane %v8361, 4
      %v8470 = vsel %vm1013, %v8468, %v8469
      %v8471 = vrot.slane %v8362, 4
      %v8472 = vsel %vm1013, %v8469, %v8471
      %v8473 = vrot.slane %v8363, 4
      %v8474 = vrot.slane %v8364, 4
      %v8475 = vsel %vm1013, %v8473, %v8474
      %v8476 = vrot.slane %v8365, 4
      %v8477 = vsel %vm1013, %v8474, %v8476
      %v8506 = vadd.f32 %v8292, %v8410
      %v8507 = vadd.f32 %v8293, %v8412
      %v8508 = vadd.f32 %v8294, %v8415
      %v8509 = vadd.f32 %v8295, %v8417
      %v8510 = vadd.f32 %v8296, %v8420
      %v8511 = vadd.f32 %v8297, %v8422
      %v8512 = vadd.f32 %v8298, %v8425
      %v8513 = vadd.f32 %v8299, %v8427
      %v8514 = vadd.f32 %v8300, %v8430
      %v8515 = vadd.f32 %v8301, %v8432
      %v8516 = vadd.f32 %v8302, %v8435
      %v8517 = vadd.f32 %v8303, %v8437
      %v8518 = vadd.f32 %v8304, %v8440
      %v8519 = vadd.f32 %v8305, %v8442
      %v8520 = vadd.f32 %v8306, %v8445
      %v8521 = vadd.f32 %v8307, %v8447
      %v8522 = vadd.f32 %v8308, %v8450
      %v8523 = vadd.f32 %v8309, %v8452
      %v8524 = vadd.f32 %v8310, %v8455
      %v8525 = vadd.f32 %v8311, %v8457
      %v8526 = vadd.f32 %v8312, %v8460
      %v8527 = vadd.f32 %v8313, %v8462
      %v8528 = vadd.f32 %v8314, %v8465
      %v8529 = vadd.f32 %v8315, %v8467
      %v8530 = vadd.f32 %v8316, %v8470
      %v8531 = vadd.f32 %v8317, %v8472
      %v8532 = vadd.f32 %v8318, %v8475
      %v8533 = vadd.f32 %v8319, %v8477
      %v8534 = vlaneseq
      %v8535 = vshrl.u32 %v8534, 7
      %v8536 = vsub.s32 7, %v8535
      %v8537 = vrot.slane %v330, %v8536
      %v8538 = vmul.f32 %v283, %v8537
      %v8539 = vmul.f32 %v284, %v8537
      %v8540 = vmul.f32 %v285, %v8537
      %v8541 = vmul.f32 %v286, %v8537
      %v8542 = vmul.f32 %v287, %v8537
      %v8543 = vmul.f32 %v288, %v8537
      %v8544 = vmul.f32 %v289, %v8537
      %v8545 = vmul.f32 %v290, %v8537
      %v8546 = vmul.f32 %v291, %v8537
      %v8547 = vmul.f32 %v292, %v8537
      %v8548 = vmul.f32 %v293, %v8537
      %v8549 = vmul.f32 %v294, %v8537
      %v8550 = vmul.f32 %v295, %v8537
      %v8551 = vmul.f32 %v296, %v8537
      %v8552 = vmul.f32 %v297, %v8537
      %v8553 = vmul.f32 %v298, %v8537
      %v8554 = vmul.f32 %v299, %v8537
      %v8555 = vmul.f32 %v300, %v8537
      %v8556 = vmul.f32 %v301, %v8537
      %v8557 = vmul.f32 %v302, %v8537
      %v8558 = vmul.f32 %v303, %v8537
      %v8559 = vmul.f32 %v304, %v8537
      %v8560 = vmul.f32 %v305, %v8537
      %v8561 = vmul.f32 %v306, %v8537
      %v8562 = vmul.f32 %v307, %v8537
      %v8563 = vmul.f32 %v308, %v8537
      %v8564 = vmul.f32 %v309, %v8537
      %v8565 = vmul.f32 %v310, %v8537
      %v8566 = vmul.f32 %v311, %v8537
      %v8567 = vmul.f32 %v312, %v8537
      %v8568 = vmul.f32 %v313, %v8537
      %v8569 = vmul.f32 %v314, %v8537
      %v8570 = vmul.f32 %v315, %v8537
      %v8571 = vmul.f32 %v316, %v8537
      %v8572 = vmul.f32 %v317, %v8537
      %v8573 = vmul.f32 %v318, %v8537
      %v8574 = vmul.f32 %v319, %v8537
      %v8575 = vmul.f32 %v320, %v8537
      %v8576 = vmul.f32 %v321, %v8537
      %v8577 = vmul.f32 %v322, %v8537
      %v8578 = vmul.f32 %v323, %v8537
      %v8579 = vmul.f32 %v324, %v8537
      %v8622 = vrot.slane %v8538, 5
      %v8623 = vrot.slane %v8539, 5
      %v8624 = vsel %vm1228, %v8622, %v8623
      %v8625 = vrot.slane %v8540, 5
      %v8626 = vsel %vm1228, %v8623, %v8625
      %v8627 = vrot.slane %v8541, 5
      %v8628 = vrot.slane %v8542, 5
      %v8629 = vsel %vm1228, %v8627, %v8628
      %v8630 = vrot.slane %v8543, 5
      %v8631 = vsel %vm1228, %v8628, %v8630
      %v8632 = vrot.slane %v8544, 5
      %v8633 = vrot.slane %v8545, 5
      %v8634 = vsel %vm1228, %v8632, %v8633
      %v8635 = vrot.slane %v8546, 5
      %v8636 = vsel %vm1228, %v8633, %v8635
      %v8637 = vrot.slane %v8547, 5
      %v8638 = vrot.slane %v8548, 5
      %v8639 = vsel %vm1228, %v8637, %v8638
      %v8640 = vrot.slane %v8549, 5
      %v8641 = vsel %vm1228, %v8638, %v8640
      %v8642 = vrot.slane %v8550, 5
      %v8643 = vrot.slane %v8551, 5
      %v8644 = vsel %vm1228, %v8642, %v8643
      %v8645 = vrot.slane %v8552, 5
      %v8646 = vsel %vm1228, %v8643, %v8645
      %v8647 = vrot.slane %v8553, 5
      %v8648 = vrot.slane %v8554, 5
      %v8649 = vsel %vm1228, %v8647, %v8648
      %v8650 = vrot.slane %v8555, 5
      %v8651 = vsel %vm1228, %v8648, %v8650
      %v8652 = vrot.slane %v8556, 5
      %v8653 = vrot.slane %v8557, 5
      %v8654 = vsel %vm1228, %v8652, %v8653
      %v8655 = vrot.slane %v8558, 5
      %v8656 = vsel %vm1228, %v8653, %v8655
      %v8657 = vrot.slane %v8559, 5
      %v8658 = vrot.slane %v8560, 5
      %v8659 = vsel %vm1228, %v8657, %v8658
      %v8660 = vrot.slane %v8561, 5
      %v8661 = vsel %vm1228, %v8658, %v8660
      %v8662 = vrot.slane %v8562, 5
      %v8663 = vrot.slane %v8563, 5
      %v8664 = vsel %vm1228, %v8662, %v8663
      %v8665 = vrot.slane %v8564, 5
      %v8666 = vsel %vm1228, %v8663, %v8665
      %v8667 = vrot.slane %v8565, 5
      %v8668 = vrot.slane %v8566, 5
      %v8669 = vsel %vm1228, %v8667, %v8668
      %v8670 = vrot.slane %v8567, 5
      %v8671 = vsel %vm1228, %v8668, %v8670
      %v8672 = vrot.slane %v8568, 5
      %v8673 = vrot.slane %v8569, 5
      %v8674 = vsel %vm1228, %v8672, %v8673
      %v8675 = vrot.slane %v8570, 5
      %v8676 = vsel %vm1228, %v8673, %v8675
      %v8677 = vrot.slane %v8571, 5
      %v8678 = vrot.slane %v8572, 5
      %v8679 = vsel %vm1228, %v8677, %v8678
      %v8680 = vrot.slane %v8573, 5
      %v8681 = vsel %vm1228, %v8678, %v8680
      %v8682 = vrot.slane %v8574, 5
      %v8683 = vrot.slane %v8575, 5
      %v8684 = vsel %vm1228, %v8682, %v8683
      %v8685 = vrot.slane %v8576, 5
      %v8686 = vsel %vm1228, %v8683, %v8685
      %v8687 = vrot.slane %v8577, 5
      %v8688 = vrot.slane %v8578, 5
      %v8689 = vsel %vm1228, %v8687, %v8688
      %v8690 = vrot.slane %v8579, 5
      %v8691 = vsel %vm1228, %v8688, %v8690
      %v8720 = vadd.f32 %v8506, %v8624
      %v8721 = vadd.f32 %v8507, %v8626
      %v8722 = vadd.f32 %v8508, %v8629
      %v8723 = vadd.f32 %v8509, %v8631
      %v8724 = vadd.f32 %v8510, %v8634
      %v8725 = vadd.f32 %v8511, %v8636
      %v8726 = vadd.f32 %v8512, %v8639
      %v8727 = vadd.f32 %v8513, %v8641
      %v8728 = vadd.f32 %v8514, %v8644
      %v8729 = vadd.f32 %v8515, %v8646
      %v8730 = vadd.f32 %v8516, %v8649
      %v8731 = vadd.f32 %v8517, %v8651
      %v8732 = vadd.f32 %v8518, %v8654
      %v8733 = vadd.f32 %v8519, %v8656
      %v8734 = vadd.f32 %v8520, %v8659
      %v8735 = vadd.f32 %v8521, %v8661
      %v8736 = vadd.f32 %v8522, %v8664
      %v8737 = vadd.f32 %v8523, %v8666
      %v8738 = vadd.f32 %v8524, %v8669
      %v8739 = vadd.f32 %v8525, %v8671
      %v8740 = vadd.f32 %v8526, %v8674
      %v8741 = vadd.f32 %v8527, %v8676
      %v8742 = vadd.f32 %v8528, %v8679
      %v8743 = vadd.f32 %v8529, %v8681
      %v8744 = vadd.f32 %v8530, %v8684
      %v8745 = vadd.f32 %v8531, %v8686
      %v8746 = vadd.f32 %v8532, %v8689
      %v8747 = vadd.f32 %v8533, %v8691
      %v8748 = vlaneseq
      %v8749 = vshrl.u32 %v8748, 7
      %v8750 = vsub.s32 0, %v8749
      %v8751 = vrot.slane %v331, %v8750
      %v8752 = vmul.f32 %v283, %v8751
      %v8753 = vmul.f32 %v284, %v8751
      %v8754 = vmul.f32 %v285, %v8751
      %v8755 = vmul.f32 %v286, %v8751
      %v8756 = vmul.f32 %v287, %v8751
      %v8757 = vmul.f32 %v288, %v8751
      %v8758 = vmul.f32 %v289, %v8751
      %v8759 = vmul.f32 %v290, %v8751
      %v8760 = vmul.f32 %v291, %v8751
      %v8761 = vmul.f32 %v292, %v8751
      %v8762 = vmul.f32 %v293, %v8751
      %v8763 = vmul.f32 %v294, %v8751
      %v8764 = vmul.f32 %v295, %v8751
      %v8765 = vmul.f32 %v296, %v8751
      %v8766 = vmul.f32 %v297, %v8751
      %v8767 = vmul.f32 %v298, %v8751
      %v8768 = vmul.f32 %v299, %v8751
      %v8769 = vmul.f32 %v300, %v8751
      %v8770 = vmul.f32 %v301, %v8751
      %v8771 = vmul.f32 %v302, %v8751
      %v8772 = vmul.f32 %v303, %v8751
      %v8773 = vmul.f32 %v304, %v8751
      %v8774 = vmul.f32 %v305, %v8751
      %v8775 = vmul.f32 %v306, %v8751
      %v8776 = vmul.f32 %v307, %v8751
      %v8777 = vmul.f32 %v308, %v8751
      %v8778 = vmul.f32 %v309, %v8751
      %v8779 = vmul.f32 %v310, %v8751
      %v8780 = vmul.f32 %v311, %v8751
      %v8781 = vmul.f32 %v312, %v8751
      %v8782 = vmul.f32 %v313, %v8751
      %v8783 = vmul.f32 %v314, %v8751
      %v8784 = vmul.f32 %v315, %v8751
      %v8785 = vmul.f32 %v316, %v8751
      %v8786 = vmul.f32 %v317, %v8751
      %v8787 = vmul.f32 %v318, %v8751
      %v8788 = vmul.f32 %v319, %v8751
      %v8789 = vmul.f32 %v320, %v8751
      %v8790 = vmul.f32 %v321, %v8751
      %v8791 = vmul.f32 %v322, %v8751
      %v8792 = vmul.f32 %v323, %v8751
      %v8793 = vmul.f32 %v324, %v8751
      %v8836 = vrot.slane %v8752, 6
      %v8837 = vrot.slane %v8753, 6
      %v8838 = vsel %vm1443, %v8836, %v8837
      %v8839 = vrot.slane %v8754, 6
      %v8840 = vsel %vm1443, %v8837, %v8839
      %v8841 = vrot.slane %v8755, 6
      %v8842 = vrot.slane %v8756, 6
      %v8843 = vsel %vm1443, %v8841, %v8842
      %v8844 = vrot.slane %v8757, 6
      %v8845 = vsel %vm1443, %v8842, %v8844
      %v8846 = vrot.slane %v8758, 6
      %v8847 = vrot.slane %v8759, 6
      %v8848 = vsel %vm1443, %v8846, %v8847
      %v8849 = vrot.slane %v8760, 6
      %v8850 = vsel %vm1443, %v8847, %v8849
      %v8851 = vrot.slane %v8761, 6
      %v8852 = vrot.slane %v8762, 6
      %v8853 = vsel %vm1443, %v8851, %v8852
      %v8854 = vrot.slane %v8763, 6
      %v8855 = vsel %vm1443, %v8852, %v8854
      %v8856 = vrot.slane %v8764, 6
      %v8857 = vrot.slane %v8765, 6
      %v8858 = vsel %vm1443, %v8856, %v8857
      %v8859 = vrot.slane %v8766, 6
      %v8860 = vsel %vm1443, %v8857, %v8859
      %v8861 = vrot.slane %v8767, 6
      %v8862 = vrot.slane %v8768, 6
      %v8863 = vsel %vm1443, %v8861, %v8862
      %v8864 = vrot.slane %v8769, 6
      %v8865 = vsel %vm1443, %v8862, %v8864
      %v8866 = vrot.slane %v8770, 6
      %v8867 = vrot.slane %v8771, 6
      %v8868 = vsel %vm1443, %v8866, %v8867
      %v8869 = vrot.slane %v8772, 6
      %v8870 = vsel %vm1443, %v8867, %v8869
      %v8871 = vrot.slane %v8773, 6
      %v8872 = vrot.slane %v8774, 6
      %v8873 = vsel %vm1443, %v8871, %v8872
      %v8874 = vrot.slane %v8775, 6
      %v8875 = vsel %vm1443, %v8872, %v8874
      %v8876 = vrot.slane %v8776, 6
      %v8877 = vrot.slane %v8777, 6
      %v8878 = vsel %vm1443, %v8876, %v8877
      %v8879 = vrot.slane %v8778, 6
      %v8880 = vsel %vm1443, %v8877, %v8879
      %v8881 = vrot.slane %v8779, 6
      %v8882 = vrot.slane %v8780, 6
      %v8883 = vsel %vm1443, %v8881, %v8882
      %v8884 = vrot.slane %v8781, 6
      %v8885 = vsel %vm1443, %v8882, %v8884
      %v8886 = vrot.slane %v8782, 6
      %v8887 = vrot.slane %v8783, 6
      %v8888 = vsel %vm1443, %v8886, %v8887
      %v8889 = vrot.slane %v8784, 6
      %v8890 = vsel %vm1443, %v8887, %v8889
      %v8891 = vrot.slane %v8785, 6
      %v8892 = vrot.slane %v8786, 6
      %v8893 = vsel %vm1443, %v8891, %v8892
      %v8894 = vrot.slane %v8787, 6
      %v8895 = vsel %vm1443, %v8892, %v8894
      %v8896 = vrot.slane %v8788, 6
      %v8897 = vrot.slane %v8789, 6
      %v8898 = vsel %vm1443, %v8896, %v8897
      %v8899 = vrot.slane %v8790, 6
      %v8900 = vsel %vm1443, %v8897, %v8899
      %v8901 = vrot.slane %v8791, 6
      %v8902 = vrot.slane %v8792, 6
      %v8903 = vsel %vm1443, %v8901, %v8902
      %v8904 = vrot.slane %v8793, 6
      %v8905 = vsel %vm1443, %v8902, %v8904
      %v8934 = vadd.f32 %v8720, %v8838
      %v8935 = vadd.f32 %v8721, %v8840
      %v8936 = vadd.f32 %v8722, %v8843
      %v8937 = vadd.f32 %v8723, %v8845
      %v8938 = vadd.f32 %v8724, %v8848
      %v8939 = vadd.f32 %v8725, %v8850
      %v8940 = vadd.f32 %v8726, %v8853
      %v8941 = vadd.f32 %v8727, %v8855
      %v8942 = vadd.f32 %v8728, %v8858
      %v8943 = vadd.f32 %v8729, %v8860
      %v8944 = vadd.f32 %v8730, %v8863
      %v8945 = vadd.f32 %v8731, %v8865
      %v8946 = vadd.f32 %v8732, %v8868
      %v8947 = vadd.f32 %v8733, %v8870
      %v8948 = vadd.f32 %v8734, %v8873
      %v8949 = vadd.f32 %v8735, %v8875
      %v8950 = vadd.f32 %v8736, %v8878
      %v8951 = vadd.f32 %v8737, %v8880
      %v8952 = vadd.f32 %v8738, %v8883
      %v8953 = vadd.f32 %v8739, %v8885
      %v8954 = vadd.f32 %v8740, %v8888
      %v8955 = vadd.f32 %v8741, %v8890
      %v8956 = vadd.f32 %v8742, %v8893
      %v8957 = vadd.f32 %v8743, %v8895
      %v8958 = vadd.f32 %v8744, %v8898
      %v8959 = vadd.f32 %v8745, %v8900
      %v8960 = vadd.f32 %v8746, %v8903
      %v8961 = vadd.f32 %v8747, %v8905
      %v8962 = vld [vmem:[%s2] sm:$0x1]
      %v8964 = vlaneseq
      %v8965 = vshrl.u32 %v8964, 7
      %v8966 = vsub.s32 0, %v8965
      %v8967 = vrot.slane %v8962, %v8966
      %v8969 = vadd.f32 %v8934, %v8967
      %v8970 = vadd.f32 %v8935, %v8967
      %v8971 = vadd.f32 %v8936, %v8967
      %v8972 = vadd.f32 %v8937, %v8967
      %v8973 = vadd.f32 %v8938, %v8967
      %v8974 = vadd.f32 %v8939, %v8967
      %v8975 = vadd.f32 %v8940, %v8967
      %v8976 = vadd.f32 %v8941, %v8967
      %v8977 = vadd.f32 %v8942, %v8967
      %v8978 = vadd.f32 %v8943, %v8967
      %v8979 = vadd.f32 %v8944, %v8967
      %v8980 = vadd.f32 %v8945, %v8967
      %v8981 = vadd.f32 %v8946, %v8967
      %v8982 = vadd.f32 %v8947, %v8967
      %v8983 = vadd.f32 %v8948, %v8967
      %v8984 = vadd.f32 %v8949, %v8967
      %v8985 = vadd.f32 %v8950, %v8967
      %v8986 = vadd.f32 %v8951, %v8967
      %v8987 = vadd.f32 %v8952, %v8967
      %v8988 = vadd.f32 %v8953, %v8967
      %v8989 = vadd.f32 %v8954, %v8967
      %v8990 = vadd.f32 %v8955, %v8967
      %v8991 = vadd.f32 %v8956, %v8967
      %v8992 = vadd.f32 %v8957, %v8967
      %v8993 = vadd.f32 %v8958, %v8967
      %v8994 = vadd.f32 %v8959, %v8967
      %v8995 = vadd.f32 %v8960, %v8967
      %v8996 = vadd.f32 %v8961, %v8967
      %vm8997 = vcmask 261120
      %8998 = vst.msk [vmem:[%s259] sm:$0xff] %vm8997, %v8969
      %vm8999 = vcmask 259072
      %9000 = vst.msk [vmem:[%s259 + $0x8] sm:$0x3f] %vm8999, %v8970
      %9001 = vst.msk [vmem:[%s259 + $0x10] sm:$0xff] %vm8997, %v8971
      %9002 = vst.msk [vmem:[%s259 + $0x18] sm:$0x3f] %vm8999, %v8972
      %9003 = vst.msk [vmem:[%s259 + $0x20] sm:$0xff] %vm8997, %v8973
      %9004 = vst.msk [vmem:[%s259 + $0x28] sm:$0x3f] %vm8999, %v8974
      %9005 = vst.msk [vmem:[%s259 + $0x30] sm:$0xff] %vm8997, %v8975
      %9006 = vst.msk [vmem:[%s259 + $0x38] sm:$0x3f] %vm8999, %v8976
      %9007 = vst.msk [vmem:[%s259 + $0x40] sm:$0xff] %vm8997, %v8977
      %9008 = vst.msk [vmem:[%s259 + $0x48] sm:$0x3f] %vm8999, %v8978
      %9009 = vst.msk [vmem:[%s259 + $0x50] sm:$0xff] %vm8997, %v8979
      %9010 = vst.msk [vmem:[%s259 + $0x58] sm:$0x3f] %vm8999, %v8980
      %9011 = vst.msk [vmem:[%s259 + $0x60] sm:$0xff] %vm8997, %v8981
      %9012 = vst.msk [vmem:[%s259 + $0x68] sm:$0x3f] %vm8999, %v8982
      %9013 = vst.msk [vmem:[%s259 + $0x70] sm:$0xff] %vm8997, %v8983
      %9014 = vst.msk [vmem:[%s259 + $0x78] sm:$0x3f] %vm8999, %v8984
      %9015 = vst.msk [vmem:[%s259 + $0x80] sm:$0xff] %vm8997, %v8985
      %9016 = vst.msk [vmem:[%s259 + $0x88] sm:$0x3f] %vm8999, %v8986
      %9017 = vst.msk [vmem:[%s259 + $0x90] sm:$0xff] %vm8997, %v8987
      %9018 = vst.msk [vmem:[%s259 + $0x98] sm:$0x3f] %vm8999, %v8988
      %9019 = vst.msk [vmem:[%s259 + $0xa0] sm:$0xff] %vm8997, %v8989
      %9020 = vst.msk [vmem:[%s259 + $0xa8] sm:$0x3f] %vm8999, %v8990
      %9021 = vst.msk [vmem:[%s259 + $0xb0] sm:$0xff] %vm8997, %v8991
      %9022 = vst.msk [vmem:[%s259 + $0xb8] sm:$0x3f] %vm8999, %v8992
      %9023 = vst.msk [vmem:[%s259 + $0xc0] sm:$0xff] %vm8997, %v8993
      %9024 = vst.msk [vmem:[%s259 + $0xc8] sm:$0x3f] %vm8999, %v8994
      %9025 = vst.msk [vmem:[%s259 + $0xd0] sm:$0xff] %vm8997, %v8995
      %9026 = vst.msk [vmem:[%s259 + $0xd8] sm:$0x3f] %vm8999, %v8996
      %v9027 = vsel %vm8997, %v8969, 0.0
      %9028 = vadd.xlane.f32.xlu0 %v9027
      %v9029 = vpop.xlane.xlu0 %9028
      %v9030 = vsel %vm8999, %v8970, 0.0
      %9031 = vadd.xlane.f32.xlu0 %v9030
      %v9032 = vpop.xlane.xlu0 %9031
      %v9033 = vsel %vm8997, %v8971, 0.0
      %9034 = vadd.xlane.f32.xlu0 %v9033
      %v9035 = vpop.xlane.xlu0 %9034
      %v9036 = vsel %vm8999, %v8972, 0.0
      %9037 = vadd.xlane.f32.xlu0 %v9036
      %v9038 = vpop.xlane.xlu0 %9037
      %v9039 = vsel %vm8997, %v8973, 0.0
      %9040 = vadd.xlane.f32.xlu0 %v9039
      %v9041 = vpop.xlane.xlu0 %9040
      %v9042 = vsel %vm8999, %v8974, 0.0
      %9043 = vadd.xlane.f32.xlu0 %v9042
      %v9044 = vpop.xlane.xlu0 %9043
      %v9045 = vsel %vm8997, %v8975, 0.0
      %9046 = vadd.xlane.f32.xlu0 %v9045
      %v9047 = vpop.xlane.xlu0 %9046
      %v9048 = vsel %vm8999, %v8976, 0.0
      %9049 = vadd.xlane.f32.xlu0 %v9048
      %v9050 = vpop.xlane.xlu0 %9049
      %v9051 = vsel %vm8997, %v8977, 0.0
      %9052 = vadd.xlane.f32.xlu0 %v9051
      %v9053 = vpop.xlane.xlu0 %9052
      %v9054 = vsel %vm8999, %v8978, 0.0
      %9055 = vadd.xlane.f32.xlu0 %v9054
      %v9056 = vpop.xlane.xlu0 %9055
      %v9057 = vsel %vm8997, %v8979, 0.0
      %9058 = vadd.xlane.f32.xlu0 %v9057
      %v9059 = vpop.xlane.xlu0 %9058
      %v9060 = vsel %vm8999, %v8980, 0.0
      %9061 = vadd.xlane.f32.xlu0 %v9060
      %v9062 = vpop.xlane.xlu0 %9061
      %v9063 = vsel %vm8997, %v8981, 0.0
      %9064 = vadd.xlane.f32.xlu0 %v9063
      %v9065 = vpop.xlane.xlu0 %9064
      %v9066 = vsel %vm8999, %v8982, 0.0
      %9067 = vadd.xlane.f32.xlu0 %v9066
      %v9068 = vpop.xlane.xlu0 %9067
      %v9069 = vsel %vm8997, %v8983, 0.0
      %9070 = vadd.xlane.f32.xlu0 %v9069
      %v9071 = vpop.xlane.xlu0 %9070
      %v9072 = vsel %vm8999, %v8984, 0.0
      %9073 = vadd.xlane.f32.xlu0 %v9072
      %v9074 = vpop.xlane.xlu0 %9073
      %v9075 = vsel %vm8997, %v8985, 0.0
      %9076 = vadd.xlane.f32.xlu0 %v9075
      %v9077 = vpop.xlane.xlu0 %9076
      %v9078 = vsel %vm8999, %v8986, 0.0
      %9079 = vadd.xlane.f32.xlu0 %v9078
      %v9080 = vpop.xlane.xlu0 %9079
      %v9081 = vsel %vm8997, %v8987, 0.0
      %9082 = vadd.xlane.f32.xlu0 %v9081
      %v9083 = vpop.xlane.xlu0 %9082
      %v9084 = vsel %vm8999, %v8988, 0.0
      %9085 = vadd.xlane.f32.xlu0 %v9084
      %v9086 = vpop.xlane.xlu0 %9085
      %v9087 = vsel %vm8997, %v8989, 0.0
      %9088 = vadd.xlane.f32.xlu0 %v9087
      %v9089 = vpop.xlane.xlu0 %9088
      %v9090 = vsel %vm8999, %v8990, 0.0
      %9091 = vadd.xlane.f32.xlu0 %v9090
      %v9092 = vpop.xlane.xlu0 %9091
      %v9093 = vsel %vm8997, %v8991, 0.0
      %9094 = vadd.xlane.f32.xlu0 %v9093
      %v9095 = vpop.xlane.xlu0 %9094
      %v9096 = vsel %vm8999, %v8992, 0.0
      %9097 = vadd.xlane.f32.xlu0 %v9096
      %v9098 = vpop.xlane.xlu0 %9097
      %v9099 = vsel %vm8997, %v8993, 0.0
      %9100 = vadd.xlane.f32.xlu0 %v9099
      %v9101 = vpop.xlane.xlu0 %9100
      %v9102 = vsel %vm8999, %v8994, 0.0
      %9103 = vadd.xlane.f32.xlu0 %v9102
      %v9104 = vpop.xlane.xlu0 %9103
      %v9105 = vsel %vm8997, %v8995, 0.0
      %9106 = vadd.xlane.f32.xlu0 %v9105
      %v9107 = vpop.xlane.xlu0 %9106
      %v9108 = vsel %vm8999, %v8996, 0.0
      %9109 = vadd.xlane.f32.xlu0 %v9108
      %v9110 = vpop.xlane.xlu0 %9109
      %v9111 = vrcp.pop 32.0
      %v9112 = vmul.f32 %v9029, %v9111
      %v9113 = vmul.f32 %v9032, %v9111
      %v9114 = vmul.f32 %v9035, %v9111
      %v9115 = vmul.f32 %v9038, %v9111
      %v9116 = vmul.f32 %v9041, %v9111
      %v9117 = vmul.f32 %v9044, %v9111
      %v9118 = vmul.f32 %v9047, %v9111
      %v9119 = vmul.f32 %v9050, %v9111
      %v9120 = vmul.f32 %v9053, %v9111
      %v9121 = vmul.f32 %v9056, %v9111
      %v9122 = vmul.f32 %v9059, %v9111
      %v9123 = vmul.f32 %v9062, %v9111
      %v9124 = vmul.f32 %v9065, %v9111
      %v9125 = vmul.f32 %v9068, %v9111
      %v9126 = vmul.f32 %v9071, %v9111
      %v9127 = vmul.f32 %v9074, %v9111
      %v9128 = vmul.f32 %v9077, %v9111
      %v9129 = vmul.f32 %v9080, %v9111
      %v9130 = vmul.f32 %v9083, %v9111
      %v9131 = vmul.f32 %v9086, %v9111
      %v9132 = vmul.f32 %v9089, %v9111
      %v9133 = vmul.f32 %v9092, %v9111
      %v9134 = vmul.f32 %v9095, %v9111
      %v9135 = vmul.f32 %v9098, %v9111
      %v9136 = vmul.f32 %v9101, %v9111
      %v9137 = vmul.f32 %v9104, %v9111
      %v9138 = vmul.f32 %v9107, %v9111
      %v9139 = vmul.f32 %v9110, %v9111
      %v9140 = vsub.f32 %v8969, %v9112
      %v9141 = vsub.f32 %v8970, %v9113
      %v9142 = vsub.f32 %v8971, %v9114
      %v9143 = vsub.f32 %v8972, %v9115
      %v9144 = vsub.f32 %v8973, %v9116
      %v9145 = vsub.f32 %v8974, %v9117
      %v9146 = vsub.f32 %v8975, %v9118
      %v9147 = vsub.f32 %v8976, %v9119
      %v9148 = vsub.f32 %v8977, %v9120
      %v9149 = vsub.f32 %v8978, %v9121
      %v9150 = vsub.f32 %v8979, %v9122
      %v9151 = vsub.f32 %v8980, %v9123
      %v9152 = vsub.f32 %v8981, %v9124
      %v9153 = vsub.f32 %v8982, %v9125
      %v9154 = vsub.f32 %v8983, %v9126
      %v9155 = vsub.f32 %v8984, %v9127
      %v9156 = vsub.f32 %v8985, %v9128
      %v9157 = vsub.f32 %v8986, %v9129
      %v9158 = vsub.f32 %v8987, %v9130
      %v9159 = vsub.f32 %v8988, %v9131
      %v9160 = vsub.f32 %v8989, %v9132
      %v9161 = vsub.f32 %v8990, %v9133
      %v9162 = vsub.f32 %v8991, %v9134
      %v9163 = vsub.f32 %v8992, %v9135
      %v9164 = vsub.f32 %v8993, %v9136
      %v9165 = vsub.f32 %v8994, %v9137
      %v9166 = vsub.f32 %v8995, %v9138
      %v9167 = vsub.f32 %v8996, %v9139
      %v9168 = vmul.f32 %v9140, %v9140
      %v9169 = vmul.f32 %v9141, %v9141
      %v9170 = vmul.f32 %v9142, %v9142
      %v9171 = vmul.f32 %v9143, %v9143
      %v9172 = vmul.f32 %v9144, %v9144
      %v9173 = vmul.f32 %v9145, %v9145
      %v9174 = vmul.f32 %v9146, %v9146
      %v9175 = vmul.f32 %v9147, %v9147
      %v9176 = vmul.f32 %v9148, %v9148
      %v9177 = vmul.f32 %v9149, %v9149
      %v9178 = vmul.f32 %v9150, %v9150
      %v9179 = vmul.f32 %v9151, %v9151
      %v9180 = vmul.f32 %v9152, %v9152
      %v9181 = vmul.f32 %v9153, %v9153
      %v9182 = vmul.f32 %v9154, %v9154
      %v9183 = vmul.f32 %v9155, %v9155
      %v9184 = vmul.f32 %v9156, %v9156
      %v9185 = vmul.f32 %v9157, %v9157
      %v9186 = vmul.f32 %v9158, %v9158
      %v9187 = vmul.f32 %v9159, %v9159
      %v9188 = vmul.f32 %v9160, %v9160
      %v9189 = vmul.f32 %v9161, %v9161
      %v9190 = vmul.f32 %v9162, %v9162
      %v9191 = vmul.f32 %v9163, %v9163
      %v9192 = vmul.f32 %v9164, %v9164
      %v9193 = vmul.f32 %v9165, %v9165
      %v9194 = vmul.f32 %v9166, %v9166
      %v9195 = vmul.f32 %v9167, %v9167
      %v9196 = vsel %vm8997, %v9168, 0.0
      %9197 = vadd.xlane.f32.xlu0 %v9196
      %v9198 = vpop.xlane.xlu0 %9197
      %v9199 = vsel %vm8999, %v9169, 0.0
      %9200 = vadd.xlane.f32.xlu0 %v9199
      %v9201 = vpop.xlane.xlu0 %9200
      %v9202 = vsel %vm8997, %v9170, 0.0
      %9203 = vadd.xlane.f32.xlu0 %v9202
      %v9204 = vpop.xlane.xlu0 %9203
      %v9205 = vsel %vm8999, %v9171, 0.0
      %9206 = vadd.xlane.f32.xlu0 %v9205
      %v9207 = vpop.xlane.xlu0 %9206
      %v9208 = vsel %vm8997, %v9172, 0.0
      %9209 = vadd.xlane.f32.xlu0 %v9208
      %v9210 = vpop.xlane.xlu0 %9209
      %v9211 = vsel %vm8999, %v9173, 0.0
      %9212 = vadd.xlane.f32.xlu0 %v9211
      %v9213 = vpop.xlane.xlu0 %9212
      %v9214 = vsel %vm8997, %v9174, 0.0
      %9215 = vadd.xlane.f32.xlu0 %v9214
      %v9216 = vpop.xlane.xlu0 %9215
      %v9217 = vsel %vm8999, %v9175, 0.0
      %9218 = vadd.xlane.f32.xlu0 %v9217
      %v9219 = vpop.xlane.xlu0 %9218
      %v9220 = vsel %vm8997, %v9176, 0.0
      %9221 = vadd.xlane.f32.xlu0 %v9220
      %v9222 = vpop.xlane.xlu0 %9221
      %v9223 = vsel %vm8999, %v9177, 0.0
      %9224 = vadd.xlane.f32.xlu0 %v9223
      %v9225 = vpop.xlane.xlu0 %9224
      %v9226 = vsel %vm8997, %v9178, 0.0
      %9227 = vadd.xlane.f32.xlu0 %v9226
      %v9228 = vpop.xlane.xlu0 %9227
      %v9229 = vsel %vm8999, %v9179, 0.0
      %9230 = vadd.xlane.f32.xlu0 %v9229
      %v9231 = vpop.xlane.xlu0 %9230
      %v9232 = vsel %vm8997, %v9180, 0.0
      %9233 = vadd.xlane.f32.xlu0 %v9232
      %v9234 = vpop.xlane.xlu0 %9233
      %v9235 = vsel %vm8999, %v9181, 0.0
      %9236 = vadd.xlane.f32.xlu0 %v9235
      %v9237 = vpop.xlane.xlu0 %9236
      %v9238 = vsel %vm8997, %v9182, 0.0
      %9239 = vadd.xlane.f32.xlu0 %v9238
      %v9240 = vpop.xlane.xlu0 %9239
      %v9241 = vsel %vm8999, %v9183, 0.0
      %9242 = vadd.xlane.f32.xlu0 %v9241
      %v9243 = vpop.xlane.xlu0 %9242
      %v9244 = vsel %vm8997, %v9184, 0.0
      %9245 = vadd.xlane.f32.xlu0 %v9244
      %v9246 = vpop.xlane.xlu0 %9245
      %v9247 = vsel %vm8999, %v9185, 0.0
      %9248 = vadd.xlane.f32.xlu0 %v9247
      %v9249 = vpop.xlane.xlu0 %9248
      %v9250 = vsel %vm8997, %v9186, 0.0
      %9251 = vadd.xlane.f32.xlu0 %v9250
      %v9252 = vpop.xlane.xlu0 %9251
      %v9253 = vsel %vm8999, %v9187, 0.0
      %9254 = vadd.xlane.f32.xlu0 %v9253
      %v9255 = vpop.xlane.xlu0 %9254
      %v9256 = vsel %vm8997, %v9188, 0.0
      %9257 = vadd.xlane.f32.xlu0 %v9256
      %v9258 = vpop.xlane.xlu0 %9257
      %v9259 = vsel %vm8999, %v9189, 0.0
      %9260 = vadd.xlane.f32.xlu0 %v9259
      %v9261 = vpop.xlane.xlu0 %9260
      %v9262 = vsel %vm8997, %v9190, 0.0
      %9263 = vadd.xlane.f32.xlu0 %v9262
      %v9264 = vpop.xlane.xlu0 %9263
      %v9265 = vsel %vm8999, %v9191, 0.0
      %9266 = vadd.xlane.f32.xlu0 %v9265
      %v9267 = vpop.xlane.xlu0 %9266
      %v9268 = vsel %vm8997, %v9192, 0.0
      %9269 = vadd.xlane.f32.xlu0 %v9268
      %v9270 = vpop.xlane.xlu0 %9269
      %v9271 = vsel %vm8999, %v9193, 0.0
      %9272 = vadd.xlane.f32.xlu0 %v9271
      %v9273 = vpop.xlane.xlu0 %9272
      %v9274 = vsel %vm8997, %v9194, 0.0
      %9275 = vadd.xlane.f32.xlu0 %v9274
      %v9276 = vpop.xlane.xlu0 %9275
      %v9277 = vsel %vm8999, %v9195, 0.0
      %9278 = vadd.xlane.f32.xlu0 %v9277
      %v9279 = vpop.xlane.xlu0 %9278
      %v9280 = vmul.f32 %v9198, %v9111
      %v9281 = vmul.f32 %v9201, %v9111
      %v9282 = vmul.f32 %v9204, %v9111
      %v9283 = vmul.f32 %v9207, %v9111
      %v9284 = vmul.f32 %v9210, %v9111
      %v9285 = vmul.f32 %v9213, %v9111
      %v9286 = vmul.f32 %v9216, %v9111
      %v9287 = vmul.f32 %v9219, %v9111
      %v9288 = vmul.f32 %v9222, %v9111
      %v9289 = vmul.f32 %v9225, %v9111
      %v9290 = vmul.f32 %v9228, %v9111
      %v9291 = vmul.f32 %v9231, %v9111
      %v9292 = vmul.f32 %v9234, %v9111
      %v9293 = vmul.f32 %v9237, %v9111
      %v9294 = vmul.f32 %v9240, %v9111
      %v9295 = vmul.f32 %v9243, %v9111
      %v9296 = vmul.f32 %v9246, %v9111
      %v9297 = vmul.f32 %v9249, %v9111
      %v9298 = vmul.f32 %v9252, %v9111
      %v9299 = vmul.f32 %v9255, %v9111
      %v9300 = vmul.f32 %v9258, %v9111
      %v9301 = vmul.f32 %v9261, %v9111
      %v9302 = vmul.f32 %v9264, %v9111
      %v9303 = vmul.f32 %v9267, %v9111
      %v9304 = vmul.f32 %v9270, %v9111
      %v9305 = vmul.f32 %v9273, %v9111
      %v9306 = vmul.f32 %v9276, %v9111
      %v9307 = vmul.f32 %v9279, %v9111
      %v9308 = vadd.f32 %v9280, 1e-06
      %v9309 = vadd.f32 %v9281, 1e-06
      %v9310 = vadd.f32 %v9282, 1e-06
      %v9311 = vadd.f32 %v9283, 1e-06
      %v9312 = vadd.f32 %v9284, 1e-06
      %v9313 = vadd.f32 %v9285, 1e-06
      %v9314 = vadd.f32 %v9286, 1e-06
      %v9315 = vadd.f32 %v9287, 1e-06
      %v9316 = vadd.f32 %v9288, 1e-06
      %v9317 = vadd.f32 %v9289, 1e-06
      %v9318 = vadd.f32 %v9290, 1e-06
      %v9319 = vadd.f32 %v9291, 1e-06
      %v9320 = vadd.f32 %v9292, 1e-06
      %v9321 = vadd.f32 %v9293, 1e-06
      %v9322 = vadd.f32 %v9294, 1e-06
      %v9323 = vadd.f32 %v9295, 1e-06
      %v9324 = vadd.f32 %v9296, 1e-06
      %v9325 = vadd.f32 %v9297, 1e-06
      %v9326 = vadd.f32 %v9298, 1e-06
      %v9327 = vadd.f32 %v9299, 1e-06
      %v9328 = vadd.f32 %v9300, 1e-06
      %v9329 = vadd.f32 %v9301, 1e-06
      %v9330 = vadd.f32 %v9302, 1e-06
      %v9331 = vadd.f32 %v9303, 1e-06
      %v9332 = vadd.f32 %v9304, 1e-06
      %v9333 = vadd.f32 %v9305, 1e-06
      %v9334 = vadd.f32 %v9306, 1e-06
      %v9335 = vadd.f32 %v9307, 1e-06
      %v9336 = vrsqrt.pop %v9308
      %v9337 = vrsqrt.pop %v9309
      %v9338 = vrsqrt.pop %v9310
      %v9339 = vrsqrt.pop %v9311
      %v9340 = vrsqrt.pop %v9312
      %v9341 = vrsqrt.pop %v9313
      %v9342 = vrsqrt.pop %v9314
      %v9343 = vrsqrt.pop %v9315
      %v9344 = vrsqrt.pop %v9316
      %v9345 = vrsqrt.pop %v9317
      %v9346 = vrsqrt.pop %v9318
      %v9347 = vrsqrt.pop %v9319
      %v9348 = vrsqrt.pop %v9320
      %v9349 = vrsqrt.pop %v9321
      %v9350 = vrsqrt.pop %v9322
      %v9351 = vrsqrt.pop %v9323
      %v9352 = vrsqrt.pop %v9324
      %v9353 = vrsqrt.pop %v9325
      %v9354 = vrsqrt.pop %v9326
      %v9355 = vrsqrt.pop %v9327
      %v9356 = vrsqrt.pop %v9328
      %v9357 = vrsqrt.pop %v9329
      %v9358 = vrsqrt.pop %v9330
      %v9359 = vrsqrt.pop %v9331
      %v9360 = vrsqrt.pop %v9332
      %v9361 = vrsqrt.pop %v9333
      %v9362 = vrsqrt.pop %v9334
      %v9363 = vrsqrt.pop %v9335
      %v9364 = vmul.f32 %v9140, %v9336
      %v9365 = vmul.f32 %v9141, %v9337
      %v9366 = vmul.f32 %v9142, %v9338
      %v9367 = vmul.f32 %v9143, %v9339
      %v9368 = vmul.f32 %v9144, %v9340
      %v9369 = vmul.f32 %v9145, %v9341
      %v9370 = vmul.f32 %v9146, %v9342
      %v9371 = vmul.f32 %v9147, %v9343
      %v9372 = vmul.f32 %v9148, %v9344
      %v9373 = vmul.f32 %v9149, %v9345
      %v9374 = vmul.f32 %v9150, %v9346
      %v9375 = vmul.f32 %v9151, %v9347
      %v9376 = vmul.f32 %v9152, %v9348
      %v9377 = vmul.f32 %v9153, %v9349
      %v9378 = vmul.f32 %v9154, %v9350
      %v9379 = vmul.f32 %v9155, %v9351
      %v9380 = vmul.f32 %v9156, %v9352
      %v9381 = vmul.f32 %v9157, %v9353
      %v9382 = vmul.f32 %v9158, %v9354
      %v9383 = vmul.f32 %v9159, %v9355
      %v9384 = vmul.f32 %v9160, %v9356
      %v9385 = vmul.f32 %v9161, %v9357
      %v9386 = vmul.f32 %v9162, %v9358
      %v9387 = vmul.f32 %v9163, %v9359
      %v9388 = vmul.f32 %v9164, %v9360
      %v9389 = vmul.f32 %v9165, %v9361
      %v9390 = vmul.f32 %v9166, %v9362
      %v9391 = vmul.f32 %v9167, %v9363
      %v9392 = vld [vmem:[%s3] sm:$0x1]
      %v9394 = vlaneseq
      %v9395 = vshrl.u32 %v9394, 7
      %v9396 = vsub.s32 0, %v9395
      %v9397 = vrot.slane %v9392, %v9396
      %v9399 = vmul.f32 %v9364, %v9397
      %v9400 = vmul.f32 %v9365, %v9397
      %v9401 = vmul.f32 %v9366, %v9397
      %v9402 = vmul.f32 %v9367, %v9397
      %v9403 = vmul.f32 %v9368, %v9397
      %v9404 = vmul.f32 %v9369, %v9397
      %v9405 = vmul.f32 %v9370, %v9397
      %v9406 = vmul.f32 %v9371, %v9397
      %v9407 = vmul.f32 %v9372, %v9397
      %v9408 = vmul.f32 %v9373, %v9397
      %v9409 = vmul.f32 %v9374, %v9397
      %v9410 = vmul.f32 %v9375, %v9397
      %v9411 = vmul.f32 %v9376, %v9397
      %v9412 = vmul.f32 %v9377, %v9397
      %v9413 = vmul.f32 %v9378, %v9397
      %v9414 = vmul.f32 %v9379, %v9397
      %v9415 = vmul.f32 %v9380, %v9397
      %v9416 = vmul.f32 %v9381, %v9397
      %v9417 = vmul.f32 %v9382, %v9397
      %v9418 = vmul.f32 %v9383, %v9397
      %v9419 = vmul.f32 %v9384, %v9397
      %v9420 = vmul.f32 %v9385, %v9397
      %v9421 = vmul.f32 %v9386, %v9397
      %v9422 = vmul.f32 %v9387, %v9397
      %v9423 = vmul.f32 %v9388, %v9397
      %v9424 = vmul.f32 %v9389, %v9397
      %v9425 = vmul.f32 %v9390, %v9397
      %v9426 = vmul.f32 %v9391, %v9397
      %v9427 = vld [vmem:[%s4] sm:$0x1]
      %v9429 = vlaneseq
      %v9430 = vshrl.u32 %v9429, 7
      %v9431 = vsub.s32 0, %v9430
      %v9432 = vrot.slane %v9427, %v9431
      %v9434 = vadd.f32 %v9399, %v9432
      %v9435 = vadd.f32 %v9400, %v9432
      %v9436 = vadd.f32 %v9401, %v9432
      %v9437 = vadd.f32 %v9402, %v9432
      %v9438 = vadd.f32 %v9403, %v9432
      %v9439 = vadd.f32 %v9404, %v9432
      %v9440 = vadd.f32 %v9405, %v9432
      %v9441 = vadd.f32 %v9406, %v9432
      %v9442 = vadd.f32 %v9407, %v9432
      %v9443 = vadd.f32 %v9408, %v9432
      %v9444 = vadd.f32 %v9409, %v9432
      %v9445 = vadd.f32 %v9410, %v9432
      %v9446 = vadd.f32 %v9411, %v9432
      %v9447 = vadd.f32 %v9412, %v9432
      %v9448 = vadd.f32 %v9413, %v9432
      %v9449 = vadd.f32 %v9414, %v9432
      %v9450 = vadd.f32 %v9415, %v9432
      %v9451 = vadd.f32 %v9416, %v9432
      %v9452 = vadd.f32 %v9417, %v9432
      %v9453 = vadd.f32 %v9418, %v9432
      %v9454 = vadd.f32 %v9419, %v9432
      %v9455 = vadd.f32 %v9420, %v9432
      %v9456 = vadd.f32 %v9421, %v9432
      %v9457 = vadd.f32 %v9422, %v9432
      %v9458 = vadd.f32 %v9423, %v9432
      %v9459 = vadd.f32 %v9424, %v9432
      %v9460 = vadd.f32 %v9425, %v9432
      %v9461 = vadd.f32 %v9426, %v9432
      %v9462 = vpack.c.bf16 %v9435, %v9434
      %v9463 = vpack.c.bf16 %v9437, %v9436
      %v9464 = vpack.c.bf16 %v9439, %v9438
      %v9465 = vpack.c.bf16 %v9441, %v9440
      %v9466 = vpack.c.bf16 %v9443, %v9442
      %v9467 = vpack.c.bf16 %v9445, %v9444
      %v9468 = vpack.c.bf16 %v9447, %v9446
      %v9469 = vpack.c.bf16 %v9449, %v9448
      %v9470 = vpack.c.bf16 %v9451, %v9450
      %v9471 = vpack.c.bf16 %v9453, %v9452
      %v9472 = vpack.c.bf16 %v9455, %v9454
      %v9473 = vpack.c.bf16 %v9457, %v9456
      %v9474 = vpack.c.bf16 %v9459, %v9458
      %v9475 = vpack.c.bf16 %v9461, %v9460
      %v9490 = vunpack.c.l.b16 %v9462
      %v9491 = vunpack.c.h.b16 %v9462
      %v9492 = vunpack.c.l.b16 %v9463
      %v9493 = vunpack.c.h.b16 %v9463
      %v9494 = vunpack.c.l.b16 %v9464
      %v9495 = vunpack.c.h.b16 %v9464
      %v9496 = vunpack.c.l.b16 %v9465
      %v9497 = vunpack.c.h.b16 %v9465
      %v9498 = vunpack.c.l.b16 %v9466
      %v9499 = vunpack.c.h.b16 %v9466
      %v9500 = vunpack.c.l.b16 %v9467
      %v9501 = vunpack.c.h.b16 %v9467
      %v9502 = vunpack.c.l.b16 %v9468
      %v9503 = vunpack.c.h.b16 %v9468
      %v9504 = vunpack.c.l.b16 %v9469
      %v9505 = vunpack.c.h.b16 %v9469
      %v9506 = vunpack.c.l.b16 %v9470
      %v9507 = vunpack.c.h.b16 %v9470
      %v9508 = vunpack.c.l.b16 %v9471
      %v9509 = vunpack.c.h.b16 %v9471
      %v9510 = vunpack.c.l.b16 %v9472
      %v9511 = vunpack.c.h.b16 %v9472
      %v9512 = vunpack.c.l.b16 %v9473
      %v9513 = vunpack.c.h.b16 %v9473
      %v9514 = vunpack.c.l.b16 %v9474
      %v9515 = vunpack.c.h.b16 %v9474
      %v9516 = vunpack.c.l.b16 %v9475
      %v9517 = vunpack.c.h.b16 %v9475
      %v9518 = vpack.c.b16 %v9490, %v9490
      %v9519 = vpack.c.b16 %v9491, %v9491
      %v9520 = vpack.c.b16 %v9492, %v9492
      %v9521 = vpack.c.b16 %v9493, %v9493
      %v9522 = vpack.c.b16 %v9494, %v9494
      %v9523 = vpack.c.b16 %v9495, %v9495
      %v9524 = vpack.c.b16 %v9496, %v9496
      %v9525 = vpack.c.b16 %v9497, %v9497
      %v9526 = vpack.c.b16 %v9498, %v9498
      %v9527 = vpack.c.b16 %v9499, %v9499
      %v9528 = vpack.c.b16 %v9500, %v9500
      %v9529 = vpack.c.b16 %v9501, %v9501
      %v9530 = vpack.c.b16 %v9502, %v9502
      %v9531 = vpack.c.b16 %v9503, %v9503
      %v9532 = vpack.c.b16 %v9504, %v9504
      %v9533 = vpack.c.b16 %v9505, %v9505
      %v9534 = vpack.c.b16 %v9506, %v9506
      %v9535 = vpack.c.b16 %v9507, %v9507
      %v9536 = vpack.c.b16 %v9508, %v9508
      %v9537 = vpack.c.b16 %v9509, %v9509
      %v9538 = vpack.c.b16 %v9510, %v9510
      %v9539 = vpack.c.b16 %v9511, %v9511
      %v9540 = vpack.c.b16 %v9512, %v9512
      %v9541 = vpack.c.b16 %v9513, %v9513
      %v9542 = vpack.c.b16 %v9514, %v9514
      %v9543 = vpack.c.b16 %v9515, %v9515
      %v9544 = vpack.c.b16 %v9516, %v9516
      %v9545 = vpack.c.b16 %v9517, %v9517
      %vm9574 = vcmask 257024
      %9575 = vst.msk [vmem:[%s264] sm:$0xf] %vm9574, %v9518
      %vm9576 = vcmask 256000
      %9577 = vst.msk [vmem:[%s264 + $0x4] sm:$0x7] %vm9576, %v9519
      %9578 = vst.msk [vmem:[%s264 + $0x8] sm:$0xf] %vm9574, %v9520
      %9579 = vst.msk [vmem:[%s264 + $0xc] sm:$0x7] %vm9576, %v9521
      %9580 = vst.msk [vmem:[%s264 + $0x10] sm:$0xf] %vm9574, %v9522
      %9581 = vst.msk [vmem:[%s264 + $0x14] sm:$0x7] %vm9576, %v9523
      %9582 = vst.msk [vmem:[%s264 + $0x18] sm:$0xf] %vm9574, %v9524
      %9583 = vst.msk [vmem:[%s264 + $0x1c] sm:$0x7] %vm9576, %v9525
      %9584 = vst.msk [vmem:[%s264 + $0x20] sm:$0xf] %vm9574, %v9526
      %9585 = vst.msk [vmem:[%s264 + $0x24] sm:$0x7] %vm9576, %v9527
      %9586 = vst.msk [vmem:[%s264 + $0x28] sm:$0xf] %vm9574, %v9528
      %9587 = vst.msk [vmem:[%s264 + $0x2c] sm:$0x7] %vm9576, %v9529
      %9588 = vst.msk [vmem:[%s264 + $0x30] sm:$0xf] %vm9574, %v9530
      %9589 = vst.msk [vmem:[%s264 + $0x34] sm:$0x7] %vm9576, %v9531
      %9590 = vst.msk [vmem:[%s264 + $0x38] sm:$0xf] %vm9574, %v9532
      %9591 = vst.msk [vmem:[%s264 + $0x3c] sm:$0x7] %vm9576, %v9533
      %9592 = vst.msk [vmem:[%s264 + $0x40] sm:$0xf] %vm9574, %v9534
      %9593 = vst.msk [vmem:[%s264 + $0x44] sm:$0x7] %vm9576, %v9535
      %9594 = vst.msk [vmem:[%s264 + $0x48] sm:$0xf] %vm9574, %v9536
      %9595 = vst.msk [vmem:[%s264 + $0x4c] sm:$0x7] %vm9576, %v9537
      %9596 = vst.msk [vmem:[%s264 + $0x50] sm:$0xf] %vm9574, %v9538
      %9597 = vst.msk [vmem:[%s264 + $0x54] sm:$0x7] %vm9576, %v9539
      %9598 = vst.msk [vmem:[%s264 + $0x58] sm:$0xf] %vm9574, %v9540
      %9599 = vst.msk [vmem:[%s264 + $0x5c] sm:$0x7] %vm9576, %v9541
      %9600 = vst.msk [vmem:[%s264 + $0x60] sm:$0xf] %vm9574, %v9542
      %9601 = vst.msk [vmem:[%s264 + $0x64] sm:$0x7] %vm9576, %v9543
      %9602 = vst.msk [vmem:[%s264 + $0x68] sm:$0xf] %vm9574, %v9544
      %9603 = vst.msk [vmem:[%s264 + $0x6c] sm:$0x7] %vm9576, %v9545
      %p9604 = scmp.lt.s32.totalorder %s18, 1
      %s9605 = scalar_select %p9604, %s18, 1
      %s9606 = smul.addr %s9605, 28
      %s9607 = smul.addr %s9606, 8
      %s9608 = scalar_lea.vmem %s5, %s9607
      %p9609 = scmp.lt.s32.totalorder %s18, 1
      %s9610 = scalar_select %p9609, %s18, 1
      %s9611 = smul.addr %s9610, 28
      %s9612 = smul.addr %s9611, 4
      %s9613 = scalar_lea.vmem %s6, %s9612
      // Predicated region
      $region41: #{basicblock2_forward.3} parent=39 // pred_check
        %p9614 = pneg %p146
      $region42: #{basicblock2_forward.3} parent=39 // pred_check_branch
        %9616 = sbr.rel (%p9614) target = $region44
      $region43: #{basicblock2_forward.3} parent=39 // pred_region
        _
      $region44: #{basicblock2_forward.3} parent=39 // pred_fallthru
        _
      // Predicated region
      $region45: #{basicblock2_forward.3} parent=39 // pred_check
        %p9617 = pneg %p172
      $region46: #{basicblock2_forward.3} parent=39 // pred_check_branch
        %9619 = sbr.rel (%p9617) target = $region48
      $region47: #{basicblock2_forward.3} parent=39 // pred_region
        _
      $region48: #{basicblock2_forward.3} parent=39 // pred_fallthru
        _
    $region40: #{basicblock2_forward.3} parent=5 // pred_fallthru
      _
    %p9620 = scmp.le.s32.totalorder 2, %s13
    // Predicated region
    $region49: #{basicblock2_forward.3} parent=5 // pred_check
      %p9621 = pneg %p9620
    $region50: #{basicblock2_forward.3} parent=5 // pred_check_branch
      %9623 = sbr.rel (%p9621) target = $region52
    $region51: #{basicblock2_forward.3} parent=5 // pred_region
      %s9624 = ssub.s32 %s13, 2
      // Predicated region
      $region53: #{basicblock2_forward.3} parent=51 // pred_check
        %p9625 = pneg %p152
      $region54: #{basicblock2_forward.3} parent=51 // pred_check_branch
        %9627 = sbr.rel (%p9625) target = $region56
      $region55: #{basicblock2_forward.3} parent=51 // pred_region
        %p9628 = scmp.lt.s32.totalorder %s19, 1
        %s9629 = scalar_select %p9628, %s19, 1
        %s9630 = smul.addr %s9629, 28
        %s9631 = smul.addr %s9630, 8
        %s9632 = scalar_lea.vmem %s5, %s9631
      $region56: #{basicblock2_forward.3} parent=51 // pred_fallthru
        _
      // Predicated region
      $region57: #{basicblock2_forward.3} parent=51 // pred_check
        %p9633 = pneg %p178
      $region58: #{basicblock2_forward.3} parent=51 // pred_check_branch
        %9635 = sbr.rel (%p9633) target = $region60
      $region59: #{basicblock2_forward.3} parent=51 // pred_region
        %p9636 = scmp.lt.s32.totalorder %s19, 1
        %s9637 = scalar_select %p9636, %s19, 1
        %s9638 = smul.addr %s9637, 28
        %s9639 = smul.addr %s9638, 4
        %s9640 = scalar_lea.vmem %s6, %s9639
      $region60: #{basicblock2_forward.3} parent=51 // pred_fallthru
        _
    $region52: #{basicblock2_forward.3} parent=5 // pred_fallthru
      _
  $region6: #{basicblock2_forward.3} parent=0 // loop_footer
    %s17 = sadd.s32 1, %s13
  $region7: #{basicblock2_forward.3} parent=0 // loop_footer_branch
    %12 = sbr.rel target = $region3
  $region8: #{basicblock2_forward.3} parent=0 // loop_exit
    _

</llo_original>
